<compile_context>
chip_gen: v6e
topology: v6e:2x2x1
jax: 0.10.0
libtpu: 0.0.40
codegen_flags: <defaults>
</compile_context>

<pallas_src>
import jax
import jax.numpy as jnp
from jax import lax
from jax.experimental import pallas as pl
from jax.experimental.pallas import tpu as pltpu

_HP = lax.Precision.HIGHEST


def _full_spec(shape):
    # Whole-array block, trivial index map (grid is (1,)).
    return pl.BlockSpec(shape, lambda *_: (0,) * len(shape))


def make_fused_kernel(n_layers, T, B, H, N):
    """Stacked LSTM (PyTorch gate order i,f,g,o, zero-init state) + fused Linear head."""
    last_start = T * B - N          # first flat row of lstm_out.view(seq_len, N, H)[-1]
    use_roll = (4 * H) % 128 == 0   # gate block spans whole 128-lane vregs -> XLU rotate path

    def extract_gate(mat, k):
        # mat: (B, 4H). Return gate k (PyTorch order i,f,g,o) aligned at lane offset 0,
        # so the following elementwise ops against c/h need no lane realignment.
        if k == 0:
            return mat[:, :H]
        if use_roll:
            # Explicit XLU lane rotation (idle slot on this latency-bound path) instead
            # of relying on Mosaic's lowering of an offset slice.
            return pltpu.roll(mat, shift=(4 - k) * H, axis=1)[:, :H]
        return mat[:, k * H:(k + 1) * H]

    def kernel(*refs):
        x_ref = refs[0]                                    # (T*B, F_pad) time-major flat input
        layer_refs = [(refs[1 + 3 * l], refs[2 + 3 * l], refs[3 + 3 * l])
                      for l in range(n_layers)]
        wlin_ref = refs[1 + 3 * n_layers]                  # (1, H)   nn.Linear weight row (VMEM)
        blin_ref = refs[2 + 3 * n_layers]                  # (1,)     nn.Linear bias (SMEM scalar)
        out_ref = refs[3 + 3 * n_layers]                   # (N, 1)
        seq_scr = refs[4 + 3 * n_layers]                   # VMEM (T*B, H) scratch

        seq = x_ref[...]                                   # (T*B, F_0)
        last = None
        for l in range(n_layers):
            wih_ref, whh_ref, b_ref = layer_refs[l]
            wih = wih_ref[...]                             # (F_l, 4H) pre-transposed
            whh = whh_ref[...]                             # (H, 4H), held across the T loop
            b = b_ref[...]                                 # (1, 4H) = b_ih + b_hh

            # Hoisted, batched input projection (bias folded in) — off the serial chain.
            gx = jnp.dot(seq, wih, precision=_HP,
                         preferred_element_type=jnp.float32) + b            # (T*B, 4H)

            h = jnp.zeros((B, H), jnp.float32)             # reset_hidden_state()
            c = jnp.zeros((B, H), jnp.float32)
            final_layer = (l == n_layers - 1)
            for t in range(T):                             # fully unrolled (T static, small)
                # TODO(synk): MXU-resident whh via pltpu.matmul_push_rhs/acc_lhs/pop.
                gates = gx[t * B:(t + 1) * B, :] + jnp.dot(
                    h, whh, precision=_HP, preferred_element_type=jnp.float32)  # (B, 4H)
                sig = jax.nn.sigmoid(gates)                # one EUP pass over full vreg(s)
                th = jnp.tanh(gates)                       # one EUP pass over full vreg(s)
                i_g = extract_gate(sig, 0)
                f_g = extract_gate(sig, 1)
                g_g = extract_gate(th, 2)
                o_g = extract_gate(sig, 3)
                c = f_g * c + i_g * g_g
                h = o_g * jnp.tanh(c)

                # Write per-step hidden straight to VMEM scratch instead of keeping all
                # T (B,H) values live in vregs; the final layer stores only timesteps
                # the `last` gather actually reads.
                if not final_layer:
                    seq_scr[t * B:(t + 1) * B, :] = h
                elif N > B and (t + 1) * B > last_start:
                    seq_scr[t * B:(t + 1) * B, :] = h

            if not final_layer:
                seq = seq_scr[...]                         # (T*B, H) next layer's hoisted input
            elif N <= B:
                # lstm_out.view(seq_len, N, H)[-1] == last N flat rows of the row-major
                # (T, B, H) output; when N <= B they all live in timestep T-1.
                last = h[B - N:, :]
            else:
                last = seq_scr[pl.ds(last_start, N), :]

        # Fused Linear head: VPU multiply + lane reduction (avoids a 1-lane MXU output).
        blin = blin_ref[0]                                 # scalar from SMEM
        y = jnp.sum(last * wlin_ref[...], axis=1, keepdims=True) + blin      # (N, 1)
        # (N, 1) output is a single masked store at these sizes; if N ever grows beyond
        # a tile, emit it lane-dense (1, padded-N) instead.
        out_ref[...] = y

    return kernel


def covid_predictor_forward(x, layer_params, w_lin, b_lin, n_hidden):
    """x: (N, seq_len, F) float32. Returns (N, 1) float32."""
    T, B, F = x.shape              # T = N (LSTM time), B = seq_len (LSTM batch)
    N = T
    H = n_hidden
    n_layers = len(layer_params)

    x_flat = x.reshape(T * B, F)   # metadata-only, row-major == time-major flatten

    # Pad the layer-0 feature dim to a sublane multiple (8) with zeros (free at prep
    # time, mathematically identical) so the layer-0 projection is tile-aligned.
    F_pad = ((F + 7) // 8) * 8
    wih0, whh0, b0 = layer_params[0]
    if F_pad != F:
        x_flat = jnp.pad(x_flat, ((0, 0), (0, F_pad - F)))
        wih0 = jnp.pad(wih0, ((0, F_pad - F), (0, 0)))
    padded_params = [(wih0, whh0, b0)] + list(layer_params[1:])

    kernel = make_fused_kernel(n_layers, T, B, H, N)

    args = [x_flat]
    in_specs = [_full_spec(x_flat.shape)]
    for (wih, whh, b) in padded_params:
        args += [wih, whh, b]
        in_specs += [_full_spec(wih.shape), _full_spec(whh.shape), _full_spec(b.shape)]
    b_lin_flat = b_lin.reshape(-1)                        # (1,) scalar, lives in SMEM
    args += [w_lin, b_lin_flat]
    in_specs += [_full_spec(w_lin.shape),
                 pl.BlockSpec(memory_space=pltpu.MemorySpace.SMEM)]

    # Advisory cost estimate so XLA schedules the custom call sensibly.
    flops = 0
    transcendentals = 0
    for (wih, whh, b) in padded_params:
        f_in = wih.shape[0]
        flops += 2 * T * B * f_in * 4 * H        # hoisted input projection
        flops += 2 * T * B * H * 4 * H           # recurrent matmuls
        flops += 10 * T * B * H                  # gate elementwise combines
        transcendentals += T * B * 9 * H         # sigmoid+tanh on (B,4H) + tanh(c)
    flops += 2 * N * H                           # linear head
    bytes_accessed = 4 * (x_flat.size
                          + sum(w.size + u.size + bb.size for (w, u, bb) in padded_params)
                          + w_lin.size + b_lin_flat.size + N)

    # NOTE(v7x): grid=(1,) uses one TensorCore; batching independent forward calls
    # along a leading 'parallel' grid axis (or along B) is how to fill the 2nd TC.
    return pl.pallas_call(
        kernel,
        grid=(1,),
        out_shape=jax.ShapeDtypeStruct((N, 1), jnp.float32),
        in_specs=in_specs,
        out_specs=_full_spec((N, 1)),
        scratch_shapes=[pltpu.VMEM((T * B, H), jnp.float32)],
        compiler_params=pltpu.CompilerParams(dimension_semantics=("arbitrary",)),
        cost_estimate=pl.CostEstimate(flops=flops,
                                      transcendentals=transcendentals,
                                      bytes_accessed=bytes_accessed),
    )(*args)


class CovidPredictorPallas:
    """JAX/Pallas re-implementation of model/LSTM.py::CovidPredictor.forward."""

    def __init__(self, n_features, n_hidden, seq_len, n_layers, key):
        self.n_features = n_features
        self.n_hidden = n_hidden
        self.seq_len = seq_len
        self.n_layers = n_layers

        H = n_hidden
        bound = 1.0 / jnp.sqrt(jnp.float32(H))
        keys = jax.random.split(key, 4 * n_layers + 2)

        self.layer_params = []
        for l in range(n_layers):
            f_in = n_features if l == 0 else H
            k_ih, k_hh, k_bih, k_bhh = keys[4 * l:4 * l + 4]
            wih = jax.random.uniform(k_ih, (f_in, 4 * H), jnp.float32, -bound, bound)
            whh = jax.random.uniform(k_hh, (H, 4 * H), jnp.float32, -bound, bound)
            b_ih = jax.random.uniform(k_bih, (1, 4 * H), jnp.float32, -bound, bound)
            b_hh = jax.random.uniform(k_bhh, (1, 4 * H), jnp.float32, -bound, bound)
            self.layer_params.append((wih, whh, b_ih + b_hh))

        k_w, k_b = keys[4 * n_layers:4 * n_layers + 2]
        self.w_lin = jax.random.uniform(k_w, (1, H), jnp.float32, -bound, bound)  # nn.Linear weight row
        self.b_lin = jax.random.uniform(k_b, (1, 1), jnp.float32, -bound, bound)

    def forward(self, sequences):
        N = sequences.shape[0]
        # sequences.view(len(sequences), seq_len, -1)
        x = sequences.reshape(N, self.seq_len, -1).astype(jnp.float32)
        return covid_predictor_forward(x, self.layer_params, self.w_lin, self.b_lin,
                                       self.n_hidden)


def _reference_forward(sequences, layer_params, w_lin, b_lin, n_hidden, seq_len):
    """Pure-JAX reference of the PyTorch forward (post reset_hidden_state)."""
    N = sequences.shape[0]
    H = n_hidden
    seq = sequences.reshape(N, seq_len, -1).astype(jnp.float32)   # (T, B, F)
    T, B, _ = seq.shape
    out = seq
    for (wih, whh, b) in layer_params:
        h = jnp.zeros((B, H), jnp.float32)
        c = jnp.zeros((B, H), jnp.float32)
        ys = []
        for t in range(T):
            gates = (jnp.dot(out[t], wih, precision=_HP)
                     + jnp.dot(h, whh, precision=_HP) + b)
            i = jax.nn.sigmoid(gates[:, 0 * H:1 * H])
            f = jax.nn.sigmoid(gates[:, 1 * H:2 * H])
            g = jnp.tanh(gates[:, 2 * H:3 * H])
            o = jax.nn.sigmoid(gates[:, 3 * H:4 * H])
            c = f * c + i * g
            h = o * jnp.tanh(c)
            ys.append(h)
        out = jnp.stack(ys, axis=0)
    last = out.reshape(seq_len, N, H)[-1]
    return jnp.dot(last, w_lin.T, precision=_HP) + b_lin


if __name__ == "__main__":
    n_features, n_hidden, seq_len, n_layers = 4, 32, 8, 2
    N = 6  # len(sequences)

    key = jax.random.PRNGKey(0)
    k_data, k_params = jax.random.split(key)

    model = CovidPredictorPallas(n_features, n_hidden, seq_len, n_layers, k_params)
    sequences = jax.random.normal(k_data, (N, seq_len, n_features), jnp.float32)

    y_pred = model.forward(sequences)
    jax.block_until_ready(y_pred)

    assert y_pred.shape == (N, 1) and y_pred.dtype == jnp.float32
    assert bool(jnp.all(jnp.isfinite(y_pred)))

    y_ref = _reference_forward(sequences, model.layer_params, model.w_lin, model.b_lin,
                               n_hidden, seq_len)
    assert bool(jnp.allclose(y_pred, y_ref, rtol=5e-3, atol=5e-3))

    print("KERNEL_OK")
</pallas_src>

<mosaic_0001>
module attributes {stable_mosaic.version = 11 : i64} {
  func.func @kernel(%arg0: i32, %arg1: memref<48x8xf32, #tpu.memory_space<vmem>>, %arg2: memref<8x128xf32, #tpu.memory_space<vmem>>, %arg3: memref<32x128xf32, #tpu.memory_space<vmem>>, %arg4: memref<1x128xf32, #tpu.memory_space<vmem>>, %arg5: memref<32x128xf32, #tpu.memory_space<vmem>>, %arg6: memref<32x128xf32, #tpu.memory_space<vmem>>, %arg7: memref<1x128xf32, #tpu.memory_space<vmem>>, %arg8: memref<1x32xf32, #tpu.memory_space<vmem>>, %arg9: memref<1xf32, #tpu.memory_space<smem>>, %arg10: memref<6x1xf32, #tpu.memory_space<vmem>>, %arg11: memref<48x32xf32, #tpu.memory_space<vmem>>) attributes {dimension_semantics = [#tpu.dimension_semantics<arbitrary>], iteration_bounds = array<i64: 1>, scalar_prefetch = 0 : i64, scratch_operands = 1 : i64, tpu.core_type = #tpu.core_type<tc>, window_params = [{pipeline_mode = #tpu.pipeline_mode<synchronous>, transform_indices = @transform_0, window_bounds = array<i64: 48, 8>}, {pipeline_mode = #tpu.pipeline_mode<synchronous>, transform_indices = @transform_1, window_bounds = array<i64: 8, 128>}, {pipeline_mode = #tpu.pipeline_mode<synchronous>, transform_indices = @transform_2, window_bounds = array<i64: 32, 128>}, {pipeline_mode = #tpu.pipeline_mode<synchronous>, transform_indices = @transform_3, window_bounds = array<i64: 1, 128>}, {pipeline_mode = #tpu.pipeline_mode<synchronous>, transform_indices = @transform_4, window_bounds = array<i64: 32, 128>}, {pipeline_mode = #tpu.pipeline_mode<synchronous>, transform_indices = @transform_5, window_bounds = array<i64: 32, 128>}, {pipeline_mode = #tpu.pipeline_mode<synchronous>, transform_indices = @transform_6, window_bounds = array<i64: 1, 128>}, {pipeline_mode = #tpu.pipeline_mode<synchronous>, transform_indices = @transform_7, window_bounds = array<i64: 1, 32>}, {transform_indices = @transform_8, window_bounds = array<i64: 1>}, {pipeline_mode = #tpu.pipeline_mode<synchronous>, transform_indices = @transform_9, window_bounds = array<i64: 6, 1>}]} {
    %c0 = arith.constant 0 : index
    %c0_0 = arith.constant 0 : index
    %0 = vector.load %arg1[%c0, %c0_0] : memref<48x8xf32, #tpu.memory_space<vmem>>, vector<48x8xf32>
    %c0_1 = arith.constant 0 : index
    %c0_2 = arith.constant 0 : index
    %1 = vector.load %arg2[%c0_1, %c0_2] : memref<8x128xf32, #tpu.memory_space<vmem>>, vector<8x128xf32>
    %c0_3 = arith.constant 0 : index
    %c0_4 = arith.constant 0 : index
    %2 = vector.load %arg3[%c0_3, %c0_4] : memref<32x128xf32, #tpu.memory_space<vmem>>, vector<32x128xf32>
    %c0_5 = arith.constant 0 : index
    %c0_6 = arith.constant 0 : index
    %3 = vector.load %arg4[%c0_5, %c0_6] : memref<1x128xf32, #tpu.memory_space<vmem>>, vector<1x128xf32>
    %cst = arith.constant dense<0.000000e+00> : vector<48x128xf32>
    %4 = tpu.matmul %0, %1, %cst {dimension_numbers = #tpu.dot_dimension_numbers<[1], [0], [0], [1], [0, 0, 1, 1], [], []>, precision = #tpu.contract_precision<fp32>} : vector<48x8xf32>, vector<8x128xf32>, vector<48x128xf32> -> vector<48x128xf32>
    %5 = vector.broadcast %3 : vector<1x128xf32> to vector<48x128xf32>
    %6 = arith.addf %4, %5 : vector<48x128xf32>
    %cst_7 = arith.constant 0.000000e+00 : f32
    %7 = vector.broadcast %cst_7 : f32 to vector<8x32xf32>
    %cst_8 = arith.constant 0.000000e+00 : f32
    %8 = vector.broadcast %cst_8 : f32 to vector<8x32xf32>
    %9 = vector.extract_strided_slice %6 {offsets = [0, 0], sizes = [8, 128], strides = [1, 1]} : vector<48x128xf32> to vector<8x128xf32>
    %cst_9 = arith.constant dense<0.000000e+00> : vector<8x128xf32>
    %10 = tpu.matmul %7, %2, %cst_9 {dimension_numbers = #tpu.dot_dimension_numbers<[1], [0], [0], [1], [0, 0, 1, 1], [], []>, precision = #tpu.contract_precision<fp32>} : vector<8x32xf32>, vector<32x128xf32>, vector<8x128xf32> -> vector<8x128xf32>
    %11 = arith.addf %9, %10 : vector<8x128xf32>
    %12 = arith.negf %11 : vector<8x128xf32>
    %13 = math.exp %12 : vector<8x128xf32>
    %cst_10 = arith.constant 1.000000e+00 : f32
    %14 = vector.broadcast %cst_10 : f32 to vector<8x128xf32>
    %15 = arith.addf %14, %13 : vector<8x128xf32>
    %16 = arith.divf %14, %15 : vector<8x128xf32>
    %17 = math.tanh %11 : vector<8x128xf32>
    %18 = vector.extract_strided_slice %16 {offsets = [0, 0], sizes = [8, 32], strides = [1, 1]} : vector<8x128xf32> to vector<8x32xf32>
    %c96_i32 = arith.constant 96 : i32
    %19 = tpu.dynamic_rotate %16 by %c96_i32 dim 1 : vector<8x128xf32>, i32 -> vector<8x128xf32>
    %20 = vector.extract_strided_slice %19 {offsets = [0, 0], sizes = [8, 32], strides = [1, 1]} : vector<8x128xf32> to vector<8x32xf32>
    %c64_i32 = arith.constant 64 : i32
    %21 = tpu.dynamic_rotate %17 by %c64_i32 dim 1 : vector<8x128xf32>, i32 -> vector<8x128xf32>
    %22 = vector.extract_strided_slice %21 {offsets = [0, 0], sizes = [8, 32], strides = [1, 1]} : vector<8x128xf32> to vector<8x32xf32>
    %c32_i32 = arith.constant 32 : i32
    %23 = tpu.dynamic_rotate %16 by %c32_i32 dim 1 : vector<8x128xf32>, i32 -> vector<8x128xf32>
    %24 = vector.extract_strided_slice %23 {offsets = [0, 0], sizes = [8, 32], strides = [1, 1]} : vector<8x128xf32> to vector<8x32xf32>
    %25 = arith.mulf %20, %8 : vector<8x32xf32>
    %26 = arith.mulf %18, %22 : vector<8x32xf32>
    %27 = arith.addf %25, %26 : vector<8x32xf32>
    %28 = math.tanh %27 : vector<8x32xf32>
    %29 = arith.mulf %24, %28 : vector<8x32xf32>
    %c0_11 = arith.constant 0 : index
    %c0_12 = arith.constant 0 : index
    %30 = vector.load %arg11[%c0_11, %c0_12] : memref<48x32xf32, #tpu.memory_space<vmem>>, vector<8x32xf32>
    tpu.vector_store %arg11[%c0_11, %c0_12], %29 {strides = array<i32>} : memref<48x32xf32, #tpu.memory_space<vmem>>, vector<8x32xf32>,
    %31 = vector.extract_strided_slice %6 {offsets = [8, 0], sizes = [8, 128], strides = [1, 1]} : vector<48x128xf32> to vector<8x128xf32>
    %cst_13 = arith.constant dense<0.000000e+00> : vector<8x128xf32>
    %32 = tpu.matmul %29, %2, %cst_13 {dimension_numbers = #tpu.dot_dimension_numbers<[1], [0], [0], [1], [0, 0, 1, 1], [], []>, precision = #tpu.contract_precision<fp32>} : vector<8x32xf32>, vector<32x128xf32>, vector<8x128xf32> -> vector<8x128xf32>
    %33 = arith.addf %31, %32 : vector<8x128xf32>
    %34 = arith.negf %33 : vector<8x128xf32>
    %35 = math.exp %34 : vector<8x128xf32>
    %cst_14 = arith.constant 1.000000e+00 : f32
    %36 = vector.broadcast %cst_14 : f32 to vector<8x128xf32>
    %37 = arith.addf %36, %35 : vector<8x128xf32>
    %38 = arith.divf %36, %37 : vector<8x128xf32>
    %39 = math.tanh %33 : vector<8x128xf32>
    %40 = vector.extract_strided_slice %38 {offsets = [0, 0], sizes = [8, 32], strides = [1, 1]} : vector<8x128xf32> to vector<8x32xf32>
    %c96_i32_15 = arith.constant 96 : i32
    %41 = tpu.dynamic_rotate %38 by %c96_i32_15 dim 1 : vector<8x128xf32>, i32 -> vector<8x128xf32>
    %42 = vector.extract_strided_slice %41 {offsets = [0, 0], sizes = [8, 32], strides = [1, 1]} : vector<8x128xf32> to vector<8x32xf32>
    %c64_i32_16 = arith.constant 64 : i32
    %43 = tpu.dynamic_rotate %39 by %c64_i32_16 dim 1 : vector<8x128xf32>, i32 -> vector<8x128xf32>
    %44 = vector.extract_strided_slice %43 {offsets = [0, 0], sizes = [8, 32], strides = [1, 1]} : vector<8x128xf32> to vector<8x32xf32>
    %c32_i32_17 = arith.constant 32 : i32
    %45 = tpu.dynamic_rotate %38 by %c32_i32_17 dim 1 : vector<8x128xf32>, i32 -> vector<8x128xf32>
    %46 = vector.extract_strided_slice %45 {offsets = [0, 0], sizes = [8, 32], strides = [1, 1]} : vector<8x128xf32> to vector<8x32xf32>
    %47 = arith.mulf %42, %27 : vector<8x32xf32>
    %48 = arith.mulf %40, %44 : vector<8x32xf32>
    %49 = arith.addf %47, %48 : vector<8x32xf32>
    %50 = math.tanh %49 : vector<8x32xf32>
    %51 = arith.mulf %46, %50 : vector<8x32xf32>
    %c8 = arith.constant 8 : index
    %c0_18 = arith.constant 0 : index
    %52 = vector.load %arg11[%c8, %c0_18] : memref<48x32xf32, #tpu.memory_space<vmem>>, vector<8x32xf32>
    tpu.vector_store %arg11[%c8, %c0_18], %51 {strides = array<i32>} : memref<48x32xf32, #tpu.memory_space<vmem>>, vector<8x32xf32>,
    %53 = vector.extract_strided_slice %6 {offsets = [16, 0], sizes = [8, 128], strides = [1, 1]} : vector<48x128xf32> to vector<8x128xf32>
    %cst_19 = arith.constant dense<0.000000e+00> : vector<8x128xf32>
    %54 = tpu.matmul %51, %2, %cst_19 {dimension_numbers = #tpu.dot_dimension_numbers<[1], [0], [0], [1], [0, 0, 1, 1], [], []>, precision = #tpu.contract_precision<fp32>} : vector<8x32xf32>, vector<32x128xf32>, vector<8x128xf32> -> vector<8x128xf32>
    %55 = arith.addf %53, %54 : vector<8x128xf32>
    %56 = arith.negf %55 : vector<8x128xf32>
    %57 = math.exp %56 : vector<8x128xf32>
    %cst_20 = arith.constant 1.000000e+00 : f32
    %58 = vector.broadcast %cst_20 : f32 to vector<8x128xf32>
    %59 = arith.addf %58, %57 : vector<8x128xf32>
    %60 = arith.divf %58, %59 : vector<8x128xf32>
    %61 = math.tanh %55 : vector<8x128xf32>
    %62 = vector.extract_strided_slice %60 {offsets = [0, 0], sizes = [8, 32], strides = [1, 1]} : vector<8x128xf32> to vector<8x32xf32>
    %c96_i32_21 = arith.constant 96 : i32
    %63 = tpu.dynamic_rotate %60 by %c96_i32_21 dim 1 : vector<8x128xf32>, i32 -> vector<8x128xf32>
    %64 = vector.extract_strided_slice %63 {offsets = [0, 0], sizes = [8, 32], strides = [1, 1]} : vector<8x128xf32> to vector<8x32xf32>
    %c64_i32_22 = arith.constant 64 : i32
    %65 = tpu.dynamic_rotate %61 by %c64_i32_22 dim 1 : vector<8x128xf32>, i32 -> vector<8x128xf32>
    %66 = vector.extract_strided_slice %65 {offsets = [0, 0], sizes = [8, 32], strides = [1, 1]} : vector<8x128xf32> to vector<8x32xf32>
    %c32_i32_23 = arith.constant 32 : i32
    %67 = tpu.dynamic_rotate %60 by %c32_i32_23 dim 1 : vector<8x128xf32>, i32 -> vector<8x128xf32>
    %68 = vector.extract_strided_slice %67 {offsets = [0, 0], sizes = [8, 32], strides = [1, 1]} : vector<8x128xf32> to vector<8x32xf32>
    %69 = arith.mulf %64, %49 : vector<8x32xf32>
    %70 = arith.mulf %62, %66 : vector<8x32xf32>
    %71 = arith.addf %69, %70 : vector<8x32xf32>
    %72 = math.tanh %71 : vector<8x32xf32>
    %73 = arith.mulf %68, %72 : vector<8x32xf32>
    %c16 = arith.constant 16 : index
    %c0_24 = arith.constant 0 : index
    %74 = vector.load %arg11[%c16, %c0_24] : memref<48x32xf32, #tpu.memory_space<vmem>>, vector<8x32xf32>
    tpu.vector_store %arg11[%c16, %c0_24], %73 {strides = array<i32>} : memref<48x32xf32, #tpu.memory_space<vmem>>, vector<8x32xf32>,
    %75 = vector.extract_strided_slice %6 {offsets = [24, 0], sizes = [8, 128], strides = [1, 1]} : vector<48x128xf32> to vector<8x128xf32>
    %cst_25 = arith.constant dense<0.000000e+00> : vector<8x128xf32>
    %76 = tpu.matmul %73, %2, %cst_25 {dimension_numbers = #tpu.dot_dimension_numbers<[1], [0], [0], [1], [0, 0, 1, 1], [], []>, precision = #tpu.contract_precision<fp32>} : vector<8x32xf32>, vector<32x128xf32>, vector<8x128xf32> -> vector<8x128xf32>
    %77 = arith.addf %75, %76 : vector<8x128xf32>
    %78 = arith.negf %77 : vector<8x128xf32>
    %79 = math.exp %78 : vector<8x128xf32>
    %cst_26 = arith.constant 1.000000e+00 : f32
    %80 = vector.broadcast %cst_26 : f32 to vector<8x128xf32>
    %81 = arith.addf %80, %79 : vector<8x128xf32>
    %82 = arith.divf %80, %81 : vector<8x128xf32>
    %83 = math.tanh %77 : vector<8x128xf32>
    %84 = vector.extract_strided_slice %82 {offsets = [0, 0], sizes = [8, 32], strides = [1, 1]} : vector<8x128xf32> to vector<8x32xf32>
    %c96_i32_27 = arith.constant 96 : i32
    %85 = tpu.dynamic_rotate %82 by %c96_i32_27 dim 1 : vector<8x128xf32>, i32 -> vector<8x128xf32>
    %86 = vector.extract_strided_slice %85 {offsets = [0, 0], sizes = [8, 32], strides = [1, 1]} : vector<8x128xf32> to vector<8x32xf32>
    %c64_i32_28 = arith.constant 64 : i32
    %87 = tpu.dynamic_rotate %83 by %c64_i32_28 dim 1 : vector<8x128xf32>, i32 -> vector<8x128xf32>
    %88 = vector.extract_strided_slice %87 {offsets = [0, 0], sizes = [8, 32], strides = [1, 1]} : vector<8x128xf32> to vector<8x32xf32>
    %c32_i32_29 = arith.constant 32 : i32
    %89 = tpu.dynamic_rotate %82 by %c32_i32_29 dim 1 : vector<8x128xf32>, i32 -> vector<8x128xf32>
    %90 = vector.extract_strided_slice %89 {offsets = [0, 0], sizes = [8, 32], strides = [1, 1]} : vector<8x128xf32> to vector<8x32xf32>
    %91 = arith.mulf %86, %71 : vector<8x32xf32>
    %92 = arith.mulf %84, %88 : vector<8x32xf32>
    %93 = arith.addf %91, %92 : vector<8x32xf32>
    %94 = math.tanh %93 : vector<8x32xf32>
    %95 = arith.mulf %90, %94 : vector<8x32xf32>
    %c24 = arith.constant 24 : index
    %c0_30 = arith.constant 0 : index
    %96 = vector.load %arg11[%c24, %c0_30] : memref<48x32xf32, #tpu.memory_space<vmem>>, vector<8x32xf32>
    tpu.vector_store %arg11[%c24, %c0_30], %95 {strides = array<i32>} : memref<48x32xf32, #tpu.memory_space<vmem>>, vector<8x32xf32>,
    %97 = vector.extract_strided_slice %6 {offsets = [32, 0], sizes = [8, 128], strides = [1, 1]} : vector<48x128xf32> to vector<8x128xf32>
    %cst_31 = arith.constant dense<0.000000e+00> : vector<8x128xf32>
    %98 = tpu.matmul %95, %2, %cst_31 {dimension_numbers = #tpu.dot_dimension_numbers<[1], [0], [0], [1], [0, 0, 1, 1], [], []>, precision = #tpu.contract_precision<fp32>} : vector<8x32xf32>, vector<32x128xf32>, vector<8x128xf32> -> vector<8x128xf32>
    %99 = arith.addf %97, %98 : vector<8x128xf32>
    %100 = arith.negf %99 : vector<8x128xf32>
    %101 = math.exp %100 : vector<8x128xf32>
    %cst_32 = arith.constant 1.000000e+00 : f32
    %102 = vector.broadcast %cst_32 : f32 to vector<8x128xf32>
    %103 = arith.addf %102, %101 : vector<8x128xf32>
    %104 = arith.divf %102, %103 : vector<8x128xf32>
    %105 = math.tanh %99 : vector<8x128xf32>
    %106 = vector.extract_strided_slice %104 {offsets = [0, 0], sizes = [8, 32], strides = [1, 1]} : vector<8x128xf32> to vector<8x32xf32>
    %c96_i32_33 = arith.constant 96 : i32
    %107 = tpu.dynamic_rotate %104 by %c96_i32_33 dim 1 : vector<8x128xf32>, i32 -> vector<8x128xf32>
    %108 = vector.extract_strided_slice %107 {offsets = [0, 0], sizes = [8, 32], strides = [1, 1]} : vector<8x128xf32> to vector<8x32xf32>
    %c64_i32_34 = arith.constant 64 : i32
    %109 = tpu.dynamic_rotate %105 by %c64_i32_34 dim 1 : vector<8x128xf32>, i32 -> vector<8x128xf32>
    %110 = vector.extract_strided_slice %109 {offsets = [0, 0], sizes = [8, 32], strides = [1, 1]} : vector<8x128xf32> to vector<8x32xf32>
    %c32_i32_35 = arith.constant 32 : i32
    %111 = tpu.dynamic_rotate %104 by %c32_i32_35 dim 1 : vector<8x128xf32>, i32 -> vector<8x128xf32>
    %112 = vector.extract_strided_slice %111 {offsets = [0, 0], sizes = [8, 32], strides = [1, 1]} : vector<8x128xf32> to vector<8x32xf32>
    %113 = arith.mulf %108, %93 : vector<8x32xf32>
    %114 = arith.mulf %106, %110 : vector<8x32xf32>
    %115 = arith.addf %113, %114 : vector<8x32xf32>
    %116 = math.tanh %115 : vector<8x32xf32>
    %117 = arith.mulf %112, %116 : vector<8x32xf32>
    %c32 = arith.constant 32 : index
    %c0_36 = arith.constant 0 : index
    %118 = vector.load %arg11[%c32, %c0_36] : memref<48x32xf32, #tpu.memory_space<vmem>>, vector<8x32xf32>
    tpu.vector_store %arg11[%c32, %c0_36], %117 {strides = array<i32>} : memref<48x32xf32, #tpu.memory_space<vmem>>, vector<8x32xf32>,
    %119 = vector.extract_strided_slice %6 {offsets = [40, 0], sizes = [8, 128], strides = [1, 1]} : vector<48x128xf32> to vector<8x128xf32>
    %cst_37 = arith.constant dense<0.000000e+00> : vector<8x128xf32>
    %120 = tpu.matmul %117, %2, %cst_37 {dimension_numbers = #tpu.dot_dimension_numbers<[1], [0], [0], [1], [0, 0, 1, 1], [], []>, precision = #tpu.contract_precision<fp32>} : vector<8x32xf32>, vector<32x128xf32>, vector<8x128xf32> -> vector<8x128xf32>
    %121 = arith.addf %119, %120 : vector<8x128xf32>
    %122 = arith.negf %121 : vector<8x128xf32>
    %123 = math.exp %122 : vector<8x128xf32>
    %cst_38 = arith.constant 1.000000e+00 : f32
    %124 = vector.broadcast %cst_38 : f32 to vector<8x128xf32>
    %125 = arith.addf %124, %123 : vector<8x128xf32>
    %126 = arith.divf %124, %125 : vector<8x128xf32>
    %127 = math.tanh %121 : vector<8x128xf32>
    %128 = vector.extract_strided_slice %126 {offsets = [0, 0], sizes = [8, 32], strides = [1, 1]} : vector<8x128xf32> to vector<8x32xf32>
    %c96_i32_39 = arith.constant 96 : i32
    %129 = tpu.dynamic_rotate %126 by %c96_i32_39 dim 1 : vector<8x128xf32>, i32 -> vector<8x128xf32>
    %130 = vector.extract_strided_slice %129 {offsets = [0, 0], sizes = [8, 32], strides = [1, 1]} : vector<8x128xf32> to vector<8x32xf32>
    %c64_i32_40 = arith.constant 64 : i32
    %131 = tpu.dynamic_rotate %127 by %c64_i32_40 dim 1 : vector<8x128xf32>, i32 -> vector<8x128xf32>
    %132 = vector.extract_strided_slice %131 {offsets = [0, 0], sizes = [8, 32], strides = [1, 1]} : vector<8x128xf32> to vector<8x32xf32>
    %c32_i32_41 = arith.constant 32 : i32
    %133 = tpu.dynamic_rotate %126 by %c32_i32_41 dim 1 : vector<8x128xf32>, i32 -> vector<8x128xf32>
    %134 = vector.extract_strided_slice %133 {offsets = [0, 0], sizes = [8, 32], strides = [1, 1]} : vector<8x128xf32> to vector<8x32xf32>
    %135 = arith.mulf %130, %115 : vector<8x32xf32>
    %136 = arith.mulf %128, %132 : vector<8x32xf32>
    %137 = arith.addf %135, %136 : vector<8x32xf32>
    %138 = math.tanh %137 : vector<8x32xf32>
    %139 = arith.mulf %134, %138 : vector<8x32xf32>
    %c40 = arith.constant 40 : index
    %c0_42 = arith.constant 0 : index
    %140 = vector.load %arg11[%c40, %c0_42] : memref<48x32xf32, #tpu.memory_space<vmem>>, vector<8x32xf32>
    tpu.vector_store %arg11[%c40, %c0_42], %139 {strides = array<i32>} : memref<48x32xf32, #tpu.memory_space<vmem>>, vector<8x32xf32>,
    %c0_43 = arith.constant 0 : index
    %c0_44 = arith.constant 0 : index
    %141 = vector.load %arg11[%c0_43, %c0_44] : memref<48x32xf32, #tpu.memory_space<vmem>>, vector<48x32xf32>
    %c0_45 = arith.constant 0 : index
    %c0_46 = arith.constant 0 : index
    %142 = vector.load %arg5[%c0_45, %c0_46] : memref<32x128xf32, #tpu.memory_space<vmem>>, vector<32x128xf32>
    %c0_47 = arith.constant 0 : index
    %c0_48 = arith.constant 0 : index
    %143 = vector.load %arg6[%c0_47, %c0_48] : memref<32x128xf32, #tpu.memory_space<vmem>>, vector<32x128xf32>
    %c0_49 = arith.constant 0 : index
    %c0_50 = arith.constant 0 : index
    %144 = vector.load %arg7[%c0_49, %c0_50] : memref<1x128xf32, #tpu.memory_space<vmem>>, vector<1x128xf32>
    %cst_51 = arith.constant dense<0.000000e+00> : vector<48x128xf32>
    %145 = tpu.matmul %141, %142, %cst_51 {dimension_numbers = #tpu.dot_dimension_numbers<[1], [0], [0], [1], [0, 0, 1, 1], [], []>, precision = #tpu.contract_precision<fp32>} : vector<48x32xf32>, vector<32x128xf32>, vector<48x128xf32> -> vector<48x128xf32>
    %146 = vector.broadcast %144 : vector<1x128xf32> to vector<48x128xf32>
    %147 = arith.addf %145, %146 : vector<48x128xf32>
    %cst_52 = arith.constant 0.000000e+00 : f32
    %148 = vector.broadcast %cst_52 : f32 to vector<8x32xf32>
    %cst_53 = arith.constant 0.000000e+00 : f32
    %149 = vector.broadcast %cst_53 : f32 to vector<8x32xf32>
    %150 = vector.extract_strided_slice %147 {offsets = [0, 0], sizes = [8, 128], strides = [1, 1]} : vector<48x128xf32> to vector<8x128xf32>
    %cst_54 = arith.constant dense<0.000000e+00> : vector<8x128xf32>
    %151 = tpu.matmul %148, %143, %cst_54 {dimension_numbers = #tpu.dot_dimension_numbers<[1], [0], [0], [1], [0, 0, 1, 1], [], []>, precision = #tpu.contract_precision<fp32>} : vector<8x32xf32>, vector<32x128xf32>, vector<8x128xf32> -> vector<8x128xf32>
    %152 = arith.addf %150, %151 : vector<8x128xf32>
    %153 = arith.negf %152 : vector<8x128xf32>
    %154 = math.exp %153 : vector<8x128xf32>
    %cst_55 = arith.constant 1.000000e+00 : f32
    %155 = vector.broadcast %cst_55 : f32 to vector<8x128xf32>
    %156 = arith.addf %155, %154 : vector<8x128xf32>
    %157 = arith.divf %155, %156 : vector<8x128xf32>
    %158 = math.tanh %152 : vector<8x128xf32>
    %159 = vector.extract_strided_slice %157 {offsets = [0, 0], sizes = [8, 32], strides = [1, 1]} : vector<8x128xf32> to vector<8x32xf32>
    %c96_i32_56 = arith.constant 96 : i32
    %160 = tpu.dynamic_rotate %157 by %c96_i32_56 dim 1 : vector<8x128xf32>, i32 -> vector<8x128xf32>
    %161 = vector.extract_strided_slice %160 {offsets = [0, 0], sizes = [8, 32], strides = [1, 1]} : vector<8x128xf32> to vector<8x32xf32>
    %c64_i32_57 = arith.constant 64 : i32
    %162 = tpu.dynamic_rotate %158 by %c64_i32_57 dim 1 : vector<8x128xf32>, i32 -> vector<8x128xf32>
    %163 = vector.extract_strided_slice %162 {offsets = [0, 0], sizes = [8, 32], strides = [1, 1]} : vector<8x128xf32> to vector<8x32xf32>
    %c32_i32_58 = arith.constant 32 : i32
    %164 = tpu.dynamic_rotate %157 by %c32_i32_58 dim 1 : vector<8x128xf32>, i32 -> vector<8x128xf32>
    %165 = vector.extract_strided_slice %164 {offsets = [0, 0], sizes = [8, 32], strides = [1, 1]} : vector<8x128xf32> to vector<8x32xf32>
    %166 = arith.mulf %161, %149 : vector<8x32xf32>
    %167 = arith.mulf %159, %163 : vector<8x32xf32>
    %168 = arith.addf %166, %167 : vector<8x32xf32>
    %169 = math.tanh %168 : vector<8x32xf32>
    %170 = arith.mulf %165, %169 : vector<8x32xf32>
    %171 = vector.extract_strided_slice %147 {offsets = [8, 0], sizes = [8, 128], strides = [1, 1]} : vector<48x128xf32> to vector<8x128xf32>
    %cst_59 = arith.constant dense<0.000000e+00> : vector<8x128xf32>
    %172 = tpu.matmul %170, %143, %cst_59 {dimension_numbers = #tpu.dot_dimension_numbers<[1], [0], [0], [1], [0, 0, 1, 1], [], []>, precision = #tpu.contract_precision<fp32>} : vector<8x32xf32>, vector<32x128xf32>, vector<8x128xf32> -> vector<8x128xf32>
    %173 = arith.addf %171, %172 : vector<8x128xf32>
    %174 = arith.negf %173 : vector<8x128xf32>
    %175 = math.exp %174 : vector<8x128xf32>
    %cst_60 = arith.constant 1.000000e+00 : f32
    %176 = vector.broadcast %cst_60 : f32 to vector<8x128xf32>
    %177 = arith.addf %176, %175 : vector<8x128xf32>
    %178 = arith.divf %176, %177 : vector<8x128xf32>
    %179 = math.tanh %173 : vector<8x128xf32>
    %180 = vector.extract_strided_slice %178 {offsets = [0, 0], sizes = [8, 32], strides = [1, 1]} : vector<8x128xf32> to vector<8x32xf32>
    %c96_i32_61 = arith.constant 96 : i32
    %181 = tpu.dynamic_rotate %178 by %c96_i32_61 dim 1 : vector<8x128xf32>, i32 -> vector<8x128xf32>
    %182 = vector.extract_strided_slice %181 {offsets = [0, 0], sizes = [8, 32], strides = [1, 1]} : vector<8x128xf32> to vector<8x32xf32>
    %c64_i32_62 = arith.constant 64 : i32
    %183 = tpu.dynamic_rotate %179 by %c64_i32_62 dim 1 : vector<8x128xf32>, i32 -> vector<8x128xf32>
    %184 = vector.extract_strided_slice %183 {offsets = [0, 0], sizes = [8, 32], strides = [1, 1]} : vector<8x128xf32> to vector<8x32xf32>
    %c32_i32_63 = arith.constant 32 : i32
    %185 = tpu.dynamic_rotate %178 by %c32_i32_63 dim 1 : vector<8x128xf32>, i32 -> vector<8x128xf32>
    %186 = vector.extract_strided_slice %185 {offsets = [0, 0], sizes = [8, 32], strides = [1, 1]} : vector<8x128xf32> to vector<8x32xf32>
    %187 = arith.mulf %182, %168 : vector<8x32xf32>
    %188 = arith.mulf %180, %184 : vector<8x32xf32>
    %189 = arith.addf %187, %188 : vector<8x32xf32>
    %190 = math.tanh %189 : vector<8x32xf32>
    %191 = arith.mulf %186, %190 : vector<8x32xf32>
    %192 = vector.extract_strided_slice %147 {offsets = [16, 0], sizes = [8, 128], strides = [1, 1]} : vector<48x128xf32> to vector<8x128xf32>
    %cst_64 = arith.constant dense<0.000000e+00> : vector<8x128xf32>
    %193 = tpu.matmul %191, %143, %cst_64 {dimension_numbers = #tpu.dot_dimension_numbers<[1], [0], [0], [1], [0, 0, 1, 1], [], []>, precision = #tpu.contract_precision<fp32>} : vector<8x32xf32>, vector<32x128xf32>, vector<8x128xf32> -> vector<8x128xf32>
    %194 = arith.addf %192, %193 : vector<8x128xf32>
    %195 = arith.negf %194 : vector<8x128xf32>
    %196 = math.exp %195 : vector<8x128xf32>
    %cst_65 = arith.constant 1.000000e+00 : f32
    %197 = vector.broadcast %cst_65 : f32 to vector<8x128xf32>
    %198 = arith.addf %197, %196 : vector<8x128xf32>
    %199 = arith.divf %197, %198 : vector<8x128xf32>
    %200 = math.tanh %194 : vector<8x128xf32>
    %201 = vector.extract_strided_slice %199 {offsets = [0, 0], sizes = [8, 32], strides = [1, 1]} : vector<8x128xf32> to vector<8x32xf32>
    %c96_i32_66 = arith.constant 96 : i32
    %202 = tpu.dynamic_rotate %199 by %c96_i32_66 dim 1 : vector<8x128xf32>, i32 -> vector<8x128xf32>
    %203 = vector.extract_strided_slice %202 {offsets = [0, 0], sizes = [8, 32], strides = [1, 1]} : vector<8x128xf32> to vector<8x32xf32>
    %c64_i32_67 = arith.constant 64 : i32
    %204 = tpu.dynamic_rotate %200 by %c64_i32_67 dim 1 : vector<8x128xf32>, i32 -> vector<8x128xf32>
    %205 = vector.extract_strided_slice %204 {offsets = [0, 0], sizes = [8, 32], strides = [1, 1]} : vector<8x128xf32> to vector<8x32xf32>
    %c32_i32_68 = arith.constant 32 : i32
    %206 = tpu.dynamic_rotate %199 by %c32_i32_68 dim 1 : vector<8x128xf32>, i32 -> vector<8x128xf32>
    %207 = vector.extract_strided_slice %206 {offsets = [0, 0], sizes = [8, 32], strides = [1, 1]} : vector<8x128xf32> to vector<8x32xf32>
    %208 = arith.mulf %203, %189 : vector<8x32xf32>
    %209 = arith.mulf %201, %205 : vector<8x32xf32>
    %210 = arith.addf %208, %209 : vector<8x32xf32>
    %211 = math.tanh %210 : vector<8x32xf32>
    %212 = arith.mulf %207, %211 : vector<8x32xf32>
    %213 = vector.extract_strided_slice %147 {offsets = [24, 0], sizes = [8, 128], strides = [1, 1]} : vector<48x128xf32> to vector<8x128xf32>
    %cst_69 = arith.constant dense<0.000000e+00> : vector<8x128xf32>
    %214 = tpu.matmul %212, %143, %cst_69 {dimension_numbers = #tpu.dot_dimension_numbers<[1], [0], [0], [1], [0, 0, 1, 1], [], []>, precision = #tpu.contract_precision<fp32>} : vector<8x32xf32>, vector<32x128xf32>, vector<8x128xf32> -> vector<8x128xf32>
    %215 = arith.addf %213, %214 : vector<8x128xf32>
    %216 = arith.negf %215 : vector<8x128xf32>
    %217 = math.exp %216 : vector<8x128xf32>
    %cst_70 = arith.constant 1.000000e+00 : f32
    %218 = vector.broadcast %cst_70 : f32 to vector<8x128xf32>
    %219 = arith.addf %218, %217 : vector<8x128xf32>
    %220 = arith.divf %218, %219 : vector<8x128xf32>
    %221 = math.tanh %215 : vector<8x128xf32>
    %222 = vector.extract_strided_slice %220 {offsets = [0, 0], sizes = [8, 32], strides = [1, 1]} : vector<8x128xf32> to vector<8x32xf32>
    %c96_i32_71 = arith.constant 96 : i32
    %223 = tpu.dynamic_rotate %220 by %c96_i32_71 dim 1 : vector<8x128xf32>, i32 -> vector<8x128xf32>
    %224 = vector.extract_strided_slice %223 {offsets = [0, 0], sizes = [8, 32], strides = [1, 1]} : vector<8x128xf32> to vector<8x32xf32>
    %c64_i32_72 = arith.constant 64 : i32
    %225 = tpu.dynamic_rotate %221 by %c64_i32_72 dim 1 : vector<8x128xf32>, i32 -> vector<8x128xf32>
    %226 = vector.extract_strided_slice %225 {offsets = [0, 0], sizes = [8, 32], strides = [1, 1]} : vector<8x128xf32> to vector<8x32xf32>
    %c32_i32_73 = arith.constant 32 : i32
    %227 = tpu.dynamic_rotate %220 by %c32_i32_73 dim 1 : vector<8x128xf32>, i32 -> vector<8x128xf32>
    %228 = vector.extract_strided_slice %227 {offsets = [0, 0], sizes = [8, 32], strides = [1, 1]} : vector<8x128xf32> to vector<8x32xf32>
    %229 = arith.mulf %224, %210 : vector<8x32xf32>
    %230 = arith.mulf %222, %226 : vector<8x32xf32>
    %231 = arith.addf %229, %230 : vector<8x32xf32>
    %232 = math.tanh %231 : vector<8x32xf32>
    %233 = arith.mulf %228, %232 : vector<8x32xf32>
    %234 = vector.extract_strided_slice %147 {offsets = [32, 0], sizes = [8, 128], strides = [1, 1]} : vector<48x128xf32> to vector<8x128xf32>
    %cst_74 = arith.constant dense<0.000000e+00> : vector<8x128xf32>
    %235 = tpu.matmul %233, %143, %cst_74 {dimension_numbers = #tpu.dot_dimension_numbers<[1], [0], [0], [1], [0, 0, 1, 1], [], []>, precision = #tpu.contract_precision<fp32>} : vector<8x32xf32>, vector<32x128xf32>, vector<8x128xf32> -> vector<8x128xf32>
    %236 = arith.addf %234, %235 : vector<8x128xf32>
    %237 = arith.negf %236 : vector<8x128xf32>
    %238 = math.exp %237 : vector<8x128xf32>
    %cst_75 = arith.constant 1.000000e+00 : f32
    %239 = vector.broadcast %cst_75 : f32 to vector<8x128xf32>
    %240 = arith.addf %239, %238 : vector<8x128xf32>
    %241 = arith.divf %239, %240 : vector<8x128xf32>
    %242 = math.tanh %236 : vector<8x128xf32>
    %243 = vector.extract_strided_slice %241 {offsets = [0, 0], sizes = [8, 32], strides = [1, 1]} : vector<8x128xf32> to vector<8x32xf32>
    %c96_i32_76 = arith.constant 96 : i32
    %244 = tpu.dynamic_rotate %241 by %c96_i32_76 dim 1 : vector<8x128xf32>, i32 -> vector<8x128xf32>
    %245 = vector.extract_strided_slice %244 {offsets = [0, 0], sizes = [8, 32], strides = [1, 1]} : vector<8x128xf32> to vector<8x32xf32>
    %c64_i32_77 = arith.constant 64 : i32
    %246 = tpu.dynamic_rotate %242 by %c64_i32_77 dim 1 : vector<8x128xf32>, i32 -> vector<8x128xf32>
    %247 = vector.extract_strided_slice %246 {offsets = [0, 0], sizes = [8, 32], strides = [1, 1]} : vector<8x128xf32> to vector<8x32xf32>
    %c32_i32_78 = arith.constant 32 : i32
    %248 = tpu.dynamic_rotate %241 by %c32_i32_78 dim 1 : vector<8x128xf32>, i32 -> vector<8x128xf32>
    %249 = vector.extract_strided_slice %248 {offsets = [0, 0], sizes = [8, 32], strides = [1, 1]} : vector<8x128xf32> to vector<8x32xf32>
    %250 = arith.mulf %245, %231 : vector<8x32xf32>
    %251 = arith.mulf %243, %247 : vector<8x32xf32>
    %252 = arith.addf %250, %251 : vector<8x32xf32>
    %253 = math.tanh %252 : vector<8x32xf32>
    %254 = arith.mulf %249, %253 : vector<8x32xf32>
    %255 = vector.extract_strided_slice %147 {offsets = [40, 0], sizes = [8, 128], strides = [1, 1]} : vector<48x128xf32> to vector<8x128xf32>
    %cst_79 = arith.constant dense<0.000000e+00> : vector<8x128xf32>
    %256 = tpu.matmul %254, %143, %cst_79 {dimension_numbers = #tpu.dot_dimension_numbers<[1], [0], [0], [1], [0, 0, 1, 1], [], []>, precision = #tpu.contract_precision<fp32>} : vector<8x32xf32>, vector<32x128xf32>, vector<8x128xf32> -> vector<8x128xf32>
    %257 = arith.addf %255, %256 : vector<8x128xf32>
    %258 = arith.negf %257 : vector<8x128xf32>
    %259 = math.exp %258 : vector<8x128xf32>
    %cst_80 = arith.constant 1.000000e+00 : f32
    %260 = vector.broadcast %cst_80 : f32 to vector<8x128xf32>
    %261 = arith.addf %260, %259 : vector<8x128xf32>
    %262 = arith.divf %260, %261 : vector<8x128xf32>
    %263 = math.tanh %257 : vector<8x128xf32>
    %264 = vector.extract_strided_slice %262 {offsets = [0, 0], sizes = [8, 32], strides = [1, 1]} : vector<8x128xf32> to vector<8x32xf32>
    %c96_i32_81 = arith.constant 96 : i32
    %265 = tpu.dynamic_rotate %262 by %c96_i32_81 dim 1 : vector<8x128xf32>, i32 -> vector<8x128xf32>
    %266 = vector.extract_strided_slice %265 {offsets = [0, 0], sizes = [8, 32], strides = [1, 1]} : vector<8x128xf32> to vector<8x32xf32>
    %c64_i32_82 = arith.constant 64 : i32
    %267 = tpu.dynamic_rotate %263 by %c64_i32_82 dim 1 : vector<8x128xf32>, i32 -> vector<8x128xf32>
    %268 = vector.extract_strided_slice %267 {offsets = [0, 0], sizes = [8, 32], strides = [1, 1]} : vector<8x128xf32> to vector<8x32xf32>
    %c32_i32_83 = arith.constant 32 : i32
    %269 = tpu.dynamic_rotate %262 by %c32_i32_83 dim 1 : vector<8x128xf32>, i32 -> vector<8x128xf32>
    %270 = vector.extract_strided_slice %269 {offsets = [0, 0], sizes = [8, 32], strides = [1, 1]} : vector<8x128xf32> to vector<8x32xf32>
    %271 = arith.mulf %266, %252 : vector<8x32xf32>
    %272 = arith.mulf %264, %268 : vector<8x32xf32>
    %273 = arith.addf %271, %272 : vector<8x32xf32>
    %274 = math.tanh %273 : vector<8x32xf32>
    %275 = arith.mulf %270, %274 : vector<8x32xf32>
    %276 = vector.extract_strided_slice %275 {offsets = [2, 0], sizes = [6, 32], strides = [1, 1]} : vector<8x32xf32> to vector<6x32xf32>
    %c0_84 = arith.constant 0 : index
    %277 = memref.load %arg9[%c0_84] : memref<1xf32, #tpu.memory_space<smem>>
    %c0_85 = arith.constant 0 : index
    %c0_86 = arith.constant 0 : index
    %278 = vector.load %arg8[%c0_85, %c0_86] : memref<1x32xf32, #tpu.memory_space<vmem>>, vector<1x32xf32>
    %279 = vector.broadcast %278 : vector<1x32xf32> to vector<6x32xf32>
    %280 = arith.mulf %276, %279 : vector<6x32xf32>
    %cst_87 = arith.constant dense<0.000000e+00> : vector<6xf32>
    %281 = vector.multi_reduction <add>, %280, %cst_87 [1] : vector<6x32xf32> to vector<6xf32>
    %282 = vector.shape_cast %281 : vector<6xf32> to vector<6x1xf32>
    %283 = vector.broadcast %277 : f32 to vector<6x1xf32>
    %284 = arith.addf %282, %283 : vector<6x1xf32>
    %c0_88 = arith.constant 0 : index
    %c0_89 = arith.constant 0 : index
    %285 = vector.load %arg10[%c0_88, %c0_89] : memref<6x1xf32, #tpu.memory_space<vmem>>, vector<6x1xf32>
    tpu.vector_store %arg10[%c0_88, %c0_89], %284 {strides = array<i32>} : memref<6x1xf32, #tpu.memory_space<vmem>>, vector<6x1xf32>,
    return
  }
  func.func @transform_0(%arg0: i32) -> (i32, i32) {
    %c0_i32 = arith.constant 0 : i32
    %c0_i32_0 = arith.constant 0 : i32
    %c0_i32_1 = arith.constant 0 : i32
    return %c0_i32, %c0_i32_0 : i32, i32
  }
  func.func @transform_1(%arg0: i32) -> (i32, i32) {
    %c0_i32 = arith.constant 0 : i32
    %c0_i32_0 = arith.constant 0 : i32
    %c0_i32_1 = arith.constant 0 : i32
    return %c0_i32, %c0_i32_0 : i32, i32
  }
  func.func @transform_2(%arg0: i32) -> (i32, i32) {
    %c0_i32 = arith.constant 0 : i32
    %c0_i32_0 = arith.constant 0 : i32
    %c0_i32_1 = arith.constant 0 : i32
    return %c0_i32, %c0_i32_0 : i32, i32
  }
  func.func @transform_3(%arg0: i32) -> (i32, i32) {
    %c0_i32 = arith.constant 0 : i32
    %c0_i32_0 = arith.constant 0 : i32
    %c0_i32_1 = arith.constant 0 : i32
    return %c0_i32, %c0_i32_0 : i32, i32
  }
  func.func @transform_4(%arg0: i32) -> (i32, i32) {
    %c0_i32 = arith.constant 0 : i32
    %c0_i32_0 = arith.constant 0 : i32
    %c0_i32_1 = arith.constant 0 : i32
    return %c0_i32, %c0_i32_0 : i32, i32
  }
  func.func @transform_5(%arg0: i32) -> (i32, i32) {
    %c0_i32 = arith.constant 0 : i32
    %c0_i32_0 = arith.constant 0 : i32
    %c0_i32_1 = arith.constant 0 : i32
    return %c0_i32, %c0_i32_0 : i32, i32
  }
  func.func @transform_6(%arg0: i32) -> (i32, i32) {
    %c0_i32 = arith.constant 0 : i32
    %c0_i32_0 = arith.constant 0 : i32
    %c0_i32_1 = arith.constant 0 : i32
    return %c0_i32, %c0_i32_0 : i32, i32
  }
  func.func @transform_7(%arg0: i32) -> (i32, i32) {
    %c0_i32 = arith.constant 0 : i32
    %c0_i32_0 = arith.constant 0 : i32
    %c0_i32_1 = arith.constant 0 : i32
    return %c0_i32, %c0_i32_0 : i32, i32
  }
  func.func @transform_8(%arg0: i32) -> i32 {
    %c0_i32 = arith.constant 0 : i32
    %c0_i32_0 = arith.constant 0 : i32
    return %c0_i32 : i32
  }
  func.func @transform_9(%arg0: i32) -> (i32, i32) {
    %c0_i32 = arith.constant 0 : i32
    %c0_i32_0 = arith.constant 0 : i32
    %c0_i32_1 = arith.constant 0 : i32
    return %c0_i32, %c0_i32_0 : i32, i32
  }
}

</mosaic_0001>

<llo_original>
// kernel: tpu_custom_call.1
$region0: #{tpu_custom_call.1}
  #allocation0 [shape = 'u32[]', space=smem, size = 0x4, offset = 0x4, fixed_abs, tag = 'smem constant byte address 0x4 - core index']
  #allocation1 [shape = 'u32[144,128]{1,0:T(1,128)}', space=vmem, size = 0x12000, scoped, tag = 'internal scratch']
  #allocation2 [shape = 'f32[48,32]{1,0:T(8,128)}', space=vmem, size = 0x6000, scoped, tag = 'scratch operand']
  #allocation3 [shape = 'f32[1]{0:T(128)S(6)}', space=smem, size = 0x200, scoped, tag = 'scoped memory for tpu_custom_call.1']
  %s0 = inlined_call_operand.vmem [shape: f32[48,8], index: 0, kind: input, shape index: {}]
  %s1 = inlined_call_operand.hbm [shape: f32[8,128], index: 1, kind: input, shape index: {}]
  %s2 = inlined_call_operand.vmem [shape: f32[32,128], index: 2, kind: input, shape index: {}]
  %s3 = inlined_call_operand.vmem [shape: f32[1,128], index: 3, kind: input, shape index: {}]
  %s4 = inlined_call_operand.vmem [shape: f32[32,128], index: 4, kind: input, shape index: {}]
  %s5 = inlined_call_operand.hbm [shape: f32[32,128], index: 5, kind: input, shape index: {}]
  %s6 = inlined_call_operand.vmem [shape: f32[1,128], index: 6, kind: input, shape index: {}]
  %s7 = inlined_call_operand.vmem [shape: f32[1,32], index: 7, kind: input, shape index: {}]
  %s8 = inlined_call_operand.<no memory space> [shape: f32[1], index: 8, kind: input, shape index: {}]
  %s9 = inlined_call_operand.vmem [shape: f32[6,1], index: 9, kind: output, shape index: {}]
  %s10 = sld [smem:[#allocation0]]
  $region54: #{tpu_custom_call.1} parent=0
    _
  %s12 = ssub.s32 1, %s10
  %s13 = scalar_select 0, %s12, %s10
  %14 = sst [smem:[#allocation3]] %s8
  $region1: #{tpu_custom_call.1} parent=0
    #allocation4 [shape = 'u8[4096]{0}', space=vmem, size = 0x1000, scoped, tag = 'input window, operand 1, single buffered']
    #allocation5 [shape = 's32[1]{0}', space=sflag, size = 0x4, scoped, tag = 'scoped memory for tpu_custom_call.1']
    #allocation6 [shape = 'u8[16384]{0}', space=vmem, size = 0x4000, scoped, tag = 'input window, operand 5, single buffered']
    #allocation7 [shape = 's32[1]{0}', space=sflag, size = 0x4, scoped, tag = 'scoped memory for tpu_custom_call.1']
    %15 = vsyncpa [#allocation5], 0
    %16 = vsyncpa [#allocation7], 0
    // Predicated region
    $region2: #{tpu_custom_call.1} parent=1 // pred_check
      _
    $region3: #{tpu_custom_call.1} parent=1 // pred_check_branch
      %18 = sbr.rel (0) target = $region5
    $region4: #{tpu_custom_call.1} parent=1 // pred_region
      _
    $region5: #{tpu_custom_call.1} parent=1 // pred_fallthru
      _
    // Predicated region
    $region6: #{tpu_custom_call.1} parent=1 // pred_check
      _
    $region7: #{tpu_custom_call.1} parent=1 // pred_check_branch
      %20 = sbr.rel (0) target = $region9
    $region8: #{tpu_custom_call.1} parent=1 // pred_region
      %s22 = ssub.s32 128, 128
      %23 = vsyncadd [#allocation5], %s22
      %s25 = sshll.u32 [#allocation4], 4
      %s26 = int_to_ptr.vmem [resolvable:$true] %s25
      %28 = dma.hbm_to_vmem [thread:$0]  %s1, 128, %s26, [#allocation5]
    $region9: #{tpu_custom_call.1} parent=1 // pred_fallthru
      _
    // Predicated region
    $region10: #{tpu_custom_call.1} parent=1 // pred_check
      _
    $region11: #{tpu_custom_call.1} parent=1 // pred_check_branch
      %30 = sbr.rel (0) target = $region13
    $region12: #{tpu_custom_call.1} parent=1 // pred_region
      _
    $region13: #{tpu_custom_call.1} parent=1 // pred_fallthru
      _
    // Predicated region
    $region14: #{tpu_custom_call.1} parent=1 // pred_check
      _
    $region15: #{tpu_custom_call.1} parent=1 // pred_check_branch
      %32 = sbr.rel (0) target = $region17
    $region16: #{tpu_custom_call.1} parent=1 // pred_region
      _
    $region17: #{tpu_custom_call.1} parent=1 // pred_fallthru
      _
    // Predicated region
    $region18: #{tpu_custom_call.1} parent=1 // pred_check
      _
    $region19: #{tpu_custom_call.1} parent=1 // pred_check_branch
      %34 = sbr.rel (0) target = $region21
    $region20: #{tpu_custom_call.1} parent=1 // pred_region
      _
    $region21: #{tpu_custom_call.1} parent=1 // pred_fallthru
      _
    // Predicated region
    $region22: #{tpu_custom_call.1} parent=1 // pred_check
      _
    $region23: #{tpu_custom_call.1} parent=1 // pred_check_branch
      %36 = sbr.rel (0) target = $region25
    $region24: #{tpu_custom_call.1} parent=1 // pred_region
      %s38 = ssub.s32 512, 512
      %39 = vsyncadd [#allocation7], %s38
      %s40 = sshll.u32 [#allocation6], 4
      %s41 = int_to_ptr.vmem [resolvable:$true] %s40
      %46 = dma.hbm_to_vmem [thread:$0]  %s5, 512, %s41, [#allocation7], 128, 128, 8
    $region25: #{tpu_custom_call.1} parent=1 // pred_fallthru
      _
    // Predicated region
    $region26: #{tpu_custom_call.1} parent=1 // pred_check
      _
    $region27: #{tpu_custom_call.1} parent=1 // pred_check_branch
      %48 = sbr.rel (0) target = $region29
    $region28: #{tpu_custom_call.1} parent=1 // pred_region
      _
    $region29: #{tpu_custom_call.1} parent=1 // pred_fallthru
      _
    // Predicated region
    $region30: #{tpu_custom_call.1} parent=1 // pred_check
      _
    $region31: #{tpu_custom_call.1} parent=1 // pred_check_branch
      %50 = sbr.rel (0) target = $region33
    $region32: #{tpu_custom_call.1} parent=1 // pred_region
      _
    $region33: #{tpu_custom_call.1} parent=1 // pred_fallthru
      _
    // Predicated region
    $region34: #{tpu_custom_call.1} parent=1 // pred_check
      _
    $region35: #{tpu_custom_call.1} parent=1 // pred_check_branch
      %52 = sbr.rel (0) target = $region37
    $region36: #{tpu_custom_call.1} parent=1 // pred_region
      _
    $region37: #{tpu_custom_call.1} parent=1 // pred_fallthru
      _
    // Predicated region
    $region38: #{tpu_custom_call.1} parent=1 // pred_check
      _
    $region39: #{tpu_custom_call.1} parent=1 // pred_check_branch
      %54 = sbr.rel (0) target = $region41
    $region40: #{tpu_custom_call.1} parent=1 // pred_region
      %55 = dma.done [#allocation5], 128
    $region41: #{tpu_custom_call.1} parent=1 // pred_fallthru
      _
    // Predicated region
    $region42: #{tpu_custom_call.1} parent=1 // pred_check
      _
    $region43: #{tpu_custom_call.1} parent=1 // pred_check_branch
      %57 = sbr.rel (0) target = $region45
    $region44: #{tpu_custom_call.1} parent=1 // pred_region
      %58 = dma.done [#allocation7], 512
    $region45: #{tpu_custom_call.1} parent=1 // pred_fallthru
      _
    %v59 = vld [vmem:[%s0] sm:$0xff]
    %v60 = vld [vmem:[%s0 + $0x8] sm:$0xff]
    %v61 = vld [vmem:[%s0 + $0x10] sm:$0xff]
    %v62 = vld [vmem:[%s0 + $0x18] sm:$0xff]
    %v63 = vld [vmem:[%s0 + $0x20] sm:$0xff]
    %v64 = vld [vmem:[%s0 + $0x28] sm:$0xff]
    %v65 = vld [vmem:[#allocation4] sm:$0xff]
    %v66 = vld [vmem:[%s2] sm:$0xff]
    %v67 = vld [vmem:[%s2 + $0x8] sm:$0xff]
    %v68 = vld [vmem:[%s2 + $0x10] sm:$0xff]
    %v69 = vld [vmem:[%s2 + $0x18] sm:$0xff]
    %v70 = vld [vmem:[%s3] sm:$0x1]
    %v72 = vlaneseq
    %v73 = vshrl.u32 %v72, 7
    %v74 = vsub.s32 0, %v73
    %v75 = vrot.slane %v70, %v74
    %vm77 = vcmask 64512
    %v79 = vsel %vm77, %v59, 0
    %v82 = vsel %vm77, %v60, 0
    %v85 = vsel %vm77, %v61, 0
    %v88 = vsel %vm77, %v62, 0
    %v91 = vsel %vm77, %v63, 0
    %v94 = vsel %vm77, %v64, 0
    %96 = vmatprep.subr.mxu0 0.0
    %97 = vmatpush1.msra.mxu0 0.0
    %98 = vmatprep.subr.mxu0 0.0
    %99 = vmatpush1.msra.mxu0 0.0
    %100 = vmatprep.subr.mxu0 0.0
    %101 = vmatpush1.msra.mxu0 0.0
    %102 = vmatprep.subr.mxu0 0.0
    %103 = vmatpush1.msra.mxu0 0.0
    %104 = vmatprep.subr.mxu0 0.0
    %105 = vmatpush1.msra.mxu0 0.0
    %106 = vmatprep.subr.mxu0 0.0
    %107 = vmatpush1.msra.mxu0 0.0
    %108 = vmatprep.subr.mxu0 0.0
    %109 = vmatpush1.msra.mxu0 0.0
    %110 = vmatprep.subr.mxu0 0.0
    %111 = vmatpush1.msra.mxu0 0.0
    %112 = vmatprep.subr.mxu0 0.0
    %113 = vmatpush1.msra.mxu0 0.0
    %114 = vmatprep.subr.mxu0 0.0
    %115 = vmatpush1.msra.mxu0 0.0
    %116 = vmatprep.subr.mxu0 0.0
    %117 = vmatpush1.msra.mxu0 0.0
    %118 = vmatprep.subr.mxu0 0.0
    %119 = vmatpush1.msra.mxu0 0.0
    %120 = vmatprep.subr.mxu0 0.0
    %121 = vmatpush1.msra.mxu0 0.0
    %122 = vmatprep.subr.mxu0 0.0
    %123 = vmatpush1.msra.mxu0 0.0
    %124 = vmatprep.subr.mxu0 0.0
    %125 = vmatpush1.msra.mxu0 0.0
    %126 = vmatprep.subr.mxu0 0.0
    %v127 = vand.u32 %v65, 4294901760
    %128 = vmatpush1.msra.mxu0 %v127
    %129 = vmatprep.subr.mxu0 0.0
    %130 = vmatpush2.msra.mxu0 0.0
    %131 = vmatprep.subr.mxu0 0.0
    %132 = vmatpush2.msra.mxu0 0.0
    %133 = vmatprep.subr.mxu0 0.0
    %134 = vmatpush2.msra.mxu0 0.0
    %135 = vmatprep.subr.mxu0 0.0
    %136 = vmatpush2.msra.mxu0 0.0
    %137 = vmatprep.subr.mxu0 0.0
    %138 = vmatpush2.msra.mxu0 0.0
    %139 = vmatprep.subr.mxu0 0.0
    %140 = vmatpush2.msra.mxu0 0.0
    %141 = vmatprep.subr.mxu0 0.0
    %142 = vmatpush2.msra.mxu0 0.0
    %143 = vmatprep.subr.mxu0 0.0
    %144 = vmatpush2.msra.mxu0 0.0
    %145 = vmatprep.subr.mxu0 0.0
    %146 = vmatpush2.msra.mxu0 0.0
    %147 = vmatprep.subr.mxu0 0.0
    %148 = vmatpush2.msra.mxu0 0.0
    %149 = vmatprep.subr.mxu0 0.0
    %150 = vmatpush2.msra.mxu0 0.0
    %151 = vmatprep.subr.mxu0 0.0
    %152 = vmatpush2.msra.mxu0 0.0
    %153 = vmatprep.subr.mxu0 0.0
    %154 = vmatpush2.msra.mxu0 0.0
    %155 = vmatprep.subr.mxu0 0.0
    %156 = vmatpush2.msra.mxu0 0.0
    %157 = vmatprep.subr.mxu0 0.0
    %158 = vmatpush2.msra.mxu0 0.0
    %159 = vmatprep.subr.mxu0 0.0
    %160 = vmatpush2.msra.mxu0 0.0
    %161 = vmatprep.mubr.f32.mxu0 0.0
    %v162 = vand.u32 %v79, 4294901760
    %v163 = vsub.f32 %v79, %v162
    %v164 = vand.u32 %v163, 4294901760
    %v165 = vsub.f32 %v163, %v164
    %v166 = vand.u32 %v165, 4294901760
    %167 = vmatmul.mubr.f32.gmra.mxu0 %v166
    %v168 = vpop.f32.mrf.mxu0
    %v169 = vadd.f32 %v75, %v168
    %v170 = vpop.f32.mrf.mxu0
    %171 = vmatprep.mubr.f32.mxu0 0.0
    %v172 = vand.u32 %v82, 4294901760
    %v173 = vsub.f32 %v82, %v172
    %v174 = vand.u32 %v173, 4294901760
    %v175 = vsub.f32 %v173, %v174
    %v176 = vand.u32 %v175, 4294901760
    %177 = vmatmul.mubr.f32.gmra.mxu0 %v176
    %v178 = vpop.f32.mrf.mxu0
    %v179 = vadd.f32 %v75, %v178
    %v180 = vpop.f32.mrf.mxu0
    %181 = vmatprep.mubr.f32.mxu0 0.0
    %v182 = vand.u32 %v85, 4294901760
    %v183 = vsub.f32 %v85, %v182
    %v184 = vand.u32 %v183, 4294901760
    %v185 = vsub.f32 %v183, %v184
    %v186 = vand.u32 %v185, 4294901760
    %187 = vmatmul.mubr.f32.gmra.mxu0 %v186
    %v188 = vpop.f32.mrf.mxu0
    %v189 = vadd.f32 %v75, %v188
    %v190 = vpop.f32.mrf.mxu0
    %191 = vmatprep.mubr.f32.mxu0 0.0
    %v192 = vand.u32 %v88, 4294901760
    %v193 = vsub.f32 %v88, %v192
    %v194 = vand.u32 %v193, 4294901760
    %v195 = vsub.f32 %v193, %v194
    %v196 = vand.u32 %v195, 4294901760
    %197 = vmatmul.mubr.f32.gmra.mxu0 %v196
    %v198 = vpop.f32.mrf.mxu0
    %v199 = vadd.f32 %v75, %v198
    %v200 = vpop.f32.mrf.mxu0
    %201 = vmatprep.mubr.f32.mxu0 0.0
    %v202 = vand.u32 %v91, 4294901760
    %v203 = vsub.f32 %v91, %v202
    %v204 = vand.u32 %v203, 4294901760
    %v205 = vsub.f32 %v203, %v204
    %v206 = vand.u32 %v205, 4294901760
    %207 = vmatmul.mubr.f32.gmra.mxu0 %v206
    %v208 = vpop.f32.mrf.mxu0
    %v209 = vadd.f32 %v75, %v208
    %v210 = vpop.f32.mrf.mxu0
    %211 = vmatprep.mubr.f32.mxu0 0.0
    %v212 = vand.u32 %v94, 4294901760
    %v213 = vsub.f32 %v94, %v212
    %v214 = vand.u32 %v213, 4294901760
    %v215 = vsub.f32 %v213, %v214
    %v216 = vand.u32 %v215, 4294901760
    %217 = vmatmul.mubr.f32.gmra.mxu0 %v216
    %v218 = vpop.f32.mrf.mxu0
    %v219 = vadd.f32 %v75, %v218
    %v220 = vpop.f32.mrf.mxu0
    %221 = vdwg.mxu0
    %222 = vmatprep.subr.mxu0 0.0
    %223 = vmatpush1.msra.mxu0 0.0
    %224 = vmatprep.subr.mxu0 0.0
    %225 = vmatpush1.msra.mxu0 0.0
    %226 = vmatprep.subr.mxu0 0.0
    %227 = vmatpush1.msra.mxu0 0.0
    %228 = vmatprep.subr.mxu0 0.0
    %229 = vmatpush1.msra.mxu0 0.0
    %230 = vmatprep.subr.mxu0 0.0
    %231 = vmatpush1.msra.mxu0 0.0
    %232 = vmatprep.subr.mxu0 0.0
    %233 = vmatpush1.msra.mxu0 0.0
    %234 = vmatprep.subr.mxu0 0.0
    %235 = vmatpush1.msra.mxu0 0.0
    %236 = vmatprep.subr.mxu0 0.0
    %237 = vmatpush1.msra.mxu0 0.0
    %238 = vmatprep.subr.mxu0 0.0
    %239 = vmatpush1.msra.mxu0 0.0
    %240 = vmatprep.subr.mxu0 0.0
    %241 = vmatpush1.msra.mxu0 0.0
    %242 = vmatprep.subr.mxu0 0.0
    %243 = vmatpush1.msra.mxu0 0.0
    %244 = vmatprep.subr.mxu0 0.0
    %245 = vmatpush1.msra.mxu0 0.0
    %246 = vmatprep.subr.mxu0 0.0
    %247 = vmatpush1.msra.mxu0 0.0
    %248 = vmatprep.subr.mxu0 0.0
    %249 = vmatpush1.msra.mxu0 0.0
    %250 = vmatprep.subr.mxu0 0.0
    %251 = vmatpush1.msra.mxu0 0.0
    %252 = vmatprep.subr.mxu0 0.0
    %v253 = vand.u32 %v65, 4294901760
    %v254 = vsub.f32 %v65, %v253
    %v255 = vand.u32 %v254, 4294901760
    %v256 = vsub.f32 %v254, %v255
    %v257 = vand.u32 %v256, 4294901760
    %258 = vmatpush1.msra.mxu0 %v257
    %259 = vmatprep.subr.mxu0 0.0
    %260 = vmatpush2.msra.mxu0 0.0
    %261 = vmatprep.subr.mxu0 0.0
    %262 = vmatpush2.msra.mxu0 0.0
    %263 = vmatprep.subr.mxu0 0.0
    %264 = vmatpush2.msra.mxu0 0.0
    %265 = vmatprep.subr.mxu0 0.0
    %266 = vmatpush2.msra.mxu0 0.0
    %267 = vmatprep.subr.mxu0 0.0
    %268 = vmatpush2.msra.mxu0 0.0
    %269 = vmatprep.subr.mxu0 0.0
    %270 = vmatpush2.msra.mxu0 0.0
    %271 = vmatprep.subr.mxu0 0.0
    %272 = vmatpush2.msra.mxu0 0.0
    %273 = vmatprep.subr.mxu0 0.0
    %274 = vmatpush2.msra.mxu0 0.0
    %275 = vmatprep.subr.mxu0 0.0
    %276 = vmatpush2.msra.mxu0 0.0
    %277 = vmatprep.subr.mxu0 0.0
    %278 = vmatpush2.msra.mxu0 0.0
    %279 = vmatprep.subr.mxu0 0.0
    %280 = vmatpush2.msra.mxu0 0.0
    %281 = vmatprep.subr.mxu0 0.0
    %282 = vmatpush2.msra.mxu0 0.0
    %283 = vmatprep.subr.mxu0 0.0
    %284 = vmatpush2.msra.mxu0 0.0
    %285 = vmatprep.subr.mxu0 0.0
    %286 = vmatpush2.msra.mxu0 0.0
    %287 = vmatprep.subr.mxu0 0.0
    %288 = vmatpush2.msra.mxu0 0.0
    %289 = vmatprep.subr.mxu0 0.0
    %290 = vmatpush2.msra.mxu0 0.0
    %291 = vmatprep.mubr.f32.mxu0 0.0
    %v292 = vand.u32 %v79, 4294901760
    %293 = vmatmul.mubr.f32.gmra.mxu0 %v292
    %v294 = vpop.f32.mrf.mxu0
    %v295 = vadd.f32 %v169, %v294
    %v296 = vpop.f32.mrf.mxu0
    %297 = vmatprep.mubr.f32.mxu0 0.0
    %v298 = vand.u32 %v82, 4294901760
    %299 = vmatmul.mubr.f32.gmra.mxu0 %v298
    %v300 = vpop.f32.mrf.mxu0
    %v301 = vadd.f32 %v179, %v300
    %v302 = vpop.f32.mrf.mxu0
    %303 = vmatprep.mubr.f32.mxu0 0.0
    %v304 = vand.u32 %v85, 4294901760
    %305 = vmatmul.mubr.f32.gmra.mxu0 %v304
    %v306 = vpop.f32.mrf.mxu0
    %v307 = vadd.f32 %v189, %v306
    %v308 = vpop.f32.mrf.mxu0
    %309 = vmatprep.mubr.f32.mxu0 0.0
    %v310 = vand.u32 %v88, 4294901760
    %311 = vmatmul.mubr.f32.gmra.mxu0 %v310
    %v312 = vpop.f32.mrf.mxu0
    %v313 = vadd.f32 %v199, %v312
    %v314 = vpop.f32.mrf.mxu0
    %315 = vmatprep.mubr.f32.mxu0 0.0
    %v316 = vand.u32 %v91, 4294901760
    %317 = vmatmul.mubr.f32.gmra.mxu0 %v316
    %v318 = vpop.f32.mrf.mxu0
    %v319 = vadd.f32 %v209, %v318
    %v320 = vpop.f32.mrf.mxu0
    %321 = vmatprep.mubr.f32.mxu0 0.0
    %v322 = vand.u32 %v94, 4294901760
    %323 = vmatmul.mubr.f32.gmra.mxu0 %v322
    %v324 = vpop.f32.mrf.mxu0
    %v325 = vadd.f32 %v219, %v324
    %v326 = vpop.f32.mrf.mxu0
    %327 = vdwg.mxu0
    %328 = vmatprep.subr.mxu0 0.0
    %329 = vmatpush1.msra.mxu0 0.0
    %330 = vmatprep.subr.mxu0 0.0
    %331 = vmatpush1.msra.mxu0 0.0
    %332 = vmatprep.subr.mxu0 0.0
    %333 = vmatpush1.msra.mxu0 0.0
    %334 = vmatprep.subr.mxu0 0.0
    %335 = vmatpush1.msra.mxu0 0.0
    %336 = vmatprep.subr.mxu0 0.0
    %337 = vmatpush1.msra.mxu0 0.0
    %338 = vmatprep.subr.mxu0 0.0
    %339 = vmatpush1.msra.mxu0 0.0
    %340 = vmatprep.subr.mxu0 0.0
    %341 = vmatpush1.msra.mxu0 0.0
    %342 = vmatprep.subr.mxu0 0.0
    %343 = vmatpush1.msra.mxu0 0.0
    %344 = vmatprep.subr.mxu0 0.0
    %345 = vmatpush1.msra.mxu0 0.0
    %346 = vmatprep.subr.mxu0 0.0
    %347 = vmatpush1.msra.mxu0 0.0
    %348 = vmatprep.subr.mxu0 0.0
    %349 = vmatpush1.msra.mxu0 0.0
    %350 = vmatprep.subr.mxu0 0.0
    %351 = vmatpush1.msra.mxu0 0.0
    %352 = vmatprep.subr.mxu0 0.0
    %353 = vmatpush1.msra.mxu0 0.0
    %354 = vmatprep.subr.mxu0 0.0
    %355 = vmatpush1.msra.mxu0 0.0
    %356 = vmatprep.subr.mxu0 0.0
    %357 = vmatpush1.msra.mxu0 0.0
    %358 = vmatprep.subr.mxu0 0.0
    %v359 = vand.u32 %v65, 4294901760
    %v360 = vsub.f32 %v65, %v359
    %361 = vmatpush1.msra.mxu0 %v360
    %362 = vmatprep.subr.mxu0 0.0
    %363 = vmatpush2.msra.mxu0 0.0
    %364 = vmatprep.subr.mxu0 0.0
    %365 = vmatpush2.msra.mxu0 0.0
    %366 = vmatprep.subr.mxu0 0.0
    %367 = vmatpush2.msra.mxu0 0.0
    %368 = vmatprep.subr.mxu0 0.0
    %369 = vmatpush2.msra.mxu0 0.0
    %370 = vmatprep.subr.mxu0 0.0
    %371 = vmatpush2.msra.mxu0 0.0
    %372 = vmatprep.subr.mxu0 0.0
    %373 = vmatpush2.msra.mxu0 0.0
    %374 = vmatprep.subr.mxu0 0.0
    %375 = vmatpush2.msra.mxu0 0.0
    %376 = vmatprep.subr.mxu0 0.0
    %377 = vmatpush2.msra.mxu0 0.0
    %378 = vmatprep.subr.mxu0 0.0
    %379 = vmatpush2.msra.mxu0 0.0
    %380 = vmatprep.subr.mxu0 0.0
    %381 = vmatpush2.msra.mxu0 0.0
    %382 = vmatprep.subr.mxu0 0.0
    %383 = vmatpush2.msra.mxu0 0.0
    %384 = vmatprep.subr.mxu0 0.0
    %385 = vmatpush2.msra.mxu0 0.0
    %386 = vmatprep.subr.mxu0 0.0
    %387 = vmatpush2.msra.mxu0 0.0
    %388 = vmatprep.subr.mxu0 0.0
    %389 = vmatpush2.msra.mxu0 0.0
    %390 = vmatprep.subr.mxu0 0.0
    %391 = vmatpush2.msra.mxu0 0.0
    %392 = vmatprep.subr.mxu0 0.0
    %393 = vmatpush2.msra.mxu0 0.0
    %394 = vmatprep.mubr.f32.mxu0 0.0
    %v395 = vand.u32 %v79, 4294901760
    %v396 = vsub.f32 %v79, %v395
    %397 = vmatmul.mubr.f32.gmra.mxu0 %v396
    %v398 = vpop.f32.mrf.mxu0
    %v399 = vadd.f32 %v295, %v398
    %v400 = vpop.f32.mrf.mxu0
    %401 = vmatprep.mubr.f32.mxu0 0.0
    %v402 = vand.u32 %v82, 4294901760
    %v403 = vsub.f32 %v82, %v402
    %404 = vmatmul.mubr.f32.gmra.mxu0 %v403
    %v405 = vpop.f32.mrf.mxu0
    %v406 = vadd.f32 %v301, %v405
    %v407 = vpop.f32.mrf.mxu0
    %408 = vmatprep.mubr.f32.mxu0 0.0
    %v409 = vand.u32 %v85, 4294901760
    %v410 = vsub.f32 %v85, %v409
    %411 = vmatmul.mubr.f32.gmra.mxu0 %v410
    %v412 = vpop.f32.mrf.mxu0
    %v413 = vadd.f32 %v307, %v412
    %v414 = vpop.f32.mrf.mxu0
    %415 = vmatprep.mubr.f32.mxu0 0.0
    %v416 = vand.u32 %v88, 4294901760
    %v417 = vsub.f32 %v88, %v416
    %418 = vmatmul.mubr.f32.gmra.mxu0 %v417
    %v419 = vpop.f32.mrf.mxu0
    %v420 = vadd.f32 %v313, %v419
    %v421 = vpop.f32.mrf.mxu0
    %422 = vmatprep.mubr.f32.mxu0 0.0
    %v423 = vand.u32 %v91, 4294901760
    %v424 = vsub.f32 %v91, %v423
    %425 = vmatmul.mubr.f32.gmra.mxu0 %v424
    %v426 = vpop.f32.mrf.mxu0
    %v427 = vadd.f32 %v319, %v426
    %v428 = vpop.f32.mrf.mxu0
    %429 = vmatprep.mubr.f32.mxu0 0.0
    %v430 = vand.u32 %v94, 4294901760
    %v431 = vsub.f32 %v94, %v430
    %432 = vmatmul.mubr.f32.gmra.mxu0 %v431
    %v433 = vpop.f32.mrf.mxu0
    %v434 = vadd.f32 %v325, %v433
    %v435 = vpop.f32.mrf.mxu0
    %436 = vdwg.mxu0
    %437 = vmatprep.subr.mxu0 0.0
    %438 = vmatpush1.msra.mxu0 0.0
    %439 = vmatprep.subr.mxu0 0.0
    %440 = vmatpush1.msra.mxu0 0.0
    %441 = vmatprep.subr.mxu0 0.0
    %442 = vmatpush1.msra.mxu0 0.0
    %443 = vmatprep.subr.mxu0 0.0
    %444 = vmatpush1.msra.mxu0 0.0
    %445 = vmatprep.subr.mxu0 0.0
    %446 = vmatpush1.msra.mxu0 0.0
    %447 = vmatprep.subr.mxu0 0.0
    %448 = vmatpush1.msra.mxu0 0.0
    %449 = vmatprep.subr.mxu0 0.0
    %450 = vmatpush1.msra.mxu0 0.0
    %451 = vmatprep.subr.mxu0 0.0
    %452 = vmatpush1.msra.mxu0 0.0
    %453 = vmatprep.subr.mxu0 0.0
    %454 = vmatpush1.msra.mxu0 0.0
    %455 = vmatprep.subr.mxu0 0.0
    %456 = vmatpush1.msra.mxu0 0.0
    %457 = vmatprep.subr.mxu0 0.0
    %458 = vmatpush1.msra.mxu0 0.0
    %459 = vmatprep.subr.mxu0 0.0
    %460 = vmatpush1.msra.mxu0 0.0
    %461 = vmatprep.subr.mxu0 0.0
    %462 = vmatpush1.msra.mxu0 0.0
    %463 = vmatprep.subr.mxu0 0.0
    %464 = vmatpush1.msra.mxu0 0.0
    %465 = vmatprep.subr.mxu0 0.0
    %466 = vmatpush1.msra.mxu0 0.0
    %467 = vmatprep.subr.mxu0 0.0
    %v468 = vand.u32 %v65, 4294901760
    %469 = vmatpush1.msra.mxu0 %v468
    %470 = vmatprep.subr.mxu0 0.0
    %471 = vmatpush2.msra.mxu0 0.0
    %472 = vmatprep.subr.mxu0 0.0
    %473 = vmatpush2.msra.mxu0 0.0
    %474 = vmatprep.subr.mxu0 0.0
    %475 = vmatpush2.msra.mxu0 0.0
    %476 = vmatprep.subr.mxu0 0.0
    %477 = vmatpush2.msra.mxu0 0.0
    %478 = vmatprep.subr.mxu0 0.0
    %479 = vmatpush2.msra.mxu0 0.0
    %480 = vmatprep.subr.mxu0 0.0
    %481 = vmatpush2.msra.mxu0 0.0
    %482 = vmatprep.subr.mxu0 0.0
    %483 = vmatpush2.msra.mxu0 0.0
    %484 = vmatprep.subr.mxu0 0.0
    %485 = vmatpush2.msra.mxu0 0.0
    %486 = vmatprep.subr.mxu0 0.0
    %487 = vmatpush2.msra.mxu0 0.0
    %488 = vmatprep.subr.mxu0 0.0
    %489 = vmatpush2.msra.mxu0 0.0
    %490 = vmatprep.subr.mxu0 0.0
    %491 = vmatpush2.msra.mxu0 0.0
    %492 = vmatprep.subr.mxu0 0.0
    %493 = vmatpush2.msra.mxu0 0.0
    %494 = vmatprep.subr.mxu0 0.0
    %495 = vmatpush2.msra.mxu0 0.0
    %496 = vmatprep.subr.mxu0 0.0
    %497 = vmatpush2.msra.mxu0 0.0
    %498 = vmatprep.subr.mxu0 0.0
    %499 = vmatpush2.msra.mxu0 0.0
    %500 = vmatprep.subr.mxu0 0.0
    %501 = vmatpush2.msra.mxu0 0.0
    %502 = vmatprep.mubr.f32.mxu0 0.0
    %v503 = vand.u32 %v79, 4294901760
    %v504 = vsub.f32 %v79, %v503
    %v505 = vand.u32 %v504, 4294901760
    %506 = vmatmul.mubr.f32.gmra.mxu0 %v505
    %v507 = vpop.f32.mrf.mxu0
    %v508 = vadd.f32 %v399, %v507
    %v509 = vpop.f32.mrf.mxu0
    %510 = vmatprep.mubr.f32.mxu0 0.0
    %v511 = vand.u32 %v82, 4294901760
    %v512 = vsub.f32 %v82, %v511
    %v513 = vand.u32 %v512, 4294901760
    %514 = vmatmul.mubr.f32.gmra.mxu0 %v513
    %v515 = vpop.f32.mrf.mxu0
    %v516 = vadd.f32 %v406, %v515
    %v517 = vpop.f32.mrf.mxu0
    %518 = vmatprep.mubr.f32.mxu0 0.0
    %v519 = vand.u32 %v85, 4294901760
    %v520 = vsub.f32 %v85, %v519
    %v521 = vand.u32 %v520, 4294901760
    %522 = vmatmul.mubr.f32.gmra.mxu0 %v521
    %v523 = vpop.f32.mrf.mxu0
    %v524 = vadd.f32 %v413, %v523
    %v525 = vpop.f32.mrf.mxu0
    %526 = vmatprep.mubr.f32.mxu0 0.0
    %v527 = vand.u32 %v88, 4294901760
    %v528 = vsub.f32 %v88, %v527
    %v529 = vand.u32 %v528, 4294901760
    %530 = vmatmul.mubr.f32.gmra.mxu0 %v529
    %v531 = vpop.f32.mrf.mxu0
    %v532 = vadd.f32 %v420, %v531
    %v533 = vpop.f32.mrf.mxu0
    %534 = vmatprep.mubr.f32.mxu0 0.0
    %v535 = vand.u32 %v91, 4294901760
    %v536 = vsub.f32 %v91, %v535
    %v537 = vand.u32 %v536, 4294901760
    %538 = vmatmul.mubr.f32.gmra.mxu0 %v537
    %v539 = vpop.f32.mrf.mxu0
    %v540 = vadd.f32 %v427, %v539
    %v541 = vpop.f32.mrf.mxu0
    %542 = vmatprep.mubr.f32.mxu0 0.0
    %v543 = vand.u32 %v94, 4294901760
    %v544 = vsub.f32 %v94, %v543
    %v545 = vand.u32 %v544, 4294901760
    %546 = vmatmul.mubr.f32.gmra.mxu0 %v545
    %v547 = vpop.f32.mrf.mxu0
    %v548 = vadd.f32 %v434, %v547
    %v549 = vpop.f32.mrf.mxu0
    %550 = vdwg.mxu0
    %551 = vmatprep.subr.mxu0 0.0
    %552 = vmatpush1.msra.mxu0 0.0
    %553 = vmatprep.subr.mxu0 0.0
    %554 = vmatpush1.msra.mxu0 0.0
    %555 = vmatprep.subr.mxu0 0.0
    %556 = vmatpush1.msra.mxu0 0.0
    %557 = vmatprep.subr.mxu0 0.0
    %558 = vmatpush1.msra.mxu0 0.0
    %559 = vmatprep.subr.mxu0 0.0
    %560 = vmatpush1.msra.mxu0 0.0
    %561 = vmatprep.subr.mxu0 0.0
    %562 = vmatpush1.msra.mxu0 0.0
    %563 = vmatprep.subr.mxu0 0.0
    %564 = vmatpush1.msra.mxu0 0.0
    %565 = vmatprep.subr.mxu0 0.0
    %566 = vmatpush1.msra.mxu0 0.0
    %567 = vmatprep.subr.mxu0 0.0
    %568 = vmatpush1.msra.mxu0 0.0
    %569 = vmatprep.subr.mxu0 0.0
    %570 = vmatpush1.msra.mxu0 0.0
    %571 = vmatprep.subr.mxu0 0.0
    %572 = vmatpush1.msra.mxu0 0.0
    %573 = vmatprep.subr.mxu0 0.0
    %574 = vmatpush1.msra.mxu0 0.0
    %575 = vmatprep.subr.mxu0 0.0
    %576 = vmatpush1.msra.mxu0 0.0
    %577 = vmatprep.subr.mxu0 0.0
    %578 = vmatpush1.msra.mxu0 0.0
    %579 = vmatprep.subr.mxu0 0.0
    %580 = vmatpush1.msra.mxu0 0.0
    %581 = vmatprep.subr.mxu0 0.0
    %v582 = vand.u32 %v65, 4294901760
    %v583 = vsub.f32 %v65, %v582
    %v584 = vand.u32 %v583, 4294901760
    %585 = vmatpush1.msra.mxu0 %v584
    %586 = vmatprep.subr.mxu0 0.0
    %587 = vmatpush2.msra.mxu0 0.0
    %588 = vmatprep.subr.mxu0 0.0
    %589 = vmatpush2.msra.mxu0 0.0
    %590 = vmatprep.subr.mxu0 0.0
    %591 = vmatpush2.msra.mxu0 0.0
    %592 = vmatprep.subr.mxu0 0.0
    %593 = vmatpush2.msra.mxu0 0.0
    %594 = vmatprep.subr.mxu0 0.0
    %595 = vmatpush2.msra.mxu0 0.0
    %596 = vmatprep.subr.mxu0 0.0
    %597 = vmatpush2.msra.mxu0 0.0
    %598 = vmatprep.subr.mxu0 0.0
    %599 = vmatpush2.msra.mxu0 0.0
    %600 = vmatprep.subr.mxu0 0.0
    %601 = vmatpush2.msra.mxu0 0.0
    %602 = vmatprep.subr.mxu0 0.0
    %603 = vmatpush2.msra.mxu0 0.0
    %604 = vmatprep.subr.mxu0 0.0
    %605 = vmatpush2.msra.mxu0 0.0
    %606 = vmatprep.subr.mxu0 0.0
    %607 = vmatpush2.msra.mxu0 0.0
    %608 = vmatprep.subr.mxu0 0.0
    %609 = vmatpush2.msra.mxu0 0.0
    %610 = vmatprep.subr.mxu0 0.0
    %611 = vmatpush2.msra.mxu0 0.0
    %612 = vmatprep.subr.mxu0 0.0
    %613 = vmatpush2.msra.mxu0 0.0
    %614 = vmatprep.subr.mxu0 0.0
    %615 = vmatpush2.msra.mxu0 0.0
    %616 = vmatprep.subr.mxu0 0.0
    %617 = vmatpush2.msra.mxu0 0.0
    %618 = vmatprep.mubr.f32.mxu0 0.0
    %v619 = vand.u32 %v79, 4294901760
    %620 = vmatmul.mubr.f32.gmra.mxu0 %v619
    %v621 = vpop.f32.mrf.mxu0
    %v622 = vadd.f32 %v508, %v621
    %v623 = vpop.f32.mrf.mxu0
    %624 = vmatprep.mubr.f32.mxu0 0.0
    %v625 = vand.u32 %v82, 4294901760
    %626 = vmatmul.mubr.f32.gmra.mxu0 %v625
    %v627 = vpop.f32.mrf.mxu0
    %v628 = vadd.f32 %v516, %v627
    %v629 = vpop.f32.mrf.mxu0
    %630 = vmatprep.mubr.f32.mxu0 0.0
    %v631 = vand.u32 %v85, 4294901760
    %632 = vmatmul.mubr.f32.gmra.mxu0 %v631
    %v633 = vpop.f32.mrf.mxu0
    %v634 = vadd.f32 %v524, %v633
    %v635 = vpop.f32.mrf.mxu0
    %636 = vmatprep.mubr.f32.mxu0 0.0
    %v637 = vand.u32 %v88, 4294901760
    %638 = vmatmul.mubr.f32.gmra.mxu0 %v637
    %v639 = vpop.f32.mrf.mxu0
    %v640 = vadd.f32 %v532, %v639
    %v641 = vpop.f32.mrf.mxu0
    %642 = vmatprep.mubr.f32.mxu0 0.0
    %v643 = vand.u32 %v91, 4294901760
    %644 = vmatmul.mubr.f32.gmra.mxu0 %v643
    %v645 = vpop.f32.mrf.mxu0
    %v646 = vadd.f32 %v540, %v645
    %v647 = vpop.f32.mrf.mxu0
    %648 = vmatprep.mubr.f32.mxu0 0.0
    %v649 = vand.u32 %v94, 4294901760
    %650 = vmatmul.mubr.f32.gmra.mxu0 %v649
    %v651 = vpop.f32.mrf.mxu0
    %v652 = vadd.f32 %v548, %v651
    %v653 = vpop.f32.mrf.mxu0
    %654 = vdwg.mxu0
    %655 = vmatprep.subr.mxu0 0.0
    %656 = vmatpush1.msra.mxu0 0.0
    %657 = vmatprep.subr.mxu0 0.0
    %658 = vmatpush1.msra.mxu0 0.0
    %659 = vmatprep.subr.mxu0 0.0
    %660 = vmatpush1.msra.mxu0 0.0
    %661 = vmatprep.subr.mxu0 0.0
    %662 = vmatpush1.msra.mxu0 0.0
    %663 = vmatprep.subr.mxu0 0.0
    %664 = vmatpush1.msra.mxu0 0.0
    %665 = vmatprep.subr.mxu0 0.0
    %666 = vmatpush1.msra.mxu0 0.0
    %667 = vmatprep.subr.mxu0 0.0
    %668 = vmatpush1.msra.mxu0 0.0
    %669 = vmatprep.subr.mxu0 0.0
    %670 = vmatpush1.msra.mxu0 0.0
    %671 = vmatprep.subr.mxu0 0.0
    %672 = vmatpush1.msra.mxu0 0.0
    %673 = vmatprep.subr.mxu0 0.0
    %674 = vmatpush1.msra.mxu0 0.0
    %675 = vmatprep.subr.mxu0 0.0
    %676 = vmatpush1.msra.mxu0 0.0
    %677 = vmatprep.subr.mxu0 0.0
    %678 = vmatpush1.msra.mxu0 0.0
    %679 = vmatprep.subr.mxu0 0.0
    %680 = vmatpush1.msra.mxu0 0.0
    %681 = vmatprep.subr.mxu0 0.0
    %682 = vmatpush1.msra.mxu0 0.0
    %683 = vmatprep.subr.mxu0 0.0
    %684 = vmatpush1.msra.mxu0 0.0
    %685 = vmatprep.subr.mxu0 0.0
    %v686 = vand.u32 %v65, 4294901760
    %687 = vmatpush1.msra.mxu0 %v686
    %688 = vmatprep.subr.mxu0 0.0
    %689 = vmatpush2.msra.mxu0 0.0
    %690 = vmatprep.subr.mxu0 0.0
    %691 = vmatpush2.msra.mxu0 0.0
    %692 = vmatprep.subr.mxu0 0.0
    %693 = vmatpush2.msra.mxu0 0.0
    %694 = vmatprep.subr.mxu0 0.0
    %695 = vmatpush2.msra.mxu0 0.0
    %696 = vmatprep.subr.mxu0 0.0
    %697 = vmatpush2.msra.mxu0 0.0
    %698 = vmatprep.subr.mxu0 0.0
    %699 = vmatpush2.msra.mxu0 0.0
    %700 = vmatprep.subr.mxu0 0.0
    %701 = vmatpush2.msra.mxu0 0.0
    %702 = vmatprep.subr.mxu0 0.0
    %703 = vmatpush2.msra.mxu0 0.0
    %704 = vmatprep.subr.mxu0 0.0
    %705 = vmatpush2.msra.mxu0 0.0
    %706 = vmatprep.subr.mxu0 0.0
    %707 = vmatpush2.msra.mxu0 0.0
    %708 = vmatprep.subr.mxu0 0.0
    %709 = vmatpush2.msra.mxu0 0.0
    %710 = vmatprep.subr.mxu0 0.0
    %711 = vmatpush2.msra.mxu0 0.0
    %712 = vmatprep.subr.mxu0 0.0
    %713 = vmatpush2.msra.mxu0 0.0
    %714 = vmatprep.subr.mxu0 0.0
    %715 = vmatpush2.msra.mxu0 0.0
    %716 = vmatprep.subr.mxu0 0.0
    %717 = vmatpush2.msra.mxu0 0.0
    %718 = vmatprep.subr.mxu0 0.0
    %719 = vmatpush2.msra.mxu0 0.0
    %720 = vmatprep.mubr.f32.mxu0 0.0
    %v721 = vand.u32 %v79, 4294901760
    %722 = vmatmul.mubr.f32.gmra.mxu0 %v721
    %v723 = vpop.f32.mrf.mxu0
    %v724 = vadd.f32 %v622, %v723
    %v725 = vpop.f32.mrf.mxu0
    %726 = vmatprep.mubr.f32.mxu0 0.0
    %v727 = vand.u32 %v82, 4294901760
    %728 = vmatmul.mubr.f32.gmra.mxu0 %v727
    %v729 = vpop.f32.mrf.mxu0
    %v730 = vadd.f32 %v628, %v729
    %v731 = vpop.f32.mrf.mxu0
    %732 = vmatprep.mubr.f32.mxu0 0.0
    %v733 = vand.u32 %v85, 4294901760
    %734 = vmatmul.mubr.f32.gmra.mxu0 %v733
    %v735 = vpop.f32.mrf.mxu0
    %v736 = vadd.f32 %v634, %v735
    %v737 = vpop.f32.mrf.mxu0
    %738 = vmatprep.mubr.f32.mxu0 0.0
    %v739 = vand.u32 %v88, 4294901760
    %740 = vmatmul.mubr.f32.gmra.mxu0 %v739
    %v741 = vpop.f32.mrf.mxu0
    %v742 = vadd.f32 %v640, %v741
    %v743 = vpop.f32.mrf.mxu0
    %744 = vmatprep.mubr.f32.mxu0 0.0
    %v745 = vand.u32 %v91, 4294901760
    %746 = vmatmul.mubr.f32.gmra.mxu0 %v745
    %v747 = vpop.f32.mrf.mxu0
    %v748 = vadd.f32 %v646, %v747
    %v749 = vpop.f32.mrf.mxu0
    %750 = vmatprep.mubr.f32.mxu0 0.0
    %v751 = vand.u32 %v94, 4294901760
    %752 = vmatmul.mubr.f32.gmra.mxu0 %v751
    %v753 = vpop.f32.mrf.mxu0
    %v754 = vadd.f32 %v652, %v753
    %v755 = vpop.f32.mrf.mxu0
    %756 = vdwg.mxu0
    %vm757 = vcmask 261120
    %v759 = vsel %vm757, 0.0, 0
    %761 = vmatprep.subr.mxu0 0.0
    %762 = vmatpush1.msra.mxu0 0.0
    %763 = vmatprep.subr.mxu0 0.0
    %764 = vmatpush1.msra.mxu0 0.0
    %765 = vmatprep.subr.mxu0 0.0
    %766 = vmatpush1.msra.mxu0 0.0
    %767 = vmatprep.subr.mxu0 0.0
    %768 = vmatpush1.msra.mxu0 0.0
    %769 = vmatprep.subr.mxu0 0.0
    %770 = vmatpush1.msra.mxu0 0.0
    %771 = vmatprep.subr.mxu0 0.0
    %772 = vmatpush1.msra.mxu0 0.0
    %773 = vmatprep.subr.mxu0 0.0
    %774 = vmatpush1.msra.mxu0 0.0
    %775 = vmatprep.subr.mxu0 0.0
    %776 = vmatpush1.msra.mxu0 0.0
    %777 = vmatprep.subr.mxu0 0.0
    %778 = vmatpush1.msra.mxu0 0.0
    %779 = vmatprep.subr.mxu0 0.0
    %780 = vmatpush1.msra.mxu0 0.0
    %781 = vmatprep.subr.mxu0 0.0
    %782 = vmatpush1.msra.mxu0 0.0
    %783 = vmatprep.subr.mxu0 0.0
    %784 = vmatpush1.msra.mxu0 0.0
    %785 = vmatprep.subr.mxu0 0.0
    %v786 = vand.u32 %v69, 4294901760
    %787 = vmatpush1.msra.mxu0 %v786
    %788 = vmatprep.subr.mxu0 0.0
    %v789 = vand.u32 %v68, 4294901760
    %790 = vmatpush1.msra.mxu0 %v789
    %791 = vmatprep.subr.mxu0 0.0
    %v792 = vand.u32 %v67, 4294901760
    %793 = vmatpush1.msra.mxu0 %v792
    %794 = vmatprep.subr.mxu0 0.0
    %v795 = vand.u32 %v66, 4294901760
    %796 = vmatpush1.msra.mxu0 %v795
    %797 = vmatprep.subr.mxu0 0.0
    %798 = vmatpush2.msra.mxu0 0.0
    %799 = vmatprep.subr.mxu0 0.0
    %800 = vmatpush2.msra.mxu0 0.0
    %801 = vmatprep.subr.mxu0 0.0
    %802 = vmatpush2.msra.mxu0 0.0
    %803 = vmatprep.subr.mxu0 0.0
    %804 = vmatpush2.msra.mxu0 0.0
    %805 = vmatprep.subr.mxu0 0.0
    %806 = vmatpush2.msra.mxu0 0.0
    %807 = vmatprep.subr.mxu0 0.0
    %808 = vmatpush2.msra.mxu0 0.0
    %809 = vmatprep.subr.mxu0 0.0
    %810 = vmatpush2.msra.mxu0 0.0
    %811 = vmatprep.subr.mxu0 0.0
    %812 = vmatpush2.msra.mxu0 0.0
    %813 = vmatprep.subr.mxu0 0.0
    %814 = vmatpush2.msra.mxu0 0.0
    %815 = vmatprep.subr.mxu0 0.0
    %816 = vmatpush2.msra.mxu0 0.0
    %817 = vmatprep.subr.mxu0 0.0
    %818 = vmatpush2.msra.mxu0 0.0
    %819 = vmatprep.subr.mxu0 0.0
    %820 = vmatpush2.msra.mxu0 0.0
    %821 = vmatprep.subr.mxu0 0.0
    %822 = vmatpush2.msra.mxu0 0.0
    %823 = vmatprep.subr.mxu0 0.0
    %824 = vmatpush2.msra.mxu0 0.0
    %825 = vmatprep.subr.mxu0 0.0
    %826 = vmatpush2.msra.mxu0 0.0
    %827 = vmatprep.subr.mxu0 0.0
    %828 = vmatpush2.msra.mxu0 0.0
    %829 = vmatprep.mubr.f32.mxu0 0.0
    %v830 = vand.u32 %v759, 4294901760
    %v831 = vsub.f32 %v759, %v830
    %v832 = vand.u32 %v831, 4294901760
    %v833 = vsub.f32 %v831, %v832
    %v834 = vand.u32 %v833, 4294901760
    %835 = vmatmul.mubr.f32.gmra.mxu0 %v834
    %v836 = vpop.f32.mrf.mxu0
    %v837 = vadd.f32 0.0, %v836
    %v838 = vpop.f32.mrf.mxu0
    %839 = vdwg.mxu0
    %840 = vmatprep.subr.mxu0 0.0
    %841 = vmatpush1.msra.mxu0 0.0
    %842 = vmatprep.subr.mxu0 0.0
    %843 = vmatpush1.msra.mxu0 0.0
    %844 = vmatprep.subr.mxu0 0.0
    %845 = vmatpush1.msra.mxu0 0.0
    %846 = vmatprep.subr.mxu0 0.0
    %847 = vmatpush1.msra.mxu0 0.0
    %848 = vmatprep.subr.mxu0 0.0
    %849 = vmatpush1.msra.mxu0 0.0
    %850 = vmatprep.subr.mxu0 0.0
    %851 = vmatpush1.msra.mxu0 0.0
    %852 = vmatprep.subr.mxu0 0.0
    %853 = vmatpush1.msra.mxu0 0.0
    %854 = vmatprep.subr.mxu0 0.0
    %855 = vmatpush1.msra.mxu0 0.0
    %856 = vmatprep.subr.mxu0 0.0
    %857 = vmatpush1.msra.mxu0 0.0
    %858 = vmatprep.subr.mxu0 0.0
    %859 = vmatpush1.msra.mxu0 0.0
    %860 = vmatprep.subr.mxu0 0.0
    %861 = vmatpush1.msra.mxu0 0.0
    %862 = vmatprep.subr.mxu0 0.0
    %863 = vmatpush1.msra.mxu0 0.0
    %864 = vmatprep.subr.mxu0 0.0
    %v865 = vand.u32 %v69, 4294901760
    %v866 = vsub.f32 %v69, %v865
    %v867 = vand.u32 %v866, 4294901760
    %v868 = vsub.f32 %v866, %v867
    %v869 = vand.u32 %v868, 4294901760
    %870 = vmatpush1.msra.mxu0 %v869
    %871 = vmatprep.subr.mxu0 0.0
    %v872 = vand.u32 %v68, 4294901760
    %v873 = vsub.f32 %v68, %v872
    %v874 = vand.u32 %v873, 4294901760
    %v875 = vsub.f32 %v873, %v874
    %v876 = vand.u32 %v875, 4294901760
    %877 = vmatpush1.msra.mxu0 %v876
    %878 = vmatprep.subr.mxu0 0.0
    %v879 = vand.u32 %v67, 4294901760
    %v880 = vsub.f32 %v67, %v879
    %v881 = vand.u32 %v880, 4294901760
    %v882 = vsub.f32 %v880, %v881
    %v883 = vand.u32 %v882, 4294901760
    %884 = vmatpush1.msra.mxu0 %v883
    %885 = vmatprep.subr.mxu0 0.0
    %v886 = vand.u32 %v66, 4294901760
    %v887 = vsub.f32 %v66, %v886
    %v888 = vand.u32 %v887, 4294901760
    %v889 = vsub.f32 %v887, %v888
    %v890 = vand.u32 %v889, 4294901760
    %891 = vmatpush1.msra.mxu0 %v890
    %892 = vmatprep.subr.mxu0 0.0
    %893 = vmatpush2.msra.mxu0 0.0
    %894 = vmatprep.subr.mxu0 0.0
    %895 = vmatpush2.msra.mxu0 0.0
    %896 = vmatprep.subr.mxu0 0.0
    %897 = vmatpush2.msra.mxu0 0.0
    %898 = vmatprep.subr.mxu0 0.0
    %899 = vmatpush2.msra.mxu0 0.0
    %900 = vmatprep.subr.mxu0 0.0
    %901 = vmatpush2.msra.mxu0 0.0
    %902 = vmatprep.subr.mxu0 0.0
    %903 = vmatpush2.msra.mxu0 0.0
    %904 = vmatprep.subr.mxu0 0.0
    %905 = vmatpush2.msra.mxu0 0.0
    %906 = vmatprep.subr.mxu0 0.0
    %907 = vmatpush2.msra.mxu0 0.0
    %908 = vmatprep.subr.mxu0 0.0
    %909 = vmatpush2.msra.mxu0 0.0
    %910 = vmatprep.subr.mxu0 0.0
    %911 = vmatpush2.msra.mxu0 0.0
    %912 = vmatprep.subr.mxu0 0.0
    %913 = vmatpush2.msra.mxu0 0.0
    %914 = vmatprep.subr.mxu0 0.0
    %915 = vmatpush2.msra.mxu0 0.0
    %916 = vmatprep.subr.mxu0 0.0
    %917 = vmatpush2.msra.mxu0 0.0
    %918 = vmatprep.subr.mxu0 0.0
    %919 = vmatpush2.msra.mxu0 0.0
    %920 = vmatprep.subr.mxu0 0.0
    %921 = vmatpush2.msra.mxu0 0.0
    %922 = vmatprep.subr.mxu0 0.0
    %923 = vmatpush2.msra.mxu0 0.0
    %924 = vmatprep.mubr.f32.mxu0 0.0
    %v925 = vand.u32 %v759, 4294901760
    %926 = vmatmul.mubr.f32.gmra.mxu0 %v925
    %v927 = vpop.f32.mrf.mxu0
    %v928 = vadd.f32 %v837, %v927
    %v929 = vpop.f32.mrf.mxu0
    %930 = vdwg.mxu0
    %931 = vmatprep.subr.mxu0 0.0
    %932 = vmatpush1.msra.mxu0 0.0
    %933 = vmatprep.subr.mxu0 0.0
    %934 = vmatpush1.msra.mxu0 0.0
    %935 = vmatprep.subr.mxu0 0.0
    %936 = vmatpush1.msra.mxu0 0.0
    %937 = vmatprep.subr.mxu0 0.0
    %938 = vmatpush1.msra.mxu0 0.0
    %939 = vmatprep.subr.mxu0 0.0
    %940 = vmatpush1.msra.mxu0 0.0
    %941 = vmatprep.subr.mxu0 0.0
    %942 = vmatpush1.msra.mxu0 0.0
    %943 = vmatprep.subr.mxu0 0.0
    %944 = vmatpush1.msra.mxu0 0.0
    %945 = vmatprep.subr.mxu0 0.0
    %946 = vmatpush1.msra.mxu0 0.0
    %947 = vmatprep.subr.mxu0 0.0
    %948 = vmatpush1.msra.mxu0 0.0
    %949 = vmatprep.subr.mxu0 0.0
    %950 = vmatpush1.msra.mxu0 0.0
    %951 = vmatprep.subr.mxu0 0.0
    %952 = vmatpush1.msra.mxu0 0.0
    %953 = vmatprep.subr.mxu0 0.0
    %954 = vmatpush1.msra.mxu0 0.0
    %955 = vmatprep.subr.mxu0 0.0
    %v956 = vand.u32 %v69, 4294901760
    %v957 = vsub.f32 %v69, %v956
    %958 = vmatpush1.msra.mxu0 %v957
    %959 = vmatprep.subr.mxu0 0.0
    %v960 = vand.u32 %v68, 4294901760
    %v961 = vsub.f32 %v68, %v960
    %962 = vmatpush1.msra.mxu0 %v961
    %963 = vmatprep.subr.mxu0 0.0
    %v964 = vand.u32 %v67, 4294901760
    %v965 = vsub.f32 %v67, %v964
    %966 = vmatpush1.msra.mxu0 %v965
    %967 = vmatprep.subr.mxu0 0.0
    %v968 = vand.u32 %v66, 4294901760
    %v969 = vsub.f32 %v66, %v968
    %970 = vmatpush1.msra.mxu0 %v969
    %971 = vmatprep.subr.mxu0 0.0
    %972 = vmatpush2.msra.mxu0 0.0
    %973 = vmatprep.subr.mxu0 0.0
    %974 = vmatpush2.msra.mxu0 0.0
    %975 = vmatprep.subr.mxu0 0.0
    %976 = vmatpush2.msra.mxu0 0.0
    %977 = vmatprep.subr.mxu0 0.0
    %978 = vmatpush2.msra.mxu0 0.0
    %979 = vmatprep.subr.mxu0 0.0
    %980 = vmatpush2.msra.mxu0 0.0
    %981 = vmatprep.subr.mxu0 0.0
    %982 = vmatpush2.msra.mxu0 0.0
    %983 = vmatprep.subr.mxu0 0.0
    %984 = vmatpush2.msra.mxu0 0.0
    %985 = vmatprep.subr.mxu0 0.0
    %986 = vmatpush2.msra.mxu0 0.0
    %987 = vmatprep.subr.mxu0 0.0
    %988 = vmatpush2.msra.mxu0 0.0
    %989 = vmatprep.subr.mxu0 0.0
    %990 = vmatpush2.msra.mxu0 0.0
    %991 = vmatprep.subr.mxu0 0.0
    %992 = vmatpush2.msra.mxu0 0.0
    %993 = vmatprep.subr.mxu0 0.0
    %994 = vmatpush2.msra.mxu0 0.0
    %995 = vmatprep.subr.mxu0 0.0
    %996 = vmatpush2.msra.mxu0 0.0
    %997 = vmatprep.subr.mxu0 0.0
    %998 = vmatpush2.msra.mxu0 0.0
    %999 = vmatprep.subr.mxu0 0.0
    %1000 = vmatpush2.msra.mxu0 0.0
    %1001 = vmatprep.subr.mxu0 0.0
    %1002 = vmatpush2.msra.mxu0 0.0
    %1003 = vmatprep.mubr.f32.mxu0 0.0
    %v1004 = vand.u32 %v759, 4294901760
    %v1005 = vsub.f32 %v759, %v1004
    %1006 = vmatmul.mubr.f32.gmra.mxu0 %v1005
    %v1007 = vpop.f32.mrf.mxu0
    %v1008 = vadd.f32 %v928, %v1007
    %v1009 = vpop.f32.mrf.mxu0
    %1010 = vdwg.mxu0
    %1011 = vmatprep.subr.mxu0 0.0
    %1012 = vmatpush1.msra.mxu0 0.0
    %1013 = vmatprep.subr.mxu0 0.0
    %1014 = vmatpush1.msra.mxu0 0.0
    %1015 = vmatprep.subr.mxu0 0.0
    %1016 = vmatpush1.msra.mxu0 0.0
    %1017 = vmatprep.subr.mxu0 0.0
    %1018 = vmatpush1.msra.mxu0 0.0
    %1019 = vmatprep.subr.mxu0 0.0
    %1020 = vmatpush1.msra.mxu0 0.0
    %1021 = vmatprep.subr.mxu0 0.0
    %1022 = vmatpush1.msra.mxu0 0.0
    %1023 = vmatprep.subr.mxu0 0.0
    %1024 = vmatpush1.msra.mxu0 0.0
    %1025 = vmatprep.subr.mxu0 0.0
    %1026 = vmatpush1.msra.mxu0 0.0
    %1027 = vmatprep.subr.mxu0 0.0
    %1028 = vmatpush1.msra.mxu0 0.0
    %1029 = vmatprep.subr.mxu0 0.0
    %1030 = vmatpush1.msra.mxu0 0.0
    %1031 = vmatprep.subr.mxu0 0.0
    %1032 = vmatpush1.msra.mxu0 0.0
    %1033 = vmatprep.subr.mxu0 0.0
    %1034 = vmatpush1.msra.mxu0 0.0
    %1035 = vmatprep.subr.mxu0 0.0
    %v1036 = vand.u32 %v69, 4294901760
    %1037 = vmatpush1.msra.mxu0 %v1036
    %1038 = vmatprep.subr.mxu0 0.0
    %v1039 = vand.u32 %v68, 4294901760
    %1040 = vmatpush1.msra.mxu0 %v1039
    %1041 = vmatprep.subr.mxu0 0.0
    %v1042 = vand.u32 %v67, 4294901760
    %1043 = vmatpush1.msra.mxu0 %v1042
    %1044 = vmatprep.subr.mxu0 0.0
    %v1045 = vand.u32 %v66, 4294901760
    %1046 = vmatpush1.msra.mxu0 %v1045
    %1047 = vmatprep.subr.mxu0 0.0
    %1048 = vmatpush2.msra.mxu0 0.0
    %1049 = vmatprep.subr.mxu0 0.0
    %1050 = vmatpush2.msra.mxu0 0.0
    %1051 = vmatprep.subr.mxu0 0.0
    %1052 = vmatpush2.msra.mxu0 0.0
    %1053 = vmatprep.subr.mxu0 0.0
    %1054 = vmatpush2.msra.mxu0 0.0
    %1055 = vmatprep.subr.mxu0 0.0
    %1056 = vmatpush2.msra.mxu0 0.0
    %1057 = vmatprep.subr.mxu0 0.0
    %1058 = vmatpush2.msra.mxu0 0.0
    %1059 = vmatprep.subr.mxu0 0.0
    %1060 = vmatpush2.msra.mxu0 0.0
    %1061 = vmatprep.subr.mxu0 0.0
    %1062 = vmatpush2.msra.mxu0 0.0
    %1063 = vmatprep.subr.mxu0 0.0
    %1064 = vmatpush2.msra.mxu0 0.0
    %1065 = vmatprep.subr.mxu0 0.0
    %1066 = vmatpush2.msra.mxu0 0.0
    %1067 = vmatprep.subr.mxu0 0.0
    %1068 = vmatpush2.msra.mxu0 0.0
    %1069 = vmatprep.subr.mxu0 0.0
    %1070 = vmatpush2.msra.mxu0 0.0
    %1071 = vmatprep.subr.mxu0 0.0
    %1072 = vmatpush2.msra.mxu0 0.0
    %1073 = vmatprep.subr.mxu0 0.0
    %1074 = vmatpush2.msra.mxu0 0.0
    %1075 = vmatprep.subr.mxu0 0.0
    %1076 = vmatpush2.msra.mxu0 0.0
    %1077 = vmatprep.subr.mxu0 0.0
    %1078 = vmatpush2.msra.mxu0 0.0
    %1079 = vmatprep.mubr.f32.mxu0 0.0
    %v1080 = vand.u32 %v759, 4294901760
    %v1081 = vsub.f32 %v759, %v1080
    %v1082 = vand.u32 %v1081, 4294901760
    %1083 = vmatmul.mubr.f32.gmra.mxu0 %v1082
    %v1084 = vpop.f32.mrf.mxu0
    %v1085 = vadd.f32 %v1008, %v1084
    %v1086 = vpop.f32.mrf.mxu0
    %1087 = vdwg.mxu0
    %1088 = vmatprep.subr.mxu0 0.0
    %1089 = vmatpush1.msra.mxu0 0.0
    %1090 = vmatprep.subr.mxu0 0.0
    %1091 = vmatpush1.msra.mxu0 0.0
    %1092 = vmatprep.subr.mxu0 0.0
    %1093 = vmatpush1.msra.mxu0 0.0
    %1094 = vmatprep.subr.mxu0 0.0
    %1095 = vmatpush1.msra.mxu0 0.0
    %1096 = vmatprep.subr.mxu0 0.0
    %1097 = vmatpush1.msra.mxu0 0.0
    %1098 = vmatprep.subr.mxu0 0.0
    %1099 = vmatpush1.msra.mxu0 0.0
    %1100 = vmatprep.subr.mxu0 0.0
    %1101 = vmatpush1.msra.mxu0 0.0
    %1102 = vmatprep.subr.mxu0 0.0
    %1103 = vmatpush1.msra.mxu0 0.0
    %1104 = vmatprep.subr.mxu0 0.0
    %1105 = vmatpush1.msra.mxu0 0.0
    %1106 = vmatprep.subr.mxu0 0.0
    %1107 = vmatpush1.msra.mxu0 0.0
    %1108 = vmatprep.subr.mxu0 0.0
    %1109 = vmatpush1.msra.mxu0 0.0
    %1110 = vmatprep.subr.mxu0 0.0
    %1111 = vmatpush1.msra.mxu0 0.0
    %1112 = vmatprep.subr.mxu0 0.0
    %v1113 = vand.u32 %v69, 4294901760
    %v1114 = vsub.f32 %v69, %v1113
    %v1115 = vand.u32 %v1114, 4294901760
    %1116 = vmatpush1.msra.mxu0 %v1115
    %1117 = vmatprep.subr.mxu0 0.0
    %v1118 = vand.u32 %v68, 4294901760
    %v1119 = vsub.f32 %v68, %v1118
    %v1120 = vand.u32 %v1119, 4294901760
    %1121 = vmatpush1.msra.mxu0 %v1120
    %1122 = vmatprep.subr.mxu0 0.0
    %v1123 = vand.u32 %v67, 4294901760
    %v1124 = vsub.f32 %v67, %v1123
    %v1125 = vand.u32 %v1124, 4294901760
    %1126 = vmatpush1.msra.mxu0 %v1125
    %1127 = vmatprep.subr.mxu0 0.0
    %v1128 = vand.u32 %v66, 4294901760
    %v1129 = vsub.f32 %v66, %v1128
    %v1130 = vand.u32 %v1129, 4294901760
    %1131 = vmatpush1.msra.mxu0 %v1130
    %1132 = vmatprep.subr.mxu0 0.0
    %1133 = vmatpush2.msra.mxu0 0.0
    %1134 = vmatprep.subr.mxu0 0.0
    %1135 = vmatpush2.msra.mxu0 0.0
    %1136 = vmatprep.subr.mxu0 0.0
    %1137 = vmatpush2.msra.mxu0 0.0
    %1138 = vmatprep.subr.mxu0 0.0
    %1139 = vmatpush2.msra.mxu0 0.0
    %1140 = vmatprep.subr.mxu0 0.0
    %1141 = vmatpush2.msra.mxu0 0.0
    %1142 = vmatprep.subr.mxu0 0.0
    %1143 = vmatpush2.msra.mxu0 0.0
    %1144 = vmatprep.subr.mxu0 0.0
    %1145 = vmatpush2.msra.mxu0 0.0
    %1146 = vmatprep.subr.mxu0 0.0
    %1147 = vmatpush2.msra.mxu0 0.0
    %1148 = vmatprep.subr.mxu0 0.0
    %1149 = vmatpush2.msra.mxu0 0.0
    %1150 = vmatprep.subr.mxu0 0.0
    %1151 = vmatpush2.msra.mxu0 0.0
    %1152 = vmatprep.subr.mxu0 0.0
    %1153 = vmatpush2.msra.mxu0 0.0
    %1154 = vmatprep.subr.mxu0 0.0
    %1155 = vmatpush2.msra.mxu0 0.0
    %1156 = vmatprep.subr.mxu0 0.0
    %1157 = vmatpush2.msra.mxu0 0.0
    %1158 = vmatprep.subr.mxu0 0.0
    %1159 = vmatpush2.msra.mxu0 0.0
    %1160 = vmatprep.subr.mxu0 0.0
    %1161 = vmatpush2.msra.mxu0 0.0
    %1162 = vmatprep.subr.mxu0 0.0
    %1163 = vmatpush2.msra.mxu0 0.0
    %1164 = vmatprep.mubr.f32.mxu0 0.0
    %v1165 = vand.u32 %v759, 4294901760
    %1166 = vmatmul.mubr.f32.gmra.mxu0 %v1165
    %v1167 = vpop.f32.mrf.mxu0
    %v1168 = vadd.f32 %v1085, %v1167
    %v1169 = vpop.f32.mrf.mxu0
    %1170 = vdwg.mxu0
    %1171 = vmatprep.subr.mxu0 0.0
    %1172 = vmatpush1.msra.mxu0 0.0
    %1173 = vmatprep.subr.mxu0 0.0
    %1174 = vmatpush1.msra.mxu0 0.0
    %1175 = vmatprep.subr.mxu0 0.0
    %1176 = vmatpush1.msra.mxu0 0.0
    %1177 = vmatprep.subr.mxu0 0.0
    %1178 = vmatpush1.msra.mxu0 0.0
    %1179 = vmatprep.subr.mxu0 0.0
    %1180 = vmatpush1.msra.mxu0 0.0
    %1181 = vmatprep.subr.mxu0 0.0
    %1182 = vmatpush1.msra.mxu0 0.0
    %1183 = vmatprep.subr.mxu0 0.0
    %1184 = vmatpush1.msra.mxu0 0.0
    %1185 = vmatprep.subr.mxu0 0.0
    %1186 = vmatpush1.msra.mxu0 0.0
    %1187 = vmatprep.subr.mxu0 0.0
    %1188 = vmatpush1.msra.mxu0 0.0
    %1189 = vmatprep.subr.mxu0 0.0
    %1190 = vmatpush1.msra.mxu0 0.0
    %1191 = vmatprep.subr.mxu0 0.0
    %1192 = vmatpush1.msra.mxu0 0.0
    %1193 = vmatprep.subr.mxu0 0.0
    %1194 = vmatpush1.msra.mxu0 0.0
    %1195 = vmatprep.subr.mxu0 0.0
    %v1196 = vand.u32 %v69, 4294901760
    %1197 = vmatpush1.msra.mxu0 %v1196
    %1198 = vmatprep.subr.mxu0 0.0
    %v1199 = vand.u32 %v68, 4294901760
    %1200 = vmatpush1.msra.mxu0 %v1199
    %1201 = vmatprep.subr.mxu0 0.0
    %v1202 = vand.u32 %v67, 4294901760
    %1203 = vmatpush1.msra.mxu0 %v1202
    %1204 = vmatprep.subr.mxu0 0.0
    %v1205 = vand.u32 %v66, 4294901760
    %1206 = vmatpush1.msra.mxu0 %v1205
    %1207 = vmatprep.subr.mxu0 0.0
    %1208 = vmatpush2.msra.mxu0 0.0
    %1209 = vmatprep.subr.mxu0 0.0
    %1210 = vmatpush2.msra.mxu0 0.0
    %1211 = vmatprep.subr.mxu0 0.0
    %1212 = vmatpush2.msra.mxu0 0.0
    %1213 = vmatprep.subr.mxu0 0.0
    %1214 = vmatpush2.msra.mxu0 0.0
    %1215 = vmatprep.subr.mxu0 0.0
    %1216 = vmatpush2.msra.mxu0 0.0
    %1217 = vmatprep.subr.mxu0 0.0
    %1218 = vmatpush2.msra.mxu0 0.0
    %1219 = vmatprep.subr.mxu0 0.0
    %1220 = vmatpush2.msra.mxu0 0.0
    %1221 = vmatprep.subr.mxu0 0.0
    %1222 = vmatpush2.msra.mxu0 0.0
    %1223 = vmatprep.subr.mxu0 0.0
    %1224 = vmatpush2.msra.mxu0 0.0
    %1225 = vmatprep.subr.mxu0 0.0
    %1226 = vmatpush2.msra.mxu0 0.0
    %1227 = vmatprep.subr.mxu0 0.0
    %1228 = vmatpush2.msra.mxu0 0.0
    %1229 = vmatprep.subr.mxu0 0.0
    %1230 = vmatpush2.msra.mxu0 0.0
    %1231 = vmatprep.subr.mxu0 0.0
    %1232 = vmatpush2.msra.mxu0 0.0
    %1233 = vmatprep.subr.mxu0 0.0
    %1234 = vmatpush2.msra.mxu0 0.0
    %1235 = vmatprep.subr.mxu0 0.0
    %1236 = vmatpush2.msra.mxu0 0.0
    %1237 = vmatprep.subr.mxu0 0.0
    %1238 = vmatpush2.msra.mxu0 0.0
    %1239 = vmatprep.mubr.f32.mxu0 0.0
    %v1240 = vand.u32 %v759, 4294901760
    %1241 = vmatmul.mubr.f32.gmra.mxu0 %v1240
    %v1242 = vpop.f32.mrf.mxu0
    %v1243 = vadd.f32 %v1168, %v1242
    %v1244 = vpop.f32.mrf.mxu0
    %1245 = vdwg.mxu0
    %v1246 = vadd.f32 %v724, %v1243
    %v1247 = vxor.u32 %v1246, 2147483648
    %v1248 = vmul.f32 %v1247, 1.442695
    %v1249 = vpow.pop %v1248
    %v1250 = vadd.f32 %v1249, 1.0
    %v1251 = vrcp.pop %v1250
    %v1252 = vmul.f32 1.0, %v1251
    %v1253 = vtanh.pop %v1246
    %1254 = vrot.lane.b32.xlu0 %v1252, 96
    %v1255 = vpop.permute.xlu0 %1254
    %1256 = vrot.lane.b32.xlu0 %v1253, 64
    %v1257 = vpop.permute.xlu0 %1256
    %1258 = vrot.lane.b32.xlu0 %v1252, 32
    %v1259 = vpop.permute.xlu0 %1258
    %v1260 = vmul.f32 %v1255, 0.0
    %v1261 = vmul.f32 %v1252, %v1257
    %v1262 = vadd.f32 %v1260, %v1261
    %v1263 = vtanh.pop %v1262
    %v1264 = vmul.f32 %v1259, %v1263
    %1265 = vst.msk [vmem:[#allocation2] sm:$0xff] %vm757, %v1264
    %v1267 = vsel %vm757, %v1264, 0
    %1269 = vmatprep.subr.mxu0 0.0
    %1270 = vmatpush1.msra.mxu0 0.0
    %1271 = vmatprep.subr.mxu0 0.0
    %1272 = vmatpush1.msra.mxu0 0.0
    %1273 = vmatprep.subr.mxu0 0.0
    %1274 = vmatpush1.msra.mxu0 0.0
    %1275 = vmatprep.subr.mxu0 0.0
    %1276 = vmatpush1.msra.mxu0 0.0
    %1277 = vmatprep.subr.mxu0 0.0
    %1278 = vmatpush1.msra.mxu0 0.0
    %1279 = vmatprep.subr.mxu0 0.0
    %1280 = vmatpush1.msra.mxu0 0.0
    %1281 = vmatprep.subr.mxu0 0.0
    %1282 = vmatpush1.msra.mxu0 0.0
    %1283 = vmatprep.subr.mxu0 0.0
    %1284 = vmatpush1.msra.mxu0 0.0
    %1285 = vmatprep.subr.mxu0 0.0
    %1286 = vmatpush1.msra.mxu0 0.0
    %1287 = vmatprep.subr.mxu0 0.0
    %1288 = vmatpush1.msra.mxu0 0.0
    %1289 = vmatprep.subr.mxu0 0.0
    %1290 = vmatpush1.msra.mxu0 0.0
    %1291 = vmatprep.subr.mxu0 0.0
    %1292 = vmatpush1.msra.mxu0 0.0
    %1293 = vmatprep.subr.mxu0 0.0
    %v1294 = vand.u32 %v69, 4294901760
    %1295 = vmatpush1.msra.mxu0 %v1294
    %1296 = vmatprep.subr.mxu0 0.0
    %v1297 = vand.u32 %v68, 4294901760
    %1298 = vmatpush1.msra.mxu0 %v1297
    %1299 = vmatprep.subr.mxu0 0.0
    %v1300 = vand.u32 %v67, 4294901760
    %1301 = vmatpush1.msra.mxu0 %v1300
    %1302 = vmatprep.subr.mxu0 0.0
    %v1303 = vand.u32 %v66, 4294901760
    %1304 = vmatpush1.msra.mxu0 %v1303
    %1305 = vmatprep.subr.mxu0 0.0
    %1306 = vmatpush2.msra.mxu0 0.0
    %1307 = vmatprep.subr.mxu0 0.0
    %1308 = vmatpush2.msra.mxu0 0.0
    %1309 = vmatprep.subr.mxu0 0.0
    %1310 = vmatpush2.msra.mxu0 0.0
    %1311 = vmatprep.subr.mxu0 0.0
    %1312 = vmatpush2.msra.mxu0 0.0
    %1313 = vmatprep.subr.mxu0 0.0
    %1314 = vmatpush2.msra.mxu0 0.0
    %1315 = vmatprep.subr.mxu0 0.0
    %1316 = vmatpush2.msra.mxu0 0.0
    %1317 = vmatprep.subr.mxu0 0.0
    %1318 = vmatpush2.msra.mxu0 0.0
    %1319 = vmatprep.subr.mxu0 0.0
    %1320 = vmatpush2.msra.mxu0 0.0
    %1321 = vmatprep.subr.mxu0 0.0
    %1322 = vmatpush2.msra.mxu0 0.0
    %1323 = vmatprep.subr.mxu0 0.0
    %1324 = vmatpush2.msra.mxu0 0.0
    %1325 = vmatprep.subr.mxu0 0.0
    %1326 = vmatpush2.msra.mxu0 0.0
    %1327 = vmatprep.subr.mxu0 0.0
    %1328 = vmatpush2.msra.mxu0 0.0
    %1329 = vmatprep.subr.mxu0 0.0
    %1330 = vmatpush2.msra.mxu0 0.0
    %1331 = vmatprep.subr.mxu0 0.0
    %1332 = vmatpush2.msra.mxu0 0.0
    %1333 = vmatprep.subr.mxu0 0.0
    %1334 = vmatpush2.msra.mxu0 0.0
    %1335 = vmatprep.subr.mxu0 0.0
    %1336 = vmatpush2.msra.mxu0 0.0
    %1337 = vmatprep.mubr.f32.mxu0 0.0
    %v1338 = vand.u32 %v1267, 4294901760
    %v1339 = vsub.f32 %v1267, %v1338
    %v1340 = vand.u32 %v1339, 4294901760
    %v1341 = vsub.f32 %v1339, %v1340
    %v1342 = vand.u32 %v1341, 4294901760
    %1343 = vmatmul.mubr.f32.gmra.mxu0 %v1342
    %v1344 = vpop.f32.mrf.mxu0
    %v1345 = vadd.f32 0.0, %v1344
    %v1346 = vpop.f32.mrf.mxu0
    %1347 = vdwg.mxu0
    %1348 = vmatprep.subr.mxu0 0.0
    %1349 = vmatpush1.msra.mxu0 0.0
    %1350 = vmatprep.subr.mxu0 0.0
    %1351 = vmatpush1.msra.mxu0 0.0
    %1352 = vmatprep.subr.mxu0 0.0
    %1353 = vmatpush1.msra.mxu0 0.0
    %1354 = vmatprep.subr.mxu0 0.0
    %1355 = vmatpush1.msra.mxu0 0.0
    %1356 = vmatprep.subr.mxu0 0.0
    %1357 = vmatpush1.msra.mxu0 0.0
    %1358 = vmatprep.subr.mxu0 0.0
    %1359 = vmatpush1.msra.mxu0 0.0
    %1360 = vmatprep.subr.mxu0 0.0
    %1361 = vmatpush1.msra.mxu0 0.0
    %1362 = vmatprep.subr.mxu0 0.0
    %1363 = vmatpush1.msra.mxu0 0.0
    %1364 = vmatprep.subr.mxu0 0.0
    %1365 = vmatpush1.msra.mxu0 0.0
    %1366 = vmatprep.subr.mxu0 0.0
    %1367 = vmatpush1.msra.mxu0 0.0
    %1368 = vmatprep.subr.mxu0 0.0
    %1369 = vmatpush1.msra.mxu0 0.0
    %1370 = vmatprep.subr.mxu0 0.0
    %1371 = vmatpush1.msra.mxu0 0.0
    %1372 = vmatprep.subr.mxu0 0.0
    %v1373 = vand.u32 %v69, 4294901760
    %v1374 = vsub.f32 %v69, %v1373
    %v1375 = vand.u32 %v1374, 4294901760
    %v1376 = vsub.f32 %v1374, %v1375
    %v1377 = vand.u32 %v1376, 4294901760
    %1378 = vmatpush1.msra.mxu0 %v1377
    %1379 = vmatprep.subr.mxu0 0.0
    %v1380 = vand.u32 %v68, 4294901760
    %v1381 = vsub.f32 %v68, %v1380
    %v1382 = vand.u32 %v1381, 4294901760
    %v1383 = vsub.f32 %v1381, %v1382
    %v1384 = vand.u32 %v1383, 4294901760
    %1385 = vmatpush1.msra.mxu0 %v1384
    %1386 = vmatprep.subr.mxu0 0.0
    %v1387 = vand.u32 %v67, 4294901760
    %v1388 = vsub.f32 %v67, %v1387
    %v1389 = vand.u32 %v1388, 4294901760
    %v1390 = vsub.f32 %v1388, %v1389
    %v1391 = vand.u32 %v1390, 4294901760
    %1392 = vmatpush1.msra.mxu0 %v1391
    %1393 = vmatprep.subr.mxu0 0.0
    %v1394 = vand.u32 %v66, 4294901760
    %v1395 = vsub.f32 %v66, %v1394
    %v1396 = vand.u32 %v1395, 4294901760
    %v1397 = vsub.f32 %v1395, %v1396
    %v1398 = vand.u32 %v1397, 4294901760
    %1399 = vmatpush1.msra.mxu0 %v1398
    %1400 = vmatprep.subr.mxu0 0.0
    %1401 = vmatpush2.msra.mxu0 0.0
    %1402 = vmatprep.subr.mxu0 0.0
    %1403 = vmatpush2.msra.mxu0 0.0
    %1404 = vmatprep.subr.mxu0 0.0
    %1405 = vmatpush2.msra.mxu0 0.0
    %1406 = vmatprep.subr.mxu0 0.0
    %1407 = vmatpush2.msra.mxu0 0.0
    %1408 = vmatprep.subr.mxu0 0.0
    %1409 = vmatpush2.msra.mxu0 0.0
    %1410 = vmatprep.subr.mxu0 0.0
    %1411 = vmatpush2.msra.mxu0 0.0
    %1412 = vmatprep.subr.mxu0 0.0
    %1413 = vmatpush2.msra.mxu0 0.0
    %1414 = vmatprep.subr.mxu0 0.0
    %1415 = vmatpush2.msra.mxu0 0.0
    %1416 = vmatprep.subr.mxu0 0.0
    %1417 = vmatpush2.msra.mxu0 0.0
    %1418 = vmatprep.subr.mxu0 0.0
    %1419 = vmatpush2.msra.mxu0 0.0
    %1420 = vmatprep.subr.mxu0 0.0
    %1421 = vmatpush2.msra.mxu0 0.0
    %1422 = vmatprep.subr.mxu0 0.0
    %1423 = vmatpush2.msra.mxu0 0.0
    %1424 = vmatprep.subr.mxu0 0.0
    %1425 = vmatpush2.msra.mxu0 0.0
    %1426 = vmatprep.subr.mxu0 0.0
    %1427 = vmatpush2.msra.mxu0 0.0
    %1428 = vmatprep.subr.mxu0 0.0
    %1429 = vmatpush2.msra.mxu0 0.0
    %1430 = vmatprep.subr.mxu0 0.0
    %1431 = vmatpush2.msra.mxu0 0.0
    %1432 = vmatprep.mubr.f32.mxu0 0.0
    %v1433 = vand.u32 %v1267, 4294901760
    %1434 = vmatmul.mubr.f32.gmra.mxu0 %v1433
    %v1435 = vpop.f32.mrf.mxu0
    %v1436 = vadd.f32 %v1345, %v1435
    %v1437 = vpop.f32.mrf.mxu0
    %1438 = vdwg.mxu0
    %1439 = vmatprep.subr.mxu0 0.0
    %1440 = vmatpush1.msra.mxu0 0.0
    %1441 = vmatprep.subr.mxu0 0.0
    %1442 = vmatpush1.msra.mxu0 0.0
    %1443 = vmatprep.subr.mxu0 0.0
    %1444 = vmatpush1.msra.mxu0 0.0
    %1445 = vmatprep.subr.mxu0 0.0
    %1446 = vmatpush1.msra.mxu0 0.0
    %1447 = vmatprep.subr.mxu0 0.0
    %1448 = vmatpush1.msra.mxu0 0.0
    %1449 = vmatprep.subr.mxu0 0.0
    %1450 = vmatpush1.msra.mxu0 0.0
    %1451 = vmatprep.subr.mxu0 0.0
    %1452 = vmatpush1.msra.mxu0 0.0
    %1453 = vmatprep.subr.mxu0 0.0
    %1454 = vmatpush1.msra.mxu0 0.0
    %1455 = vmatprep.subr.mxu0 0.0
    %1456 = vmatpush1.msra.mxu0 0.0
    %1457 = vmatprep.subr.mxu0 0.0
    %1458 = vmatpush1.msra.mxu0 0.0
    %1459 = vmatprep.subr.mxu0 0.0
    %1460 = vmatpush1.msra.mxu0 0.0
    %1461 = vmatprep.subr.mxu0 0.0
    %1462 = vmatpush1.msra.mxu0 0.0
    %1463 = vmatprep.subr.mxu0 0.0
    %v1464 = vand.u32 %v69, 4294901760
    %v1465 = vsub.f32 %v69, %v1464
    %1466 = vmatpush1.msra.mxu0 %v1465
    %1467 = vmatprep.subr.mxu0 0.0
    %v1468 = vand.u32 %v68, 4294901760
    %v1469 = vsub.f32 %v68, %v1468
    %1470 = vmatpush1.msra.mxu0 %v1469
    %1471 = vmatprep.subr.mxu0 0.0
    %v1472 = vand.u32 %v67, 4294901760
    %v1473 = vsub.f32 %v67, %v1472
    %1474 = vmatpush1.msra.mxu0 %v1473
    %1475 = vmatprep.subr.mxu0 0.0
    %v1476 = vand.u32 %v66, 4294901760
    %v1477 = vsub.f32 %v66, %v1476
    %1478 = vmatpush1.msra.mxu0 %v1477
    %1479 = vmatprep.subr.mxu0 0.0
    %1480 = vmatpush2.msra.mxu0 0.0
    %1481 = vmatprep.subr.mxu0 0.0
    %1482 = vmatpush2.msra.mxu0 0.0
    %1483 = vmatprep.subr.mxu0 0.0
    %1484 = vmatpush2.msra.mxu0 0.0
    %1485 = vmatprep.subr.mxu0 0.0
    %1486 = vmatpush2.msra.mxu0 0.0
    %1487 = vmatprep.subr.mxu0 0.0
    %1488 = vmatpush2.msra.mxu0 0.0
    %1489 = vmatprep.subr.mxu0 0.0
    %1490 = vmatpush2.msra.mxu0 0.0
    %1491 = vmatprep.subr.mxu0 0.0
    %1492 = vmatpush2.msra.mxu0 0.0
    %1493 = vmatprep.subr.mxu0 0.0
    %1494 = vmatpush2.msra.mxu0 0.0
    %1495 = vmatprep.subr.mxu0 0.0
    %1496 = vmatpush2.msra.mxu0 0.0
    %1497 = vmatprep.subr.mxu0 0.0
    %1498 = vmatpush2.msra.mxu0 0.0
    %1499 = vmatprep.subr.mxu0 0.0
    %1500 = vmatpush2.msra.mxu0 0.0
    %1501 = vmatprep.subr.mxu0 0.0
    %1502 = vmatpush2.msra.mxu0 0.0
    %1503 = vmatprep.subr.mxu0 0.0
    %1504 = vmatpush2.msra.mxu0 0.0
    %1505 = vmatprep.subr.mxu0 0.0
    %1506 = vmatpush2.msra.mxu0 0.0
    %1507 = vmatprep.subr.mxu0 0.0
    %1508 = vmatpush2.msra.mxu0 0.0
    %1509 = vmatprep.subr.mxu0 0.0
    %1510 = vmatpush2.msra.mxu0 0.0
    %1511 = vmatprep.mubr.f32.mxu0 0.0
    %v1512 = vand.u32 %v1267, 4294901760
    %v1513 = vsub.f32 %v1267, %v1512
    %1514 = vmatmul.mubr.f32.gmra.mxu0 %v1513
    %v1515 = vpop.f32.mrf.mxu0
    %v1516 = vadd.f32 %v1436, %v1515
    %v1517 = vpop.f32.mrf.mxu0
    %1518 = vdwg.mxu0
    %1519 = vmatprep.subr.mxu0 0.0
    %1520 = vmatpush1.msra.mxu0 0.0
    %1521 = vmatprep.subr.mxu0 0.0
    %1522 = vmatpush1.msra.mxu0 0.0
    %1523 = vmatprep.subr.mxu0 0.0
    %1524 = vmatpush1.msra.mxu0 0.0
    %1525 = vmatprep.subr.mxu0 0.0
    %1526 = vmatpush1.msra.mxu0 0.0
    %1527 = vmatprep.subr.mxu0 0.0
    %1528 = vmatpush1.msra.mxu0 0.0
    %1529 = vmatprep.subr.mxu0 0.0
    %1530 = vmatpush1.msra.mxu0 0.0
    %1531 = vmatprep.subr.mxu0 0.0
    %1532 = vmatpush1.msra.mxu0 0.0
    %1533 = vmatprep.subr.mxu0 0.0
    %1534 = vmatpush1.msra.mxu0 0.0
    %1535 = vmatprep.subr.mxu0 0.0
    %1536 = vmatpush1.msra.mxu0 0.0
    %1537 = vmatprep.subr.mxu0 0.0
    %1538 = vmatpush1.msra.mxu0 0.0
    %1539 = vmatprep.subr.mxu0 0.0
    %1540 = vmatpush1.msra.mxu0 0.0
    %1541 = vmatprep.subr.mxu0 0.0
    %1542 = vmatpush1.msra.mxu0 0.0
    %1543 = vmatprep.subr.mxu0 0.0
    %v1544 = vand.u32 %v69, 4294901760
    %1545 = vmatpush1.msra.mxu0 %v1544
    %1546 = vmatprep.subr.mxu0 0.0
    %v1547 = vand.u32 %v68, 4294901760
    %1548 = vmatpush1.msra.mxu0 %v1547
    %1549 = vmatprep.subr.mxu0 0.0
    %v1550 = vand.u32 %v67, 4294901760
    %1551 = vmatpush1.msra.mxu0 %v1550
    %1552 = vmatprep.subr.mxu0 0.0
    %v1553 = vand.u32 %v66, 4294901760
    %1554 = vmatpush1.msra.mxu0 %v1553
    %1555 = vmatprep.subr.mxu0 0.0
    %1556 = vmatpush2.msra.mxu0 0.0
    %1557 = vmatprep.subr.mxu0 0.0
    %1558 = vmatpush2.msra.mxu0 0.0
    %1559 = vmatprep.subr.mxu0 0.0
    %1560 = vmatpush2.msra.mxu0 0.0
    %1561 = vmatprep.subr.mxu0 0.0
    %1562 = vmatpush2.msra.mxu0 0.0
    %1563 = vmatprep.subr.mxu0 0.0
    %1564 = vmatpush2.msra.mxu0 0.0
    %1565 = vmatprep.subr.mxu0 0.0
    %1566 = vmatpush2.msra.mxu0 0.0
    %1567 = vmatprep.subr.mxu0 0.0
    %1568 = vmatpush2.msra.mxu0 0.0
    %1569 = vmatprep.subr.mxu0 0.0
    %1570 = vmatpush2.msra.mxu0 0.0
    %1571 = vmatprep.subr.mxu0 0.0
    %1572 = vmatpush2.msra.mxu0 0.0
    %1573 = vmatprep.subr.mxu0 0.0
    %1574 = vmatpush2.msra.mxu0 0.0
    %1575 = vmatprep.subr.mxu0 0.0
    %1576 = vmatpush2.msra.mxu0 0.0
    %1577 = vmatprep.subr.mxu0 0.0
    %1578 = vmatpush2.msra.mxu0 0.0
    %1579 = vmatprep.subr.mxu0 0.0
    %1580 = vmatpush2.msra.mxu0 0.0
    %1581 = vmatprep.subr.mxu0 0.0
    %1582 = vmatpush2.msra.mxu0 0.0
    %1583 = vmatprep.subr.mxu0 0.0
    %1584 = vmatpush2.msra.mxu0 0.0
    %1585 = vmatprep.subr.mxu0 0.0
    %1586 = vmatpush2.msra.mxu0 0.0
    %1587 = vmatprep.mubr.f32.mxu0 0.0
    %v1588 = vand.u32 %v1267, 4294901760
    %v1589 = vsub.f32 %v1267, %v1588
    %v1590 = vand.u32 %v1589, 4294901760
    %1591 = vmatmul.mubr.f32.gmra.mxu0 %v1590
    %v1592 = vpop.f32.mrf.mxu0
    %v1593 = vadd.f32 %v1516, %v1592
    %v1594 = vpop.f32.mrf.mxu0
    %1595 = vdwg.mxu0
    %1596 = vmatprep.subr.mxu0 0.0
    %1597 = vmatpush1.msra.mxu0 0.0
    %1598 = vmatprep.subr.mxu0 0.0
    %1599 = vmatpush1.msra.mxu0 0.0
    %1600 = vmatprep.subr.mxu0 0.0
    %1601 = vmatpush1.msra.mxu0 0.0
    %1602 = vmatprep.subr.mxu0 0.0
    %1603 = vmatpush1.msra.mxu0 0.0
    %1604 = vmatprep.subr.mxu0 0.0
    %1605 = vmatpush1.msra.mxu0 0.0
    %1606 = vmatprep.subr.mxu0 0.0
    %1607 = vmatpush1.msra.mxu0 0.0
    %1608 = vmatprep.subr.mxu0 0.0
    %1609 = vmatpush1.msra.mxu0 0.0
    %1610 = vmatprep.subr.mxu0 0.0
    %1611 = vmatpush1.msra.mxu0 0.0
    %1612 = vmatprep.subr.mxu0 0.0
    %1613 = vmatpush1.msra.mxu0 0.0
    %1614 = vmatprep.subr.mxu0 0.0
    %1615 = vmatpush1.msra.mxu0 0.0
    %1616 = vmatprep.subr.mxu0 0.0
    %1617 = vmatpush1.msra.mxu0 0.0
    %1618 = vmatprep.subr.mxu0 0.0
    %1619 = vmatpush1.msra.mxu0 0.0
    %1620 = vmatprep.subr.mxu0 0.0
    %v1621 = vand.u32 %v69, 4294901760
    %v1622 = vsub.f32 %v69, %v1621
    %v1623 = vand.u32 %v1622, 4294901760
    %1624 = vmatpush1.msra.mxu0 %v1623
    %1625 = vmatprep.subr.mxu0 0.0
    %v1626 = vand.u32 %v68, 4294901760
    %v1627 = vsub.f32 %v68, %v1626
    %v1628 = vand.u32 %v1627, 4294901760
    %1629 = vmatpush1.msra.mxu0 %v1628
    %1630 = vmatprep.subr.mxu0 0.0
    %v1631 = vand.u32 %v67, 4294901760
    %v1632 = vsub.f32 %v67, %v1631
    %v1633 = vand.u32 %v1632, 4294901760
    %1634 = vmatpush1.msra.mxu0 %v1633
    %1635 = vmatprep.subr.mxu0 0.0
    %v1636 = vand.u32 %v66, 4294901760
    %v1637 = vsub.f32 %v66, %v1636
    %v1638 = vand.u32 %v1637, 4294901760
    %1639 = vmatpush1.msra.mxu0 %v1638
    %1640 = vmatprep.subr.mxu0 0.0
    %1641 = vmatpush2.msra.mxu0 0.0
    %1642 = vmatprep.subr.mxu0 0.0
    %1643 = vmatpush2.msra.mxu0 0.0
    %1644 = vmatprep.subr.mxu0 0.0
    %1645 = vmatpush2.msra.mxu0 0.0
    %1646 = vmatprep.subr.mxu0 0.0
    %1647 = vmatpush2.msra.mxu0 0.0
    %1648 = vmatprep.subr.mxu0 0.0
    %1649 = vmatpush2.msra.mxu0 0.0
    %1650 = vmatprep.subr.mxu0 0.0
    %1651 = vmatpush2.msra.mxu0 0.0
    %1652 = vmatprep.subr.mxu0 0.0
    %1653 = vmatpush2.msra.mxu0 0.0
    %1654 = vmatprep.subr.mxu0 0.0
    %1655 = vmatpush2.msra.mxu0 0.0
    %1656 = vmatprep.subr.mxu0 0.0
    %1657 = vmatpush2.msra.mxu0 0.0
    %1658 = vmatprep.subr.mxu0 0.0
    %1659 = vmatpush2.msra.mxu0 0.0
    %1660 = vmatprep.subr.mxu0 0.0
    %1661 = vmatpush2.msra.mxu0 0.0
    %1662 = vmatprep.subr.mxu0 0.0
    %1663 = vmatpush2.msra.mxu0 0.0
    %1664 = vmatprep.subr.mxu0 0.0
    %1665 = vmatpush2.msra.mxu0 0.0
    %1666 = vmatprep.subr.mxu0 0.0
    %1667 = vmatpush2.msra.mxu0 0.0
    %1668 = vmatprep.subr.mxu0 0.0
    %1669 = vmatpush2.msra.mxu0 0.0
    %1670 = vmatprep.subr.mxu0 0.0
    %1671 = vmatpush2.msra.mxu0 0.0
    %1672 = vmatprep.mubr.f32.mxu0 0.0
    %v1673 = vand.u32 %v1267, 4294901760
    %1674 = vmatmul.mubr.f32.gmra.mxu0 %v1673
    %v1675 = vpop.f32.mrf.mxu0
    %v1676 = vadd.f32 %v1593, %v1675
    %v1677 = vpop.f32.mrf.mxu0
    %1678 = vdwg.mxu0
    %1679 = vmatprep.subr.mxu0 0.0
    %1680 = vmatpush1.msra.mxu0 0.0
    %1681 = vmatprep.subr.mxu0 0.0
    %1682 = vmatpush1.msra.mxu0 0.0
    %1683 = vmatprep.subr.mxu0 0.0
    %1684 = vmatpush1.msra.mxu0 0.0
    %1685 = vmatprep.subr.mxu0 0.0
    %1686 = vmatpush1.msra.mxu0 0.0
    %1687 = vmatprep.subr.mxu0 0.0
    %1688 = vmatpush1.msra.mxu0 0.0
    %1689 = vmatprep.subr.mxu0 0.0
    %1690 = vmatpush1.msra.mxu0 0.0
    %1691 = vmatprep.subr.mxu0 0.0
    %1692 = vmatpush1.msra.mxu0 0.0
    %1693 = vmatprep.subr.mxu0 0.0
    %1694 = vmatpush1.msra.mxu0 0.0
    %1695 = vmatprep.subr.mxu0 0.0
    %1696 = vmatpush1.msra.mxu0 0.0
    %1697 = vmatprep.subr.mxu0 0.0
    %1698 = vmatpush1.msra.mxu0 0.0
    %1699 = vmatprep.subr.mxu0 0.0
    %1700 = vmatpush1.msra.mxu0 0.0
    %1701 = vmatprep.subr.mxu0 0.0
    %1702 = vmatpush1.msra.mxu0 0.0
    %1703 = vmatprep.subr.mxu0 0.0
    %v1704 = vand.u32 %v69, 4294901760
    %1705 = vmatpush1.msra.mxu0 %v1704
    %1706 = vmatprep.subr.mxu0 0.0
    %v1707 = vand.u32 %v68, 4294901760
    %1708 = vmatpush1.msra.mxu0 %v1707
    %1709 = vmatprep.subr.mxu0 0.0
    %v1710 = vand.u32 %v67, 4294901760
    %1711 = vmatpush1.msra.mxu0 %v1710
    %1712 = vmatprep.subr.mxu0 0.0
    %v1713 = vand.u32 %v66, 4294901760
    %1714 = vmatpush1.msra.mxu0 %v1713
    %1715 = vmatprep.subr.mxu0 0.0
    %1716 = vmatpush2.msra.mxu0 0.0
    %1717 = vmatprep.subr.mxu0 0.0
    %1718 = vmatpush2.msra.mxu0 0.0
    %1719 = vmatprep.subr.mxu0 0.0
    %1720 = vmatpush2.msra.mxu0 0.0
    %1721 = vmatprep.subr.mxu0 0.0
    %1722 = vmatpush2.msra.mxu0 0.0
    %1723 = vmatprep.subr.mxu0 0.0
    %1724 = vmatpush2.msra.mxu0 0.0
    %1725 = vmatprep.subr.mxu0 0.0
    %1726 = vmatpush2.msra.mxu0 0.0
    %1727 = vmatprep.subr.mxu0 0.0
    %1728 = vmatpush2.msra.mxu0 0.0
    %1729 = vmatprep.subr.mxu0 0.0
    %1730 = vmatpush2.msra.mxu0 0.0
    %1731 = vmatprep.subr.mxu0 0.0
    %1732 = vmatpush2.msra.mxu0 0.0
    %1733 = vmatprep.subr.mxu0 0.0
    %1734 = vmatpush2.msra.mxu0 0.0
    %1735 = vmatprep.subr.mxu0 0.0
    %1736 = vmatpush2.msra.mxu0 0.0
    %1737 = vmatprep.subr.mxu0 0.0
    %1738 = vmatpush2.msra.mxu0 0.0
    %1739 = vmatprep.subr.mxu0 0.0
    %1740 = vmatpush2.msra.mxu0 0.0
    %1741 = vmatprep.subr.mxu0 0.0
    %1742 = vmatpush2.msra.mxu0 0.0
    %1743 = vmatprep.subr.mxu0 0.0
    %1744 = vmatpush2.msra.mxu0 0.0
    %1745 = vmatprep.subr.mxu0 0.0
    %1746 = vmatpush2.msra.mxu0 0.0
    %1747 = vmatprep.mubr.f32.mxu0 0.0
    %v1748 = vand.u32 %v1267, 4294901760
    %1749 = vmatmul.mubr.f32.gmra.mxu0 %v1748
    %v1750 = vpop.f32.mrf.mxu0
    %v1751 = vadd.f32 %v1676, %v1750
    %v1752 = vpop.f32.mrf.mxu0
    %1753 = vdwg.mxu0
    %v1754 = vadd.f32 %v730, %v1751
    %v1755 = vxor.u32 %v1754, 2147483648
    %v1756 = vmul.f32 %v1755, 1.442695
    %v1757 = vpow.pop %v1756
    %v1758 = vadd.f32 %v1757, 1.0
    %v1759 = vrcp.pop %v1758
    %v1760 = vmul.f32 1.0, %v1759
    %v1761 = vtanh.pop %v1754
    %1762 = vrot.lane.b32.xlu0 %v1760, 96
    %v1763 = vpop.permute.xlu0 %1762
    %1764 = vrot.lane.b32.xlu0 %v1761, 64
    %v1765 = vpop.permute.xlu0 %1764
    %1766 = vrot.lane.b32.xlu0 %v1760, 32
    %v1767 = vpop.permute.xlu0 %1766
    %v1768 = vmul.f32 %v1763, %v1262
    %v1769 = vmul.f32 %v1760, %v1765
    %v1770 = vadd.f32 %v1768, %v1769
    %v1771 = vtanh.pop %v1770
    %v1772 = vmul.f32 %v1767, %v1771
    %1773 = vst.msk [vmem:[#allocation2 + $0x8] sm:$0xff] %vm757, %v1772
    %v1775 = vsel %vm757, %v1772, 0
    %1777 = vmatprep.subr.mxu0 0.0
    %1778 = vmatpush1.msra.mxu0 0.0
    %1779 = vmatprep.subr.mxu0 0.0
    %1780 = vmatpush1.msra.mxu0 0.0
    %1781 = vmatprep.subr.mxu0 0.0
    %1782 = vmatpush1.msra.mxu0 0.0
    %1783 = vmatprep.subr.mxu0 0.0
    %1784 = vmatpush1.msra.mxu0 0.0
    %1785 = vmatprep.subr.mxu0 0.0
    %1786 = vmatpush1.msra.mxu0 0.0
    %1787 = vmatprep.subr.mxu0 0.0
    %1788 = vmatpush1.msra.mxu0 0.0
    %1789 = vmatprep.subr.mxu0 0.0
    %1790 = vmatpush1.msra.mxu0 0.0
    %1791 = vmatprep.subr.mxu0 0.0
    %1792 = vmatpush1.msra.mxu0 0.0
    %1793 = vmatprep.subr.mxu0 0.0
    %1794 = vmatpush1.msra.mxu0 0.0
    %1795 = vmatprep.subr.mxu0 0.0
    %1796 = vmatpush1.msra.mxu0 0.0
    %1797 = vmatprep.subr.mxu0 0.0
    %1798 = vmatpush1.msra.mxu0 0.0
    %1799 = vmatprep.subr.mxu0 0.0
    %1800 = vmatpush1.msra.mxu0 0.0
    %1801 = vmatprep.subr.mxu0 0.0
    %v1802 = vand.u32 %v69, 4294901760
    %1803 = vmatpush1.msra.mxu0 %v1802
    %1804 = vmatprep.subr.mxu0 0.0
    %v1805 = vand.u32 %v68, 4294901760
    %1806 = vmatpush1.msra.mxu0 %v1805
    %1807 = vmatprep.subr.mxu0 0.0
    %v1808 = vand.u32 %v67, 4294901760
    %1809 = vmatpush1.msra.mxu0 %v1808
    %1810 = vmatprep.subr.mxu0 0.0
    %v1811 = vand.u32 %v66, 4294901760
    %1812 = vmatpush1.msra.mxu0 %v1811
    %1813 = vmatprep.subr.mxu0 0.0
    %1814 = vmatpush2.msra.mxu0 0.0
    %1815 = vmatprep.subr.mxu0 0.0
    %1816 = vmatpush2.msra.mxu0 0.0
    %1817 = vmatprep.subr.mxu0 0.0
    %1818 = vmatpush2.msra.mxu0 0.0
    %1819 = vmatprep.subr.mxu0 0.0
    %1820 = vmatpush2.msra.mxu0 0.0
    %1821 = vmatprep.subr.mxu0 0.0
    %1822 = vmatpush2.msra.mxu0 0.0
    %1823 = vmatprep.subr.mxu0 0.0
    %1824 = vmatpush2.msra.mxu0 0.0
    %1825 = vmatprep.subr.mxu0 0.0
    %1826 = vmatpush2.msra.mxu0 0.0
    %1827 = vmatprep.subr.mxu0 0.0
    %1828 = vmatpush2.msra.mxu0 0.0
    %1829 = vmatprep.subr.mxu0 0.0
    %1830 = vmatpush2.msra.mxu0 0.0
    %1831 = vmatprep.subr.mxu0 0.0
    %1832 = vmatpush2.msra.mxu0 0.0
    %1833 = vmatprep.subr.mxu0 0.0
    %1834 = vmatpush2.msra.mxu0 0.0
    %1835 = vmatprep.subr.mxu0 0.0
    %1836 = vmatpush2.msra.mxu0 0.0
    %1837 = vmatprep.subr.mxu0 0.0
    %1838 = vmatpush2.msra.mxu0 0.0
    %1839 = vmatprep.subr.mxu0 0.0
    %1840 = vmatpush2.msra.mxu0 0.0
    %1841 = vmatprep.subr.mxu0 0.0
    %1842 = vmatpush2.msra.mxu0 0.0
    %1843 = vmatprep.subr.mxu0 0.0
    %1844 = vmatpush2.msra.mxu0 0.0
    %1845 = vmatprep.mubr.f32.mxu0 0.0
    %v1846 = vand.u32 %v1775, 4294901760
    %v1847 = vsub.f32 %v1775, %v1846
    %v1848 = vand.u32 %v1847, 4294901760
    %v1849 = vsub.f32 %v1847, %v1848
    %v1850 = vand.u32 %v1849, 4294901760
    %1851 = vmatmul.mubr.f32.gmra.mxu0 %v1850
    %v1852 = vpop.f32.mrf.mxu0
    %v1853 = vadd.f32 0.0, %v1852
    %v1854 = vpop.f32.mrf.mxu0
    %1855 = vdwg.mxu0
    %1856 = vmatprep.subr.mxu0 0.0
    %1857 = vmatpush1.msra.mxu0 0.0
    %1858 = vmatprep.subr.mxu0 0.0
    %1859 = vmatpush1.msra.mxu0 0.0
    %1860 = vmatprep.subr.mxu0 0.0
    %1861 = vmatpush1.msra.mxu0 0.0
    %1862 = vmatprep.subr.mxu0 0.0
    %1863 = vmatpush1.msra.mxu0 0.0
    %1864 = vmatprep.subr.mxu0 0.0
    %1865 = vmatpush1.msra.mxu0 0.0
    %1866 = vmatprep.subr.mxu0 0.0
    %1867 = vmatpush1.msra.mxu0 0.0
    %1868 = vmatprep.subr.mxu0 0.0
    %1869 = vmatpush1.msra.mxu0 0.0
    %1870 = vmatprep.subr.mxu0 0.0
    %1871 = vmatpush1.msra.mxu0 0.0
    %1872 = vmatprep.subr.mxu0 0.0
    %1873 = vmatpush1.msra.mxu0 0.0
    %1874 = vmatprep.subr.mxu0 0.0
    %1875 = vmatpush1.msra.mxu0 0.0
    %1876 = vmatprep.subr.mxu0 0.0
    %1877 = vmatpush1.msra.mxu0 0.0
    %1878 = vmatprep.subr.mxu0 0.0
    %1879 = vmatpush1.msra.mxu0 0.0
    %1880 = vmatprep.subr.mxu0 0.0
    %v1881 = vand.u32 %v69, 4294901760
    %v1882 = vsub.f32 %v69, %v1881
    %v1883 = vand.u32 %v1882, 4294901760
    %v1884 = vsub.f32 %v1882, %v1883
    %v1885 = vand.u32 %v1884, 4294901760
    %1886 = vmatpush1.msra.mxu0 %v1885
    %1887 = vmatprep.subr.mxu0 0.0
    %v1888 = vand.u32 %v68, 4294901760
    %v1889 = vsub.f32 %v68, %v1888
    %v1890 = vand.u32 %v1889, 4294901760
    %v1891 = vsub.f32 %v1889, %v1890
    %v1892 = vand.u32 %v1891, 4294901760
    %1893 = vmatpush1.msra.mxu0 %v1892
    %1894 = vmatprep.subr.mxu0 0.0
    %v1895 = vand.u32 %v67, 4294901760
    %v1896 = vsub.f32 %v67, %v1895
    %v1897 = vand.u32 %v1896, 4294901760
    %v1898 = vsub.f32 %v1896, %v1897
    %v1899 = vand.u32 %v1898, 4294901760
    %1900 = vmatpush1.msra.mxu0 %v1899
    %1901 = vmatprep.subr.mxu0 0.0
    %v1902 = vand.u32 %v66, 4294901760
    %v1903 = vsub.f32 %v66, %v1902
    %v1904 = vand.u32 %v1903, 4294901760
    %v1905 = vsub.f32 %v1903, %v1904
    %v1906 = vand.u32 %v1905, 4294901760
    %1907 = vmatpush1.msra.mxu0 %v1906
    %1908 = vmatprep.subr.mxu0 0.0
    %1909 = vmatpush2.msra.mxu0 0.0
    %1910 = vmatprep.subr.mxu0 0.0
    %1911 = vmatpush2.msra.mxu0 0.0
    %1912 = vmatprep.subr.mxu0 0.0
    %1913 = vmatpush2.msra.mxu0 0.0
    %1914 = vmatprep.subr.mxu0 0.0
    %1915 = vmatpush2.msra.mxu0 0.0
    %1916 = vmatprep.subr.mxu0 0.0
    %1917 = vmatpush2.msra.mxu0 0.0
    %1918 = vmatprep.subr.mxu0 0.0
    %1919 = vmatpush2.msra.mxu0 0.0
    %1920 = vmatprep.subr.mxu0 0.0
    %1921 = vmatpush2.msra.mxu0 0.0
    %1922 = vmatprep.subr.mxu0 0.0
    %1923 = vmatpush2.msra.mxu0 0.0
    %1924 = vmatprep.subr.mxu0 0.0
    %1925 = vmatpush2.msra.mxu0 0.0
    %1926 = vmatprep.subr.mxu0 0.0
    %1927 = vmatpush2.msra.mxu0 0.0
    %1928 = vmatprep.subr.mxu0 0.0
    %1929 = vmatpush2.msra.mxu0 0.0
    %1930 = vmatprep.subr.mxu0 0.0
    %1931 = vmatpush2.msra.mxu0 0.0
    %1932 = vmatprep.subr.mxu0 0.0
    %1933 = vmatpush2.msra.mxu0 0.0
    %1934 = vmatprep.subr.mxu0 0.0
    %1935 = vmatpush2.msra.mxu0 0.0
    %1936 = vmatprep.subr.mxu0 0.0
    %1937 = vmatpush2.msra.mxu0 0.0
    %1938 = vmatprep.subr.mxu0 0.0
    %1939 = vmatpush2.msra.mxu0 0.0
    %1940 = vmatprep.mubr.f32.mxu0 0.0
    %v1941 = vand.u32 %v1775, 4294901760
    %1942 = vmatmul.mubr.f32.gmra.mxu0 %v1941
    %v1943 = vpop.f32.mrf.mxu0
    %v1944 = vadd.f32 %v1853, %v1943
    %v1945 = vpop.f32.mrf.mxu0
    %1946 = vdwg.mxu0
    %1947 = vmatprep.subr.mxu0 0.0
    %1948 = vmatpush1.msra.mxu0 0.0
    %1949 = vmatprep.subr.mxu0 0.0
    %1950 = vmatpush1.msra.mxu0 0.0
    %1951 = vmatprep.subr.mxu0 0.0
    %1952 = vmatpush1.msra.mxu0 0.0
    %1953 = vmatprep.subr.mxu0 0.0
    %1954 = vmatpush1.msra.mxu0 0.0
    %1955 = vmatprep.subr.mxu0 0.0
    %1956 = vmatpush1.msra.mxu0 0.0
    %1957 = vmatprep.subr.mxu0 0.0
    %1958 = vmatpush1.msra.mxu0 0.0
    %1959 = vmatprep.subr.mxu0 0.0
    %1960 = vmatpush1.msra.mxu0 0.0
    %1961 = vmatprep.subr.mxu0 0.0
    %1962 = vmatpush1.msra.mxu0 0.0
    %1963 = vmatprep.subr.mxu0 0.0
    %1964 = vmatpush1.msra.mxu0 0.0
    %1965 = vmatprep.subr.mxu0 0.0
    %1966 = vmatpush1.msra.mxu0 0.0
    %1967 = vmatprep.subr.mxu0 0.0
    %1968 = vmatpush1.msra.mxu0 0.0
    %1969 = vmatprep.subr.mxu0 0.0
    %1970 = vmatpush1.msra.mxu0 0.0
    %1971 = vmatprep.subr.mxu0 0.0
    %v1972 = vand.u32 %v69, 4294901760
    %v1973 = vsub.f32 %v69, %v1972
    %1974 = vmatpush1.msra.mxu0 %v1973
    %1975 = vmatprep.subr.mxu0 0.0
    %v1976 = vand.u32 %v68, 4294901760
    %v1977 = vsub.f32 %v68, %v1976
    %1978 = vmatpush1.msra.mxu0 %v1977
    %1979 = vmatprep.subr.mxu0 0.0
    %v1980 = vand.u32 %v67, 4294901760
    %v1981 = vsub.f32 %v67, %v1980
    %1982 = vmatpush1.msra.mxu0 %v1981
    %1983 = vmatprep.subr.mxu0 0.0
    %v1984 = vand.u32 %v66, 4294901760
    %v1985 = vsub.f32 %v66, %v1984
    %1986 = vmatpush1.msra.mxu0 %v1985
    %1987 = vmatprep.subr.mxu0 0.0
    %1988 = vmatpush2.msra.mxu0 0.0
    %1989 = vmatprep.subr.mxu0 0.0
    %1990 = vmatpush2.msra.mxu0 0.0
    %1991 = vmatprep.subr.mxu0 0.0
    %1992 = vmatpush2.msra.mxu0 0.0
    %1993 = vmatprep.subr.mxu0 0.0
    %1994 = vmatpush2.msra.mxu0 0.0
    %1995 = vmatprep.subr.mxu0 0.0
    %1996 = vmatpush2.msra.mxu0 0.0
    %1997 = vmatprep.subr.mxu0 0.0
    %1998 = vmatpush2.msra.mxu0 0.0
    %1999 = vmatprep.subr.mxu0 0.0
    %2000 = vmatpush2.msra.mxu0 0.0
    %2001 = vmatprep.subr.mxu0 0.0
    %2002 = vmatpush2.msra.mxu0 0.0
    %2003 = vmatprep.subr.mxu0 0.0
    %2004 = vmatpush2.msra.mxu0 0.0
    %2005 = vmatprep.subr.mxu0 0.0
    %2006 = vmatpush2.msra.mxu0 0.0
    %2007 = vmatprep.subr.mxu0 0.0
    %2008 = vmatpush2.msra.mxu0 0.0
    %2009 = vmatprep.subr.mxu0 0.0
    %2010 = vmatpush2.msra.mxu0 0.0
    %2011 = vmatprep.subr.mxu0 0.0
    %2012 = vmatpush2.msra.mxu0 0.0
    %2013 = vmatprep.subr.mxu0 0.0
    %2014 = vmatpush2.msra.mxu0 0.0
    %2015 = vmatprep.subr.mxu0 0.0
    %2016 = vmatpush2.msra.mxu0 0.0
    %2017 = vmatprep.subr.mxu0 0.0
    %2018 = vmatpush2.msra.mxu0 0.0
    %2019 = vmatprep.mubr.f32.mxu0 0.0
    %v2020 = vand.u32 %v1775, 4294901760
    %v2021 = vsub.f32 %v1775, %v2020
    %2022 = vmatmul.mubr.f32.gmra.mxu0 %v2021
    %v2023 = vpop.f32.mrf.mxu0
    %v2024 = vadd.f32 %v1944, %v2023
    %v2025 = vpop.f32.mrf.mxu0
    %2026 = vdwg.mxu0
    %2027 = vmatprep.subr.mxu0 0.0
    %2028 = vmatpush1.msra.mxu0 0.0
    %2029 = vmatprep.subr.mxu0 0.0
    %2030 = vmatpush1.msra.mxu0 0.0
    %2031 = vmatprep.subr.mxu0 0.0
    %2032 = vmatpush1.msra.mxu0 0.0
    %2033 = vmatprep.subr.mxu0 0.0
    %2034 = vmatpush1.msra.mxu0 0.0
    %2035 = vmatprep.subr.mxu0 0.0
    %2036 = vmatpush1.msra.mxu0 0.0
    %2037 = vmatprep.subr.mxu0 0.0
    %2038 = vmatpush1.msra.mxu0 0.0
    %2039 = vmatprep.subr.mxu0 0.0
    %2040 = vmatpush1.msra.mxu0 0.0
    %2041 = vmatprep.subr.mxu0 0.0
    %2042 = vmatpush1.msra.mxu0 0.0
    %2043 = vmatprep.subr.mxu0 0.0
    %2044 = vmatpush1.msra.mxu0 0.0
    %2045 = vmatprep.subr.mxu0 0.0
    %2046 = vmatpush1.msra.mxu0 0.0
    %2047 = vmatprep.subr.mxu0 0.0
    %2048 = vmatpush1.msra.mxu0 0.0
    %2049 = vmatprep.subr.mxu0 0.0
    %2050 = vmatpush1.msra.mxu0 0.0
    %2051 = vmatprep.subr.mxu0 0.0
    %v2052 = vand.u32 %v69, 4294901760
    %2053 = vmatpush1.msra.mxu0 %v2052
    %2054 = vmatprep.subr.mxu0 0.0
    %v2055 = vand.u32 %v68, 4294901760
    %2056 = vmatpush1.msra.mxu0 %v2055
    %2057 = vmatprep.subr.mxu0 0.0
    %v2058 = vand.u32 %v67, 4294901760
    %2059 = vmatpush1.msra.mxu0 %v2058
    %2060 = vmatprep.subr.mxu0 0.0
    %v2061 = vand.u32 %v66, 4294901760
    %2062 = vmatpush1.msra.mxu0 %v2061
    %2063 = vmatprep.subr.mxu0 0.0
    %2064 = vmatpush2.msra.mxu0 0.0
    %2065 = vmatprep.subr.mxu0 0.0
    %2066 = vmatpush2.msra.mxu0 0.0
    %2067 = vmatprep.subr.mxu0 0.0
    %2068 = vmatpush2.msra.mxu0 0.0
    %2069 = vmatprep.subr.mxu0 0.0
    %2070 = vmatpush2.msra.mxu0 0.0
    %2071 = vmatprep.subr.mxu0 0.0
    %2072 = vmatpush2.msra.mxu0 0.0
    %2073 = vmatprep.subr.mxu0 0.0
    %2074 = vmatpush2.msra.mxu0 0.0
    %2075 = vmatprep.subr.mxu0 0.0
    %2076 = vmatpush2.msra.mxu0 0.0
    %2077 = vmatprep.subr.mxu0 0.0
    %2078 = vmatpush2.msra.mxu0 0.0
    %2079 = vmatprep.subr.mxu0 0.0
    %2080 = vmatpush2.msra.mxu0 0.0
    %2081 = vmatprep.subr.mxu0 0.0
    %2082 = vmatpush2.msra.mxu0 0.0
    %2083 = vmatprep.subr.mxu0 0.0
    %2084 = vmatpush2.msra.mxu0 0.0
    %2085 = vmatprep.subr.mxu0 0.0
    %2086 = vmatpush2.msra.mxu0 0.0
    %2087 = vmatprep.subr.mxu0 0.0
    %2088 = vmatpush2.msra.mxu0 0.0
    %2089 = vmatprep.subr.mxu0 0.0
    %2090 = vmatpush2.msra.mxu0 0.0
    %2091 = vmatprep.subr.mxu0 0.0
    %2092 = vmatpush2.msra.mxu0 0.0
    %2093 = vmatprep.subr.mxu0 0.0
    %2094 = vmatpush2.msra.mxu0 0.0
    %2095 = vmatprep.mubr.f32.mxu0 0.0
    %v2096 = vand.u32 %v1775, 4294901760
    %v2097 = vsub.f32 %v1775, %v2096
    %v2098 = vand.u32 %v2097, 4294901760
    %2099 = vmatmul.mubr.f32.gmra.mxu0 %v2098
    %v2100 = vpop.f32.mrf.mxu0
    %v2101 = vadd.f32 %v2024, %v2100
    %v2102 = vpop.f32.mrf.mxu0
    %2103 = vdwg.mxu0
    %2104 = vmatprep.subr.mxu0 0.0
    %2105 = vmatpush1.msra.mxu0 0.0
    %2106 = vmatprep.subr.mxu0 0.0
    %2107 = vmatpush1.msra.mxu0 0.0
    %2108 = vmatprep.subr.mxu0 0.0
    %2109 = vmatpush1.msra.mxu0 0.0
    %2110 = vmatprep.subr.mxu0 0.0
    %2111 = vmatpush1.msra.mxu0 0.0
    %2112 = vmatprep.subr.mxu0 0.0
    %2113 = vmatpush1.msra.mxu0 0.0
    %2114 = vmatprep.subr.mxu0 0.0
    %2115 = vmatpush1.msra.mxu0 0.0
    %2116 = vmatprep.subr.mxu0 0.0
    %2117 = vmatpush1.msra.mxu0 0.0
    %2118 = vmatprep.subr.mxu0 0.0
    %2119 = vmatpush1.msra.mxu0 0.0
    %2120 = vmatprep.subr.mxu0 0.0
    %2121 = vmatpush1.msra.mxu0 0.0
    %2122 = vmatprep.subr.mxu0 0.0
    %2123 = vmatpush1.msra.mxu0 0.0
    %2124 = vmatprep.subr.mxu0 0.0
    %2125 = vmatpush1.msra.mxu0 0.0
    %2126 = vmatprep.subr.mxu0 0.0
    %2127 = vmatpush1.msra.mxu0 0.0
    %2128 = vmatprep.subr.mxu0 0.0
    %v2129 = vand.u32 %v69, 4294901760
    %v2130 = vsub.f32 %v69, %v2129
    %v2131 = vand.u32 %v2130, 4294901760
    %2132 = vmatpush1.msra.mxu0 %v2131
    %2133 = vmatprep.subr.mxu0 0.0
    %v2134 = vand.u32 %v68, 4294901760
    %v2135 = vsub.f32 %v68, %v2134
    %v2136 = vand.u32 %v2135, 4294901760
    %2137 = vmatpush1.msra.mxu0 %v2136
    %2138 = vmatprep.subr.mxu0 0.0
    %v2139 = vand.u32 %v67, 4294901760
    %v2140 = vsub.f32 %v67, %v2139
    %v2141 = vand.u32 %v2140, 4294901760
    %2142 = vmatpush1.msra.mxu0 %v2141
    %2143 = vmatprep.subr.mxu0 0.0
    %v2144 = vand.u32 %v66, 4294901760
    %v2145 = vsub.f32 %v66, %v2144
    %v2146 = vand.u32 %v2145, 4294901760
    %2147 = vmatpush1.msra.mxu0 %v2146
    %2148 = vmatprep.subr.mxu0 0.0
    %2149 = vmatpush2.msra.mxu0 0.0
    %2150 = vmatprep.subr.mxu0 0.0
    %2151 = vmatpush2.msra.mxu0 0.0
    %2152 = vmatprep.subr.mxu0 0.0
    %2153 = vmatpush2.msra.mxu0 0.0
    %2154 = vmatprep.subr.mxu0 0.0
    %2155 = vmatpush2.msra.mxu0 0.0
    %2156 = vmatprep.subr.mxu0 0.0
    %2157 = vmatpush2.msra.mxu0 0.0
    %2158 = vmatprep.subr.mxu0 0.0
    %2159 = vmatpush2.msra.mxu0 0.0
    %2160 = vmatprep.subr.mxu0 0.0
    %2161 = vmatpush2.msra.mxu0 0.0
    %2162 = vmatprep.subr.mxu0 0.0
    %2163 = vmatpush2.msra.mxu0 0.0
    %2164 = vmatprep.subr.mxu0 0.0
    %2165 = vmatpush2.msra.mxu0 0.0
    %2166 = vmatprep.subr.mxu0 0.0
    %2167 = vmatpush2.msra.mxu0 0.0
    %2168 = vmatprep.subr.mxu0 0.0
    %2169 = vmatpush2.msra.mxu0 0.0
    %2170 = vmatprep.subr.mxu0 0.0
    %2171 = vmatpush2.msra.mxu0 0.0
    %2172 = vmatprep.subr.mxu0 0.0
    %2173 = vmatpush2.msra.mxu0 0.0
    %2174 = vmatprep.subr.mxu0 0.0
    %2175 = vmatpush2.msra.mxu0 0.0
    %2176 = vmatprep.subr.mxu0 0.0
    %2177 = vmatpush2.msra.mxu0 0.0
    %2178 = vmatprep.subr.mxu0 0.0
    %2179 = vmatpush2.msra.mxu0 0.0
    %2180 = vmatprep.mubr.f32.mxu0 0.0
    %v2181 = vand.u32 %v1775, 4294901760
    %2182 = vmatmul.mubr.f32.gmra.mxu0 %v2181
    %v2183 = vpop.f32.mrf.mxu0
    %v2184 = vadd.f32 %v2101, %v2183
    %v2185 = vpop.f32.mrf.mxu0
    %2186 = vdwg.mxu0
    %2187 = vmatprep.subr.mxu0 0.0
    %2188 = vmatpush1.msra.mxu0 0.0
    %2189 = vmatprep.subr.mxu0 0.0
    %2190 = vmatpush1.msra.mxu0 0.0
    %2191 = vmatprep.subr.mxu0 0.0
    %2192 = vmatpush1.msra.mxu0 0.0
    %2193 = vmatprep.subr.mxu0 0.0
    %2194 = vmatpush1.msra.mxu0 0.0
    %2195 = vmatprep.subr.mxu0 0.0
    %2196 = vmatpush1.msra.mxu0 0.0
    %2197 = vmatprep.subr.mxu0 0.0
    %2198 = vmatpush1.msra.mxu0 0.0
    %2199 = vmatprep.subr.mxu0 0.0
    %2200 = vmatpush1.msra.mxu0 0.0
    %2201 = vmatprep.subr.mxu0 0.0
    %2202 = vmatpush1.msra.mxu0 0.0
    %2203 = vmatprep.subr.mxu0 0.0
    %2204 = vmatpush1.msra.mxu0 0.0
    %2205 = vmatprep.subr.mxu0 0.0
    %2206 = vmatpush1.msra.mxu0 0.0
    %2207 = vmatprep.subr.mxu0 0.0
    %2208 = vmatpush1.msra.mxu0 0.0
    %2209 = vmatprep.subr.mxu0 0.0
    %2210 = vmatpush1.msra.mxu0 0.0
    %2211 = vmatprep.subr.mxu0 0.0
    %v2212 = vand.u32 %v69, 4294901760
    %2213 = vmatpush1.msra.mxu0 %v2212
    %2214 = vmatprep.subr.mxu0 0.0
    %v2215 = vand.u32 %v68, 4294901760
    %2216 = vmatpush1.msra.mxu0 %v2215
    %2217 = vmatprep.subr.mxu0 0.0
    %v2218 = vand.u32 %v67, 4294901760
    %2219 = vmatpush1.msra.mxu0 %v2218
    %2220 = vmatprep.subr.mxu0 0.0
    %v2221 = vand.u32 %v66, 4294901760
    %2222 = vmatpush1.msra.mxu0 %v2221
    %2223 = vmatprep.subr.mxu0 0.0
    %2224 = vmatpush2.msra.mxu0 0.0
    %2225 = vmatprep.subr.mxu0 0.0
    %2226 = vmatpush2.msra.mxu0 0.0
    %2227 = vmatprep.subr.mxu0 0.0
    %2228 = vmatpush2.msra.mxu0 0.0
    %2229 = vmatprep.subr.mxu0 0.0
    %2230 = vmatpush2.msra.mxu0 0.0
    %2231 = vmatprep.subr.mxu0 0.0
    %2232 = vmatpush2.msra.mxu0 0.0
    %2233 = vmatprep.subr.mxu0 0.0
    %2234 = vmatpush2.msra.mxu0 0.0
    %2235 = vmatprep.subr.mxu0 0.0
    %2236 = vmatpush2.msra.mxu0 0.0
    %2237 = vmatprep.subr.mxu0 0.0
    %2238 = vmatpush2.msra.mxu0 0.0
    %2239 = vmatprep.subr.mxu0 0.0
    %2240 = vmatpush2.msra.mxu0 0.0
    %2241 = vmatprep.subr.mxu0 0.0
    %2242 = vmatpush2.msra.mxu0 0.0
    %2243 = vmatprep.subr.mxu0 0.0
    %2244 = vmatpush2.msra.mxu0 0.0
    %2245 = vmatprep.subr.mxu0 0.0
    %2246 = vmatpush2.msra.mxu0 0.0
    %2247 = vmatprep.subr.mxu0 0.0
    %2248 = vmatpush2.msra.mxu0 0.0
    %2249 = vmatprep.subr.mxu0 0.0
    %2250 = vmatpush2.msra.mxu0 0.0
    %2251 = vmatprep.subr.mxu0 0.0
    %2252 = vmatpush2.msra.mxu0 0.0
    %2253 = vmatprep.subr.mxu0 0.0
    %2254 = vmatpush2.msra.mxu0 0.0
    %2255 = vmatprep.mubr.f32.mxu0 0.0
    %v2256 = vand.u32 %v1775, 4294901760
    %2257 = vmatmul.mubr.f32.gmra.mxu0 %v2256
    %v2258 = vpop.f32.mrf.mxu0
    %v2259 = vadd.f32 %v2184, %v2258
    %v2260 = vpop.f32.mrf.mxu0
    %2261 = vdwg.mxu0
    %v2262 = vadd.f32 %v736, %v2259
    %v2263 = vxor.u32 %v2262, 2147483648
    %v2264 = vmul.f32 %v2263, 1.442695
    %v2265 = vpow.pop %v2264
    %v2266 = vadd.f32 %v2265, 1.0
    %v2267 = vrcp.pop %v2266
    %v2268 = vmul.f32 1.0, %v2267
    %v2269 = vtanh.pop %v2262
    %2270 = vrot.lane.b32.xlu0 %v2268, 96
    %v2271 = vpop.permute.xlu0 %2270
    %2272 = vrot.lane.b32.xlu0 %v2269, 64
    %v2273 = vpop.permute.xlu0 %2272
    %2274 = vrot.lane.b32.xlu0 %v2268, 32
    %v2275 = vpop.permute.xlu0 %2274
    %v2276 = vmul.f32 %v2271, %v1770
    %v2277 = vmul.f32 %v2268, %v2273
    %v2278 = vadd.f32 %v2276, %v2277
    %v2279 = vtanh.pop %v2278
    %v2280 = vmul.f32 %v2275, %v2279
    %2281 = vst.msk [vmem:[#allocation2 + $0x10] sm:$0xff] %vm757, %v2280
    %v2283 = vsel %vm757, %v2280, 0
    %2285 = vmatprep.subr.mxu0 0.0
    %2286 = vmatpush1.msra.mxu0 0.0
    %2287 = vmatprep.subr.mxu0 0.0
    %2288 = vmatpush1.msra.mxu0 0.0
    %2289 = vmatprep.subr.mxu0 0.0
    %2290 = vmatpush1.msra.mxu0 0.0
    %2291 = vmatprep.subr.mxu0 0.0
    %2292 = vmatpush1.msra.mxu0 0.0
    %2293 = vmatprep.subr.mxu0 0.0
    %2294 = vmatpush1.msra.mxu0 0.0
    %2295 = vmatprep.subr.mxu0 0.0
    %2296 = vmatpush1.msra.mxu0 0.0
    %2297 = vmatprep.subr.mxu0 0.0
    %2298 = vmatpush1.msra.mxu0 0.0
    %2299 = vmatprep.subr.mxu0 0.0
    %2300 = vmatpush1.msra.mxu0 0.0
    %2301 = vmatprep.subr.mxu0 0.0
    %2302 = vmatpush1.msra.mxu0 0.0
    %2303 = vmatprep.subr.mxu0 0.0
    %2304 = vmatpush1.msra.mxu0 0.0
    %2305 = vmatprep.subr.mxu0 0.0
    %2306 = vmatpush1.msra.mxu0 0.0
    %2307 = vmatprep.subr.mxu0 0.0
    %2308 = vmatpush1.msra.mxu0 0.0
    %2309 = vmatprep.subr.mxu0 0.0
    %v2310 = vand.u32 %v69, 4294901760
    %2311 = vmatpush1.msra.mxu0 %v2310
    %2312 = vmatprep.subr.mxu0 0.0
    %v2313 = vand.u32 %v68, 4294901760
    %2314 = vmatpush1.msra.mxu0 %v2313
    %2315 = vmatprep.subr.mxu0 0.0
    %v2316 = vand.u32 %v67, 4294901760
    %2317 = vmatpush1.msra.mxu0 %v2316
    %2318 = vmatprep.subr.mxu0 0.0
    %v2319 = vand.u32 %v66, 4294901760
    %2320 = vmatpush1.msra.mxu0 %v2319
    %2321 = vmatprep.subr.mxu0 0.0
    %2322 = vmatpush2.msra.mxu0 0.0
    %2323 = vmatprep.subr.mxu0 0.0
    %2324 = vmatpush2.msra.mxu0 0.0
    %2325 = vmatprep.subr.mxu0 0.0
    %2326 = vmatpush2.msra.mxu0 0.0
    %2327 = vmatprep.subr.mxu0 0.0
    %2328 = vmatpush2.msra.mxu0 0.0
    %2329 = vmatprep.subr.mxu0 0.0
    %2330 = vmatpush2.msra.mxu0 0.0
    %2331 = vmatprep.subr.mxu0 0.0
    %2332 = vmatpush2.msra.mxu0 0.0
    %2333 = vmatprep.subr.mxu0 0.0
    %2334 = vmatpush2.msra.mxu0 0.0
    %2335 = vmatprep.subr.mxu0 0.0
    %2336 = vmatpush2.msra.mxu0 0.0
    %2337 = vmatprep.subr.mxu0 0.0
    %2338 = vmatpush2.msra.mxu0 0.0
    %2339 = vmatprep.subr.mxu0 0.0
    %2340 = vmatpush2.msra.mxu0 0.0
    %2341 = vmatprep.subr.mxu0 0.0
    %2342 = vmatpush2.msra.mxu0 0.0
    %2343 = vmatprep.subr.mxu0 0.0
    %2344 = vmatpush2.msra.mxu0 0.0
    %2345 = vmatprep.subr.mxu0 0.0
    %2346 = vmatpush2.msra.mxu0 0.0
    %2347 = vmatprep.subr.mxu0 0.0
    %2348 = vmatpush2.msra.mxu0 0.0
    %2349 = vmatprep.subr.mxu0 0.0
    %2350 = vmatpush2.msra.mxu0 0.0
    %2351 = vmatprep.subr.mxu0 0.0
    %2352 = vmatpush2.msra.mxu0 0.0
    %2353 = vmatprep.mubr.f32.mxu0 0.0
    %v2354 = vand.u32 %v2283, 4294901760
    %v2355 = vsub.f32 %v2283, %v2354
    %v2356 = vand.u32 %v2355, 4294901760
    %v2357 = vsub.f32 %v2355, %v2356
    %v2358 = vand.u32 %v2357, 4294901760
    %2359 = vmatmul.mubr.f32.gmra.mxu0 %v2358
    %v2360 = vpop.f32.mrf.mxu0
    %v2361 = vadd.f32 0.0, %v2360
    %v2362 = vpop.f32.mrf.mxu0
    %2363 = vdwg.mxu0
    %2364 = vmatprep.subr.mxu0 0.0
    %2365 = vmatpush1.msra.mxu0 0.0
    %2366 = vmatprep.subr.mxu0 0.0
    %2367 = vmatpush1.msra.mxu0 0.0
    %2368 = vmatprep.subr.mxu0 0.0
    %2369 = vmatpush1.msra.mxu0 0.0
    %2370 = vmatprep.subr.mxu0 0.0
    %2371 = vmatpush1.msra.mxu0 0.0
    %2372 = vmatprep.subr.mxu0 0.0
    %2373 = vmatpush1.msra.mxu0 0.0
    %2374 = vmatprep.subr.mxu0 0.0
    %2375 = vmatpush1.msra.mxu0 0.0
    %2376 = vmatprep.subr.mxu0 0.0
    %2377 = vmatpush1.msra.mxu0 0.0
    %2378 = vmatprep.subr.mxu0 0.0
    %2379 = vmatpush1.msra.mxu0 0.0
    %2380 = vmatprep.subr.mxu0 0.0
    %2381 = vmatpush1.msra.mxu0 0.0
    %2382 = vmatprep.subr.mxu0 0.0
    %2383 = vmatpush1.msra.mxu0 0.0
    %2384 = vmatprep.subr.mxu0 0.0
    %2385 = vmatpush1.msra.mxu0 0.0
    %2386 = vmatprep.subr.mxu0 0.0
    %2387 = vmatpush1.msra.mxu0 0.0
    %2388 = vmatprep.subr.mxu0 0.0
    %v2389 = vand.u32 %v69, 4294901760
    %v2390 = vsub.f32 %v69, %v2389
    %v2391 = vand.u32 %v2390, 4294901760
    %v2392 = vsub.f32 %v2390, %v2391
    %v2393 = vand.u32 %v2392, 4294901760
    %2394 = vmatpush1.msra.mxu0 %v2393
    %2395 = vmatprep.subr.mxu0 0.0
    %v2396 = vand.u32 %v68, 4294901760
    %v2397 = vsub.f32 %v68, %v2396
    %v2398 = vand.u32 %v2397, 4294901760
    %v2399 = vsub.f32 %v2397, %v2398
    %v2400 = vand.u32 %v2399, 4294901760
    %2401 = vmatpush1.msra.mxu0 %v2400
    %2402 = vmatprep.subr.mxu0 0.0
    %v2403 = vand.u32 %v67, 4294901760
    %v2404 = vsub.f32 %v67, %v2403
    %v2405 = vand.u32 %v2404, 4294901760
    %v2406 = vsub.f32 %v2404, %v2405
    %v2407 = vand.u32 %v2406, 4294901760
    %2408 = vmatpush1.msra.mxu0 %v2407
    %2409 = vmatprep.subr.mxu0 0.0
    %v2410 = vand.u32 %v66, 4294901760
    %v2411 = vsub.f32 %v66, %v2410
    %v2412 = vand.u32 %v2411, 4294901760
    %v2413 = vsub.f32 %v2411, %v2412
    %v2414 = vand.u32 %v2413, 4294901760
    %2415 = vmatpush1.msra.mxu0 %v2414
    %2416 = vmatprep.subr.mxu0 0.0
    %2417 = vmatpush2.msra.mxu0 0.0
    %2418 = vmatprep.subr.mxu0 0.0
    %2419 = vmatpush2.msra.mxu0 0.0
    %2420 = vmatprep.subr.mxu0 0.0
    %2421 = vmatpush2.msra.mxu0 0.0
    %2422 = vmatprep.subr.mxu0 0.0
    %2423 = vmatpush2.msra.mxu0 0.0
    %2424 = vmatprep.subr.mxu0 0.0
    %2425 = vmatpush2.msra.mxu0 0.0
    %2426 = vmatprep.subr.mxu0 0.0
    %2427 = vmatpush2.msra.mxu0 0.0
    %2428 = vmatprep.subr.mxu0 0.0
    %2429 = vmatpush2.msra.mxu0 0.0
    %2430 = vmatprep.subr.mxu0 0.0
    %2431 = vmatpush2.msra.mxu0 0.0
    %2432 = vmatprep.subr.mxu0 0.0
    %2433 = vmatpush2.msra.mxu0 0.0
    %2434 = vmatprep.subr.mxu0 0.0
    %2435 = vmatpush2.msra.mxu0 0.0
    %2436 = vmatprep.subr.mxu0 0.0
    %2437 = vmatpush2.msra.mxu0 0.0
    %2438 = vmatprep.subr.mxu0 0.0
    %2439 = vmatpush2.msra.mxu0 0.0
    %2440 = vmatprep.subr.mxu0 0.0
    %2441 = vmatpush2.msra.mxu0 0.0
    %2442 = vmatprep.subr.mxu0 0.0
    %2443 = vmatpush2.msra.mxu0 0.0
    %2444 = vmatprep.subr.mxu0 0.0
    %2445 = vmatpush2.msra.mxu0 0.0
    %2446 = vmatprep.subr.mxu0 0.0
    %2447 = vmatpush2.msra.mxu0 0.0
    %2448 = vmatprep.mubr.f32.mxu0 0.0
    %v2449 = vand.u32 %v2283, 4294901760
    %2450 = vmatmul.mubr.f32.gmra.mxu0 %v2449
    %v2451 = vpop.f32.mrf.mxu0
    %v2452 = vadd.f32 %v2361, %v2451
    %v2453 = vpop.f32.mrf.mxu0
    %2454 = vdwg.mxu0
    %2455 = vmatprep.subr.mxu0 0.0
    %2456 = vmatpush1.msra.mxu0 0.0
    %2457 = vmatprep.subr.mxu0 0.0
    %2458 = vmatpush1.msra.mxu0 0.0
    %2459 = vmatprep.subr.mxu0 0.0
    %2460 = vmatpush1.msra.mxu0 0.0
    %2461 = vmatprep.subr.mxu0 0.0
    %2462 = vmatpush1.msra.mxu0 0.0
    %2463 = vmatprep.subr.mxu0 0.0
    %2464 = vmatpush1.msra.mxu0 0.0
    %2465 = vmatprep.subr.mxu0 0.0
    %2466 = vmatpush1.msra.mxu0 0.0
    %2467 = vmatprep.subr.mxu0 0.0
    %2468 = vmatpush1.msra.mxu0 0.0
    %2469 = vmatprep.subr.mxu0 0.0
    %2470 = vmatpush1.msra.mxu0 0.0
    %2471 = vmatprep.subr.mxu0 0.0
    %2472 = vmatpush1.msra.mxu0 0.0
    %2473 = vmatprep.subr.mxu0 0.0
    %2474 = vmatpush1.msra.mxu0 0.0
    %2475 = vmatprep.subr.mxu0 0.0
    %2476 = vmatpush1.msra.mxu0 0.0
    %2477 = vmatprep.subr.mxu0 0.0
    %2478 = vmatpush1.msra.mxu0 0.0
    %2479 = vmatprep.subr.mxu0 0.0
    %v2480 = vand.u32 %v69, 4294901760
    %v2481 = vsub.f32 %v69, %v2480
    %2482 = vmatpush1.msra.mxu0 %v2481
    %2483 = vmatprep.subr.mxu0 0.0
    %v2484 = vand.u32 %v68, 4294901760
    %v2485 = vsub.f32 %v68, %v2484
    %2486 = vmatpush1.msra.mxu0 %v2485
    %2487 = vmatprep.subr.mxu0 0.0
    %v2488 = vand.u32 %v67, 4294901760
    %v2489 = vsub.f32 %v67, %v2488
    %2490 = vmatpush1.msra.mxu0 %v2489
    %2491 = vmatprep.subr.mxu0 0.0
    %v2492 = vand.u32 %v66, 4294901760
    %v2493 = vsub.f32 %v66, %v2492
    %2494 = vmatpush1.msra.mxu0 %v2493
    %2495 = vmatprep.subr.mxu0 0.0
    %2496 = vmatpush2.msra.mxu0 0.0
    %2497 = vmatprep.subr.mxu0 0.0
    %2498 = vmatpush2.msra.mxu0 0.0
    %2499 = vmatprep.subr.mxu0 0.0
    %2500 = vmatpush2.msra.mxu0 0.0
    %2501 = vmatprep.subr.mxu0 0.0
    %2502 = vmatpush2.msra.mxu0 0.0
    %2503 = vmatprep.subr.mxu0 0.0
    %2504 = vmatpush2.msra.mxu0 0.0
    %2505 = vmatprep.subr.mxu0 0.0
    %2506 = vmatpush2.msra.mxu0 0.0
    %2507 = vmatprep.subr.mxu0 0.0
    %2508 = vmatpush2.msra.mxu0 0.0
    %2509 = vmatprep.subr.mxu0 0.0
    %2510 = vmatpush2.msra.mxu0 0.0
    %2511 = vmatprep.subr.mxu0 0.0
    %2512 = vmatpush2.msra.mxu0 0.0
    %2513 = vmatprep.subr.mxu0 0.0
    %2514 = vmatpush2.msra.mxu0 0.0
    %2515 = vmatprep.subr.mxu0 0.0
    %2516 = vmatpush2.msra.mxu0 0.0
    %2517 = vmatprep.subr.mxu0 0.0
    %2518 = vmatpush2.msra.mxu0 0.0
    %2519 = vmatprep.subr.mxu0 0.0
    %2520 = vmatpush2.msra.mxu0 0.0
    %2521 = vmatprep.subr.mxu0 0.0
    %2522 = vmatpush2.msra.mxu0 0.0
    %2523 = vmatprep.subr.mxu0 0.0
    %2524 = vmatpush2.msra.mxu0 0.0
    %2525 = vmatprep.subr.mxu0 0.0
    %2526 = vmatpush2.msra.mxu0 0.0
    %2527 = vmatprep.mubr.f32.mxu0 0.0
    %v2528 = vand.u32 %v2283, 4294901760
    %v2529 = vsub.f32 %v2283, %v2528
    %2530 = vmatmul.mubr.f32.gmra.mxu0 %v2529
    %v2531 = vpop.f32.mrf.mxu0
    %v2532 = vadd.f32 %v2452, %v2531
    %v2533 = vpop.f32.mrf.mxu0
    %2534 = vdwg.mxu0
    %2535 = vmatprep.subr.mxu0 0.0
    %2536 = vmatpush1.msra.mxu0 0.0
    %2537 = vmatprep.subr.mxu0 0.0
    %2538 = vmatpush1.msra.mxu0 0.0
    %2539 = vmatprep.subr.mxu0 0.0
    %2540 = vmatpush1.msra.mxu0 0.0
    %2541 = vmatprep.subr.mxu0 0.0
    %2542 = vmatpush1.msra.mxu0 0.0
    %2543 = vmatprep.subr.mxu0 0.0
    %2544 = vmatpush1.msra.mxu0 0.0
    %2545 = vmatprep.subr.mxu0 0.0
    %2546 = vmatpush1.msra.mxu0 0.0
    %2547 = vmatprep.subr.mxu0 0.0
    %2548 = vmatpush1.msra.mxu0 0.0
    %2549 = vmatprep.subr.mxu0 0.0
    %2550 = vmatpush1.msra.mxu0 0.0
    %2551 = vmatprep.subr.mxu0 0.0
    %2552 = vmatpush1.msra.mxu0 0.0
    %2553 = vmatprep.subr.mxu0 0.0
    %2554 = vmatpush1.msra.mxu0 0.0
    %2555 = vmatprep.subr.mxu0 0.0
    %2556 = vmatpush1.msra.mxu0 0.0
    %2557 = vmatprep.subr.mxu0 0.0
    %2558 = vmatpush1.msra.mxu0 0.0
    %2559 = vmatprep.subr.mxu0 0.0
    %v2560 = vand.u32 %v69, 4294901760
    %2561 = vmatpush1.msra.mxu0 %v2560
    %2562 = vmatprep.subr.mxu0 0.0
    %v2563 = vand.u32 %v68, 4294901760
    %2564 = vmatpush1.msra.mxu0 %v2563
    %2565 = vmatprep.subr.mxu0 0.0
    %v2566 = vand.u32 %v67, 4294901760
    %2567 = vmatpush1.msra.mxu0 %v2566
    %2568 = vmatprep.subr.mxu0 0.0
    %v2569 = vand.u32 %v66, 4294901760
    %2570 = vmatpush1.msra.mxu0 %v2569
    %2571 = vmatprep.subr.mxu0 0.0
    %2572 = vmatpush2.msra.mxu0 0.0
    %2573 = vmatprep.subr.mxu0 0.0
    %2574 = vmatpush2.msra.mxu0 0.0
    %2575 = vmatprep.subr.mxu0 0.0
    %2576 = vmatpush2.msra.mxu0 0.0
    %2577 = vmatprep.subr.mxu0 0.0
    %2578 = vmatpush2.msra.mxu0 0.0
    %2579 = vmatprep.subr.mxu0 0.0
    %2580 = vmatpush2.msra.mxu0 0.0
    %2581 = vmatprep.subr.mxu0 0.0
    %2582 = vmatpush2.msra.mxu0 0.0
    %2583 = vmatprep.subr.mxu0 0.0
    %2584 = vmatpush2.msra.mxu0 0.0
    %2585 = vmatprep.subr.mxu0 0.0
    %2586 = vmatpush2.msra.mxu0 0.0
    %2587 = vmatprep.subr.mxu0 0.0
    %2588 = vmatpush2.msra.mxu0 0.0
    %2589 = vmatprep.subr.mxu0 0.0
    %2590 = vmatpush2.msra.mxu0 0.0
    %2591 = vmatprep.subr.mxu0 0.0
    %2592 = vmatpush2.msra.mxu0 0.0
    %2593 = vmatprep.subr.mxu0 0.0
    %2594 = vmatpush2.msra.mxu0 0.0
    %2595 = vmatprep.subr.mxu0 0.0
    %2596 = vmatpush2.msra.mxu0 0.0
    %2597 = vmatprep.subr.mxu0 0.0
    %2598 = vmatpush2.msra.mxu0 0.0
    %2599 = vmatprep.subr.mxu0 0.0
    %2600 = vmatpush2.msra.mxu0 0.0
    %2601 = vmatprep.subr.mxu0 0.0
    %2602 = vmatpush2.msra.mxu0 0.0
    %2603 = vmatprep.mubr.f32.mxu0 0.0
    %v2604 = vand.u32 %v2283, 4294901760
    %v2605 = vsub.f32 %v2283, %v2604
    %v2606 = vand.u32 %v2605, 4294901760
    %2607 = vmatmul.mubr.f32.gmra.mxu0 %v2606
    %v2608 = vpop.f32.mrf.mxu0
    %v2609 = vadd.f32 %v2532, %v2608
    %v2610 = vpop.f32.mrf.mxu0
    %2611 = vdwg.mxu0
    %2612 = vmatprep.subr.mxu0 0.0
    %2613 = vmatpush1.msra.mxu0 0.0
    %2614 = vmatprep.subr.mxu0 0.0
    %2615 = vmatpush1.msra.mxu0 0.0
    %2616 = vmatprep.subr.mxu0 0.0
    %2617 = vmatpush1.msra.mxu0 0.0
    %2618 = vmatprep.subr.mxu0 0.0
    %2619 = vmatpush1.msra.mxu0 0.0
    %2620 = vmatprep.subr.mxu0 0.0
    %2621 = vmatpush1.msra.mxu0 0.0
    %2622 = vmatprep.subr.mxu0 0.0
    %2623 = vmatpush1.msra.mxu0 0.0
    %2624 = vmatprep.subr.mxu0 0.0
    %2625 = vmatpush1.msra.mxu0 0.0
    %2626 = vmatprep.subr.mxu0 0.0
    %2627 = vmatpush1.msra.mxu0 0.0
    %2628 = vmatprep.subr.mxu0 0.0
    %2629 = vmatpush1.msra.mxu0 0.0
    %2630 = vmatprep.subr.mxu0 0.0
    %2631 = vmatpush1.msra.mxu0 0.0
    %2632 = vmatprep.subr.mxu0 0.0
    %2633 = vmatpush1.msra.mxu0 0.0
    %2634 = vmatprep.subr.mxu0 0.0
    %2635 = vmatpush1.msra.mxu0 0.0
    %2636 = vmatprep.subr.mxu0 0.0
    %v2637 = vand.u32 %v69, 4294901760
    %v2638 = vsub.f32 %v69, %v2637
    %v2639 = vand.u32 %v2638, 4294901760
    %2640 = vmatpush1.msra.mxu0 %v2639
    %2641 = vmatprep.subr.mxu0 0.0
    %v2642 = vand.u32 %v68, 4294901760
    %v2643 = vsub.f32 %v68, %v2642
    %v2644 = vand.u32 %v2643, 4294901760
    %2645 = vmatpush1.msra.mxu0 %v2644
    %2646 = vmatprep.subr.mxu0 0.0
    %v2647 = vand.u32 %v67, 4294901760
    %v2648 = vsub.f32 %v67, %v2647
    %v2649 = vand.u32 %v2648, 4294901760
    %2650 = vmatpush1.msra.mxu0 %v2649
    %2651 = vmatprep.subr.mxu0 0.0
    %v2652 = vand.u32 %v66, 4294901760
    %v2653 = vsub.f32 %v66, %v2652
    %v2654 = vand.u32 %v2653, 4294901760
    %2655 = vmatpush1.msra.mxu0 %v2654
    %2656 = vmatprep.subr.mxu0 0.0
    %2657 = vmatpush2.msra.mxu0 0.0
    %2658 = vmatprep.subr.mxu0 0.0
    %2659 = vmatpush2.msra.mxu0 0.0
    %2660 = vmatprep.subr.mxu0 0.0
    %2661 = vmatpush2.msra.mxu0 0.0
    %2662 = vmatprep.subr.mxu0 0.0
    %2663 = vmatpush2.msra.mxu0 0.0
    %2664 = vmatprep.subr.mxu0 0.0
    %2665 = vmatpush2.msra.mxu0 0.0
    %2666 = vmatprep.subr.mxu0 0.0
    %2667 = vmatpush2.msra.mxu0 0.0
    %2668 = vmatprep.subr.mxu0 0.0
    %2669 = vmatpush2.msra.mxu0 0.0
    %2670 = vmatprep.subr.mxu0 0.0
    %2671 = vmatpush2.msra.mxu0 0.0
    %2672 = vmatprep.subr.mxu0 0.0
    %2673 = vmatpush2.msra.mxu0 0.0
    %2674 = vmatprep.subr.mxu0 0.0
    %2675 = vmatpush2.msra.mxu0 0.0
    %2676 = vmatprep.subr.mxu0 0.0
    %2677 = vmatpush2.msra.mxu0 0.0
    %2678 = vmatprep.subr.mxu0 0.0
    %2679 = vmatpush2.msra.mxu0 0.0
    %2680 = vmatprep.subr.mxu0 0.0
    %2681 = vmatpush2.msra.mxu0 0.0
    %2682 = vmatprep.subr.mxu0 0.0
    %2683 = vmatpush2.msra.mxu0 0.0
    %2684 = vmatprep.subr.mxu0 0.0
    %2685 = vmatpush2.msra.mxu0 0.0
    %2686 = vmatprep.subr.mxu0 0.0
    %2687 = vmatpush2.msra.mxu0 0.0
    %2688 = vmatprep.mubr.f32.mxu0 0.0
    %v2689 = vand.u32 %v2283, 4294901760
    %2690 = vmatmul.mubr.f32.gmra.mxu0 %v2689
    %v2691 = vpop.f32.mrf.mxu0
    %v2692 = vadd.f32 %v2609, %v2691
    %v2693 = vpop.f32.mrf.mxu0
    %2694 = vdwg.mxu0
    %2695 = vmatprep.subr.mxu0 0.0
    %2696 = vmatpush1.msra.mxu0 0.0
    %2697 = vmatprep.subr.mxu0 0.0
    %2698 = vmatpush1.msra.mxu0 0.0
    %2699 = vmatprep.subr.mxu0 0.0
    %2700 = vmatpush1.msra.mxu0 0.0
    %2701 = vmatprep.subr.mxu0 0.0
    %2702 = vmatpush1.msra.mxu0 0.0
    %2703 = vmatprep.subr.mxu0 0.0
    %2704 = vmatpush1.msra.mxu0 0.0
    %2705 = vmatprep.subr.mxu0 0.0
    %2706 = vmatpush1.msra.mxu0 0.0
    %2707 = vmatprep.subr.mxu0 0.0
    %2708 = vmatpush1.msra.mxu0 0.0
    %2709 = vmatprep.subr.mxu0 0.0
    %2710 = vmatpush1.msra.mxu0 0.0
    %2711 = vmatprep.subr.mxu0 0.0
    %2712 = vmatpush1.msra.mxu0 0.0
    %2713 = vmatprep.subr.mxu0 0.0
    %2714 = vmatpush1.msra.mxu0 0.0
    %2715 = vmatprep.subr.mxu0 0.0
    %2716 = vmatpush1.msra.mxu0 0.0
    %2717 = vmatprep.subr.mxu0 0.0
    %2718 = vmatpush1.msra.mxu0 0.0
    %2719 = vmatprep.subr.mxu0 0.0
    %v2720 = vand.u32 %v69, 4294901760
    %2721 = vmatpush1.msra.mxu0 %v2720
    %2722 = vmatprep.subr.mxu0 0.0
    %v2723 = vand.u32 %v68, 4294901760
    %2724 = vmatpush1.msra.mxu0 %v2723
    %2725 = vmatprep.subr.mxu0 0.0
    %v2726 = vand.u32 %v67, 4294901760
    %2727 = vmatpush1.msra.mxu0 %v2726
    %2728 = vmatprep.subr.mxu0 0.0
    %v2729 = vand.u32 %v66, 4294901760
    %2730 = vmatpush1.msra.mxu0 %v2729
    %2731 = vmatprep.subr.mxu0 0.0
    %2732 = vmatpush2.msra.mxu0 0.0
    %2733 = vmatprep.subr.mxu0 0.0
    %2734 = vmatpush2.msra.mxu0 0.0
    %2735 = vmatprep.subr.mxu0 0.0
    %2736 = vmatpush2.msra.mxu0 0.0
    %2737 = vmatprep.subr.mxu0 0.0
    %2738 = vmatpush2.msra.mxu0 0.0
    %2739 = vmatprep.subr.mxu0 0.0
    %2740 = vmatpush2.msra.mxu0 0.0
    %2741 = vmatprep.subr.mxu0 0.0
    %2742 = vmatpush2.msra.mxu0 0.0
    %2743 = vmatprep.subr.mxu0 0.0
    %2744 = vmatpush2.msra.mxu0 0.0
    %2745 = vmatprep.subr.mxu0 0.0
    %2746 = vmatpush2.msra.mxu0 0.0
    %2747 = vmatprep.subr.mxu0 0.0
    %2748 = vmatpush2.msra.mxu0 0.0
    %2749 = vmatprep.subr.mxu0 0.0
    %2750 = vmatpush2.msra.mxu0 0.0
    %2751 = vmatprep.subr.mxu0 0.0
    %2752 = vmatpush2.msra.mxu0 0.0
    %2753 = vmatprep.subr.mxu0 0.0
    %2754 = vmatpush2.msra.mxu0 0.0
    %2755 = vmatprep.subr.mxu0 0.0
    %2756 = vmatpush2.msra.mxu0 0.0
    %2757 = vmatprep.subr.mxu0 0.0
    %2758 = vmatpush2.msra.mxu0 0.0
    %2759 = vmatprep.subr.mxu0 0.0
    %2760 = vmatpush2.msra.mxu0 0.0
    %2761 = vmatprep.subr.mxu0 0.0
    %2762 = vmatpush2.msra.mxu0 0.0
    %2763 = vmatprep.mubr.f32.mxu0 0.0
    %v2764 = vand.u32 %v2283, 4294901760
    %2765 = vmatmul.mubr.f32.gmra.mxu0 %v2764
    %v2766 = vpop.f32.mrf.mxu0
    %v2767 = vadd.f32 %v2692, %v2766
    %v2768 = vpop.f32.mrf.mxu0
    %2769 = vdwg.mxu0
    %v2770 = vadd.f32 %v742, %v2767
    %v2771 = vxor.u32 %v2770, 2147483648
    %v2772 = vmul.f32 %v2771, 1.442695
    %v2773 = vpow.pop %v2772
    %v2774 = vadd.f32 %v2773, 1.0
    %v2775 = vrcp.pop %v2774
    %v2776 = vmul.f32 1.0, %v2775
    %v2777 = vtanh.pop %v2770
    %2778 = vrot.lane.b32.xlu0 %v2776, 96
    %v2779 = vpop.permute.xlu0 %2778
    %2780 = vrot.lane.b32.xlu0 %v2777, 64
    %v2781 = vpop.permute.xlu0 %2780
    %2782 = vrot.lane.b32.xlu0 %v2776, 32
    %v2783 = vpop.permute.xlu0 %2782
    %v2784 = vmul.f32 %v2779, %v2278
    %v2785 = vmul.f32 %v2776, %v2781
    %v2786 = vadd.f32 %v2784, %v2785
    %v2787 = vtanh.pop %v2786
    %v2788 = vmul.f32 %v2783, %v2787
    %2789 = vst.msk [vmem:[#allocation2 + $0x18] sm:$0xff] %vm757, %v2788
    %v2791 = vsel %vm757, %v2788, 0
    %2793 = vmatprep.subr.mxu0 0.0
    %2794 = vmatpush1.msra.mxu0 0.0
    %2795 = vmatprep.subr.mxu0 0.0
    %2796 = vmatpush1.msra.mxu0 0.0
    %2797 = vmatprep.subr.mxu0 0.0
    %2798 = vmatpush1.msra.mxu0 0.0
    %2799 = vmatprep.subr.mxu0 0.0
    %2800 = vmatpush1.msra.mxu0 0.0
    %2801 = vmatprep.subr.mxu0 0.0
    %2802 = vmatpush1.msra.mxu0 0.0
    %2803 = vmatprep.subr.mxu0 0.0
    %2804 = vmatpush1.msra.mxu0 0.0
    %2805 = vmatprep.subr.mxu0 0.0
    %2806 = vmatpush1.msra.mxu0 0.0
    %2807 = vmatprep.subr.mxu0 0.0
    %2808 = vmatpush1.msra.mxu0 0.0
    %2809 = vmatprep.subr.mxu0 0.0
    %2810 = vmatpush1.msra.mxu0 0.0
    %2811 = vmatprep.subr.mxu0 0.0
    %2812 = vmatpush1.msra.mxu0 0.0
    %2813 = vmatprep.subr.mxu0 0.0
    %2814 = vmatpush1.msra.mxu0 0.0
    %2815 = vmatprep.subr.mxu0 0.0
    %2816 = vmatpush1.msra.mxu0 0.0
    %2817 = vmatprep.subr.mxu0 0.0
    %v2818 = vand.u32 %v69, 4294901760
    %2819 = vmatpush1.msra.mxu0 %v2818
    %2820 = vmatprep.subr.mxu0 0.0
    %v2821 = vand.u32 %v68, 4294901760
    %2822 = vmatpush1.msra.mxu0 %v2821
    %2823 = vmatprep.subr.mxu0 0.0
    %v2824 = vand.u32 %v67, 4294901760
    %2825 = vmatpush1.msra.mxu0 %v2824
    %2826 = vmatprep.subr.mxu0 0.0
    %v2827 = vand.u32 %v66, 4294901760
    %2828 = vmatpush1.msra.mxu0 %v2827
    %2829 = vmatprep.subr.mxu0 0.0
    %2830 = vmatpush2.msra.mxu0 0.0
    %2831 = vmatprep.subr.mxu0 0.0
    %2832 = vmatpush2.msra.mxu0 0.0
    %2833 = vmatprep.subr.mxu0 0.0
    %2834 = vmatpush2.msra.mxu0 0.0
    %2835 = vmatprep.subr.mxu0 0.0
    %2836 = vmatpush2.msra.mxu0 0.0
    %2837 = vmatprep.subr.mxu0 0.0
    %2838 = vmatpush2.msra.mxu0 0.0
    %2839 = vmatprep.subr.mxu0 0.0
    %2840 = vmatpush2.msra.mxu0 0.0
    %2841 = vmatprep.subr.mxu0 0.0
    %2842 = vmatpush2.msra.mxu0 0.0
    %2843 = vmatprep.subr.mxu0 0.0
    %2844 = vmatpush2.msra.mxu0 0.0
    %2845 = vmatprep.subr.mxu0 0.0
    %2846 = vmatpush2.msra.mxu0 0.0
    %2847 = vmatprep.subr.mxu0 0.0
    %2848 = vmatpush2.msra.mxu0 0.0
    %2849 = vmatprep.subr.mxu0 0.0
    %2850 = vmatpush2.msra.mxu0 0.0
    %2851 = vmatprep.subr.mxu0 0.0
    %2852 = vmatpush2.msra.mxu0 0.0
    %2853 = vmatprep.subr.mxu0 0.0
    %2854 = vmatpush2.msra.mxu0 0.0
    %2855 = vmatprep.subr.mxu0 0.0
    %2856 = vmatpush2.msra.mxu0 0.0
    %2857 = vmatprep.subr.mxu0 0.0
    %2858 = vmatpush2.msra.mxu0 0.0
    %2859 = vmatprep.subr.mxu0 0.0
    %2860 = vmatpush2.msra.mxu0 0.0
    %2861 = vmatprep.mubr.f32.mxu0 0.0
    %v2862 = vand.u32 %v2791, 4294901760
    %v2863 = vsub.f32 %v2791, %v2862
    %v2864 = vand.u32 %v2863, 4294901760
    %v2865 = vsub.f32 %v2863, %v2864
    %v2866 = vand.u32 %v2865, 4294901760
    %2867 = vmatmul.mubr.f32.gmra.mxu0 %v2866
    %v2868 = vpop.f32.mrf.mxu0
    %v2869 = vadd.f32 0.0, %v2868
    %v2870 = vpop.f32.mrf.mxu0
    %2871 = vdwg.mxu0
    %2872 = vmatprep.subr.mxu0 0.0
    %2873 = vmatpush1.msra.mxu0 0.0
    %2874 = vmatprep.subr.mxu0 0.0
    %2875 = vmatpush1.msra.mxu0 0.0
    %2876 = vmatprep.subr.mxu0 0.0
    %2877 = vmatpush1.msra.mxu0 0.0
    %2878 = vmatprep.subr.mxu0 0.0
    %2879 = vmatpush1.msra.mxu0 0.0
    %2880 = vmatprep.subr.mxu0 0.0
    %2881 = vmatpush1.msra.mxu0 0.0
    %2882 = vmatprep.subr.mxu0 0.0
    %2883 = vmatpush1.msra.mxu0 0.0
    %2884 = vmatprep.subr.mxu0 0.0
    %2885 = vmatpush1.msra.mxu0 0.0
    %2886 = vmatprep.subr.mxu0 0.0
    %2887 = vmatpush1.msra.mxu0 0.0
    %2888 = vmatprep.subr.mxu0 0.0
    %2889 = vmatpush1.msra.mxu0 0.0
    %2890 = vmatprep.subr.mxu0 0.0
    %2891 = vmatpush1.msra.mxu0 0.0
    %2892 = vmatprep.subr.mxu0 0.0
    %2893 = vmatpush1.msra.mxu0 0.0
    %2894 = vmatprep.subr.mxu0 0.0
    %2895 = vmatpush1.msra.mxu0 0.0
    %2896 = vmatprep.subr.mxu0 0.0
    %v2897 = vand.u32 %v69, 4294901760
    %v2898 = vsub.f32 %v69, %v2897
    %v2899 = vand.u32 %v2898, 4294901760
    %v2900 = vsub.f32 %v2898, %v2899
    %v2901 = vand.u32 %v2900, 4294901760
    %2902 = vmatpush1.msra.mxu0 %v2901
    %2903 = vmatprep.subr.mxu0 0.0
    %v2904 = vand.u32 %v68, 4294901760
    %v2905 = vsub.f32 %v68, %v2904
    %v2906 = vand.u32 %v2905, 4294901760
    %v2907 = vsub.f32 %v2905, %v2906
    %v2908 = vand.u32 %v2907, 4294901760
    %2909 = vmatpush1.msra.mxu0 %v2908
    %2910 = vmatprep.subr.mxu0 0.0
    %v2911 = vand.u32 %v67, 4294901760
    %v2912 = vsub.f32 %v67, %v2911
    %v2913 = vand.u32 %v2912, 4294901760
    %v2914 = vsub.f32 %v2912, %v2913
    %v2915 = vand.u32 %v2914, 4294901760
    %2916 = vmatpush1.msra.mxu0 %v2915
    %2917 = vmatprep.subr.mxu0 0.0
    %v2918 = vand.u32 %v66, 4294901760
    %v2919 = vsub.f32 %v66, %v2918
    %v2920 = vand.u32 %v2919, 4294901760
    %v2921 = vsub.f32 %v2919, %v2920
    %v2922 = vand.u32 %v2921, 4294901760
    %2923 = vmatpush1.msra.mxu0 %v2922
    %2924 = vmatprep.subr.mxu0 0.0
    %2925 = vmatpush2.msra.mxu0 0.0
    %2926 = vmatprep.subr.mxu0 0.0
    %2927 = vmatpush2.msra.mxu0 0.0
    %2928 = vmatprep.subr.mxu0 0.0
    %2929 = vmatpush2.msra.mxu0 0.0
    %2930 = vmatprep.subr.mxu0 0.0
    %2931 = vmatpush2.msra.mxu0 0.0
    %2932 = vmatprep.subr.mxu0 0.0
    %2933 = vmatpush2.msra.mxu0 0.0
    %2934 = vmatprep.subr.mxu0 0.0
    %2935 = vmatpush2.msra.mxu0 0.0
    %2936 = vmatprep.subr.mxu0 0.0
    %2937 = vmatpush2.msra.mxu0 0.0
    %2938 = vmatprep.subr.mxu0 0.0
    %2939 = vmatpush2.msra.mxu0 0.0
    %2940 = vmatprep.subr.mxu0 0.0
    %2941 = vmatpush2.msra.mxu0 0.0
    %2942 = vmatprep.subr.mxu0 0.0
    %2943 = vmatpush2.msra.mxu0 0.0
    %2944 = vmatprep.subr.mxu0 0.0
    %2945 = vmatpush2.msra.mxu0 0.0
    %2946 = vmatprep.subr.mxu0 0.0
    %2947 = vmatpush2.msra.mxu0 0.0
    %2948 = vmatprep.subr.mxu0 0.0
    %2949 = vmatpush2.msra.mxu0 0.0
    %2950 = vmatprep.subr.mxu0 0.0
    %2951 = vmatpush2.msra.mxu0 0.0
    %2952 = vmatprep.subr.mxu0 0.0
    %2953 = vmatpush2.msra.mxu0 0.0
    %2954 = vmatprep.subr.mxu0 0.0
    %2955 = vmatpush2.msra.mxu0 0.0
    %2956 = vmatprep.mubr.f32.mxu0 0.0
    %v2957 = vand.u32 %v2791, 4294901760
    %2958 = vmatmul.mubr.f32.gmra.mxu0 %v2957
    %v2959 = vpop.f32.mrf.mxu0
    %v2960 = vadd.f32 %v2869, %v2959
    %v2961 = vpop.f32.mrf.mxu0
    %2962 = vdwg.mxu0
    %2963 = vmatprep.subr.mxu0 0.0
    %2964 = vmatpush1.msra.mxu0 0.0
    %2965 = vmatprep.subr.mxu0 0.0
    %2966 = vmatpush1.msra.mxu0 0.0
    %2967 = vmatprep.subr.mxu0 0.0
    %2968 = vmatpush1.msra.mxu0 0.0
    %2969 = vmatprep.subr.mxu0 0.0
    %2970 = vmatpush1.msra.mxu0 0.0
    %2971 = vmatprep.subr.mxu0 0.0
    %2972 = vmatpush1.msra.mxu0 0.0
    %2973 = vmatprep.subr.mxu0 0.0
    %2974 = vmatpush1.msra.mxu0 0.0
    %2975 = vmatprep.subr.mxu0 0.0
    %2976 = vmatpush1.msra.mxu0 0.0
    %2977 = vmatprep.subr.mxu0 0.0
    %2978 = vmatpush1.msra.mxu0 0.0
    %2979 = vmatprep.subr.mxu0 0.0
    %2980 = vmatpush1.msra.mxu0 0.0
    %2981 = vmatprep.subr.mxu0 0.0
    %2982 = vmatpush1.msra.mxu0 0.0
    %2983 = vmatprep.subr.mxu0 0.0
    %2984 = vmatpush1.msra.mxu0 0.0
    %2985 = vmatprep.subr.mxu0 0.0
    %2986 = vmatpush1.msra.mxu0 0.0
    %2987 = vmatprep.subr.mxu0 0.0
    %v2988 = vand.u32 %v69, 4294901760
    %v2989 = vsub.f32 %v69, %v2988
    %2990 = vmatpush1.msra.mxu0 %v2989
    %2991 = vmatprep.subr.mxu0 0.0
    %v2992 = vand.u32 %v68, 4294901760
    %v2993 = vsub.f32 %v68, %v2992
    %2994 = vmatpush1.msra.mxu0 %v2993
    %2995 = vmatprep.subr.mxu0 0.0
    %v2996 = vand.u32 %v67, 4294901760
    %v2997 = vsub.f32 %v67, %v2996
    %2998 = vmatpush1.msra.mxu0 %v2997
    %2999 = vmatprep.subr.mxu0 0.0
    %v3000 = vand.u32 %v66, 4294901760
    %v3001 = vsub.f32 %v66, %v3000
    %3002 = vmatpush1.msra.mxu0 %v3001
    %3003 = vmatprep.subr.mxu0 0.0
    %3004 = vmatpush2.msra.mxu0 0.0
    %3005 = vmatprep.subr.mxu0 0.0
    %3006 = vmatpush2.msra.mxu0 0.0
    %3007 = vmatprep.subr.mxu0 0.0
    %3008 = vmatpush2.msra.mxu0 0.0
    %3009 = vmatprep.subr.mxu0 0.0
    %3010 = vmatpush2.msra.mxu0 0.0
    %3011 = vmatprep.subr.mxu0 0.0
    %3012 = vmatpush2.msra.mxu0 0.0
    %3013 = vmatprep.subr.mxu0 0.0
    %3014 = vmatpush2.msra.mxu0 0.0
    %3015 = vmatprep.subr.mxu0 0.0
    %3016 = vmatpush2.msra.mxu0 0.0
    %3017 = vmatprep.subr.mxu0 0.0
    %3018 = vmatpush2.msra.mxu0 0.0
    %3019 = vmatprep.subr.mxu0 0.0
    %3020 = vmatpush2.msra.mxu0 0.0
    %3021 = vmatprep.subr.mxu0 0.0
    %3022 = vmatpush2.msra.mxu0 0.0
    %3023 = vmatprep.subr.mxu0 0.0
    %3024 = vmatpush2.msra.mxu0 0.0
    %3025 = vmatprep.subr.mxu0 0.0
    %3026 = vmatpush2.msra.mxu0 0.0
    %3027 = vmatprep.subr.mxu0 0.0
    %3028 = vmatpush2.msra.mxu0 0.0
    %3029 = vmatprep.subr.mxu0 0.0
    %3030 = vmatpush2.msra.mxu0 0.0
    %3031 = vmatprep.subr.mxu0 0.0
    %3032 = vmatpush2.msra.mxu0 0.0
    %3033 = vmatprep.subr.mxu0 0.0
    %3034 = vmatpush2.msra.mxu0 0.0
    %3035 = vmatprep.mubr.f32.mxu0 0.0
    %v3036 = vand.u32 %v2791, 4294901760
    %v3037 = vsub.f32 %v2791, %v3036
    %3038 = vmatmul.mubr.f32.gmra.mxu0 %v3037
    %v3039 = vpop.f32.mrf.mxu0
    %v3040 = vadd.f32 %v2960, %v3039
    %v3041 = vpop.f32.mrf.mxu0
    %3042 = vdwg.mxu0
    %3043 = vmatprep.subr.mxu0 0.0
    %3044 = vmatpush1.msra.mxu0 0.0
    %3045 = vmatprep.subr.mxu0 0.0
    %3046 = vmatpush1.msra.mxu0 0.0
    %3047 = vmatprep.subr.mxu0 0.0
    %3048 = vmatpush1.msra.mxu0 0.0
    %3049 = vmatprep.subr.mxu0 0.0
    %3050 = vmatpush1.msra.mxu0 0.0
    %3051 = vmatprep.subr.mxu0 0.0
    %3052 = vmatpush1.msra.mxu0 0.0
    %3053 = vmatprep.subr.mxu0 0.0
    %3054 = vmatpush1.msra.mxu0 0.0
    %3055 = vmatprep.subr.mxu0 0.0
    %3056 = vmatpush1.msra.mxu0 0.0
    %3057 = vmatprep.subr.mxu0 0.0
    %3058 = vmatpush1.msra.mxu0 0.0
    %3059 = vmatprep.subr.mxu0 0.0
    %3060 = vmatpush1.msra.mxu0 0.0
    %3061 = vmatprep.subr.mxu0 0.0
    %3062 = vmatpush1.msra.mxu0 0.0
    %3063 = vmatprep.subr.mxu0 0.0
    %3064 = vmatpush1.msra.mxu0 0.0
    %3065 = vmatprep.subr.mxu0 0.0
    %3066 = vmatpush1.msra.mxu0 0.0
    %3067 = vmatprep.subr.mxu0 0.0
    %v3068 = vand.u32 %v69, 4294901760
    %3069 = vmatpush1.msra.mxu0 %v3068
    %3070 = vmatprep.subr.mxu0 0.0
    %v3071 = vand.u32 %v68, 4294901760
    %3072 = vmatpush1.msra.mxu0 %v3071
    %3073 = vmatprep.subr.mxu0 0.0
    %v3074 = vand.u32 %v67, 4294901760
    %3075 = vmatpush1.msra.mxu0 %v3074
    %3076 = vmatprep.subr.mxu0 0.0
    %v3077 = vand.u32 %v66, 4294901760
    %3078 = vmatpush1.msra.mxu0 %v3077
    %3079 = vmatprep.subr.mxu0 0.0
    %3080 = vmatpush2.msra.mxu0 0.0
    %3081 = vmatprep.subr.mxu0 0.0
    %3082 = vmatpush2.msra.mxu0 0.0
    %3083 = vmatprep.subr.mxu0 0.0
    %3084 = vmatpush2.msra.mxu0 0.0
    %3085 = vmatprep.subr.mxu0 0.0
    %3086 = vmatpush2.msra.mxu0 0.0
    %3087 = vmatprep.subr.mxu0 0.0
    %3088 = vmatpush2.msra.mxu0 0.0
    %3089 = vmatprep.subr.mxu0 0.0
    %3090 = vmatpush2.msra.mxu0 0.0
    %3091 = vmatprep.subr.mxu0 0.0
    %3092 = vmatpush2.msra.mxu0 0.0
    %3093 = vmatprep.subr.mxu0 0.0
    %3094 = vmatpush2.msra.mxu0 0.0
    %3095 = vmatprep.subr.mxu0 0.0
    %3096 = vmatpush2.msra.mxu0 0.0
    %3097 = vmatprep.subr.mxu0 0.0
    %3098 = vmatpush2.msra.mxu0 0.0
    %3099 = vmatprep.subr.mxu0 0.0
    %3100 = vmatpush2.msra.mxu0 0.0
    %3101 = vmatprep.subr.mxu0 0.0
    %3102 = vmatpush2.msra.mxu0 0.0
    %3103 = vmatprep.subr.mxu0 0.0
    %3104 = vmatpush2.msra.mxu0 0.0
    %3105 = vmatprep.subr.mxu0 0.0
    %3106 = vmatpush2.msra.mxu0 0.0
    %3107 = vmatprep.subr.mxu0 0.0
    %3108 = vmatpush2.msra.mxu0 0.0
    %3109 = vmatprep.subr.mxu0 0.0
    %3110 = vmatpush2.msra.mxu0 0.0
    %3111 = vmatprep.mubr.f32.mxu0 0.0
    %v3112 = vand.u32 %v2791, 4294901760
    %v3113 = vsub.f32 %v2791, %v3112
    %v3114 = vand.u32 %v3113, 4294901760
    %3115 = vmatmul.mubr.f32.gmra.mxu0 %v3114
    %v3116 = vpop.f32.mrf.mxu0
    %v3117 = vadd.f32 %v3040, %v3116
    %v3118 = vpop.f32.mrf.mxu0
    %3119 = vdwg.mxu0
    %3120 = vmatprep.subr.mxu0 0.0
    %3121 = vmatpush1.msra.mxu0 0.0
    %3122 = vmatprep.subr.mxu0 0.0
    %3123 = vmatpush1.msra.mxu0 0.0
    %3124 = vmatprep.subr.mxu0 0.0
    %3125 = vmatpush1.msra.mxu0 0.0
    %3126 = vmatprep.subr.mxu0 0.0
    %3127 = vmatpush1.msra.mxu0 0.0
    %3128 = vmatprep.subr.mxu0 0.0
    %3129 = vmatpush1.msra.mxu0 0.0
    %3130 = vmatprep.subr.mxu0 0.0
    %3131 = vmatpush1.msra.mxu0 0.0
    %3132 = vmatprep.subr.mxu0 0.0
    %3133 = vmatpush1.msra.mxu0 0.0
    %3134 = vmatprep.subr.mxu0 0.0
    %3135 = vmatpush1.msra.mxu0 0.0
    %3136 = vmatprep.subr.mxu0 0.0
    %3137 = vmatpush1.msra.mxu0 0.0
    %3138 = vmatprep.subr.mxu0 0.0
    %3139 = vmatpush1.msra.mxu0 0.0
    %3140 = vmatprep.subr.mxu0 0.0
    %3141 = vmatpush1.msra.mxu0 0.0
    %3142 = vmatprep.subr.mxu0 0.0
    %3143 = vmatpush1.msra.mxu0 0.0
    %3144 = vmatprep.subr.mxu0 0.0
    %v3145 = vand.u32 %v69, 4294901760
    %v3146 = vsub.f32 %v69, %v3145
    %v3147 = vand.u32 %v3146, 4294901760
    %3148 = vmatpush1.msra.mxu0 %v3147
    %3149 = vmatprep.subr.mxu0 0.0
    %v3150 = vand.u32 %v68, 4294901760
    %v3151 = vsub.f32 %v68, %v3150
    %v3152 = vand.u32 %v3151, 4294901760
    %3153 = vmatpush1.msra.mxu0 %v3152
    %3154 = vmatprep.subr.mxu0 0.0
    %v3155 = vand.u32 %v67, 4294901760
    %v3156 = vsub.f32 %v67, %v3155
    %v3157 = vand.u32 %v3156, 4294901760
    %3158 = vmatpush1.msra.mxu0 %v3157
    %3159 = vmatprep.subr.mxu0 0.0
    %v3160 = vand.u32 %v66, 4294901760
    %v3161 = vsub.f32 %v66, %v3160
    %v3162 = vand.u32 %v3161, 4294901760
    %3163 = vmatpush1.msra.mxu0 %v3162
    %3164 = vmatprep.subr.mxu0 0.0
    %3165 = vmatpush2.msra.mxu0 0.0
    %3166 = vmatprep.subr.mxu0 0.0
    %3167 = vmatpush2.msra.mxu0 0.0
    %3168 = vmatprep.subr.mxu0 0.0
    %3169 = vmatpush2.msra.mxu0 0.0
    %3170 = vmatprep.subr.mxu0 0.0
    %3171 = vmatpush2.msra.mxu0 0.0
    %3172 = vmatprep.subr.mxu0 0.0
    %3173 = vmatpush2.msra.mxu0 0.0
    %3174 = vmatprep.subr.mxu0 0.0
    %3175 = vmatpush2.msra.mxu0 0.0
    %3176 = vmatprep.subr.mxu0 0.0
    %3177 = vmatpush2.msra.mxu0 0.0
    %3178 = vmatprep.subr.mxu0 0.0
    %3179 = vmatpush2.msra.mxu0 0.0
    %3180 = vmatprep.subr.mxu0 0.0
    %3181 = vmatpush2.msra.mxu0 0.0
    %3182 = vmatprep.subr.mxu0 0.0
    %3183 = vmatpush2.msra.mxu0 0.0
    %3184 = vmatprep.subr.mxu0 0.0
    %3185 = vmatpush2.msra.mxu0 0.0
    %3186 = vmatprep.subr.mxu0 0.0
    %3187 = vmatpush2.msra.mxu0 0.0
    %3188 = vmatprep.subr.mxu0 0.0
    %3189 = vmatpush2.msra.mxu0 0.0
    %3190 = vmatprep.subr.mxu0 0.0
    %3191 = vmatpush2.msra.mxu0 0.0
    %3192 = vmatprep.subr.mxu0 0.0
    %3193 = vmatpush2.msra.mxu0 0.0
    %3194 = vmatprep.subr.mxu0 0.0
    %3195 = vmatpush2.msra.mxu0 0.0
    %3196 = vmatprep.mubr.f32.mxu0 0.0
    %v3197 = vand.u32 %v2791, 4294901760
    %3198 = vmatmul.mubr.f32.gmra.mxu0 %v3197
    %v3199 = vpop.f32.mrf.mxu0
    %v3200 = vadd.f32 %v3117, %v3199
    %v3201 = vpop.f32.mrf.mxu0
    %3202 = vdwg.mxu0
    %3203 = vmatprep.subr.mxu0 0.0
    %3204 = vmatpush1.msra.mxu0 0.0
    %3205 = vmatprep.subr.mxu0 0.0
    %3206 = vmatpush1.msra.mxu0 0.0
    %3207 = vmatprep.subr.mxu0 0.0
    %3208 = vmatpush1.msra.mxu0 0.0
    %3209 = vmatprep.subr.mxu0 0.0
    %3210 = vmatpush1.msra.mxu0 0.0
    %3211 = vmatprep.subr.mxu0 0.0
    %3212 = vmatpush1.msra.mxu0 0.0
    %3213 = vmatprep.subr.mxu0 0.0
    %3214 = vmatpush1.msra.mxu0 0.0
    %3215 = vmatprep.subr.mxu0 0.0
    %3216 = vmatpush1.msra.mxu0 0.0
    %3217 = vmatprep.subr.mxu0 0.0
    %3218 = vmatpush1.msra.mxu0 0.0
    %3219 = vmatprep.subr.mxu0 0.0
    %3220 = vmatpush1.msra.mxu0 0.0
    %3221 = vmatprep.subr.mxu0 0.0
    %3222 = vmatpush1.msra.mxu0 0.0
    %3223 = vmatprep.subr.mxu0 0.0
    %3224 = vmatpush1.msra.mxu0 0.0
    %3225 = vmatprep.subr.mxu0 0.0
    %3226 = vmatpush1.msra.mxu0 0.0
    %3227 = vmatprep.subr.mxu0 0.0
    %v3228 = vand.u32 %v69, 4294901760
    %3229 = vmatpush1.msra.mxu0 %v3228
    %3230 = vmatprep.subr.mxu0 0.0
    %v3231 = vand.u32 %v68, 4294901760
    %3232 = vmatpush1.msra.mxu0 %v3231
    %3233 = vmatprep.subr.mxu0 0.0
    %v3234 = vand.u32 %v67, 4294901760
    %3235 = vmatpush1.msra.mxu0 %v3234
    %3236 = vmatprep.subr.mxu0 0.0
    %v3237 = vand.u32 %v66, 4294901760
    %3238 = vmatpush1.msra.mxu0 %v3237
    %3239 = vmatprep.subr.mxu0 0.0
    %3240 = vmatpush2.msra.mxu0 0.0
    %3241 = vmatprep.subr.mxu0 0.0
    %3242 = vmatpush2.msra.mxu0 0.0
    %3243 = vmatprep.subr.mxu0 0.0
    %3244 = vmatpush2.msra.mxu0 0.0
    %3245 = vmatprep.subr.mxu0 0.0
    %3246 = vmatpush2.msra.mxu0 0.0
    %3247 = vmatprep.subr.mxu0 0.0
    %3248 = vmatpush2.msra.mxu0 0.0
    %3249 = vmatprep.subr.mxu0 0.0
    %3250 = vmatpush2.msra.mxu0 0.0
    %3251 = vmatprep.subr.mxu0 0.0
    %3252 = vmatpush2.msra.mxu0 0.0
    %3253 = vmatprep.subr.mxu0 0.0
    %3254 = vmatpush2.msra.mxu0 0.0
    %3255 = vmatprep.subr.mxu0 0.0
    %3256 = vmatpush2.msra.mxu0 0.0
    %3257 = vmatprep.subr.mxu0 0.0
    %3258 = vmatpush2.msra.mxu0 0.0
    %3259 = vmatprep.subr.mxu0 0.0
    %3260 = vmatpush2.msra.mxu0 0.0
    %3261 = vmatprep.subr.mxu0 0.0
    %3262 = vmatpush2.msra.mxu0 0.0
    %3263 = vmatprep.subr.mxu0 0.0
    %3264 = vmatpush2.msra.mxu0 0.0
    %3265 = vmatprep.subr.mxu0 0.0
    %3266 = vmatpush2.msra.mxu0 0.0
    %3267 = vmatprep.subr.mxu0 0.0
    %3268 = vmatpush2.msra.mxu0 0.0
    %3269 = vmatprep.subr.mxu0 0.0
    %3270 = vmatpush2.msra.mxu0 0.0
    %3271 = vmatprep.mubr.f32.mxu0 0.0
    %v3272 = vand.u32 %v2791, 4294901760
    %3273 = vmatmul.mubr.f32.gmra.mxu0 %v3272
    %v3274 = vpop.f32.mrf.mxu0
    %v3275 = vadd.f32 %v3200, %v3274
    %v3276 = vpop.f32.mrf.mxu0
    %3277 = vdwg.mxu0
    %v3278 = vadd.f32 %v748, %v3275
    %v3279 = vxor.u32 %v3278, 2147483648
    %v3280 = vmul.f32 %v3279, 1.442695
    %v3281 = vpow.pop %v3280
    %v3282 = vadd.f32 %v3281, 1.0
    %v3283 = vrcp.pop %v3282
    %v3284 = vmul.f32 1.0, %v3283
    %v3285 = vtanh.pop %v3278
    %3286 = vrot.lane.b32.xlu0 %v3284, 96
    %v3287 = vpop.permute.xlu0 %3286
    %3288 = vrot.lane.b32.xlu0 %v3285, 64
    %v3289 = vpop.permute.xlu0 %3288
    %3290 = vrot.lane.b32.xlu0 %v3284, 32
    %v3291 = vpop.permute.xlu0 %3290
    %v3292 = vmul.f32 %v3287, %v2786
    %v3293 = vmul.f32 %v3284, %v3289
    %v3294 = vadd.f32 %v3292, %v3293
    %v3295 = vtanh.pop %v3294
    %v3296 = vmul.f32 %v3291, %v3295
    %3297 = vst.msk [vmem:[#allocation2 + $0x20] sm:$0xff] %vm757, %v3296
    %v3299 = vsel %vm757, %v3296, 0
    %3301 = vmatprep.subr.mxu0 0.0
    %3302 = vmatpush1.msra.mxu0 0.0
    %3303 = vmatprep.subr.mxu0 0.0
    %3304 = vmatpush1.msra.mxu0 0.0
    %3305 = vmatprep.subr.mxu0 0.0
    %3306 = vmatpush1.msra.mxu0 0.0
    %3307 = vmatprep.subr.mxu0 0.0
    %3308 = vmatpush1.msra.mxu0 0.0
    %3309 = vmatprep.subr.mxu0 0.0
    %3310 = vmatpush1.msra.mxu0 0.0
    %3311 = vmatprep.subr.mxu0 0.0
    %3312 = vmatpush1.msra.mxu0 0.0
    %3313 = vmatprep.subr.mxu0 0.0
    %3314 = vmatpush1.msra.mxu0 0.0
    %3315 = vmatprep.subr.mxu0 0.0
    %3316 = vmatpush1.msra.mxu0 0.0
    %3317 = vmatprep.subr.mxu0 0.0
    %3318 = vmatpush1.msra.mxu0 0.0
    %3319 = vmatprep.subr.mxu0 0.0
    %3320 = vmatpush1.msra.mxu0 0.0
    %3321 = vmatprep.subr.mxu0 0.0
    %3322 = vmatpush1.msra.mxu0 0.0
    %3323 = vmatprep.subr.mxu0 0.0
    %3324 = vmatpush1.msra.mxu0 0.0
    %3325 = vmatprep.subr.mxu0 0.0
    %v3326 = vand.u32 %v69, 4294901760
    %3327 = vmatpush1.msra.mxu0 %v3326
    %3328 = vmatprep.subr.mxu0 0.0
    %v3329 = vand.u32 %v68, 4294901760
    %3330 = vmatpush1.msra.mxu0 %v3329
    %3331 = vmatprep.subr.mxu0 0.0
    %v3332 = vand.u32 %v67, 4294901760
    %3333 = vmatpush1.msra.mxu0 %v3332
    %3334 = vmatprep.subr.mxu0 0.0
    %v3335 = vand.u32 %v66, 4294901760
    %3336 = vmatpush1.msra.mxu0 %v3335
    %3337 = vmatprep.subr.mxu0 0.0
    %3338 = vmatpush2.msra.mxu0 0.0
    %3339 = vmatprep.subr.mxu0 0.0
    %3340 = vmatpush2.msra.mxu0 0.0
    %3341 = vmatprep.subr.mxu0 0.0
    %3342 = vmatpush2.msra.mxu0 0.0
    %3343 = vmatprep.subr.mxu0 0.0
    %3344 = vmatpush2.msra.mxu0 0.0
    %3345 = vmatprep.subr.mxu0 0.0
    %3346 = vmatpush2.msra.mxu0 0.0
    %3347 = vmatprep.subr.mxu0 0.0
    %3348 = vmatpush2.msra.mxu0 0.0
    %3349 = vmatprep.subr.mxu0 0.0
    %3350 = vmatpush2.msra.mxu0 0.0
    %3351 = vmatprep.subr.mxu0 0.0
    %3352 = vmatpush2.msra.mxu0 0.0
    %3353 = vmatprep.subr.mxu0 0.0
    %3354 = vmatpush2.msra.mxu0 0.0
    %3355 = vmatprep.subr.mxu0 0.0
    %3356 = vmatpush2.msra.mxu0 0.0
    %3357 = vmatprep.subr.mxu0 0.0
    %3358 = vmatpush2.msra.mxu0 0.0
    %3359 = vmatprep.subr.mxu0 0.0
    %3360 = vmatpush2.msra.mxu0 0.0
    %3361 = vmatprep.subr.mxu0 0.0
    %3362 = vmatpush2.msra.mxu0 0.0
    %3363 = vmatprep.subr.mxu0 0.0
    %3364 = vmatpush2.msra.mxu0 0.0
    %3365 = vmatprep.subr.mxu0 0.0
    %3366 = vmatpush2.msra.mxu0 0.0
    %3367 = vmatprep.subr.mxu0 0.0
    %3368 = vmatpush2.msra.mxu0 0.0
    %3369 = vmatprep.mubr.f32.mxu0 0.0
    %v3370 = vand.u32 %v3299, 4294901760
    %v3371 = vsub.f32 %v3299, %v3370
    %v3372 = vand.u32 %v3371, 4294901760
    %v3373 = vsub.f32 %v3371, %v3372
    %v3374 = vand.u32 %v3373, 4294901760
    %3375 = vmatmul.mubr.f32.gmra.mxu0 %v3374
    %v3376 = vpop.f32.mrf.mxu0
    %v3377 = vadd.f32 0.0, %v3376
    %v3378 = vpop.f32.mrf.mxu0
    %3379 = vdwg.mxu0
    %3380 = vmatprep.subr.mxu0 0.0
    %3381 = vmatpush1.msra.mxu0 0.0
    %3382 = vmatprep.subr.mxu0 0.0
    %3383 = vmatpush1.msra.mxu0 0.0
    %3384 = vmatprep.subr.mxu0 0.0
    %3385 = vmatpush1.msra.mxu0 0.0
    %3386 = vmatprep.subr.mxu0 0.0
    %3387 = vmatpush1.msra.mxu0 0.0
    %3388 = vmatprep.subr.mxu0 0.0
    %3389 = vmatpush1.msra.mxu0 0.0
    %3390 = vmatprep.subr.mxu0 0.0
    %3391 = vmatpush1.msra.mxu0 0.0
    %3392 = vmatprep.subr.mxu0 0.0
    %3393 = vmatpush1.msra.mxu0 0.0
    %3394 = vmatprep.subr.mxu0 0.0
    %3395 = vmatpush1.msra.mxu0 0.0
    %3396 = vmatprep.subr.mxu0 0.0
    %3397 = vmatpush1.msra.mxu0 0.0
    %3398 = vmatprep.subr.mxu0 0.0
    %3399 = vmatpush1.msra.mxu0 0.0
    %3400 = vmatprep.subr.mxu0 0.0
    %3401 = vmatpush1.msra.mxu0 0.0
    %3402 = vmatprep.subr.mxu0 0.0
    %3403 = vmatpush1.msra.mxu0 0.0
    %3404 = vmatprep.subr.mxu0 0.0
    %v3405 = vand.u32 %v69, 4294901760
    %v3406 = vsub.f32 %v69, %v3405
    %v3407 = vand.u32 %v3406, 4294901760
    %v3408 = vsub.f32 %v3406, %v3407
    %v3409 = vand.u32 %v3408, 4294901760
    %3410 = vmatpush1.msra.mxu0 %v3409
    %3411 = vmatprep.subr.mxu0 0.0
    %v3412 = vand.u32 %v68, 4294901760
    %v3413 = vsub.f32 %v68, %v3412
    %v3414 = vand.u32 %v3413, 4294901760
    %v3415 = vsub.f32 %v3413, %v3414
    %v3416 = vand.u32 %v3415, 4294901760
    %3417 = vmatpush1.msra.mxu0 %v3416
    %3418 = vmatprep.subr.mxu0 0.0
    %v3419 = vand.u32 %v67, 4294901760
    %v3420 = vsub.f32 %v67, %v3419
    %v3421 = vand.u32 %v3420, 4294901760
    %v3422 = vsub.f32 %v3420, %v3421
    %v3423 = vand.u32 %v3422, 4294901760
    %3424 = vmatpush1.msra.mxu0 %v3423
    %3425 = vmatprep.subr.mxu0 0.0
    %v3426 = vand.u32 %v66, 4294901760
    %v3427 = vsub.f32 %v66, %v3426
    %v3428 = vand.u32 %v3427, 4294901760
    %v3429 = vsub.f32 %v3427, %v3428
    %v3430 = vand.u32 %v3429, 4294901760
    %3431 = vmatpush1.msra.mxu0 %v3430
    %3432 = vmatprep.subr.mxu0 0.0
    %3433 = vmatpush2.msra.mxu0 0.0
    %3434 = vmatprep.subr.mxu0 0.0
    %3435 = vmatpush2.msra.mxu0 0.0
    %3436 = vmatprep.subr.mxu0 0.0
    %3437 = vmatpush2.msra.mxu0 0.0
    %3438 = vmatprep.subr.mxu0 0.0
    %3439 = vmatpush2.msra.mxu0 0.0
    %3440 = vmatprep.subr.mxu0 0.0
    %3441 = vmatpush2.msra.mxu0 0.0
    %3442 = vmatprep.subr.mxu0 0.0
    %3443 = vmatpush2.msra.mxu0 0.0
    %3444 = vmatprep.subr.mxu0 0.0
    %3445 = vmatpush2.msra.mxu0 0.0
    %3446 = vmatprep.subr.mxu0 0.0
    %3447 = vmatpush2.msra.mxu0 0.0
    %3448 = vmatprep.subr.mxu0 0.0
    %3449 = vmatpush2.msra.mxu0 0.0
    %3450 = vmatprep.subr.mxu0 0.0
    %3451 = vmatpush2.msra.mxu0 0.0
    %3452 = vmatprep.subr.mxu0 0.0
    %3453 = vmatpush2.msra.mxu0 0.0
    %3454 = vmatprep.subr.mxu0 0.0
    %3455 = vmatpush2.msra.mxu0 0.0
    %3456 = vmatprep.subr.mxu0 0.0
    %3457 = vmatpush2.msra.mxu0 0.0
    %3458 = vmatprep.subr.mxu0 0.0
    %3459 = vmatpush2.msra.mxu0 0.0
    %3460 = vmatprep.subr.mxu0 0.0
    %3461 = vmatpush2.msra.mxu0 0.0
    %3462 = vmatprep.subr.mxu0 0.0
    %3463 = vmatpush2.msra.mxu0 0.0
    %3464 = vmatprep.mubr.f32.mxu0 0.0
    %v3465 = vand.u32 %v3299, 4294901760
    %3466 = vmatmul.mubr.f32.gmra.mxu0 %v3465
    %v3467 = vpop.f32.mrf.mxu0
    %v3468 = vadd.f32 %v3377, %v3467
    %v3469 = vpop.f32.mrf.mxu0
    %3470 = vdwg.mxu0
    %3471 = vmatprep.subr.mxu0 0.0
    %3472 = vmatpush1.msra.mxu0 0.0
    %3473 = vmatprep.subr.mxu0 0.0
    %3474 = vmatpush1.msra.mxu0 0.0
    %3475 = vmatprep.subr.mxu0 0.0
    %3476 = vmatpush1.msra.mxu0 0.0
    %3477 = vmatprep.subr.mxu0 0.0
    %3478 = vmatpush1.msra.mxu0 0.0
    %3479 = vmatprep.subr.mxu0 0.0
    %3480 = vmatpush1.msra.mxu0 0.0
    %3481 = vmatprep.subr.mxu0 0.0
    %3482 = vmatpush1.msra.mxu0 0.0
    %3483 = vmatprep.subr.mxu0 0.0
    %3484 = vmatpush1.msra.mxu0 0.0
    %3485 = vmatprep.subr.mxu0 0.0
    %3486 = vmatpush1.msra.mxu0 0.0
    %3487 = vmatprep.subr.mxu0 0.0
    %3488 = vmatpush1.msra.mxu0 0.0
    %3489 = vmatprep.subr.mxu0 0.0
    %3490 = vmatpush1.msra.mxu0 0.0
    %3491 = vmatprep.subr.mxu0 0.0
    %3492 = vmatpush1.msra.mxu0 0.0
    %3493 = vmatprep.subr.mxu0 0.0
    %3494 = vmatpush1.msra.mxu0 0.0
    %3495 = vmatprep.subr.mxu0 0.0
    %v3496 = vand.u32 %v69, 4294901760
    %v3497 = vsub.f32 %v69, %v3496
    %3498 = vmatpush1.msra.mxu0 %v3497
    %3499 = vmatprep.subr.mxu0 0.0
    %v3500 = vand.u32 %v68, 4294901760
    %v3501 = vsub.f32 %v68, %v3500
    %3502 = vmatpush1.msra.mxu0 %v3501
    %3503 = vmatprep.subr.mxu0 0.0
    %v3504 = vand.u32 %v67, 4294901760
    %v3505 = vsub.f32 %v67, %v3504
    %3506 = vmatpush1.msra.mxu0 %v3505
    %3507 = vmatprep.subr.mxu0 0.0
    %v3508 = vand.u32 %v66, 4294901760
    %v3509 = vsub.f32 %v66, %v3508
    %3510 = vmatpush1.msra.mxu0 %v3509
    %3511 = vmatprep.subr.mxu0 0.0
    %3512 = vmatpush2.msra.mxu0 0.0
    %3513 = vmatprep.subr.mxu0 0.0
    %3514 = vmatpush2.msra.mxu0 0.0
    %3515 = vmatprep.subr.mxu0 0.0
    %3516 = vmatpush2.msra.mxu0 0.0
    %3517 = vmatprep.subr.mxu0 0.0
    %3518 = vmatpush2.msra.mxu0 0.0
    %3519 = vmatprep.subr.mxu0 0.0
    %3520 = vmatpush2.msra.mxu0 0.0
    %3521 = vmatprep.subr.mxu0 0.0
    %3522 = vmatpush2.msra.mxu0 0.0
    %3523 = vmatprep.subr.mxu0 0.0
    %3524 = vmatpush2.msra.mxu0 0.0
    %3525 = vmatprep.subr.mxu0 0.0
    %3526 = vmatpush2.msra.mxu0 0.0
    %3527 = vmatprep.subr.mxu0 0.0
    %3528 = vmatpush2.msra.mxu0 0.0
    %3529 = vmatprep.subr.mxu0 0.0
    %3530 = vmatpush2.msra.mxu0 0.0
    %3531 = vmatprep.subr.mxu0 0.0
    %3532 = vmatpush2.msra.mxu0 0.0
    %3533 = vmatprep.subr.mxu0 0.0
    %3534 = vmatpush2.msra.mxu0 0.0
    %3535 = vmatprep.subr.mxu0 0.0
    %3536 = vmatpush2.msra.mxu0 0.0
    %3537 = vmatprep.subr.mxu0 0.0
    %3538 = vmatpush2.msra.mxu0 0.0
    %3539 = vmatprep.subr.mxu0 0.0
    %3540 = vmatpush2.msra.mxu0 0.0
    %3541 = vmatprep.subr.mxu0 0.0
    %3542 = vmatpush2.msra.mxu0 0.0
    %3543 = vmatprep.mubr.f32.mxu0 0.0
    %v3544 = vand.u32 %v3299, 4294901760
    %v3545 = vsub.f32 %v3299, %v3544
    %3546 = vmatmul.mubr.f32.gmra.mxu0 %v3545
    %v3547 = vpop.f32.mrf.mxu0
    %v3548 = vadd.f32 %v3468, %v3547
    %v3549 = vpop.f32.mrf.mxu0
    %3550 = vdwg.mxu0
    %3551 = vmatprep.subr.mxu0 0.0
    %3552 = vmatpush1.msra.mxu0 0.0
    %3553 = vmatprep.subr.mxu0 0.0
    %3554 = vmatpush1.msra.mxu0 0.0
    %3555 = vmatprep.subr.mxu0 0.0
    %3556 = vmatpush1.msra.mxu0 0.0
    %3557 = vmatprep.subr.mxu0 0.0
    %3558 = vmatpush1.msra.mxu0 0.0
    %3559 = vmatprep.subr.mxu0 0.0
    %3560 = vmatpush1.msra.mxu0 0.0
    %3561 = vmatprep.subr.mxu0 0.0
    %3562 = vmatpush1.msra.mxu0 0.0
    %3563 = vmatprep.subr.mxu0 0.0
    %3564 = vmatpush1.msra.mxu0 0.0
    %3565 = vmatprep.subr.mxu0 0.0
    %3566 = vmatpush1.msra.mxu0 0.0
    %3567 = vmatprep.subr.mxu0 0.0
    %3568 = vmatpush1.msra.mxu0 0.0
    %3569 = vmatprep.subr.mxu0 0.0
    %3570 = vmatpush1.msra.mxu0 0.0
    %3571 = vmatprep.subr.mxu0 0.0
    %3572 = vmatpush1.msra.mxu0 0.0
    %3573 = vmatprep.subr.mxu0 0.0
    %3574 = vmatpush1.msra.mxu0 0.0
    %3575 = vmatprep.subr.mxu0 0.0
    %v3576 = vand.u32 %v69, 4294901760
    %3577 = vmatpush1.msra.mxu0 %v3576
    %3578 = vmatprep.subr.mxu0 0.0
    %v3579 = vand.u32 %v68, 4294901760
    %3580 = vmatpush1.msra.mxu0 %v3579
    %3581 = vmatprep.subr.mxu0 0.0
    %v3582 = vand.u32 %v67, 4294901760
    %3583 = vmatpush1.msra.mxu0 %v3582
    %3584 = vmatprep.subr.mxu0 0.0
    %v3585 = vand.u32 %v66, 4294901760
    %3586 = vmatpush1.msra.mxu0 %v3585
    %3587 = vmatprep.subr.mxu0 0.0
    %3588 = vmatpush2.msra.mxu0 0.0
    %3589 = vmatprep.subr.mxu0 0.0
    %3590 = vmatpush2.msra.mxu0 0.0
    %3591 = vmatprep.subr.mxu0 0.0
    %3592 = vmatpush2.msra.mxu0 0.0
    %3593 = vmatprep.subr.mxu0 0.0
    %3594 = vmatpush2.msra.mxu0 0.0
    %3595 = vmatprep.subr.mxu0 0.0
    %3596 = vmatpush2.msra.mxu0 0.0
    %3597 = vmatprep.subr.mxu0 0.0
    %3598 = vmatpush2.msra.mxu0 0.0
    %3599 = vmatprep.subr.mxu0 0.0
    %3600 = vmatpush2.msra.mxu0 0.0
    %3601 = vmatprep.subr.mxu0 0.0
    %3602 = vmatpush2.msra.mxu0 0.0
    %3603 = vmatprep.subr.mxu0 0.0
    %3604 = vmatpush2.msra.mxu0 0.0
    %3605 = vmatprep.subr.mxu0 0.0
    %3606 = vmatpush2.msra.mxu0 0.0
    %3607 = vmatprep.subr.mxu0 0.0
    %3608 = vmatpush2.msra.mxu0 0.0
    %3609 = vmatprep.subr.mxu0 0.0
    %3610 = vmatpush2.msra.mxu0 0.0
    %3611 = vmatprep.subr.mxu0 0.0
    %3612 = vmatpush2.msra.mxu0 0.0
    %3613 = vmatprep.subr.mxu0 0.0
    %3614 = vmatpush2.msra.mxu0 0.0
    %3615 = vmatprep.subr.mxu0 0.0
    %3616 = vmatpush2.msra.mxu0 0.0
    %3617 = vmatprep.subr.mxu0 0.0
    %3618 = vmatpush2.msra.mxu0 0.0
    %3619 = vmatprep.mubr.f32.mxu0 0.0
    %v3620 = vand.u32 %v3299, 4294901760
    %v3621 = vsub.f32 %v3299, %v3620
    %v3622 = vand.u32 %v3621, 4294901760
    %3623 = vmatmul.mubr.f32.gmra.mxu0 %v3622
    %v3624 = vpop.f32.mrf.mxu0
    %v3625 = vadd.f32 %v3548, %v3624
    %v3626 = vpop.f32.mrf.mxu0
    %3627 = vdwg.mxu0
    %3628 = vmatprep.subr.mxu0 0.0
    %3629 = vmatpush1.msra.mxu0 0.0
    %3630 = vmatprep.subr.mxu0 0.0
    %3631 = vmatpush1.msra.mxu0 0.0
    %3632 = vmatprep.subr.mxu0 0.0
    %3633 = vmatpush1.msra.mxu0 0.0
    %3634 = vmatprep.subr.mxu0 0.0
    %3635 = vmatpush1.msra.mxu0 0.0
    %3636 = vmatprep.subr.mxu0 0.0
    %3637 = vmatpush1.msra.mxu0 0.0
    %3638 = vmatprep.subr.mxu0 0.0
    %3639 = vmatpush1.msra.mxu0 0.0
    %3640 = vmatprep.subr.mxu0 0.0
    %3641 = vmatpush1.msra.mxu0 0.0
    %3642 = vmatprep.subr.mxu0 0.0
    %3643 = vmatpush1.msra.mxu0 0.0
    %3644 = vmatprep.subr.mxu0 0.0
    %3645 = vmatpush1.msra.mxu0 0.0
    %3646 = vmatprep.subr.mxu0 0.0
    %3647 = vmatpush1.msra.mxu0 0.0
    %3648 = vmatprep.subr.mxu0 0.0
    %3649 = vmatpush1.msra.mxu0 0.0
    %3650 = vmatprep.subr.mxu0 0.0
    %3651 = vmatpush1.msra.mxu0 0.0
    %3652 = vmatprep.subr.mxu0 0.0
    %v3653 = vand.u32 %v69, 4294901760
    %v3654 = vsub.f32 %v69, %v3653
    %v3655 = vand.u32 %v3654, 4294901760
    %3656 = vmatpush1.msra.mxu0 %v3655
    %3657 = vmatprep.subr.mxu0 0.0
    %v3658 = vand.u32 %v68, 4294901760
    %v3659 = vsub.f32 %v68, %v3658
    %v3660 = vand.u32 %v3659, 4294901760
    %3661 = vmatpush1.msra.mxu0 %v3660
    %3662 = vmatprep.subr.mxu0 0.0
    %v3663 = vand.u32 %v67, 4294901760
    %v3664 = vsub.f32 %v67, %v3663
    %v3665 = vand.u32 %v3664, 4294901760
    %3666 = vmatpush1.msra.mxu0 %v3665
    %3667 = vmatprep.subr.mxu0 0.0
    %v3668 = vand.u32 %v66, 4294901760
    %v3669 = vsub.f32 %v66, %v3668
    %v3670 = vand.u32 %v3669, 4294901760
    %3671 = vmatpush1.msra.mxu0 %v3670
    %3672 = vmatprep.subr.mxu0 0.0
    %3673 = vmatpush2.msra.mxu0 0.0
    %3674 = vmatprep.subr.mxu0 0.0
    %3675 = vmatpush2.msra.mxu0 0.0
    %3676 = vmatprep.subr.mxu0 0.0
    %3677 = vmatpush2.msra.mxu0 0.0
    %3678 = vmatprep.subr.mxu0 0.0
    %3679 = vmatpush2.msra.mxu0 0.0
    %3680 = vmatprep.subr.mxu0 0.0
    %3681 = vmatpush2.msra.mxu0 0.0
    %3682 = vmatprep.subr.mxu0 0.0
    %3683 = vmatpush2.msra.mxu0 0.0
    %3684 = vmatprep.subr.mxu0 0.0
    %3685 = vmatpush2.msra.mxu0 0.0
    %3686 = vmatprep.subr.mxu0 0.0
    %3687 = vmatpush2.msra.mxu0 0.0
    %3688 = vmatprep.subr.mxu0 0.0
    %3689 = vmatpush2.msra.mxu0 0.0
    %3690 = vmatprep.subr.mxu0 0.0
    %3691 = vmatpush2.msra.mxu0 0.0
    %3692 = vmatprep.subr.mxu0 0.0
    %3693 = vmatpush2.msra.mxu0 0.0
    %3694 = vmatprep.subr.mxu0 0.0
    %3695 = vmatpush2.msra.mxu0 0.0
    %3696 = vmatprep.subr.mxu0 0.0
    %3697 = vmatpush2.msra.mxu0 0.0
    %3698 = vmatprep.subr.mxu0 0.0
    %3699 = vmatpush2.msra.mxu0 0.0
    %3700 = vmatprep.subr.mxu0 0.0
    %3701 = vmatpush2.msra.mxu0 0.0
    %3702 = vmatprep.subr.mxu0 0.0
    %3703 = vmatpush2.msra.mxu0 0.0
    %3704 = vmatprep.mubr.f32.mxu0 0.0
    %v3705 = vand.u32 %v3299, 4294901760
    %3706 = vmatmul.mubr.f32.gmra.mxu0 %v3705
    %v3707 = vpop.f32.mrf.mxu0
    %v3708 = vadd.f32 %v3625, %v3707
    %v3709 = vpop.f32.mrf.mxu0
    %3710 = vdwg.mxu0
    %3711 = vmatprep.subr.mxu0 0.0
    %3712 = vmatpush1.msra.mxu0 0.0
    %3713 = vmatprep.subr.mxu0 0.0
    %3714 = vmatpush1.msra.mxu0 0.0
    %3715 = vmatprep.subr.mxu0 0.0
    %3716 = vmatpush1.msra.mxu0 0.0
    %3717 = vmatprep.subr.mxu0 0.0
    %3718 = vmatpush1.msra.mxu0 0.0
    %3719 = vmatprep.subr.mxu0 0.0
    %3720 = vmatpush1.msra.mxu0 0.0
    %3721 = vmatprep.subr.mxu0 0.0
    %3722 = vmatpush1.msra.mxu0 0.0
    %3723 = vmatprep.subr.mxu0 0.0
    %3724 = vmatpush1.msra.mxu0 0.0
    %3725 = vmatprep.subr.mxu0 0.0
    %3726 = vmatpush1.msra.mxu0 0.0
    %3727 = vmatprep.subr.mxu0 0.0
    %3728 = vmatpush1.msra.mxu0 0.0
    %3729 = vmatprep.subr.mxu0 0.0
    %3730 = vmatpush1.msra.mxu0 0.0
    %3731 = vmatprep.subr.mxu0 0.0
    %3732 = vmatpush1.msra.mxu0 0.0
    %3733 = vmatprep.subr.mxu0 0.0
    %3734 = vmatpush1.msra.mxu0 0.0
    %3735 = vmatprep.subr.mxu0 0.0
    %v3736 = vand.u32 %v69, 4294901760
    %3737 = vmatpush1.msra.mxu0 %v3736
    %3738 = vmatprep.subr.mxu0 0.0
    %v3739 = vand.u32 %v68, 4294901760
    %3740 = vmatpush1.msra.mxu0 %v3739
    %3741 = vmatprep.subr.mxu0 0.0
    %v3742 = vand.u32 %v67, 4294901760
    %3743 = vmatpush1.msra.mxu0 %v3742
    %3744 = vmatprep.subr.mxu0 0.0
    %v3745 = vand.u32 %v66, 4294901760
    %3746 = vmatpush1.msra.mxu0 %v3745
    %3747 = vmatprep.subr.mxu0 0.0
    %3748 = vmatpush2.msra.mxu0 0.0
    %3749 = vmatprep.subr.mxu0 0.0
    %3750 = vmatpush2.msra.mxu0 0.0
    %3751 = vmatprep.subr.mxu0 0.0
    %3752 = vmatpush2.msra.mxu0 0.0
    %3753 = vmatprep.subr.mxu0 0.0
    %3754 = vmatpush2.msra.mxu0 0.0
    %3755 = vmatprep.subr.mxu0 0.0
    %3756 = vmatpush2.msra.mxu0 0.0
    %3757 = vmatprep.subr.mxu0 0.0
    %3758 = vmatpush2.msra.mxu0 0.0
    %3759 = vmatprep.subr.mxu0 0.0
    %3760 = vmatpush2.msra.mxu0 0.0
    %3761 = vmatprep.subr.mxu0 0.0
    %3762 = vmatpush2.msra.mxu0 0.0
    %3763 = vmatprep.subr.mxu0 0.0
    %3764 = vmatpush2.msra.mxu0 0.0
    %3765 = vmatprep.subr.mxu0 0.0
    %3766 = vmatpush2.msra.mxu0 0.0
    %3767 = vmatprep.subr.mxu0 0.0
    %3768 = vmatpush2.msra.mxu0 0.0
    %3769 = vmatprep.subr.mxu0 0.0
    %3770 = vmatpush2.msra.mxu0 0.0
    %3771 = vmatprep.subr.mxu0 0.0
    %3772 = vmatpush2.msra.mxu0 0.0
    %3773 = vmatprep.subr.mxu0 0.0
    %3774 = vmatpush2.msra.mxu0 0.0
    %3775 = vmatprep.subr.mxu0 0.0
    %3776 = vmatpush2.msra.mxu0 0.0
    %3777 = vmatprep.subr.mxu0 0.0
    %3778 = vmatpush2.msra.mxu0 0.0
    %3779 = vmatprep.mubr.f32.mxu0 0.0
    %v3780 = vand.u32 %v3299, 4294901760
    %3781 = vmatmul.mubr.f32.gmra.mxu0 %v3780
    %v3782 = vpop.f32.mrf.mxu0
    %v3783 = vadd.f32 %v3708, %v3782
    %v3784 = vpop.f32.mrf.mxu0
    %3785 = vdwg.mxu0
    %v3786 = vadd.f32 %v754, %v3783
    %v3787 = vxor.u32 %v3786, 2147483648
    %v3788 = vmul.f32 %v3787, 1.442695
    %v3789 = vpow.pop %v3788
    %v3790 = vadd.f32 %v3789, 1.0
    %v3791 = vrcp.pop %v3790
    %v3792 = vmul.f32 1.0, %v3791
    %v3793 = vtanh.pop %v3786
    %3794 = vrot.lane.b32.xlu0 %v3792, 96
    %v3795 = vpop.permute.xlu0 %3794
    %3796 = vrot.lane.b32.xlu0 %v3793, 64
    %v3797 = vpop.permute.xlu0 %3796
    %3798 = vrot.lane.b32.xlu0 %v3792, 32
    %v3799 = vpop.permute.xlu0 %3798
    %v3800 = vmul.f32 %v3795, %v3294
    %v3801 = vmul.f32 %v3792, %v3797
    %v3802 = vadd.f32 %v3800, %v3801
    %v3803 = vtanh.pop %v3802
    %v3804 = vmul.f32 %v3799, %v3803
    %3805 = vst.msk [vmem:[#allocation2 + $0x28] sm:$0xff] %vm757, %v3804
    %v3806 = vld [vmem:[#allocation2] sm:$0xff]
    %v3807 = vld [vmem:[#allocation2 + $0x8] sm:$0xff]
    %v3808 = vld [vmem:[#allocation2 + $0x10] sm:$0xff]
    %v3809 = vld [vmem:[#allocation2 + $0x18] sm:$0xff]
    %v3810 = vld [vmem:[#allocation2 + $0x20] sm:$0xff]
    %v3811 = vld [vmem:[#allocation2 + $0x28] sm:$0xff]
    %v3812 = vld [vmem:[%s4] sm:$0xff]
    %v3813 = vld [vmem:[%s4 + $0x8] sm:$0xff]
    %v3814 = vld [vmem:[%s4 + $0x10] sm:$0xff]
    %v3815 = vld [vmem:[%s4 + $0x18] sm:$0xff]
    %v3816 = vld [vmem:[#allocation6] sm:$0xff]
    %v3817 = vld [vmem:[#allocation6 + $0x8] sm:$0xff]
    %v3818 = vld [vmem:[#allocation6 + $0x10] sm:$0xff]
    %v3819 = vld [vmem:[#allocation6 + $0x18] sm:$0xff]
    %v3820 = vld [vmem:[%s6] sm:$0x1]
    %v3822 = vlaneseq
    %v3823 = vshrl.u32 %v3822, 7
    %v3824 = vsub.s32 0, %v3823
    %v3825 = vrot.slane %v3820, %v3824
    %v3828 = vsel %vm757, %v3806, 0
    %v3831 = vsel %vm757, %v3807, 0
    %v3834 = vsel %vm757, %v3808, 0
    %v3837 = vsel %vm757, %v3809, 0
    %v3840 = vsel %vm757, %v3810, 0
    %v3843 = vsel %vm757, %v3811, 0
    %3845 = vmatprep.subr.mxu0 0.0
    %3846 = vmatpush1.msra.mxu0 0.0
    %3847 = vmatprep.subr.mxu0 0.0
    %3848 = vmatpush1.msra.mxu0 0.0
    %3849 = vmatprep.subr.mxu0 0.0
    %3850 = vmatpush1.msra.mxu0 0.0
    %3851 = vmatprep.subr.mxu0 0.0
    %3852 = vmatpush1.msra.mxu0 0.0
    %3853 = vmatprep.subr.mxu0 0.0
    %3854 = vmatpush1.msra.mxu0 0.0
    %3855 = vmatprep.subr.mxu0 0.0
    %3856 = vmatpush1.msra.mxu0 0.0
    %3857 = vmatprep.subr.mxu0 0.0
    %3858 = vmatpush1.msra.mxu0 0.0
    %3859 = vmatprep.subr.mxu0 0.0
    %3860 = vmatpush1.msra.mxu0 0.0
    %3861 = vmatprep.subr.mxu0 0.0
    %3862 = vmatpush1.msra.mxu0 0.0
    %3863 = vmatprep.subr.mxu0 0.0
    %3864 = vmatpush1.msra.mxu0 0.0
    %3865 = vmatprep.subr.mxu0 0.0
    %3866 = vmatpush1.msra.mxu0 0.0
    %3867 = vmatprep.subr.mxu0 0.0
    %3868 = vmatpush1.msra.mxu0 0.0
    %3869 = vmatprep.subr.mxu0 0.0
    %v3870 = vand.u32 %v3815, 4294901760
    %3871 = vmatpush1.msra.mxu0 %v3870
    %3872 = vmatprep.subr.mxu0 0.0
    %v3873 = vand.u32 %v3814, 4294901760
    %3874 = vmatpush1.msra.mxu0 %v3873
    %3875 = vmatprep.subr.mxu0 0.0
    %v3876 = vand.u32 %v3813, 4294901760
    %3877 = vmatpush1.msra.mxu0 %v3876
    %3878 = vmatprep.subr.mxu0 0.0
    %v3879 = vand.u32 %v3812, 4294901760
    %3880 = vmatpush1.msra.mxu0 %v3879
    %3881 = vmatprep.subr.mxu0 0.0
    %3882 = vmatpush2.msra.mxu0 0.0
    %3883 = vmatprep.subr.mxu0 0.0
    %3884 = vmatpush2.msra.mxu0 0.0
    %3885 = vmatprep.subr.mxu0 0.0
    %3886 = vmatpush2.msra.mxu0 0.0
    %3887 = vmatprep.subr.mxu0 0.0
    %3888 = vmatpush2.msra.mxu0 0.0
    %3889 = vmatprep.subr.mxu0 0.0
    %3890 = vmatpush2.msra.mxu0 0.0
    %3891 = vmatprep.subr.mxu0 0.0
    %3892 = vmatpush2.msra.mxu0 0.0
    %3893 = vmatprep.subr.mxu0 0.0
    %3894 = vmatpush2.msra.mxu0 0.0
    %3895 = vmatprep.subr.mxu0 0.0
    %3896 = vmatpush2.msra.mxu0 0.0
    %3897 = vmatprep.subr.mxu0 0.0
    %3898 = vmatpush2.msra.mxu0 0.0
    %3899 = vmatprep.subr.mxu0 0.0
    %3900 = vmatpush2.msra.mxu0 0.0
    %3901 = vmatprep.subr.mxu0 0.0
    %3902 = vmatpush2.msra.mxu0 0.0
    %3903 = vmatprep.subr.mxu0 0.0
    %3904 = vmatpush2.msra.mxu0 0.0
    %3905 = vmatprep.subr.mxu0 0.0
    %3906 = vmatpush2.msra.mxu0 0.0
    %3907 = vmatprep.subr.mxu0 0.0
    %3908 = vmatpush2.msra.mxu0 0.0
    %3909 = vmatprep.subr.mxu0 0.0
    %3910 = vmatpush2.msra.mxu0 0.0
    %3911 = vmatprep.subr.mxu0 0.0
    %3912 = vmatpush2.msra.mxu0 0.0
    %3913 = vmatprep.mubr.f32.mxu0 0.0
    %v3914 = vand.u32 %v3828, 4294901760
    %v3915 = vsub.f32 %v3828, %v3914
    %v3916 = vand.u32 %v3915, 4294901760
    %v3917 = vsub.f32 %v3915, %v3916
    %v3918 = vand.u32 %v3917, 4294901760
    %3919 = vmatmul.mubr.f32.gmra.mxu0 %v3918
    %v3920 = vpop.f32.mrf.mxu0
    %v3921 = vadd.f32 %v3825, %v3920
    %v3922 = vpop.f32.mrf.mxu0
    %3923 = vmatprep.mubr.f32.mxu0 0.0
    %v3924 = vand.u32 %v3831, 4294901760
    %v3925 = vsub.f32 %v3831, %v3924
    %v3926 = vand.u32 %v3925, 4294901760
    %v3927 = vsub.f32 %v3925, %v3926
    %v3928 = vand.u32 %v3927, 4294901760
    %3929 = vmatmul.mubr.f32.gmra.mxu0 %v3928
    %v3930 = vpop.f32.mrf.mxu0
    %v3931 = vadd.f32 %v3825, %v3930
    %v3932 = vpop.f32.mrf.mxu0
    %3933 = vmatprep.mubr.f32.mxu0 0.0
    %v3934 = vand.u32 %v3834, 4294901760
    %v3935 = vsub.f32 %v3834, %v3934
    %v3936 = vand.u32 %v3935, 4294901760
    %v3937 = vsub.f32 %v3935, %v3936
    %v3938 = vand.u32 %v3937, 4294901760
    %3939 = vmatmul.mubr.f32.gmra.mxu0 %v3938
    %v3940 = vpop.f32.mrf.mxu0
    %v3941 = vadd.f32 %v3825, %v3940
    %v3942 = vpop.f32.mrf.mxu0
    %3943 = vmatprep.mubr.f32.mxu0 0.0
    %v3944 = vand.u32 %v3837, 4294901760
    %v3945 = vsub.f32 %v3837, %v3944
    %v3946 = vand.u32 %v3945, 4294901760
    %v3947 = vsub.f32 %v3945, %v3946
    %v3948 = vand.u32 %v3947, 4294901760
    %3949 = vmatmul.mubr.f32.gmra.mxu0 %v3948
    %v3950 = vpop.f32.mrf.mxu0
    %v3951 = vadd.f32 %v3825, %v3950
    %v3952 = vpop.f32.mrf.mxu0
    %3953 = vmatprep.mubr.f32.mxu0 0.0
    %v3954 = vand.u32 %v3840, 4294901760
    %v3955 = vsub.f32 %v3840, %v3954
    %v3956 = vand.u32 %v3955, 4294901760
    %v3957 = vsub.f32 %v3955, %v3956
    %v3958 = vand.u32 %v3957, 4294901760
    %3959 = vmatmul.mubr.f32.gmra.mxu0 %v3958
    %v3960 = vpop.f32.mrf.mxu0
    %v3961 = vadd.f32 %v3825, %v3960
    %v3962 = vpop.f32.mrf.mxu0
    %3963 = vmatprep.mubr.f32.mxu0 0.0
    %v3964 = vand.u32 %v3843, 4294901760
    %v3965 = vsub.f32 %v3843, %v3964
    %v3966 = vand.u32 %v3965, 4294901760
    %v3967 = vsub.f32 %v3965, %v3966
    %v3968 = vand.u32 %v3967, 4294901760
    %3969 = vmatmul.mubr.f32.gmra.mxu0 %v3968
    %v3970 = vpop.f32.mrf.mxu0
    %v3971 = vadd.f32 %v3825, %v3970
    %v3972 = vpop.f32.mrf.mxu0
    %3973 = vdwg.mxu0
    %3974 = vmatprep.subr.mxu0 0.0
    %3975 = vmatpush1.msra.mxu0 0.0
    %3976 = vmatprep.subr.mxu0 0.0
    %3977 = vmatpush1.msra.mxu0 0.0
    %3978 = vmatprep.subr.mxu0 0.0
    %3979 = vmatpush1.msra.mxu0 0.0
    %3980 = vmatprep.subr.mxu0 0.0
    %3981 = vmatpush1.msra.mxu0 0.0
    %3982 = vmatprep.subr.mxu0 0.0
    %3983 = vmatpush1.msra.mxu0 0.0
    %3984 = vmatprep.subr.mxu0 0.0
    %3985 = vmatpush1.msra.mxu0 0.0
    %3986 = vmatprep.subr.mxu0 0.0
    %3987 = vmatpush1.msra.mxu0 0.0
    %3988 = vmatprep.subr.mxu0 0.0
    %3989 = vmatpush1.msra.mxu0 0.0
    %3990 = vmatprep.subr.mxu0 0.0
    %3991 = vmatpush1.msra.mxu0 0.0
    %3992 = vmatprep.subr.mxu0 0.0
    %3993 = vmatpush1.msra.mxu0 0.0
    %3994 = vmatprep.subr.mxu0 0.0
    %3995 = vmatpush1.msra.mxu0 0.0
    %3996 = vmatprep.subr.mxu0 0.0
    %3997 = vmatpush1.msra.mxu0 0.0
    %3998 = vmatprep.subr.mxu0 0.0
    %v3999 = vand.u32 %v3815, 4294901760
    %v4000 = vsub.f32 %v3815, %v3999
    %v4001 = vand.u32 %v4000, 4294901760
    %v4002 = vsub.f32 %v4000, %v4001
    %v4003 = vand.u32 %v4002, 4294901760
    %4004 = vmatpush1.msra.mxu0 %v4003
    %4005 = vmatprep.subr.mxu0 0.0
    %v4006 = vand.u32 %v3814, 4294901760
    %v4007 = vsub.f32 %v3814, %v4006
    %v4008 = vand.u32 %v4007, 4294901760
    %v4009 = vsub.f32 %v4007, %v4008
    %v4010 = vand.u32 %v4009, 4294901760
    %4011 = vmatpush1.msra.mxu0 %v4010
    %4012 = vmatprep.subr.mxu0 0.0
    %v4013 = vand.u32 %v3813, 4294901760
    %v4014 = vsub.f32 %v3813, %v4013
    %v4015 = vand.u32 %v4014, 4294901760
    %v4016 = vsub.f32 %v4014, %v4015
    %v4017 = vand.u32 %v4016, 4294901760
    %4018 = vmatpush1.msra.mxu0 %v4017
    %4019 = vmatprep.subr.mxu0 0.0
    %v4020 = vand.u32 %v3812, 4294901760
    %v4021 = vsub.f32 %v3812, %v4020
    %v4022 = vand.u32 %v4021, 4294901760
    %v4023 = vsub.f32 %v4021, %v4022
    %v4024 = vand.u32 %v4023, 4294901760
    %4025 = vmatpush1.msra.mxu0 %v4024
    %4026 = vmatprep.subr.mxu0 0.0
    %4027 = vmatpush2.msra.mxu0 0.0
    %4028 = vmatprep.subr.mxu0 0.0
    %4029 = vmatpush2.msra.mxu0 0.0
    %4030 = vmatprep.subr.mxu0 0.0
    %4031 = vmatpush2.msra.mxu0 0.0
    %4032 = vmatprep.subr.mxu0 0.0
    %4033 = vmatpush2.msra.mxu0 0.0
    %4034 = vmatprep.subr.mxu0 0.0
    %4035 = vmatpush2.msra.mxu0 0.0
    %4036 = vmatprep.subr.mxu0 0.0
    %4037 = vmatpush2.msra.mxu0 0.0
    %4038 = vmatprep.subr.mxu0 0.0
    %4039 = vmatpush2.msra.mxu0 0.0
    %4040 = vmatprep.subr.mxu0 0.0
    %4041 = vmatpush2.msra.mxu0 0.0
    %4042 = vmatprep.subr.mxu0 0.0
    %4043 = vmatpush2.msra.mxu0 0.0
    %4044 = vmatprep.subr.mxu0 0.0
    %4045 = vmatpush2.msra.mxu0 0.0
    %4046 = vmatprep.subr.mxu0 0.0
    %4047 = vmatpush2.msra.mxu0 0.0
    %4048 = vmatprep.subr.mxu0 0.0
    %4049 = vmatpush2.msra.mxu0 0.0
    %4050 = vmatprep.subr.mxu0 0.0
    %4051 = vmatpush2.msra.mxu0 0.0
    %4052 = vmatprep.subr.mxu0 0.0
    %4053 = vmatpush2.msra.mxu0 0.0
    %4054 = vmatprep.subr.mxu0 0.0
    %4055 = vmatpush2.msra.mxu0 0.0
    %4056 = vmatprep.subr.mxu0 0.0
    %4057 = vmatpush2.msra.mxu0 0.0
    %4058 = vmatprep.mubr.f32.mxu0 0.0
    %v4059 = vand.u32 %v3828, 4294901760
    %4060 = vmatmul.mubr.f32.gmra.mxu0 %v4059
    %v4061 = vpop.f32.mrf.mxu0
    %v4062 = vadd.f32 %v3921, %v4061
    %v4063 = vpop.f32.mrf.mxu0
    %4064 = vmatprep.mubr.f32.mxu0 0.0
    %v4065 = vand.u32 %v3831, 4294901760
    %4066 = vmatmul.mubr.f32.gmra.mxu0 %v4065
    %v4067 = vpop.f32.mrf.mxu0
    %v4068 = vadd.f32 %v3931, %v4067
    %v4069 = vpop.f32.mrf.mxu0
    %4070 = vmatprep.mubr.f32.mxu0 0.0
    %v4071 = vand.u32 %v3834, 4294901760
    %4072 = vmatmul.mubr.f32.gmra.mxu0 %v4071
    %v4073 = vpop.f32.mrf.mxu0
    %v4074 = vadd.f32 %v3941, %v4073
    %v4075 = vpop.f32.mrf.mxu0
    %4076 = vmatprep.mubr.f32.mxu0 0.0
    %v4077 = vand.u32 %v3837, 4294901760
    %4078 = vmatmul.mubr.f32.gmra.mxu0 %v4077
    %v4079 = vpop.f32.mrf.mxu0
    %v4080 = vadd.f32 %v3951, %v4079
    %v4081 = vpop.f32.mrf.mxu0
    %4082 = vmatprep.mubr.f32.mxu0 0.0
    %v4083 = vand.u32 %v3840, 4294901760
    %4084 = vmatmul.mubr.f32.gmra.mxu0 %v4083
    %v4085 = vpop.f32.mrf.mxu0
    %v4086 = vadd.f32 %v3961, %v4085
    %v4087 = vpop.f32.mrf.mxu0
    %4088 = vmatprep.mubr.f32.mxu0 0.0
    %v4089 = vand.u32 %v3843, 4294901760
    %4090 = vmatmul.mubr.f32.gmra.mxu0 %v4089
    %v4091 = vpop.f32.mrf.mxu0
    %v4092 = vadd.f32 %v3971, %v4091
    %v4093 = vpop.f32.mrf.mxu0
    %4094 = vdwg.mxu0
    %4095 = vmatprep.subr.mxu0 0.0
    %4096 = vmatpush1.msra.mxu0 0.0
    %4097 = vmatprep.subr.mxu0 0.0
    %4098 = vmatpush1.msra.mxu0 0.0
    %4099 = vmatprep.subr.mxu0 0.0
    %4100 = vmatpush1.msra.mxu0 0.0
    %4101 = vmatprep.subr.mxu0 0.0
    %4102 = vmatpush1.msra.mxu0 0.0
    %4103 = vmatprep.subr.mxu0 0.0
    %4104 = vmatpush1.msra.mxu0 0.0
    %4105 = vmatprep.subr.mxu0 0.0
    %4106 = vmatpush1.msra.mxu0 0.0
    %4107 = vmatprep.subr.mxu0 0.0
    %4108 = vmatpush1.msra.mxu0 0.0
    %4109 = vmatprep.subr.mxu0 0.0
    %4110 = vmatpush1.msra.mxu0 0.0
    %4111 = vmatprep.subr.mxu0 0.0
    %4112 = vmatpush1.msra.mxu0 0.0
    %4113 = vmatprep.subr.mxu0 0.0
    %4114 = vmatpush1.msra.mxu0 0.0
    %4115 = vmatprep.subr.mxu0 0.0
    %4116 = vmatpush1.msra.mxu0 0.0
    %4117 = vmatprep.subr.mxu0 0.0
    %4118 = vmatpush1.msra.mxu0 0.0
    %4119 = vmatprep.subr.mxu0 0.0
    %v4120 = vand.u32 %v3815, 4294901760
    %v4121 = vsub.f32 %v3815, %v4120
    %4122 = vmatpush1.msra.mxu0 %v4121
    %4123 = vmatprep.subr.mxu0 0.0
    %v4124 = vand.u32 %v3814, 4294901760
    %v4125 = vsub.f32 %v3814, %v4124
    %4126 = vmatpush1.msra.mxu0 %v4125
    %4127 = vmatprep.subr.mxu0 0.0
    %v4128 = vand.u32 %v3813, 4294901760
    %v4129 = vsub.f32 %v3813, %v4128
    %4130 = vmatpush1.msra.mxu0 %v4129
    %4131 = vmatprep.subr.mxu0 0.0
    %v4132 = vand.u32 %v3812, 4294901760
    %v4133 = vsub.f32 %v3812, %v4132
    %4134 = vmatpush1.msra.mxu0 %v4133
    %4135 = vmatprep.subr.mxu0 0.0
    %4136 = vmatpush2.msra.mxu0 0.0
    %4137 = vmatprep.subr.mxu0 0.0
    %4138 = vmatpush2.msra.mxu0 0.0
    %4139 = vmatprep.subr.mxu0 0.0
    %4140 = vmatpush2.msra.mxu0 0.0
    %4141 = vmatprep.subr.mxu0 0.0
    %4142 = vmatpush2.msra.mxu0 0.0
    %4143 = vmatprep.subr.mxu0 0.0
    %4144 = vmatpush2.msra.mxu0 0.0
    %4145 = vmatprep.subr.mxu0 0.0
    %4146 = vmatpush2.msra.mxu0 0.0
    %4147 = vmatprep.subr.mxu0 0.0
    %4148 = vmatpush2.msra.mxu0 0.0
    %4149 = vmatprep.subr.mxu0 0.0
    %4150 = vmatpush2.msra.mxu0 0.0
    %4151 = vmatprep.subr.mxu0 0.0
    %4152 = vmatpush2.msra.mxu0 0.0
    %4153 = vmatprep.subr.mxu0 0.0
    %4154 = vmatpush2.msra.mxu0 0.0
    %4155 = vmatprep.subr.mxu0 0.0
    %4156 = vmatpush2.msra.mxu0 0.0
    %4157 = vmatprep.subr.mxu0 0.0
    %4158 = vmatpush2.msra.mxu0 0.0
    %4159 = vmatprep.subr.mxu0 0.0
    %4160 = vmatpush2.msra.mxu0 0.0
    %4161 = vmatprep.subr.mxu0 0.0
    %4162 = vmatpush2.msra.mxu0 0.0
    %4163 = vmatprep.subr.mxu0 0.0
    %4164 = vmatpush2.msra.mxu0 0.0
    %4165 = vmatprep.subr.mxu0 0.0
    %4166 = vmatpush2.msra.mxu0 0.0
    %4167 = vmatprep.mubr.f32.mxu0 0.0
    %v4168 = vand.u32 %v3828, 4294901760
    %v4169 = vsub.f32 %v3828, %v4168
    %4170 = vmatmul.mubr.f32.gmra.mxu0 %v4169
    %v4171 = vpop.f32.mrf.mxu0
    %v4172 = vadd.f32 %v4062, %v4171
    %v4173 = vpop.f32.mrf.mxu0
    %4174 = vmatprep.mubr.f32.mxu0 0.0
    %v4175 = vand.u32 %v3831, 4294901760
    %v4176 = vsub.f32 %v3831, %v4175
    %4177 = vmatmul.mubr.f32.gmra.mxu0 %v4176
    %v4178 = vpop.f32.mrf.mxu0
    %v4179 = vadd.f32 %v4068, %v4178
    %v4180 = vpop.f32.mrf.mxu0
    %4181 = vmatprep.mubr.f32.mxu0 0.0
    %v4182 = vand.u32 %v3834, 4294901760
    %v4183 = vsub.f32 %v3834, %v4182
    %4184 = vmatmul.mubr.f32.gmra.mxu0 %v4183
    %v4185 = vpop.f32.mrf.mxu0
    %v4186 = vadd.f32 %v4074, %v4185
    %v4187 = vpop.f32.mrf.mxu0
    %4188 = vmatprep.mubr.f32.mxu0 0.0
    %v4189 = vand.u32 %v3837, 4294901760
    %v4190 = vsub.f32 %v3837, %v4189
    %4191 = vmatmul.mubr.f32.gmra.mxu0 %v4190
    %v4192 = vpop.f32.mrf.mxu0
    %v4193 = vadd.f32 %v4080, %v4192
    %v4194 = vpop.f32.mrf.mxu0
    %4195 = vmatprep.mubr.f32.mxu0 0.0
    %v4196 = vand.u32 %v3840, 4294901760
    %v4197 = vsub.f32 %v3840, %v4196
    %4198 = vmatmul.mubr.f32.gmra.mxu0 %v4197
    %v4199 = vpop.f32.mrf.mxu0
    %v4200 = vadd.f32 %v4086, %v4199
    %v4201 = vpop.f32.mrf.mxu0
    %4202 = vmatprep.mubr.f32.mxu0 0.0
    %v4203 = vand.u32 %v3843, 4294901760
    %v4204 = vsub.f32 %v3843, %v4203
    %4205 = vmatmul.mubr.f32.gmra.mxu0 %v4204
    %v4206 = vpop.f32.mrf.mxu0
    %v4207 = vadd.f32 %v4092, %v4206
    %v4208 = vpop.f32.mrf.mxu0
    %4209 = vdwg.mxu0
    %4210 = vmatprep.subr.mxu0 0.0
    %4211 = vmatpush1.msra.mxu0 0.0
    %4212 = vmatprep.subr.mxu0 0.0
    %4213 = vmatpush1.msra.mxu0 0.0
    %4214 = vmatprep.subr.mxu0 0.0
    %4215 = vmatpush1.msra.mxu0 0.0
    %4216 = vmatprep.subr.mxu0 0.0
    %4217 = vmatpush1.msra.mxu0 0.0
    %4218 = vmatprep.subr.mxu0 0.0
    %4219 = vmatpush1.msra.mxu0 0.0
    %4220 = vmatprep.subr.mxu0 0.0
    %4221 = vmatpush1.msra.mxu0 0.0
    %4222 = vmatprep.subr.mxu0 0.0
    %4223 = vmatpush1.msra.mxu0 0.0
    %4224 = vmatprep.subr.mxu0 0.0
    %4225 = vmatpush1.msra.mxu0 0.0
    %4226 = vmatprep.subr.mxu0 0.0
    %4227 = vmatpush1.msra.mxu0 0.0
    %4228 = vmatprep.subr.mxu0 0.0
    %4229 = vmatpush1.msra.mxu0 0.0
    %4230 = vmatprep.subr.mxu0 0.0
    %4231 = vmatpush1.msra.mxu0 0.0
    %4232 = vmatprep.subr.mxu0 0.0
    %4233 = vmatpush1.msra.mxu0 0.0
    %4234 = vmatprep.subr.mxu0 0.0
    %v4235 = vand.u32 %v3815, 4294901760
    %4236 = vmatpush1.msra.mxu0 %v4235
    %4237 = vmatprep.subr.mxu0 0.0
    %v4238 = vand.u32 %v3814, 4294901760
    %4239 = vmatpush1.msra.mxu0 %v4238
    %4240 = vmatprep.subr.mxu0 0.0
    %v4241 = vand.u32 %v3813, 4294901760
    %4242 = vmatpush1.msra.mxu0 %v4241
    %4243 = vmatprep.subr.mxu0 0.0
    %v4244 = vand.u32 %v3812, 4294901760
    %4245 = vmatpush1.msra.mxu0 %v4244
    %4246 = vmatprep.subr.mxu0 0.0
    %4247 = vmatpush2.msra.mxu0 0.0
    %4248 = vmatprep.subr.mxu0 0.0
    %4249 = vmatpush2.msra.mxu0 0.0
    %4250 = vmatprep.subr.mxu0 0.0
    %4251 = vmatpush2.msra.mxu0 0.0
    %4252 = vmatprep.subr.mxu0 0.0
    %4253 = vmatpush2.msra.mxu0 0.0
    %4254 = vmatprep.subr.mxu0 0.0
    %4255 = vmatpush2.msra.mxu0 0.0
    %4256 = vmatprep.subr.mxu0 0.0
    %4257 = vmatpush2.msra.mxu0 0.0
    %4258 = vmatprep.subr.mxu0 0.0
    %4259 = vmatpush2.msra.mxu0 0.0
    %4260 = vmatprep.subr.mxu0 0.0
    %4261 = vmatpush2.msra.mxu0 0.0
    %4262 = vmatprep.subr.mxu0 0.0
    %4263 = vmatpush2.msra.mxu0 0.0
    %4264 = vmatprep.subr.mxu0 0.0
    %4265 = vmatpush2.msra.mxu0 0.0
    %4266 = vmatprep.subr.mxu0 0.0
    %4267 = vmatpush2.msra.mxu0 0.0
    %4268 = vmatprep.subr.mxu0 0.0
    %4269 = vmatpush2.msra.mxu0 0.0
    %4270 = vmatprep.subr.mxu0 0.0
    %4271 = vmatpush2.msra.mxu0 0.0
    %4272 = vmatprep.subr.mxu0 0.0
    %4273 = vmatpush2.msra.mxu0 0.0
    %4274 = vmatprep.subr.mxu0 0.0
    %4275 = vmatpush2.msra.mxu0 0.0
    %4276 = vmatprep.subr.mxu0 0.0
    %4277 = vmatpush2.msra.mxu0 0.0
    %4278 = vmatprep.mubr.f32.mxu0 0.0
    %v4279 = vand.u32 %v3828, 4294901760
    %v4280 = vsub.f32 %v3828, %v4279
    %v4281 = vand.u32 %v4280, 4294901760
    %4282 = vmatmul.mubr.f32.gmra.mxu0 %v4281
    %v4283 = vpop.f32.mrf.mxu0
    %v4284 = vadd.f32 %v4172, %v4283
    %v4285 = vpop.f32.mrf.mxu0
    %4286 = vmatprep.mubr.f32.mxu0 0.0
    %v4287 = vand.u32 %v3831, 4294901760
    %v4288 = vsub.f32 %v3831, %v4287
    %v4289 = vand.u32 %v4288, 4294901760
    %4290 = vmatmul.mubr.f32.gmra.mxu0 %v4289
    %v4291 = vpop.f32.mrf.mxu0
    %v4292 = vadd.f32 %v4179, %v4291
    %v4293 = vpop.f32.mrf.mxu0
    %4294 = vmatprep.mubr.f32.mxu0 0.0
    %v4295 = vand.u32 %v3834, 4294901760
    %v4296 = vsub.f32 %v3834, %v4295
    %v4297 = vand.u32 %v4296, 4294901760
    %4298 = vmatmul.mubr.f32.gmra.mxu0 %v4297
    %v4299 = vpop.f32.mrf.mxu0
    %v4300 = vadd.f32 %v4186, %v4299
    %v4301 = vpop.f32.mrf.mxu0
    %4302 = vmatprep.mubr.f32.mxu0 0.0
    %v4303 = vand.u32 %v3837, 4294901760
    %v4304 = vsub.f32 %v3837, %v4303
    %v4305 = vand.u32 %v4304, 4294901760
    %4306 = vmatmul.mubr.f32.gmra.mxu0 %v4305
    %v4307 = vpop.f32.mrf.mxu0
    %v4308 = vadd.f32 %v4193, %v4307
    %v4309 = vpop.f32.mrf.mxu0
    %4310 = vmatprep.mubr.f32.mxu0 0.0
    %v4311 = vand.u32 %v3840, 4294901760
    %v4312 = vsub.f32 %v3840, %v4311
    %v4313 = vand.u32 %v4312, 4294901760
    %4314 = vmatmul.mubr.f32.gmra.mxu0 %v4313
    %v4315 = vpop.f32.mrf.mxu0
    %v4316 = vadd.f32 %v4200, %v4315
    %v4317 = vpop.f32.mrf.mxu0
    %4318 = vmatprep.mubr.f32.mxu0 0.0
    %v4319 = vand.u32 %v3843, 4294901760
    %v4320 = vsub.f32 %v3843, %v4319
    %v4321 = vand.u32 %v4320, 4294901760
    %4322 = vmatmul.mubr.f32.gmra.mxu0 %v4321
    %v4323 = vpop.f32.mrf.mxu0
    %v4324 = vadd.f32 %v4207, %v4323
    %v4325 = vpop.f32.mrf.mxu0
    %4326 = vdwg.mxu0
    %4327 = vmatprep.subr.mxu0 0.0
    %4328 = vmatpush1.msra.mxu0 0.0
    %4329 = vmatprep.subr.mxu0 0.0
    %4330 = vmatpush1.msra.mxu0 0.0
    %4331 = vmatprep.subr.mxu0 0.0
    %4332 = vmatpush1.msra.mxu0 0.0
    %4333 = vmatprep.subr.mxu0 0.0
    %4334 = vmatpush1.msra.mxu0 0.0
    %4335 = vmatprep.subr.mxu0 0.0
    %4336 = vmatpush1.msra.mxu0 0.0
    %4337 = vmatprep.subr.mxu0 0.0
    %4338 = vmatpush1.msra.mxu0 0.0
    %4339 = vmatprep.subr.mxu0 0.0
    %4340 = vmatpush1.msra.mxu0 0.0
    %4341 = vmatprep.subr.mxu0 0.0
    %4342 = vmatpush1.msra.mxu0 0.0
    %4343 = vmatprep.subr.mxu0 0.0
    %4344 = vmatpush1.msra.mxu0 0.0
    %4345 = vmatprep.subr.mxu0 0.0
    %4346 = vmatpush1.msra.mxu0 0.0
    %4347 = vmatprep.subr.mxu0 0.0
    %4348 = vmatpush1.msra.mxu0 0.0
    %4349 = vmatprep.subr.mxu0 0.0
    %4350 = vmatpush1.msra.mxu0 0.0
    %4351 = vmatprep.subr.mxu0 0.0
    %v4352 = vand.u32 %v3815, 4294901760
    %v4353 = vsub.f32 %v3815, %v4352
    %v4354 = vand.u32 %v4353, 4294901760
    %4355 = vmatpush1.msra.mxu0 %v4354
    %4356 = vmatprep.subr.mxu0 0.0
    %v4357 = vand.u32 %v3814, 4294901760
    %v4358 = vsub.f32 %v3814, %v4357
    %v4359 = vand.u32 %v4358, 4294901760
    %4360 = vmatpush1.msra.mxu0 %v4359
    %4361 = vmatprep.subr.mxu0 0.0
    %v4362 = vand.u32 %v3813, 4294901760
    %v4363 = vsub.f32 %v3813, %v4362
    %v4364 = vand.u32 %v4363, 4294901760
    %4365 = vmatpush1.msra.mxu0 %v4364
    %4366 = vmatprep.subr.mxu0 0.0
    %v4367 = vand.u32 %v3812, 4294901760
    %v4368 = vsub.f32 %v3812, %v4367
    %v4369 = vand.u32 %v4368, 4294901760
    %4370 = vmatpush1.msra.mxu0 %v4369
    %4371 = vmatprep.subr.mxu0 0.0
    %4372 = vmatpush2.msra.mxu0 0.0
    %4373 = vmatprep.subr.mxu0 0.0
    %4374 = vmatpush2.msra.mxu0 0.0
    %4375 = vmatprep.subr.mxu0 0.0
    %4376 = vmatpush2.msra.mxu0 0.0
    %4377 = vmatprep.subr.mxu0 0.0
    %4378 = vmatpush2.msra.mxu0 0.0
    %4379 = vmatprep.subr.mxu0 0.0
    %4380 = vmatpush2.msra.mxu0 0.0
    %4381 = vmatprep.subr.mxu0 0.0
    %4382 = vmatpush2.msra.mxu0 0.0
    %4383 = vmatprep.subr.mxu0 0.0
    %4384 = vmatpush2.msra.mxu0 0.0
    %4385 = vmatprep.subr.mxu0 0.0
    %4386 = vmatpush2.msra.mxu0 0.0
    %4387 = vmatprep.subr.mxu0 0.0
    %4388 = vmatpush2.msra.mxu0 0.0
    %4389 = vmatprep.subr.mxu0 0.0
    %4390 = vmatpush2.msra.mxu0 0.0
    %4391 = vmatprep.subr.mxu0 0.0
    %4392 = vmatpush2.msra.mxu0 0.0
    %4393 = vmatprep.subr.mxu0 0.0
    %4394 = vmatpush2.msra.mxu0 0.0
    %4395 = vmatprep.subr.mxu0 0.0
    %4396 = vmatpush2.msra.mxu0 0.0
    %4397 = vmatprep.subr.mxu0 0.0
    %4398 = vmatpush2.msra.mxu0 0.0
    %4399 = vmatprep.subr.mxu0 0.0
    %4400 = vmatpush2.msra.mxu0 0.0
    %4401 = vmatprep.subr.mxu0 0.0
    %4402 = vmatpush2.msra.mxu0 0.0
    %4403 = vmatprep.mubr.f32.mxu0 0.0
    %v4404 = vand.u32 %v3828, 4294901760
    %4405 = vmatmul.mubr.f32.gmra.mxu0 %v4404
    %v4406 = vpop.f32.mrf.mxu0
    %v4407 = vadd.f32 %v4284, %v4406
    %v4408 = vpop.f32.mrf.mxu0
    %4409 = vmatprep.mubr.f32.mxu0 0.0
    %v4410 = vand.u32 %v3831, 4294901760
    %4411 = vmatmul.mubr.f32.gmra.mxu0 %v4410
    %v4412 = vpop.f32.mrf.mxu0
    %v4413 = vadd.f32 %v4292, %v4412
    %v4414 = vpop.f32.mrf.mxu0
    %4415 = vmatprep.mubr.f32.mxu0 0.0
    %v4416 = vand.u32 %v3834, 4294901760
    %4417 = vmatmul.mubr.f32.gmra.mxu0 %v4416
    %v4418 = vpop.f32.mrf.mxu0
    %v4419 = vadd.f32 %v4300, %v4418
    %v4420 = vpop.f32.mrf.mxu0
    %4421 = vmatprep.mubr.f32.mxu0 0.0
    %v4422 = vand.u32 %v3837, 4294901760
    %4423 = vmatmul.mubr.f32.gmra.mxu0 %v4422
    %v4424 = vpop.f32.mrf.mxu0
    %v4425 = vadd.f32 %v4308, %v4424
    %v4426 = vpop.f32.mrf.mxu0
    %4427 = vmatprep.mubr.f32.mxu0 0.0
    %v4428 = vand.u32 %v3840, 4294901760
    %4429 = vmatmul.mubr.f32.gmra.mxu0 %v4428
    %v4430 = vpop.f32.mrf.mxu0
    %v4431 = vadd.f32 %v4316, %v4430
    %v4432 = vpop.f32.mrf.mxu0
    %4433 = vmatprep.mubr.f32.mxu0 0.0
    %v4434 = vand.u32 %v3843, 4294901760
    %4435 = vmatmul.mubr.f32.gmra.mxu0 %v4434
    %v4436 = vpop.f32.mrf.mxu0
    %v4437 = vadd.f32 %v4324, %v4436
    %v4438 = vpop.f32.mrf.mxu0
    %4439 = vdwg.mxu0
    %4440 = vmatprep.subr.mxu0 0.0
    %4441 = vmatpush1.msra.mxu0 0.0
    %4442 = vmatprep.subr.mxu0 0.0
    %4443 = vmatpush1.msra.mxu0 0.0
    %4444 = vmatprep.subr.mxu0 0.0
    %4445 = vmatpush1.msra.mxu0 0.0
    %4446 = vmatprep.subr.mxu0 0.0
    %4447 = vmatpush1.msra.mxu0 0.0
    %4448 = vmatprep.subr.mxu0 0.0
    %4449 = vmatpush1.msra.mxu0 0.0
    %4450 = vmatprep.subr.mxu0 0.0
    %4451 = vmatpush1.msra.mxu0 0.0
    %4452 = vmatprep.subr.mxu0 0.0
    %4453 = vmatpush1.msra.mxu0 0.0
    %4454 = vmatprep.subr.mxu0 0.0
    %4455 = vmatpush1.msra.mxu0 0.0
    %4456 = vmatprep.subr.mxu0 0.0
    %4457 = vmatpush1.msra.mxu0 0.0
    %4458 = vmatprep.subr.mxu0 0.0
    %4459 = vmatpush1.msra.mxu0 0.0
    %4460 = vmatprep.subr.mxu0 0.0
    %4461 = vmatpush1.msra.mxu0 0.0
    %4462 = vmatprep.subr.mxu0 0.0
    %4463 = vmatpush1.msra.mxu0 0.0
    %4464 = vmatprep.subr.mxu0 0.0
    %v4465 = vand.u32 %v3815, 4294901760
    %4466 = vmatpush1.msra.mxu0 %v4465
    %4467 = vmatprep.subr.mxu0 0.0
    %v4468 = vand.u32 %v3814, 4294901760
    %4469 = vmatpush1.msra.mxu0 %v4468
    %4470 = vmatprep.subr.mxu0 0.0
    %v4471 = vand.u32 %v3813, 4294901760
    %4472 = vmatpush1.msra.mxu0 %v4471
    %4473 = vmatprep.subr.mxu0 0.0
    %v4474 = vand.u32 %v3812, 4294901760
    %4475 = vmatpush1.msra.mxu0 %v4474
    %4476 = vmatprep.subr.mxu0 0.0
    %4477 = vmatpush2.msra.mxu0 0.0
    %4478 = vmatprep.subr.mxu0 0.0
    %4479 = vmatpush2.msra.mxu0 0.0
    %4480 = vmatprep.subr.mxu0 0.0
    %4481 = vmatpush2.msra.mxu0 0.0
    %4482 = vmatprep.subr.mxu0 0.0
    %4483 = vmatpush2.msra.mxu0 0.0
    %4484 = vmatprep.subr.mxu0 0.0
    %4485 = vmatpush2.msra.mxu0 0.0
    %4486 = vmatprep.subr.mxu0 0.0
    %4487 = vmatpush2.msra.mxu0 0.0
    %4488 = vmatprep.subr.mxu0 0.0
    %4489 = vmatpush2.msra.mxu0 0.0
    %4490 = vmatprep.subr.mxu0 0.0
    %4491 = vmatpush2.msra.mxu0 0.0
    %4492 = vmatprep.subr.mxu0 0.0
    %4493 = vmatpush2.msra.mxu0 0.0
    %4494 = vmatprep.subr.mxu0 0.0
    %4495 = vmatpush2.msra.mxu0 0.0
    %4496 = vmatprep.subr.mxu0 0.0
    %4497 = vmatpush2.msra.mxu0 0.0
    %4498 = vmatprep.subr.mxu0 0.0
    %4499 = vmatpush2.msra.mxu0 0.0
    %4500 = vmatprep.subr.mxu0 0.0
    %4501 = vmatpush2.msra.mxu0 0.0
    %4502 = vmatprep.subr.mxu0 0.0
    %4503 = vmatpush2.msra.mxu0 0.0
    %4504 = vmatprep.subr.mxu0 0.0
    %4505 = vmatpush2.msra.mxu0 0.0
    %4506 = vmatprep.subr.mxu0 0.0
    %4507 = vmatpush2.msra.mxu0 0.0
    %4508 = vmatprep.mubr.f32.mxu0 0.0
    %v4509 = vand.u32 %v3828, 4294901760
    %4510 = vmatmul.mubr.f32.gmra.mxu0 %v4509
    %v4511 = vpop.f32.mrf.mxu0
    %v4512 = vadd.f32 %v4407, %v4511
    %v4513 = vpop.f32.mrf.mxu0
    %4514 = vmatprep.mubr.f32.mxu0 0.0
    %v4515 = vand.u32 %v3831, 4294901760
    %4516 = vmatmul.mubr.f32.gmra.mxu0 %v4515
    %v4517 = vpop.f32.mrf.mxu0
    %v4518 = vadd.f32 %v4413, %v4517
    %v4519 = vpop.f32.mrf.mxu0
    %4520 = vmatprep.mubr.f32.mxu0 0.0
    %v4521 = vand.u32 %v3834, 4294901760
    %4522 = vmatmul.mubr.f32.gmra.mxu0 %v4521
    %v4523 = vpop.f32.mrf.mxu0
    %v4524 = vadd.f32 %v4419, %v4523
    %v4525 = vpop.f32.mrf.mxu0
    %4526 = vmatprep.mubr.f32.mxu0 0.0
    %v4527 = vand.u32 %v3837, 4294901760
    %4528 = vmatmul.mubr.f32.gmra.mxu0 %v4527
    %v4529 = vpop.f32.mrf.mxu0
    %v4530 = vadd.f32 %v4425, %v4529
    %v4531 = vpop.f32.mrf.mxu0
    %4532 = vmatprep.mubr.f32.mxu0 0.0
    %v4533 = vand.u32 %v3840, 4294901760
    %4534 = vmatmul.mubr.f32.gmra.mxu0 %v4533
    %v4535 = vpop.f32.mrf.mxu0
    %v4536 = vadd.f32 %v4431, %v4535
    %v4537 = vpop.f32.mrf.mxu0
    %4538 = vmatprep.mubr.f32.mxu0 0.0
    %v4539 = vand.u32 %v3843, 4294901760
    %4540 = vmatmul.mubr.f32.gmra.mxu0 %v4539
    %v4541 = vpop.f32.mrf.mxu0
    %v4542 = vadd.f32 %v4437, %v4541
    %v4543 = vpop.f32.mrf.mxu0
    %4544 = vdwg.mxu0
    %4545 = vmatprep.subr.mxu0 0.0
    %4546 = vmatpush1.msra.mxu0 0.0
    %4547 = vmatprep.subr.mxu0 0.0
    %4548 = vmatpush1.msra.mxu0 0.0
    %4549 = vmatprep.subr.mxu0 0.0
    %4550 = vmatpush1.msra.mxu0 0.0
    %4551 = vmatprep.subr.mxu0 0.0
    %4552 = vmatpush1.msra.mxu0 0.0
    %4553 = vmatprep.subr.mxu0 0.0
    %4554 = vmatpush1.msra.mxu0 0.0
    %4555 = vmatprep.subr.mxu0 0.0
    %4556 = vmatpush1.msra.mxu0 0.0
    %4557 = vmatprep.subr.mxu0 0.0
    %4558 = vmatpush1.msra.mxu0 0.0
    %4559 = vmatprep.subr.mxu0 0.0
    %4560 = vmatpush1.msra.mxu0 0.0
    %4561 = vmatprep.subr.mxu0 0.0
    %4562 = vmatpush1.msra.mxu0 0.0
    %4563 = vmatprep.subr.mxu0 0.0
    %4564 = vmatpush1.msra.mxu0 0.0
    %4565 = vmatprep.subr.mxu0 0.0
    %4566 = vmatpush1.msra.mxu0 0.0
    %4567 = vmatprep.subr.mxu0 0.0
    %4568 = vmatpush1.msra.mxu0 0.0
    %4569 = vmatprep.subr.mxu0 0.0
    %v4570 = vand.u32 %v3819, 4294901760
    %4571 = vmatpush1.msra.mxu0 %v4570
    %4572 = vmatprep.subr.mxu0 0.0
    %v4573 = vand.u32 %v3818, 4294901760
    %4574 = vmatpush1.msra.mxu0 %v4573
    %4575 = vmatprep.subr.mxu0 0.0
    %v4576 = vand.u32 %v3817, 4294901760
    %4577 = vmatpush1.msra.mxu0 %v4576
    %4578 = vmatprep.subr.mxu0 0.0
    %v4579 = vand.u32 %v3816, 4294901760
    %4580 = vmatpush1.msra.mxu0 %v4579
    %4581 = vmatprep.subr.mxu0 0.0
    %4582 = vmatpush2.msra.mxu0 0.0
    %4583 = vmatprep.subr.mxu0 0.0
    %4584 = vmatpush2.msra.mxu0 0.0
    %4585 = vmatprep.subr.mxu0 0.0
    %4586 = vmatpush2.msra.mxu0 0.0
    %4587 = vmatprep.subr.mxu0 0.0
    %4588 = vmatpush2.msra.mxu0 0.0
    %4589 = vmatprep.subr.mxu0 0.0
    %4590 = vmatpush2.msra.mxu0 0.0
    %4591 = vmatprep.subr.mxu0 0.0
    %4592 = vmatpush2.msra.mxu0 0.0
    %4593 = vmatprep.subr.mxu0 0.0
    %4594 = vmatpush2.msra.mxu0 0.0
    %4595 = vmatprep.subr.mxu0 0.0
    %4596 = vmatpush2.msra.mxu0 0.0
    %4597 = vmatprep.subr.mxu0 0.0
    %4598 = vmatpush2.msra.mxu0 0.0
    %4599 = vmatprep.subr.mxu0 0.0
    %4600 = vmatpush2.msra.mxu0 0.0
    %4601 = vmatprep.subr.mxu0 0.0
    %4602 = vmatpush2.msra.mxu0 0.0
    %4603 = vmatprep.subr.mxu0 0.0
    %4604 = vmatpush2.msra.mxu0 0.0
    %4605 = vmatprep.subr.mxu0 0.0
    %4606 = vmatpush2.msra.mxu0 0.0
    %4607 = vmatprep.subr.mxu0 0.0
    %4608 = vmatpush2.msra.mxu0 0.0
    %4609 = vmatprep.subr.mxu0 0.0
    %4610 = vmatpush2.msra.mxu0 0.0
    %4611 = vmatprep.subr.mxu0 0.0
    %4612 = vmatpush2.msra.mxu0 0.0
    %4613 = vmatprep.mubr.f32.mxu0 0.0
    %v4614 = vand.u32 %v759, 4294901760
    %v4615 = vsub.f32 %v759, %v4614
    %v4616 = vand.u32 %v4615, 4294901760
    %v4617 = vsub.f32 %v4615, %v4616
    %v4618 = vand.u32 %v4617, 4294901760
    %4619 = vmatmul.mubr.f32.gmra.mxu0 %v4618
    %v4620 = vpop.f32.mrf.mxu0
    %v4621 = vadd.f32 0.0, %v4620
    %v4622 = vpop.f32.mrf.mxu0
    %4623 = vdwg.mxu0
    %4624 = vmatprep.subr.mxu0 0.0
    %4625 = vmatpush1.msra.mxu0 0.0
    %4626 = vmatprep.subr.mxu0 0.0
    %4627 = vmatpush1.msra.mxu0 0.0
    %4628 = vmatprep.subr.mxu0 0.0
    %4629 = vmatpush1.msra.mxu0 0.0
    %4630 = vmatprep.subr.mxu0 0.0
    %4631 = vmatpush1.msra.mxu0 0.0
    %4632 = vmatprep.subr.mxu0 0.0
    %4633 = vmatpush1.msra.mxu0 0.0
    %4634 = vmatprep.subr.mxu0 0.0
    %4635 = vmatpush1.msra.mxu0 0.0
    %4636 = vmatprep.subr.mxu0 0.0
    %4637 = vmatpush1.msra.mxu0 0.0
    %4638 = vmatprep.subr.mxu0 0.0
    %4639 = vmatpush1.msra.mxu0 0.0
    %4640 = vmatprep.subr.mxu0 0.0
    %4641 = vmatpush1.msra.mxu0 0.0
    %4642 = vmatprep.subr.mxu0 0.0
    %4643 = vmatpush1.msra.mxu0 0.0
    %4644 = vmatprep.subr.mxu0 0.0
    %4645 = vmatpush1.msra.mxu0 0.0
    %4646 = vmatprep.subr.mxu0 0.0
    %4647 = vmatpush1.msra.mxu0 0.0
    %4648 = vmatprep.subr.mxu0 0.0
    %v4649 = vand.u32 %v3819, 4294901760
    %v4650 = vsub.f32 %v3819, %v4649
    %v4651 = vand.u32 %v4650, 4294901760
    %v4652 = vsub.f32 %v4650, %v4651
    %v4653 = vand.u32 %v4652, 4294901760
    %4654 = vmatpush1.msra.mxu0 %v4653
    %4655 = vmatprep.subr.mxu0 0.0
    %v4656 = vand.u32 %v3818, 4294901760
    %v4657 = vsub.f32 %v3818, %v4656
    %v4658 = vand.u32 %v4657, 4294901760
    %v4659 = vsub.f32 %v4657, %v4658
    %v4660 = vand.u32 %v4659, 4294901760
    %4661 = vmatpush1.msra.mxu0 %v4660
    %4662 = vmatprep.subr.mxu0 0.0
    %v4663 = vand.u32 %v3817, 4294901760
    %v4664 = vsub.f32 %v3817, %v4663
    %v4665 = vand.u32 %v4664, 4294901760
    %v4666 = vsub.f32 %v4664, %v4665
    %v4667 = vand.u32 %v4666, 4294901760
    %4668 = vmatpush1.msra.mxu0 %v4667
    %4669 = vmatprep.subr.mxu0 0.0
    %v4670 = vand.u32 %v3816, 4294901760
    %v4671 = vsub.f32 %v3816, %v4670
    %v4672 = vand.u32 %v4671, 4294901760
    %v4673 = vsub.f32 %v4671, %v4672
    %v4674 = vand.u32 %v4673, 4294901760
    %4675 = vmatpush1.msra.mxu0 %v4674
    %4676 = vmatprep.subr.mxu0 0.0
    %4677 = vmatpush2.msra.mxu0 0.0
    %4678 = vmatprep.subr.mxu0 0.0
    %4679 = vmatpush2.msra.mxu0 0.0
    %4680 = vmatprep.subr.mxu0 0.0
    %4681 = vmatpush2.msra.mxu0 0.0
    %4682 = vmatprep.subr.mxu0 0.0
    %4683 = vmatpush2.msra.mxu0 0.0
    %4684 = vmatprep.subr.mxu0 0.0
    %4685 = vmatpush2.msra.mxu0 0.0
    %4686 = vmatprep.subr.mxu0 0.0
    %4687 = vmatpush2.msra.mxu0 0.0
    %4688 = vmatprep.subr.mxu0 0.0
    %4689 = vmatpush2.msra.mxu0 0.0
    %4690 = vmatprep.subr.mxu0 0.0
    %4691 = vmatpush2.msra.mxu0 0.0
    %4692 = vmatprep.subr.mxu0 0.0
    %4693 = vmatpush2.msra.mxu0 0.0
    %4694 = vmatprep.subr.mxu0 0.0
    %4695 = vmatpush2.msra.mxu0 0.0
    %4696 = vmatprep.subr.mxu0 0.0
    %4697 = vmatpush2.msra.mxu0 0.0
    %4698 = vmatprep.subr.mxu0 0.0
    %4699 = vmatpush2.msra.mxu0 0.0
    %4700 = vmatprep.subr.mxu0 0.0
    %4701 = vmatpush2.msra.mxu0 0.0
    %4702 = vmatprep.subr.mxu0 0.0
    %4703 = vmatpush2.msra.mxu0 0.0
    %4704 = vmatprep.subr.mxu0 0.0
    %4705 = vmatpush2.msra.mxu0 0.0
    %4706 = vmatprep.subr.mxu0 0.0
    %4707 = vmatpush2.msra.mxu0 0.0
    %4708 = vmatprep.mubr.f32.mxu0 0.0
    %v4709 = vand.u32 %v759, 4294901760
    %4710 = vmatmul.mubr.f32.gmra.mxu0 %v4709
    %v4711 = vpop.f32.mrf.mxu0
    %v4712 = vadd.f32 %v4621, %v4711
    %v4713 = vpop.f32.mrf.mxu0
    %4714 = vdwg.mxu0
    %4715 = vmatprep.subr.mxu0 0.0
    %4716 = vmatpush1.msra.mxu0 0.0
    %4717 = vmatprep.subr.mxu0 0.0
    %4718 = vmatpush1.msra.mxu0 0.0
    %4719 = vmatprep.subr.mxu0 0.0
    %4720 = vmatpush1.msra.mxu0 0.0
    %4721 = vmatprep.subr.mxu0 0.0
    %4722 = vmatpush1.msra.mxu0 0.0
    %4723 = vmatprep.subr.mxu0 0.0
    %4724 = vmatpush1.msra.mxu0 0.0
    %4725 = vmatprep.subr.mxu0 0.0
    %4726 = vmatpush1.msra.mxu0 0.0
    %4727 = vmatprep.subr.mxu0 0.0
    %4728 = vmatpush1.msra.mxu0 0.0
    %4729 = vmatprep.subr.mxu0 0.0
    %4730 = vmatpush1.msra.mxu0 0.0
    %4731 = vmatprep.subr.mxu0 0.0
    %4732 = vmatpush1.msra.mxu0 0.0
    %4733 = vmatprep.subr.mxu0 0.0
    %4734 = vmatpush1.msra.mxu0 0.0
    %4735 = vmatprep.subr.mxu0 0.0
    %4736 = vmatpush1.msra.mxu0 0.0
    %4737 = vmatprep.subr.mxu0 0.0
    %4738 = vmatpush1.msra.mxu0 0.0
    %4739 = vmatprep.subr.mxu0 0.0
    %v4740 = vand.u32 %v3819, 4294901760
    %v4741 = vsub.f32 %v3819, %v4740
    %4742 = vmatpush1.msra.mxu0 %v4741
    %4743 = vmatprep.subr.mxu0 0.0
    %v4744 = vand.u32 %v3818, 4294901760
    %v4745 = vsub.f32 %v3818, %v4744
    %4746 = vmatpush1.msra.mxu0 %v4745
    %4747 = vmatprep.subr.mxu0 0.0
    %v4748 = vand.u32 %v3817, 4294901760
    %v4749 = vsub.f32 %v3817, %v4748
    %4750 = vmatpush1.msra.mxu0 %v4749
    %4751 = vmatprep.subr.mxu0 0.0
    %v4752 = vand.u32 %v3816, 4294901760
    %v4753 = vsub.f32 %v3816, %v4752
    %4754 = vmatpush1.msra.mxu0 %v4753
    %4755 = vmatprep.subr.mxu0 0.0
    %4756 = vmatpush2.msra.mxu0 0.0
    %4757 = vmatprep.subr.mxu0 0.0
    %4758 = vmatpush2.msra.mxu0 0.0
    %4759 = vmatprep.subr.mxu0 0.0
    %4760 = vmatpush2.msra.mxu0 0.0
    %4761 = vmatprep.subr.mxu0 0.0
    %4762 = vmatpush2.msra.mxu0 0.0
    %4763 = vmatprep.subr.mxu0 0.0
    %4764 = vmatpush2.msra.mxu0 0.0
    %4765 = vmatprep.subr.mxu0 0.0
    %4766 = vmatpush2.msra.mxu0 0.0
    %4767 = vmatprep.subr.mxu0 0.0
    %4768 = vmatpush2.msra.mxu0 0.0
    %4769 = vmatprep.subr.mxu0 0.0
    %4770 = vmatpush2.msra.mxu0 0.0
    %4771 = vmatprep.subr.mxu0 0.0
    %4772 = vmatpush2.msra.mxu0 0.0
    %4773 = vmatprep.subr.mxu0 0.0
    %4774 = vmatpush2.msra.mxu0 0.0
    %4775 = vmatprep.subr.mxu0 0.0
    %4776 = vmatpush2.msra.mxu0 0.0
    %4777 = vmatprep.subr.mxu0 0.0
    %4778 = vmatpush2.msra.mxu0 0.0
    %4779 = vmatprep.subr.mxu0 0.0
    %4780 = vmatpush2.msra.mxu0 0.0
    %4781 = vmatprep.subr.mxu0 0.0
    %4782 = vmatpush2.msra.mxu0 0.0
    %4783 = vmatprep.subr.mxu0 0.0
    %4784 = vmatpush2.msra.mxu0 0.0
    %4785 = vmatprep.subr.mxu0 0.0
    %4786 = vmatpush2.msra.mxu0 0.0
    %4787 = vmatprep.mubr.f32.mxu0 0.0
    %v4788 = vand.u32 %v759, 4294901760
    %v4789 = vsub.f32 %v759, %v4788
    %4790 = vmatmul.mubr.f32.gmra.mxu0 %v4789
    %v4791 = vpop.f32.mrf.mxu0
    %v4792 = vadd.f32 %v4712, %v4791
    %v4793 = vpop.f32.mrf.mxu0
    %4794 = vdwg.mxu0
    %4795 = vmatprep.subr.mxu0 0.0
    %4796 = vmatpush1.msra.mxu0 0.0
    %4797 = vmatprep.subr.mxu0 0.0
    %4798 = vmatpush1.msra.mxu0 0.0
    %4799 = vmatprep.subr.mxu0 0.0
    %4800 = vmatpush1.msra.mxu0 0.0
    %4801 = vmatprep.subr.mxu0 0.0
    %4802 = vmatpush1.msra.mxu0 0.0
    %4803 = vmatprep.subr.mxu0 0.0
    %4804 = vmatpush1.msra.mxu0 0.0
    %4805 = vmatprep.subr.mxu0 0.0
    %4806 = vmatpush1.msra.mxu0 0.0
    %4807 = vmatprep.subr.mxu0 0.0
    %4808 = vmatpush1.msra.mxu0 0.0
    %4809 = vmatprep.subr.mxu0 0.0
    %4810 = vmatpush1.msra.mxu0 0.0
    %4811 = vmatprep.subr.mxu0 0.0
    %4812 = vmatpush1.msra.mxu0 0.0
    %4813 = vmatprep.subr.mxu0 0.0
    %4814 = vmatpush1.msra.mxu0 0.0
    %4815 = vmatprep.subr.mxu0 0.0
    %4816 = vmatpush1.msra.mxu0 0.0
    %4817 = vmatprep.subr.mxu0 0.0
    %4818 = vmatpush1.msra.mxu0 0.0
    %4819 = vmatprep.subr.mxu0 0.0
    %v4820 = vand.u32 %v3819, 4294901760
    %4821 = vmatpush1.msra.mxu0 %v4820
    %4822 = vmatprep.subr.mxu0 0.0
    %v4823 = vand.u32 %v3818, 4294901760
    %4824 = vmatpush1.msra.mxu0 %v4823
    %4825 = vmatprep.subr.mxu0 0.0
    %v4826 = vand.u32 %v3817, 4294901760
    %4827 = vmatpush1.msra.mxu0 %v4826
    %4828 = vmatprep.subr.mxu0 0.0
    %v4829 = vand.u32 %v3816, 4294901760
    %4830 = vmatpush1.msra.mxu0 %v4829
    %4831 = vmatprep.subr.mxu0 0.0
    %4832 = vmatpush2.msra.mxu0 0.0
    %4833 = vmatprep.subr.mxu0 0.0
    %4834 = vmatpush2.msra.mxu0 0.0
    %4835 = vmatprep.subr.mxu0 0.0
    %4836 = vmatpush2.msra.mxu0 0.0
    %4837 = vmatprep.subr.mxu0 0.0
    %4838 = vmatpush2.msra.mxu0 0.0
    %4839 = vmatprep.subr.mxu0 0.0
    %4840 = vmatpush2.msra.mxu0 0.0
    %4841 = vmatprep.subr.mxu0 0.0
    %4842 = vmatpush2.msra.mxu0 0.0
    %4843 = vmatprep.subr.mxu0 0.0
    %4844 = vmatpush2.msra.mxu0 0.0
    %4845 = vmatprep.subr.mxu0 0.0
    %4846 = vmatpush2.msra.mxu0 0.0
    %4847 = vmatprep.subr.mxu0 0.0
    %4848 = vmatpush2.msra.mxu0 0.0
    %4849 = vmatprep.subr.mxu0 0.0
    %4850 = vmatpush2.msra.mxu0 0.0
    %4851 = vmatprep.subr.mxu0 0.0
    %4852 = vmatpush2.msra.mxu0 0.0
    %4853 = vmatprep.subr.mxu0 0.0
    %4854 = vmatpush2.msra.mxu0 0.0
    %4855 = vmatprep.subr.mxu0 0.0
    %4856 = vmatpush2.msra.mxu0 0.0
    %4857 = vmatprep.subr.mxu0 0.0
    %4858 = vmatpush2.msra.mxu0 0.0
    %4859 = vmatprep.subr.mxu0 0.0
    %4860 = vmatpush2.msra.mxu0 0.0
    %4861 = vmatprep.subr.mxu0 0.0
    %4862 = vmatpush2.msra.mxu0 0.0
    %4863 = vmatprep.mubr.f32.mxu0 0.0
    %v4864 = vand.u32 %v759, 4294901760
    %v4865 = vsub.f32 %v759, %v4864
    %v4866 = vand.u32 %v4865, 4294901760
    %4867 = vmatmul.mubr.f32.gmra.mxu0 %v4866
    %v4868 = vpop.f32.mrf.mxu0
    %v4869 = vadd.f32 %v4792, %v4868
    %v4870 = vpop.f32.mrf.mxu0
    %4871 = vdwg.mxu0
    %4872 = vmatprep.subr.mxu0 0.0
    %4873 = vmatpush1.msra.mxu0 0.0
    %4874 = vmatprep.subr.mxu0 0.0
    %4875 = vmatpush1.msra.mxu0 0.0
    %4876 = vmatprep.subr.mxu0 0.0
    %4877 = vmatpush1.msra.mxu0 0.0
    %4878 = vmatprep.subr.mxu0 0.0
    %4879 = vmatpush1.msra.mxu0 0.0
    %4880 = vmatprep.subr.mxu0 0.0
    %4881 = vmatpush1.msra.mxu0 0.0
    %4882 = vmatprep.subr.mxu0 0.0
    %4883 = vmatpush1.msra.mxu0 0.0
    %4884 = vmatprep.subr.mxu0 0.0
    %4885 = vmatpush1.msra.mxu0 0.0
    %4886 = vmatprep.subr.mxu0 0.0
    %4887 = vmatpush1.msra.mxu0 0.0
    %4888 = vmatprep.subr.mxu0 0.0
    %4889 = vmatpush1.msra.mxu0 0.0
    %4890 = vmatprep.subr.mxu0 0.0
    %4891 = vmatpush1.msra.mxu0 0.0
    %4892 = vmatprep.subr.mxu0 0.0
    %4893 = vmatpush1.msra.mxu0 0.0
    %4894 = vmatprep.subr.mxu0 0.0
    %4895 = vmatpush1.msra.mxu0 0.0
    %4896 = vmatprep.subr.mxu0 0.0
    %v4897 = vand.u32 %v3819, 4294901760
    %v4898 = vsub.f32 %v3819, %v4897
    %v4899 = vand.u32 %v4898, 4294901760
    %4900 = vmatpush1.msra.mxu0 %v4899
    %4901 = vmatprep.subr.mxu0 0.0
    %v4902 = vand.u32 %v3818, 4294901760
    %v4903 = vsub.f32 %v3818, %v4902
    %v4904 = vand.u32 %v4903, 4294901760
    %4905 = vmatpush1.msra.mxu0 %v4904
    %4906 = vmatprep.subr.mxu0 0.0
    %v4907 = vand.u32 %v3817, 4294901760
    %v4908 = vsub.f32 %v3817, %v4907
    %v4909 = vand.u32 %v4908, 4294901760
    %4910 = vmatpush1.msra.mxu0 %v4909
    %4911 = vmatprep.subr.mxu0 0.0
    %v4912 = vand.u32 %v3816, 4294901760
    %v4913 = vsub.f32 %v3816, %v4912
    %v4914 = vand.u32 %v4913, 4294901760
    %4915 = vmatpush1.msra.mxu0 %v4914
    %4916 = vmatprep.subr.mxu0 0.0
    %4917 = vmatpush2.msra.mxu0 0.0
    %4918 = vmatprep.subr.mxu0 0.0
    %4919 = vmatpush2.msra.mxu0 0.0
    %4920 = vmatprep.subr.mxu0 0.0
    %4921 = vmatpush2.msra.mxu0 0.0
    %4922 = vmatprep.subr.mxu0 0.0
    %4923 = vmatpush2.msra.mxu0 0.0
    %4924 = vmatprep.subr.mxu0 0.0
    %4925 = vmatpush2.msra.mxu0 0.0
    %4926 = vmatprep.subr.mxu0 0.0
    %4927 = vmatpush2.msra.mxu0 0.0
    %4928 = vmatprep.subr.mxu0 0.0
    %4929 = vmatpush2.msra.mxu0 0.0
    %4930 = vmatprep.subr.mxu0 0.0
    %4931 = vmatpush2.msra.mxu0 0.0
    %4932 = vmatprep.subr.mxu0 0.0
    %4933 = vmatpush2.msra.mxu0 0.0
    %4934 = vmatprep.subr.mxu0 0.0
    %4935 = vmatpush2.msra.mxu0 0.0
    %4936 = vmatprep.subr.mxu0 0.0
    %4937 = vmatpush2.msra.mxu0 0.0
    %4938 = vmatprep.subr.mxu0 0.0
    %4939 = vmatpush2.msra.mxu0 0.0
    %4940 = vmatprep.subr.mxu0 0.0
    %4941 = vmatpush2.msra.mxu0 0.0
    %4942 = vmatprep.subr.mxu0 0.0
    %4943 = vmatpush2.msra.mxu0 0.0
    %4944 = vmatprep.subr.mxu0 0.0
    %4945 = vmatpush2.msra.mxu0 0.0
    %4946 = vmatprep.subr.mxu0 0.0
    %4947 = vmatpush2.msra.mxu0 0.0
    %4948 = vmatprep.mubr.f32.mxu0 0.0
    %v4949 = vand.u32 %v759, 4294901760
    %4950 = vmatmul.mubr.f32.gmra.mxu0 %v4949
    %v4951 = vpop.f32.mrf.mxu0
    %v4952 = vadd.f32 %v4869, %v4951
    %v4953 = vpop.f32.mrf.mxu0
    %4954 = vdwg.mxu0
    %4955 = vmatprep.subr.mxu0 0.0
    %4956 = vmatpush1.msra.mxu0 0.0
    %4957 = vmatprep.subr.mxu0 0.0
    %4958 = vmatpush1.msra.mxu0 0.0
    %4959 = vmatprep.subr.mxu0 0.0
    %4960 = vmatpush1.msra.mxu0 0.0
    %4961 = vmatprep.subr.mxu0 0.0
    %4962 = vmatpush1.msra.mxu0 0.0
    %4963 = vmatprep.subr.mxu0 0.0
    %4964 = vmatpush1.msra.mxu0 0.0
    %4965 = vmatprep.subr.mxu0 0.0
    %4966 = vmatpush1.msra.mxu0 0.0
    %4967 = vmatprep.subr.mxu0 0.0
    %4968 = vmatpush1.msra.mxu0 0.0
    %4969 = vmatprep.subr.mxu0 0.0
    %4970 = vmatpush1.msra.mxu0 0.0
    %4971 = vmatprep.subr.mxu0 0.0
    %4972 = vmatpush1.msra.mxu0 0.0
    %4973 = vmatprep.subr.mxu0 0.0
    %4974 = vmatpush1.msra.mxu0 0.0
    %4975 = vmatprep.subr.mxu0 0.0
    %4976 = vmatpush1.msra.mxu0 0.0
    %4977 = vmatprep.subr.mxu0 0.0
    %4978 = vmatpush1.msra.mxu0 0.0
    %4979 = vmatprep.subr.mxu0 0.0
    %v4980 = vand.u32 %v3819, 4294901760
    %4981 = vmatpush1.msra.mxu0 %v4980
    %4982 = vmatprep.subr.mxu0 0.0
    %v4983 = vand.u32 %v3818, 4294901760
    %4984 = vmatpush1.msra.mxu0 %v4983
    %4985 = vmatprep.subr.mxu0 0.0
    %v4986 = vand.u32 %v3817, 4294901760
    %4987 = vmatpush1.msra.mxu0 %v4986
    %4988 = vmatprep.subr.mxu0 0.0
    %v4989 = vand.u32 %v3816, 4294901760
    %4990 = vmatpush1.msra.mxu0 %v4989
    %4991 = vmatprep.subr.mxu0 0.0
    %4992 = vmatpush2.msra.mxu0 0.0
    %4993 = vmatprep.subr.mxu0 0.0
    %4994 = vmatpush2.msra.mxu0 0.0
    %4995 = vmatprep.subr.mxu0 0.0
    %4996 = vmatpush2.msra.mxu0 0.0
    %4997 = vmatprep.subr.mxu0 0.0
    %4998 = vmatpush2.msra.mxu0 0.0
    %4999 = vmatprep.subr.mxu0 0.0
    %5000 = vmatpush2.msra.mxu0 0.0
    %5001 = vmatprep.subr.mxu0 0.0
    %5002 = vmatpush2.msra.mxu0 0.0
    %5003 = vmatprep.subr.mxu0 0.0
    %5004 = vmatpush2.msra.mxu0 0.0
    %5005 = vmatprep.subr.mxu0 0.0
    %5006 = vmatpush2.msra.mxu0 0.0
    %5007 = vmatprep.subr.mxu0 0.0
    %5008 = vmatpush2.msra.mxu0 0.0
    %5009 = vmatprep.subr.mxu0 0.0
    %5010 = vmatpush2.msra.mxu0 0.0
    %5011 = vmatprep.subr.mxu0 0.0
    %5012 = vmatpush2.msra.mxu0 0.0
    %5013 = vmatprep.subr.mxu0 0.0
    %5014 = vmatpush2.msra.mxu0 0.0
    %5015 = vmatprep.subr.mxu0 0.0
    %5016 = vmatpush2.msra.mxu0 0.0
    %5017 = vmatprep.subr.mxu0 0.0
    %5018 = vmatpush2.msra.mxu0 0.0
    %5019 = vmatprep.subr.mxu0 0.0
    %5020 = vmatpush2.msra.mxu0 0.0
    %5021 = vmatprep.subr.mxu0 0.0
    %5022 = vmatpush2.msra.mxu0 0.0
    %5023 = vmatprep.mubr.f32.mxu0 0.0
    %v5024 = vand.u32 %v759, 4294901760
    %5025 = vmatmul.mubr.f32.gmra.mxu0 %v5024
    %v5026 = vpop.f32.mrf.mxu0
    %v5027 = vadd.f32 %v4952, %v5026
    %v5028 = vpop.f32.mrf.mxu0
    %5029 = vdwg.mxu0
    %v5030 = vadd.f32 %v4512, %v5027
    %v5031 = vxor.u32 %v5030, 2147483648
    %v5032 = vmul.f32 %v5031, 1.442695
    %v5033 = vpow.pop %v5032
    %v5034 = vadd.f32 %v5033, 1.0
    %v5035 = vrcp.pop %v5034
    %v5036 = vmul.f32 1.0, %v5035
    %v5037 = vtanh.pop %v5030
    %5038 = vrot.lane.b32.xlu0 %v5036, 96
    %v5039 = vpop.permute.xlu0 %5038
    %5040 = vrot.lane.b32.xlu0 %v5037, 64
    %v5041 = vpop.permute.xlu0 %5040
    %5042 = vrot.lane.b32.xlu0 %v5036, 32
    %v5043 = vpop.permute.xlu0 %5042
    %v5044 = vmul.f32 %v5039, 0.0
    %v5045 = vmul.f32 %v5036, %v5041
    %v5046 = vadd.f32 %v5044, %v5045
    %v5047 = vtanh.pop %v5046
    %v5048 = vmul.f32 %v5043, %v5047
    %v5050 = vsel %vm757, %v5048, 0
    %5052 = vmatprep.subr.mxu0 0.0
    %5053 = vmatpush1.msra.mxu0 0.0
    %5054 = vmatprep.subr.mxu0 0.0
    %5055 = vmatpush1.msra.mxu0 0.0
    %5056 = vmatprep.subr.mxu0 0.0
    %5057 = vmatpush1.msra.mxu0 0.0
    %5058 = vmatprep.subr.mxu0 0.0
    %5059 = vmatpush1.msra.mxu0 0.0
    %5060 = vmatprep.subr.mxu0 0.0
    %5061 = vmatpush1.msra.mxu0 0.0
    %5062 = vmatprep.subr.mxu0 0.0
    %5063 = vmatpush1.msra.mxu0 0.0
    %5064 = vmatprep.subr.mxu0 0.0
    %5065 = vmatpush1.msra.mxu0 0.0
    %5066 = vmatprep.subr.mxu0 0.0
    %5067 = vmatpush1.msra.mxu0 0.0
    %5068 = vmatprep.subr.mxu0 0.0
    %5069 = vmatpush1.msra.mxu0 0.0
    %5070 = vmatprep.subr.mxu0 0.0
    %5071 = vmatpush1.msra.mxu0 0.0
    %5072 = vmatprep.subr.mxu0 0.0
    %5073 = vmatpush1.msra.mxu0 0.0
    %5074 = vmatprep.subr.mxu0 0.0
    %5075 = vmatpush1.msra.mxu0 0.0
    %5076 = vmatprep.subr.mxu0 0.0
    %v5077 = vand.u32 %v3819, 4294901760
    %5078 = vmatpush1.msra.mxu0 %v5077
    %5079 = vmatprep.subr.mxu0 0.0
    %v5080 = vand.u32 %v3818, 4294901760
    %5081 = vmatpush1.msra.mxu0 %v5080
    %5082 = vmatprep.subr.mxu0 0.0
    %v5083 = vand.u32 %v3817, 4294901760
    %5084 = vmatpush1.msra.mxu0 %v5083
    %5085 = vmatprep.subr.mxu0 0.0
    %v5086 = vand.u32 %v3816, 4294901760
    %5087 = vmatpush1.msra.mxu0 %v5086
    %5088 = vmatprep.subr.mxu0 0.0
    %5089 = vmatpush2.msra.mxu0 0.0
    %5090 = vmatprep.subr.mxu0 0.0
    %5091 = vmatpush2.msra.mxu0 0.0
    %5092 = vmatprep.subr.mxu0 0.0
    %5093 = vmatpush2.msra.mxu0 0.0
    %5094 = vmatprep.subr.mxu0 0.0
    %5095 = vmatpush2.msra.mxu0 0.0
    %5096 = vmatprep.subr.mxu0 0.0
    %5097 = vmatpush2.msra.mxu0 0.0
    %5098 = vmatprep.subr.mxu0 0.0
    %5099 = vmatpush2.msra.mxu0 0.0
    %5100 = vmatprep.subr.mxu0 0.0
    %5101 = vmatpush2.msra.mxu0 0.0
    %5102 = vmatprep.subr.mxu0 0.0
    %5103 = vmatpush2.msra.mxu0 0.0
    %5104 = vmatprep.subr.mxu0 0.0
    %5105 = vmatpush2.msra.mxu0 0.0
    %5106 = vmatprep.subr.mxu0 0.0
    %5107 = vmatpush2.msra.mxu0 0.0
    %5108 = vmatprep.subr.mxu0 0.0
    %5109 = vmatpush2.msra.mxu0 0.0
    %5110 = vmatprep.subr.mxu0 0.0
    %5111 = vmatpush2.msra.mxu0 0.0
    %5112 = vmatprep.subr.mxu0 0.0
    %5113 = vmatpush2.msra.mxu0 0.0
    %5114 = vmatprep.subr.mxu0 0.0
    %5115 = vmatpush2.msra.mxu0 0.0
    %5116 = vmatprep.subr.mxu0 0.0
    %5117 = vmatpush2.msra.mxu0 0.0
    %5118 = vmatprep.subr.mxu0 0.0
    %5119 = vmatpush2.msra.mxu0 0.0
    %5120 = vmatprep.mubr.f32.mxu0 0.0
    %v5121 = vand.u32 %v5050, 4294901760
    %v5122 = vsub.f32 %v5050, %v5121
    %v5123 = vand.u32 %v5122, 4294901760
    %v5124 = vsub.f32 %v5122, %v5123
    %v5125 = vand.u32 %v5124, 4294901760
    %5126 = vmatmul.mubr.f32.gmra.mxu0 %v5125
    %v5127 = vpop.f32.mrf.mxu0
    %v5128 = vadd.f32 0.0, %v5127
    %v5129 = vpop.f32.mrf.mxu0
    %5130 = vdwg.mxu0
    %5131 = vmatprep.subr.mxu0 0.0
    %5132 = vmatpush1.msra.mxu0 0.0
    %5133 = vmatprep.subr.mxu0 0.0
    %5134 = vmatpush1.msra.mxu0 0.0
    %5135 = vmatprep.subr.mxu0 0.0
    %5136 = vmatpush1.msra.mxu0 0.0
    %5137 = vmatprep.subr.mxu0 0.0
    %5138 = vmatpush1.msra.mxu0 0.0
    %5139 = vmatprep.subr.mxu0 0.0
    %5140 = vmatpush1.msra.mxu0 0.0
    %5141 = vmatprep.subr.mxu0 0.0
    %5142 = vmatpush1.msra.mxu0 0.0
    %5143 = vmatprep.subr.mxu0 0.0
    %5144 = vmatpush1.msra.mxu0 0.0
    %5145 = vmatprep.subr.mxu0 0.0
    %5146 = vmatpush1.msra.mxu0 0.0
    %5147 = vmatprep.subr.mxu0 0.0
    %5148 = vmatpush1.msra.mxu0 0.0
    %5149 = vmatprep.subr.mxu0 0.0
    %5150 = vmatpush1.msra.mxu0 0.0
    %5151 = vmatprep.subr.mxu0 0.0
    %5152 = vmatpush1.msra.mxu0 0.0
    %5153 = vmatprep.subr.mxu0 0.0
    %5154 = vmatpush1.msra.mxu0 0.0
    %5155 = vmatprep.subr.mxu0 0.0
    %v5156 = vand.u32 %v3819, 4294901760
    %v5157 = vsub.f32 %v3819, %v5156
    %v5158 = vand.u32 %v5157, 4294901760
    %v5159 = vsub.f32 %v5157, %v5158
    %v5160 = vand.u32 %v5159, 4294901760
    %5161 = vmatpush1.msra.mxu0 %v5160
    %5162 = vmatprep.subr.mxu0 0.0
    %v5163 = vand.u32 %v3818, 4294901760
    %v5164 = vsub.f32 %v3818, %v5163
    %v5165 = vand.u32 %v5164, 4294901760
    %v5166 = vsub.f32 %v5164, %v5165
    %v5167 = vand.u32 %v5166, 4294901760
    %5168 = vmatpush1.msra.mxu0 %v5167
    %5169 = vmatprep.subr.mxu0 0.0
    %v5170 = vand.u32 %v3817, 4294901760
    %v5171 = vsub.f32 %v3817, %v5170
    %v5172 = vand.u32 %v5171, 4294901760
    %v5173 = vsub.f32 %v5171, %v5172
    %v5174 = vand.u32 %v5173, 4294901760
    %5175 = vmatpush1.msra.mxu0 %v5174
    %5176 = vmatprep.subr.mxu0 0.0
    %v5177 = vand.u32 %v3816, 4294901760
    %v5178 = vsub.f32 %v3816, %v5177
    %v5179 = vand.u32 %v5178, 4294901760
    %v5180 = vsub.f32 %v5178, %v5179
    %v5181 = vand.u32 %v5180, 4294901760
    %5182 = vmatpush1.msra.mxu0 %v5181
    %5183 = vmatprep.subr.mxu0 0.0
    %5184 = vmatpush2.msra.mxu0 0.0
    %5185 = vmatprep.subr.mxu0 0.0
    %5186 = vmatpush2.msra.mxu0 0.0
    %5187 = vmatprep.subr.mxu0 0.0
    %5188 = vmatpush2.msra.mxu0 0.0
    %5189 = vmatprep.subr.mxu0 0.0
    %5190 = vmatpush2.msra.mxu0 0.0
    %5191 = vmatprep.subr.mxu0 0.0
    %5192 = vmatpush2.msra.mxu0 0.0
    %5193 = vmatprep.subr.mxu0 0.0
    %5194 = vmatpush2.msra.mxu0 0.0
    %5195 = vmatprep.subr.mxu0 0.0
    %5196 = vmatpush2.msra.mxu0 0.0
    %5197 = vmatprep.subr.mxu0 0.0
    %5198 = vmatpush2.msra.mxu0 0.0
    %5199 = vmatprep.subr.mxu0 0.0
    %5200 = vmatpush2.msra.mxu0 0.0
    %5201 = vmatprep.subr.mxu0 0.0
    %5202 = vmatpush2.msra.mxu0 0.0
    %5203 = vmatprep.subr.mxu0 0.0
    %5204 = vmatpush2.msra.mxu0 0.0
    %5205 = vmatprep.subr.mxu0 0.0
    %5206 = vmatpush2.msra.mxu0 0.0
    %5207 = vmatprep.subr.mxu0 0.0
    %5208 = vmatpush2.msra.mxu0 0.0
    %5209 = vmatprep.subr.mxu0 0.0
    %5210 = vmatpush2.msra.mxu0 0.0
    %5211 = vmatprep.subr.mxu0 0.0
    %5212 = vmatpush2.msra.mxu0 0.0
    %5213 = vmatprep.subr.mxu0 0.0
    %5214 = vmatpush2.msra.mxu0 0.0
    %5215 = vmatprep.mubr.f32.mxu0 0.0
    %v5216 = vand.u32 %v5050, 4294901760
    %5217 = vmatmul.mubr.f32.gmra.mxu0 %v5216
    %v5218 = vpop.f32.mrf.mxu0
    %v5219 = vadd.f32 %v5128, %v5218
    %v5220 = vpop.f32.mrf.mxu0
    %5221 = vdwg.mxu0
    %5222 = vmatprep.subr.mxu0 0.0
    %5223 = vmatpush1.msra.mxu0 0.0
    %5224 = vmatprep.subr.mxu0 0.0
    %5225 = vmatpush1.msra.mxu0 0.0
    %5226 = vmatprep.subr.mxu0 0.0
    %5227 = vmatpush1.msra.mxu0 0.0
    %5228 = vmatprep.subr.mxu0 0.0
    %5229 = vmatpush1.msra.mxu0 0.0
    %5230 = vmatprep.subr.mxu0 0.0
    %5231 = vmatpush1.msra.mxu0 0.0
    %5232 = vmatprep.subr.mxu0 0.0
    %5233 = vmatpush1.msra.mxu0 0.0
    %5234 = vmatprep.subr.mxu0 0.0
    %5235 = vmatpush1.msra.mxu0 0.0
    %5236 = vmatprep.subr.mxu0 0.0
    %5237 = vmatpush1.msra.mxu0 0.0
    %5238 = vmatprep.subr.mxu0 0.0
    %5239 = vmatpush1.msra.mxu0 0.0
    %5240 = vmatprep.subr.mxu0 0.0
    %5241 = vmatpush1.msra.mxu0 0.0
    %5242 = vmatprep.subr.mxu0 0.0
    %5243 = vmatpush1.msra.mxu0 0.0
    %5244 = vmatprep.subr.mxu0 0.0
    %5245 = vmatpush1.msra.mxu0 0.0
    %5246 = vmatprep.subr.mxu0 0.0
    %v5247 = vand.u32 %v3819, 4294901760
    %v5248 = vsub.f32 %v3819, %v5247
    %5249 = vmatpush1.msra.mxu0 %v5248
    %5250 = vmatprep.subr.mxu0 0.0
    %v5251 = vand.u32 %v3818, 4294901760
    %v5252 = vsub.f32 %v3818, %v5251
    %5253 = vmatpush1.msra.mxu0 %v5252
    %5254 = vmatprep.subr.mxu0 0.0
    %v5255 = vand.u32 %v3817, 4294901760
    %v5256 = vsub.f32 %v3817, %v5255
    %5257 = vmatpush1.msra.mxu0 %v5256
    %5258 = vmatprep.subr.mxu0 0.0
    %v5259 = vand.u32 %v3816, 4294901760
    %v5260 = vsub.f32 %v3816, %v5259
    %5261 = vmatpush1.msra.mxu0 %v5260
    %5262 = vmatprep.subr.mxu0 0.0
    %5263 = vmatpush2.msra.mxu0 0.0
    %5264 = vmatprep.subr.mxu0 0.0
    %5265 = vmatpush2.msra.mxu0 0.0
    %5266 = vmatprep.subr.mxu0 0.0
    %5267 = vmatpush2.msra.mxu0 0.0
    %5268 = vmatprep.subr.mxu0 0.0
    %5269 = vmatpush2.msra.mxu0 0.0
    %5270 = vmatprep.subr.mxu0 0.0
    %5271 = vmatpush2.msra.mxu0 0.0
    %5272 = vmatprep.subr.mxu0 0.0
    %5273 = vmatpush2.msra.mxu0 0.0
    %5274 = vmatprep.subr.mxu0 0.0
    %5275 = vmatpush2.msra.mxu0 0.0
    %5276 = vmatprep.subr.mxu0 0.0
    %5277 = vmatpush2.msra.mxu0 0.0
    %5278 = vmatprep.subr.mxu0 0.0
    %5279 = vmatpush2.msra.mxu0 0.0
    %5280 = vmatprep.subr.mxu0 0.0
    %5281 = vmatpush2.msra.mxu0 0.0
    %5282 = vmatprep.subr.mxu0 0.0
    %5283 = vmatpush2.msra.mxu0 0.0
    %5284 = vmatprep.subr.mxu0 0.0
    %5285 = vmatpush2.msra.mxu0 0.0
    %5286 = vmatprep.subr.mxu0 0.0
    %5287 = vmatpush2.msra.mxu0 0.0
    %5288 = vmatprep.subr.mxu0 0.0
    %5289 = vmatpush2.msra.mxu0 0.0
    %5290 = vmatprep.subr.mxu0 0.0
    %5291 = vmatpush2.msra.mxu0 0.0
    %5292 = vmatprep.subr.mxu0 0.0
    %5293 = vmatpush2.msra.mxu0 0.0
    %5294 = vmatprep.mubr.f32.mxu0 0.0
    %v5295 = vand.u32 %v5050, 4294901760
    %v5296 = vsub.f32 %v5050, %v5295
    %5297 = vmatmul.mubr.f32.gmra.mxu0 %v5296
    %v5298 = vpop.f32.mrf.mxu0
    %v5299 = vadd.f32 %v5219, %v5298
    %v5300 = vpop.f32.mrf.mxu0
    %5301 = vdwg.mxu0
    %5302 = vmatprep.subr.mxu0 0.0
    %5303 = vmatpush1.msra.mxu0 0.0
    %5304 = vmatprep.subr.mxu0 0.0
    %5305 = vmatpush1.msra.mxu0 0.0
    %5306 = vmatprep.subr.mxu0 0.0
    %5307 = vmatpush1.msra.mxu0 0.0
    %5308 = vmatprep.subr.mxu0 0.0
    %5309 = vmatpush1.msra.mxu0 0.0
    %5310 = vmatprep.subr.mxu0 0.0
    %5311 = vmatpush1.msra.mxu0 0.0
    %5312 = vmatprep.subr.mxu0 0.0
    %5313 = vmatpush1.msra.mxu0 0.0
    %5314 = vmatprep.subr.mxu0 0.0
    %5315 = vmatpush1.msra.mxu0 0.0
    %5316 = vmatprep.subr.mxu0 0.0
    %5317 = vmatpush1.msra.mxu0 0.0
    %5318 = vmatprep.subr.mxu0 0.0
    %5319 = vmatpush1.msra.mxu0 0.0
    %5320 = vmatprep.subr.mxu0 0.0
    %5321 = vmatpush1.msra.mxu0 0.0
    %5322 = vmatprep.subr.mxu0 0.0
    %5323 = vmatpush1.msra.mxu0 0.0
    %5324 = vmatprep.subr.mxu0 0.0
    %5325 = vmatpush1.msra.mxu0 0.0
    %5326 = vmatprep.subr.mxu0 0.0
    %v5327 = vand.u32 %v3819, 4294901760
    %5328 = vmatpush1.msra.mxu0 %v5327
    %5329 = vmatprep.subr.mxu0 0.0
    %v5330 = vand.u32 %v3818, 4294901760
    %5331 = vmatpush1.msra.mxu0 %v5330
    %5332 = vmatprep.subr.mxu0 0.0
    %v5333 = vand.u32 %v3817, 4294901760
    %5334 = vmatpush1.msra.mxu0 %v5333
    %5335 = vmatprep.subr.mxu0 0.0
    %v5336 = vand.u32 %v3816, 4294901760
    %5337 = vmatpush1.msra.mxu0 %v5336
    %5338 = vmatprep.subr.mxu0 0.0
    %5339 = vmatpush2.msra.mxu0 0.0
    %5340 = vmatprep.subr.mxu0 0.0
    %5341 = vmatpush2.msra.mxu0 0.0
    %5342 = vmatprep.subr.mxu0 0.0
    %5343 = vmatpush2.msra.mxu0 0.0
    %5344 = vmatprep.subr.mxu0 0.0
    %5345 = vmatpush2.msra.mxu0 0.0
    %5346 = vmatprep.subr.mxu0 0.0
    %5347 = vmatpush2.msra.mxu0 0.0
    %5348 = vmatprep.subr.mxu0 0.0
    %5349 = vmatpush2.msra.mxu0 0.0
    %5350 = vmatprep.subr.mxu0 0.0
    %5351 = vmatpush2.msra.mxu0 0.0
    %5352 = vmatprep.subr.mxu0 0.0
    %5353 = vmatpush2.msra.mxu0 0.0
    %5354 = vmatprep.subr.mxu0 0.0
    %5355 = vmatpush2.msra.mxu0 0.0
    %5356 = vmatprep.subr.mxu0 0.0
    %5357 = vmatpush2.msra.mxu0 0.0
    %5358 = vmatprep.subr.mxu0 0.0
    %5359 = vmatpush2.msra.mxu0 0.0
    %5360 = vmatprep.subr.mxu0 0.0
    %5361 = vmatpush2.msra.mxu0 0.0
    %5362 = vmatprep.subr.mxu0 0.0
    %5363 = vmatpush2.msra.mxu0 0.0
    %5364 = vmatprep.subr.mxu0 0.0
    %5365 = vmatpush2.msra.mxu0 0.0
    %5366 = vmatprep.subr.mxu0 0.0
    %5367 = vmatpush2.msra.mxu0 0.0
    %5368 = vmatprep.subr.mxu0 0.0
    %5369 = vmatpush2.msra.mxu0 0.0
    %5370 = vmatprep.mubr.f32.mxu0 0.0
    %v5371 = vand.u32 %v5050, 4294901760
    %v5372 = vsub.f32 %v5050, %v5371
    %v5373 = vand.u32 %v5372, 4294901760
    %5374 = vmatmul.mubr.f32.gmra.mxu0 %v5373
    %v5375 = vpop.f32.mrf.mxu0
    %v5376 = vadd.f32 %v5299, %v5375
    %v5377 = vpop.f32.mrf.mxu0
    %5378 = vdwg.mxu0
    %5379 = vmatprep.subr.mxu0 0.0
    %5380 = vmatpush1.msra.mxu0 0.0
    %5381 = vmatprep.subr.mxu0 0.0
    %5382 = vmatpush1.msra.mxu0 0.0
    %5383 = vmatprep.subr.mxu0 0.0
    %5384 = vmatpush1.msra.mxu0 0.0
    %5385 = vmatprep.subr.mxu0 0.0
    %5386 = vmatpush1.msra.mxu0 0.0
    %5387 = vmatprep.subr.mxu0 0.0
    %5388 = vmatpush1.msra.mxu0 0.0
    %5389 = vmatprep.subr.mxu0 0.0
    %5390 = vmatpush1.msra.mxu0 0.0
    %5391 = vmatprep.subr.mxu0 0.0
    %5392 = vmatpush1.msra.mxu0 0.0
    %5393 = vmatprep.subr.mxu0 0.0
    %5394 = vmatpush1.msra.mxu0 0.0
    %5395 = vmatprep.subr.mxu0 0.0
    %5396 = vmatpush1.msra.mxu0 0.0
    %5397 = vmatprep.subr.mxu0 0.0
    %5398 = vmatpush1.msra.mxu0 0.0
    %5399 = vmatprep.subr.mxu0 0.0
    %5400 = vmatpush1.msra.mxu0 0.0
    %5401 = vmatprep.subr.mxu0 0.0
    %5402 = vmatpush1.msra.mxu0 0.0
    %5403 = vmatprep.subr.mxu0 0.0
    %v5404 = vand.u32 %v3819, 4294901760
    %v5405 = vsub.f32 %v3819, %v5404
    %v5406 = vand.u32 %v5405, 4294901760
    %5407 = vmatpush1.msra.mxu0 %v5406
    %5408 = vmatprep.subr.mxu0 0.0
    %v5409 = vand.u32 %v3818, 4294901760
    %v5410 = vsub.f32 %v3818, %v5409
    %v5411 = vand.u32 %v5410, 4294901760
    %5412 = vmatpush1.msra.mxu0 %v5411
    %5413 = vmatprep.subr.mxu0 0.0
    %v5414 = vand.u32 %v3817, 4294901760
    %v5415 = vsub.f32 %v3817, %v5414
    %v5416 = vand.u32 %v5415, 4294901760
    %5417 = vmatpush1.msra.mxu0 %v5416
    %5418 = vmatprep.subr.mxu0 0.0
    %v5419 = vand.u32 %v3816, 4294901760
    %v5420 = vsub.f32 %v3816, %v5419
    %v5421 = vand.u32 %v5420, 4294901760
    %5422 = vmatpush1.msra.mxu0 %v5421
    %5423 = vmatprep.subr.mxu0 0.0
    %5424 = vmatpush2.msra.mxu0 0.0
    %5425 = vmatprep.subr.mxu0 0.0
    %5426 = vmatpush2.msra.mxu0 0.0
    %5427 = vmatprep.subr.mxu0 0.0
    %5428 = vmatpush2.msra.mxu0 0.0
    %5429 = vmatprep.subr.mxu0 0.0
    %5430 = vmatpush2.msra.mxu0 0.0
    %5431 = vmatprep.subr.mxu0 0.0
    %5432 = vmatpush2.msra.mxu0 0.0
    %5433 = vmatprep.subr.mxu0 0.0
    %5434 = vmatpush2.msra.mxu0 0.0
    %5435 = vmatprep.subr.mxu0 0.0
    %5436 = vmatpush2.msra.mxu0 0.0
    %5437 = vmatprep.subr.mxu0 0.0
    %5438 = vmatpush2.msra.mxu0 0.0
    %5439 = vmatprep.subr.mxu0 0.0
    %5440 = vmatpush2.msra.mxu0 0.0
    %5441 = vmatprep.subr.mxu0 0.0
    %5442 = vmatpush2.msra.mxu0 0.0
    %5443 = vmatprep.subr.mxu0 0.0
    %5444 = vmatpush2.msra.mxu0 0.0
    %5445 = vmatprep.subr.mxu0 0.0
    %5446 = vmatpush2.msra.mxu0 0.0
    %5447 = vmatprep.subr.mxu0 0.0
    %5448 = vmatpush2.msra.mxu0 0.0
    %5449 = vmatprep.subr.mxu0 0.0
    %5450 = vmatpush2.msra.mxu0 0.0
    %5451 = vmatprep.subr.mxu0 0.0
    %5452 = vmatpush2.msra.mxu0 0.0
    %5453 = vmatprep.subr.mxu0 0.0
    %5454 = vmatpush2.msra.mxu0 0.0
    %5455 = vmatprep.mubr.f32.mxu0 0.0
    %v5456 = vand.u32 %v5050, 4294901760
    %5457 = vmatmul.mubr.f32.gmra.mxu0 %v5456
    %v5458 = vpop.f32.mrf.mxu0
    %v5459 = vadd.f32 %v5376, %v5458
    %v5460 = vpop.f32.mrf.mxu0
    %5461 = vdwg.mxu0
    %5462 = vmatprep.subr.mxu0 0.0
    %5463 = vmatpush1.msra.mxu0 0.0
    %5464 = vmatprep.subr.mxu0 0.0
    %5465 = vmatpush1.msra.mxu0 0.0
    %5466 = vmatprep.subr.mxu0 0.0
    %5467 = vmatpush1.msra.mxu0 0.0
    %5468 = vmatprep.subr.mxu0 0.0
    %5469 = vmatpush1.msra.mxu0 0.0
    %5470 = vmatprep.subr.mxu0 0.0
    %5471 = vmatpush1.msra.mxu0 0.0
    %5472 = vmatprep.subr.mxu0 0.0
    %5473 = vmatpush1.msra.mxu0 0.0
    %5474 = vmatprep.subr.mxu0 0.0
    %5475 = vmatpush1.msra.mxu0 0.0
    %5476 = vmatprep.subr.mxu0 0.0
    %5477 = vmatpush1.msra.mxu0 0.0
    %5478 = vmatprep.subr.mxu0 0.0
    %5479 = vmatpush1.msra.mxu0 0.0
    %5480 = vmatprep.subr.mxu0 0.0
    %5481 = vmatpush1.msra.mxu0 0.0
    %5482 = vmatprep.subr.mxu0 0.0
    %5483 = vmatpush1.msra.mxu0 0.0
    %5484 = vmatprep.subr.mxu0 0.0
    %5485 = vmatpush1.msra.mxu0 0.0
    %5486 = vmatprep.subr.mxu0 0.0
    %v5487 = vand.u32 %v3819, 4294901760
    %5488 = vmatpush1.msra.mxu0 %v5487
    %5489 = vmatprep.subr.mxu0 0.0
    %v5490 = vand.u32 %v3818, 4294901760
    %5491 = vmatpush1.msra.mxu0 %v5490
    %5492 = vmatprep.subr.mxu0 0.0
    %v5493 = vand.u32 %v3817, 4294901760
    %5494 = vmatpush1.msra.mxu0 %v5493
    %5495 = vmatprep.subr.mxu0 0.0
    %v5496 = vand.u32 %v3816, 4294901760
    %5497 = vmatpush1.msra.mxu0 %v5496
    %5498 = vmatprep.subr.mxu0 0.0
    %5499 = vmatpush2.msra.mxu0 0.0
    %5500 = vmatprep.subr.mxu0 0.0
    %5501 = vmatpush2.msra.mxu0 0.0
    %5502 = vmatprep.subr.mxu0 0.0
    %5503 = vmatpush2.msra.mxu0 0.0
    %5504 = vmatprep.subr.mxu0 0.0
    %5505 = vmatpush2.msra.mxu0 0.0
    %5506 = vmatprep.subr.mxu0 0.0
    %5507 = vmatpush2.msra.mxu0 0.0
    %5508 = vmatprep.subr.mxu0 0.0
    %5509 = vmatpush2.msra.mxu0 0.0
    %5510 = vmatprep.subr.mxu0 0.0
    %5511 = vmatpush2.msra.mxu0 0.0
    %5512 = vmatprep.subr.mxu0 0.0
    %5513 = vmatpush2.msra.mxu0 0.0
    %5514 = vmatprep.subr.mxu0 0.0
    %5515 = vmatpush2.msra.mxu0 0.0
    %5516 = vmatprep.subr.mxu0 0.0
    %5517 = vmatpush2.msra.mxu0 0.0
    %5518 = vmatprep.subr.mxu0 0.0
    %5519 = vmatpush2.msra.mxu0 0.0
    %5520 = vmatprep.subr.mxu0 0.0
    %5521 = vmatpush2.msra.mxu0 0.0
    %5522 = vmatprep.subr.mxu0 0.0
    %5523 = vmatpush2.msra.mxu0 0.0
    %5524 = vmatprep.subr.mxu0 0.0
    %5525 = vmatpush2.msra.mxu0 0.0
    %5526 = vmatprep.subr.mxu0 0.0
    %5527 = vmatpush2.msra.mxu0 0.0
    %5528 = vmatprep.subr.mxu0 0.0
    %5529 = vmatpush2.msra.mxu0 0.0
    %5530 = vmatprep.mubr.f32.mxu0 0.0
    %v5531 = vand.u32 %v5050, 4294901760
    %5532 = vmatmul.mubr.f32.gmra.mxu0 %v5531
    %v5533 = vpop.f32.mrf.mxu0
    %v5534 = vadd.f32 %v5459, %v5533
    %v5535 = vpop.f32.mrf.mxu0
    %5536 = vdwg.mxu0
    %v5537 = vadd.f32 %v4518, %v5534
    %v5538 = vxor.u32 %v5537, 2147483648
    %v5539 = vmul.f32 %v5538, 1.442695
    %v5540 = vpow.pop %v5539
    %v5541 = vadd.f32 %v5540, 1.0
    %v5542 = vrcp.pop %v5541
    %v5543 = vmul.f32 1.0, %v5542
    %v5544 = vtanh.pop %v5537
    %5545 = vrot.lane.b32.xlu0 %v5543, 96
    %v5546 = vpop.permute.xlu0 %5545
    %5547 = vrot.lane.b32.xlu0 %v5544, 64
    %v5548 = vpop.permute.xlu0 %5547
    %5549 = vrot.lane.b32.xlu0 %v5543, 32
    %v5550 = vpop.permute.xlu0 %5549
    %v5551 = vmul.f32 %v5546, %v5046
    %v5552 = vmul.f32 %v5543, %v5548
    %v5553 = vadd.f32 %v5551, %v5552
    %v5554 = vtanh.pop %v5553
    %v5555 = vmul.f32 %v5550, %v5554
    %v5557 = vsel %vm757, %v5555, 0
    %5559 = vmatprep.subr.mxu0 0.0
    %5560 = vmatpush1.msra.mxu0 0.0
    %5561 = vmatprep.subr.mxu0 0.0
    %5562 = vmatpush1.msra.mxu0 0.0
    %5563 = vmatprep.subr.mxu0 0.0
    %5564 = vmatpush1.msra.mxu0 0.0
    %5565 = vmatprep.subr.mxu0 0.0
    %5566 = vmatpush1.msra.mxu0 0.0
    %5567 = vmatprep.subr.mxu0 0.0
    %5568 = vmatpush1.msra.mxu0 0.0
    %5569 = vmatprep.subr.mxu0 0.0
    %5570 = vmatpush1.msra.mxu0 0.0
    %5571 = vmatprep.subr.mxu0 0.0
    %5572 = vmatpush1.msra.mxu0 0.0
    %5573 = vmatprep.subr.mxu0 0.0
    %5574 = vmatpush1.msra.mxu0 0.0
    %5575 = vmatprep.subr.mxu0 0.0
    %5576 = vmatpush1.msra.mxu0 0.0
    %5577 = vmatprep.subr.mxu0 0.0
    %5578 = vmatpush1.msra.mxu0 0.0
    %5579 = vmatprep.subr.mxu0 0.0
    %5580 = vmatpush1.msra.mxu0 0.0
    %5581 = vmatprep.subr.mxu0 0.0
    %5582 = vmatpush1.msra.mxu0 0.0
    %5583 = vmatprep.subr.mxu0 0.0
    %v5584 = vand.u32 %v3819, 4294901760
    %5585 = vmatpush1.msra.mxu0 %v5584
    %5586 = vmatprep.subr.mxu0 0.0
    %v5587 = vand.u32 %v3818, 4294901760
    %5588 = vmatpush1.msra.mxu0 %v5587
    %5589 = vmatprep.subr.mxu0 0.0
    %v5590 = vand.u32 %v3817, 4294901760
    %5591 = vmatpush1.msra.mxu0 %v5590
    %5592 = vmatprep.subr.mxu0 0.0
    %v5593 = vand.u32 %v3816, 4294901760
    %5594 = vmatpush1.msra.mxu0 %v5593
    %5595 = vmatprep.subr.mxu0 0.0
    %5596 = vmatpush2.msra.mxu0 0.0
    %5597 = vmatprep.subr.mxu0 0.0
    %5598 = vmatpush2.msra.mxu0 0.0
    %5599 = vmatprep.subr.mxu0 0.0
    %5600 = vmatpush2.msra.mxu0 0.0
    %5601 = vmatprep.subr.mxu0 0.0
    %5602 = vmatpush2.msra.mxu0 0.0
    %5603 = vmatprep.subr.mxu0 0.0
    %5604 = vmatpush2.msra.mxu0 0.0
    %5605 = vmatprep.subr.mxu0 0.0
    %5606 = vmatpush2.msra.mxu0 0.0
    %5607 = vmatprep.subr.mxu0 0.0
    %5608 = vmatpush2.msra.mxu0 0.0
    %5609 = vmatprep.subr.mxu0 0.0
    %5610 = vmatpush2.msra.mxu0 0.0
    %5611 = vmatprep.subr.mxu0 0.0
    %5612 = vmatpush2.msra.mxu0 0.0
    %5613 = vmatprep.subr.mxu0 0.0
    %5614 = vmatpush2.msra.mxu0 0.0
    %5615 = vmatprep.subr.mxu0 0.0
    %5616 = vmatpush2.msra.mxu0 0.0
    %5617 = vmatprep.subr.mxu0 0.0
    %5618 = vmatpush2.msra.mxu0 0.0
    %5619 = vmatprep.subr.mxu0 0.0
    %5620 = vmatpush2.msra.mxu0 0.0
    %5621 = vmatprep.subr.mxu0 0.0
    %5622 = vmatpush2.msra.mxu0 0.0
    %5623 = vmatprep.subr.mxu0 0.0
    %5624 = vmatpush2.msra.mxu0 0.0
    %5625 = vmatprep.subr.mxu0 0.0
    %5626 = vmatpush2.msra.mxu0 0.0
    %5627 = vmatprep.mubr.f32.mxu0 0.0
    %v5628 = vand.u32 %v5557, 4294901760
    %v5629 = vsub.f32 %v5557, %v5628
    %v5630 = vand.u32 %v5629, 4294901760
    %v5631 = vsub.f32 %v5629, %v5630
    %v5632 = vand.u32 %v5631, 4294901760
    %5633 = vmatmul.mubr.f32.gmra.mxu0 %v5632
    %v5634 = vpop.f32.mrf.mxu0
    %v5635 = vadd.f32 0.0, %v5634
    %v5636 = vpop.f32.mrf.mxu0
    %5637 = vdwg.mxu0
    %5638 = vmatprep.subr.mxu0 0.0
    %5639 = vmatpush1.msra.mxu0 0.0
    %5640 = vmatprep.subr.mxu0 0.0
    %5641 = vmatpush1.msra.mxu0 0.0
    %5642 = vmatprep.subr.mxu0 0.0
    %5643 = vmatpush1.msra.mxu0 0.0
    %5644 = vmatprep.subr.mxu0 0.0
    %5645 = vmatpush1.msra.mxu0 0.0
    %5646 = vmatprep.subr.mxu0 0.0
    %5647 = vmatpush1.msra.mxu0 0.0
    %5648 = vmatprep.subr.mxu0 0.0
    %5649 = vmatpush1.msra.mxu0 0.0
    %5650 = vmatprep.subr.mxu0 0.0
    %5651 = vmatpush1.msra.mxu0 0.0
    %5652 = vmatprep.subr.mxu0 0.0
    %5653 = vmatpush1.msra.mxu0 0.0
    %5654 = vmatprep.subr.mxu0 0.0
    %5655 = vmatpush1.msra.mxu0 0.0
    %5656 = vmatprep.subr.mxu0 0.0
    %5657 = vmatpush1.msra.mxu0 0.0
    %5658 = vmatprep.subr.mxu0 0.0
    %5659 = vmatpush1.msra.mxu0 0.0
    %5660 = vmatprep.subr.mxu0 0.0
    %5661 = vmatpush1.msra.mxu0 0.0
    %5662 = vmatprep.subr.mxu0 0.0
    %v5663 = vand.u32 %v3819, 4294901760
    %v5664 = vsub.f32 %v3819, %v5663
    %v5665 = vand.u32 %v5664, 4294901760
    %v5666 = vsub.f32 %v5664, %v5665
    %v5667 = vand.u32 %v5666, 4294901760
    %5668 = vmatpush1.msra.mxu0 %v5667
    %5669 = vmatprep.subr.mxu0 0.0
    %v5670 = vand.u32 %v3818, 4294901760
    %v5671 = vsub.f32 %v3818, %v5670
    %v5672 = vand.u32 %v5671, 4294901760
    %v5673 = vsub.f32 %v5671, %v5672
    %v5674 = vand.u32 %v5673, 4294901760
    %5675 = vmatpush1.msra.mxu0 %v5674
    %5676 = vmatprep.subr.mxu0 0.0
    %v5677 = vand.u32 %v3817, 4294901760
    %v5678 = vsub.f32 %v3817, %v5677
    %v5679 = vand.u32 %v5678, 4294901760
    %v5680 = vsub.f32 %v5678, %v5679
    %v5681 = vand.u32 %v5680, 4294901760
    %5682 = vmatpush1.msra.mxu0 %v5681
    %5683 = vmatprep.subr.mxu0 0.0
    %v5684 = vand.u32 %v3816, 4294901760
    %v5685 = vsub.f32 %v3816, %v5684
    %v5686 = vand.u32 %v5685, 4294901760
    %v5687 = vsub.f32 %v5685, %v5686
    %v5688 = vand.u32 %v5687, 4294901760
    %5689 = vmatpush1.msra.mxu0 %v5688
    %5690 = vmatprep.subr.mxu0 0.0
    %5691 = vmatpush2.msra.mxu0 0.0
    %5692 = vmatprep.subr.mxu0 0.0
    %5693 = vmatpush2.msra.mxu0 0.0
    %5694 = vmatprep.subr.mxu0 0.0
    %5695 = vmatpush2.msra.mxu0 0.0
    %5696 = vmatprep.subr.mxu0 0.0
    %5697 = vmatpush2.msra.mxu0 0.0
    %5698 = vmatprep.subr.mxu0 0.0
    %5699 = vmatpush2.msra.mxu0 0.0
    %5700 = vmatprep.subr.mxu0 0.0
    %5701 = vmatpush2.msra.mxu0 0.0
    %5702 = vmatprep.subr.mxu0 0.0
    %5703 = vmatpush2.msra.mxu0 0.0
    %5704 = vmatprep.subr.mxu0 0.0
    %5705 = vmatpush2.msra.mxu0 0.0
    %5706 = vmatprep.subr.mxu0 0.0
    %5707 = vmatpush2.msra.mxu0 0.0
    %5708 = vmatprep.subr.mxu0 0.0
    %5709 = vmatpush2.msra.mxu0 0.0
    %5710 = vmatprep.subr.mxu0 0.0
    %5711 = vmatpush2.msra.mxu0 0.0
    %5712 = vmatprep.subr.mxu0 0.0
    %5713 = vmatpush2.msra.mxu0 0.0
    %5714 = vmatprep.subr.mxu0 0.0
    %5715 = vmatpush2.msra.mxu0 0.0
    %5716 = vmatprep.subr.mxu0 0.0
    %5717 = vmatpush2.msra.mxu0 0.0
    %5718 = vmatprep.subr.mxu0 0.0
    %5719 = vmatpush2.msra.mxu0 0.0
    %5720 = vmatprep.subr.mxu0 0.0
    %5721 = vmatpush2.msra.mxu0 0.0
    %5722 = vmatprep.mubr.f32.mxu0 0.0
    %v5723 = vand.u32 %v5557, 4294901760
    %5724 = vmatmul.mubr.f32.gmra.mxu0 %v5723
    %v5725 = vpop.f32.mrf.mxu0
    %v5726 = vadd.f32 %v5635, %v5725
    %v5727 = vpop.f32.mrf.mxu0
    %5728 = vdwg.mxu0
    %5729 = vmatprep.subr.mxu0 0.0
    %5730 = vmatpush1.msra.mxu0 0.0
    %5731 = vmatprep.subr.mxu0 0.0
    %5732 = vmatpush1.msra.mxu0 0.0
    %5733 = vmatprep.subr.mxu0 0.0
    %5734 = vmatpush1.msra.mxu0 0.0
    %5735 = vmatprep.subr.mxu0 0.0
    %5736 = vmatpush1.msra.mxu0 0.0
    %5737 = vmatprep.subr.mxu0 0.0
    %5738 = vmatpush1.msra.mxu0 0.0
    %5739 = vmatprep.subr.mxu0 0.0
    %5740 = vmatpush1.msra.mxu0 0.0
    %5741 = vmatprep.subr.mxu0 0.0
    %5742 = vmatpush1.msra.mxu0 0.0
    %5743 = vmatprep.subr.mxu0 0.0
    %5744 = vmatpush1.msra.mxu0 0.0
    %5745 = vmatprep.subr.mxu0 0.0
    %5746 = vmatpush1.msra.mxu0 0.0
    %5747 = vmatprep.subr.mxu0 0.0
    %5748 = vmatpush1.msra.mxu0 0.0
    %5749 = vmatprep.subr.mxu0 0.0
    %5750 = vmatpush1.msra.mxu0 0.0
    %5751 = vmatprep.subr.mxu0 0.0
    %5752 = vmatpush1.msra.mxu0 0.0
    %5753 = vmatprep.subr.mxu0 0.0
    %v5754 = vand.u32 %v3819, 4294901760
    %v5755 = vsub.f32 %v3819, %v5754
    %5756 = vmatpush1.msra.mxu0 %v5755
    %5757 = vmatprep.subr.mxu0 0.0
    %v5758 = vand.u32 %v3818, 4294901760
    %v5759 = vsub.f32 %v3818, %v5758
    %5760 = vmatpush1.msra.mxu0 %v5759
    %5761 = vmatprep.subr.mxu0 0.0
    %v5762 = vand.u32 %v3817, 4294901760
    %v5763 = vsub.f32 %v3817, %v5762
    %5764 = vmatpush1.msra.mxu0 %v5763
    %5765 = vmatprep.subr.mxu0 0.0
    %v5766 = vand.u32 %v3816, 4294901760
    %v5767 = vsub.f32 %v3816, %v5766
    %5768 = vmatpush1.msra.mxu0 %v5767
    %5769 = vmatprep.subr.mxu0 0.0
    %5770 = vmatpush2.msra.mxu0 0.0
    %5771 = vmatprep.subr.mxu0 0.0
    %5772 = vmatpush2.msra.mxu0 0.0
    %5773 = vmatprep.subr.mxu0 0.0
    %5774 = vmatpush2.msra.mxu0 0.0
    %5775 = vmatprep.subr.mxu0 0.0
    %5776 = vmatpush2.msra.mxu0 0.0
    %5777 = vmatprep.subr.mxu0 0.0
    %5778 = vmatpush2.msra.mxu0 0.0
    %5779 = vmatprep.subr.mxu0 0.0
    %5780 = vmatpush2.msra.mxu0 0.0
    %5781 = vmatprep.subr.mxu0 0.0
    %5782 = vmatpush2.msra.mxu0 0.0
    %5783 = vmatprep.subr.mxu0 0.0
    %5784 = vmatpush2.msra.mxu0 0.0
    %5785 = vmatprep.subr.mxu0 0.0
    %5786 = vmatpush2.msra.mxu0 0.0
    %5787 = vmatprep.subr.mxu0 0.0
    %5788 = vmatpush2.msra.mxu0 0.0
    %5789 = vmatprep.subr.mxu0 0.0
    %5790 = vmatpush2.msra.mxu0 0.0
    %5791 = vmatprep.subr.mxu0 0.0
    %5792 = vmatpush2.msra.mxu0 0.0
    %5793 = vmatprep.subr.mxu0 0.0
    %5794 = vmatpush2.msra.mxu0 0.0
    %5795 = vmatprep.subr.mxu0 0.0
    %5796 = vmatpush2.msra.mxu0 0.0
    %5797 = vmatprep.subr.mxu0 0.0
    %5798 = vmatpush2.msra.mxu0 0.0
    %5799 = vmatprep.subr.mxu0 0.0
    %5800 = vmatpush2.msra.mxu0 0.0
    %5801 = vmatprep.mubr.f32.mxu0 0.0
    %v5802 = vand.u32 %v5557, 4294901760
    %v5803 = vsub.f32 %v5557, %v5802
    %5804 = vmatmul.mubr.f32.gmra.mxu0 %v5803
    %v5805 = vpop.f32.mrf.mxu0
    %v5806 = vadd.f32 %v5726, %v5805
    %v5807 = vpop.f32.mrf.mxu0
    %5808 = vdwg.mxu0
    %5809 = vmatprep.subr.mxu0 0.0
    %5810 = vmatpush1.msra.mxu0 0.0
    %5811 = vmatprep.subr.mxu0 0.0
    %5812 = vmatpush1.msra.mxu0 0.0
    %5813 = vmatprep.subr.mxu0 0.0
    %5814 = vmatpush1.msra.mxu0 0.0
    %5815 = vmatprep.subr.mxu0 0.0
    %5816 = vmatpush1.msra.mxu0 0.0
    %5817 = vmatprep.subr.mxu0 0.0
    %5818 = vmatpush1.msra.mxu0 0.0
    %5819 = vmatprep.subr.mxu0 0.0
    %5820 = vmatpush1.msra.mxu0 0.0
    %5821 = vmatprep.subr.mxu0 0.0
    %5822 = vmatpush1.msra.mxu0 0.0
    %5823 = vmatprep.subr.mxu0 0.0
    %5824 = vmatpush1.msra.mxu0 0.0
    %5825 = vmatprep.subr.mxu0 0.0
    %5826 = vmatpush1.msra.mxu0 0.0
    %5827 = vmatprep.subr.mxu0 0.0
    %5828 = vmatpush1.msra.mxu0 0.0
    %5829 = vmatprep.subr.mxu0 0.0
    %5830 = vmatpush1.msra.mxu0 0.0
    %5831 = vmatprep.subr.mxu0 0.0
    %5832 = vmatpush1.msra.mxu0 0.0
    %5833 = vmatprep.subr.mxu0 0.0
    %v5834 = vand.u32 %v3819, 4294901760
    %5835 = vmatpush1.msra.mxu0 %v5834
    %5836 = vmatprep.subr.mxu0 0.0
    %v5837 = vand.u32 %v3818, 4294901760
    %5838 = vmatpush1.msra.mxu0 %v5837
    %5839 = vmatprep.subr.mxu0 0.0
    %v5840 = vand.u32 %v3817, 4294901760
    %5841 = vmatpush1.msra.mxu0 %v5840
    %5842 = vmatprep.subr.mxu0 0.0
    %v5843 = vand.u32 %v3816, 4294901760
    %5844 = vmatpush1.msra.mxu0 %v5843
    %5845 = vmatprep.subr.mxu0 0.0
    %5846 = vmatpush2.msra.mxu0 0.0
    %5847 = vmatprep.subr.mxu0 0.0
    %5848 = vmatpush2.msra.mxu0 0.0
    %5849 = vmatprep.subr.mxu0 0.0
    %5850 = vmatpush2.msra.mxu0 0.0
    %5851 = vmatprep.subr.mxu0 0.0
    %5852 = vmatpush2.msra.mxu0 0.0
    %5853 = vmatprep.subr.mxu0 0.0
    %5854 = vmatpush2.msra.mxu0 0.0
    %5855 = vmatprep.subr.mxu0 0.0
    %5856 = vmatpush2.msra.mxu0 0.0
    %5857 = vmatprep.subr.mxu0 0.0
    %5858 = vmatpush2.msra.mxu0 0.0
    %5859 = vmatprep.subr.mxu0 0.0
    %5860 = vmatpush2.msra.mxu0 0.0
    %5861 = vmatprep.subr.mxu0 0.0
    %5862 = vmatpush2.msra.mxu0 0.0
    %5863 = vmatprep.subr.mxu0 0.0
    %5864 = vmatpush2.msra.mxu0 0.0
    %5865 = vmatprep.subr.mxu0 0.0
    %5866 = vmatpush2.msra.mxu0 0.0
    %5867 = vmatprep.subr.mxu0 0.0
    %5868 = vmatpush2.msra.mxu0 0.0
    %5869 = vmatprep.subr.mxu0 0.0
    %5870 = vmatpush2.msra.mxu0 0.0
    %5871 = vmatprep.subr.mxu0 0.0
    %5872 = vmatpush2.msra.mxu0 0.0
    %5873 = vmatprep.subr.mxu0 0.0
    %5874 = vmatpush2.msra.mxu0 0.0
    %5875 = vmatprep.subr.mxu0 0.0
    %5876 = vmatpush2.msra.mxu0 0.0
    %5877 = vmatprep.mubr.f32.mxu0 0.0
    %v5878 = vand.u32 %v5557, 4294901760
    %v5879 = vsub.f32 %v5557, %v5878
    %v5880 = vand.u32 %v5879, 4294901760
    %5881 = vmatmul.mubr.f32.gmra.mxu0 %v5880
    %v5882 = vpop.f32.mrf.mxu0
    %v5883 = vadd.f32 %v5806, %v5882
    %v5884 = vpop.f32.mrf.mxu0
    %5885 = vdwg.mxu0
    %5886 = vmatprep.subr.mxu0 0.0
    %5887 = vmatpush1.msra.mxu0 0.0
    %5888 = vmatprep.subr.mxu0 0.0
    %5889 = vmatpush1.msra.mxu0 0.0
    %5890 = vmatprep.subr.mxu0 0.0
    %5891 = vmatpush1.msra.mxu0 0.0
    %5892 = vmatprep.subr.mxu0 0.0
    %5893 = vmatpush1.msra.mxu0 0.0
    %5894 = vmatprep.subr.mxu0 0.0
    %5895 = vmatpush1.msra.mxu0 0.0
    %5896 = vmatprep.subr.mxu0 0.0
    %5897 = vmatpush1.msra.mxu0 0.0
    %5898 = vmatprep.subr.mxu0 0.0
    %5899 = vmatpush1.msra.mxu0 0.0
    %5900 = vmatprep.subr.mxu0 0.0
    %5901 = vmatpush1.msra.mxu0 0.0
    %5902 = vmatprep.subr.mxu0 0.0
    %5903 = vmatpush1.msra.mxu0 0.0
    %5904 = vmatprep.subr.mxu0 0.0
    %5905 = vmatpush1.msra.mxu0 0.0
    %5906 = vmatprep.subr.mxu0 0.0
    %5907 = vmatpush1.msra.mxu0 0.0
    %5908 = vmatprep.subr.mxu0 0.0
    %5909 = vmatpush1.msra.mxu0 0.0
    %5910 = vmatprep.subr.mxu0 0.0
    %v5911 = vand.u32 %v3819, 4294901760
    %v5912 = vsub.f32 %v3819, %v5911
    %v5913 = vand.u32 %v5912, 4294901760
    %5914 = vmatpush1.msra.mxu0 %v5913
    %5915 = vmatprep.subr.mxu0 0.0
    %v5916 = vand.u32 %v3818, 4294901760
    %v5917 = vsub.f32 %v3818, %v5916
    %v5918 = vand.u32 %v5917, 4294901760
    %5919 = vmatpush1.msra.mxu0 %v5918
    %5920 = vmatprep.subr.mxu0 0.0
    %v5921 = vand.u32 %v3817, 4294901760
    %v5922 = vsub.f32 %v3817, %v5921
    %v5923 = vand.u32 %v5922, 4294901760
    %5924 = vmatpush1.msra.mxu0 %v5923
    %5925 = vmatprep.subr.mxu0 0.0
    %v5926 = vand.u32 %v3816, 4294901760
    %v5927 = vsub.f32 %v3816, %v5926
    %v5928 = vand.u32 %v5927, 4294901760
    %5929 = vmatpush1.msra.mxu0 %v5928
    %5930 = vmatprep.subr.mxu0 0.0
    %5931 = vmatpush2.msra.mxu0 0.0
    %5932 = vmatprep.subr.mxu0 0.0
    %5933 = vmatpush2.msra.mxu0 0.0
    %5934 = vmatprep.subr.mxu0 0.0
    %5935 = vmatpush2.msra.mxu0 0.0
    %5936 = vmatprep.subr.mxu0 0.0
    %5937 = vmatpush2.msra.mxu0 0.0
    %5938 = vmatprep.subr.mxu0 0.0
    %5939 = vmatpush2.msra.mxu0 0.0
    %5940 = vmatprep.subr.mxu0 0.0
    %5941 = vmatpush2.msra.mxu0 0.0
    %5942 = vmatprep.subr.mxu0 0.0
    %5943 = vmatpush2.msra.mxu0 0.0
    %5944 = vmatprep.subr.mxu0 0.0
    %5945 = vmatpush2.msra.mxu0 0.0
    %5946 = vmatprep.subr.mxu0 0.0
    %5947 = vmatpush2.msra.mxu0 0.0
    %5948 = vmatprep.subr.mxu0 0.0
    %5949 = vmatpush2.msra.mxu0 0.0
    %5950 = vmatprep.subr.mxu0 0.0
    %5951 = vmatpush2.msra.mxu0 0.0
    %5952 = vmatprep.subr.mxu0 0.0
    %5953 = vmatpush2.msra.mxu0 0.0
    %5954 = vmatprep.subr.mxu0 0.0
    %5955 = vmatpush2.msra.mxu0 0.0
    %5956 = vmatprep.subr.mxu0 0.0
    %5957 = vmatpush2.msra.mxu0 0.0
    %5958 = vmatprep.subr.mxu0 0.0
    %5959 = vmatpush2.msra.mxu0 0.0
    %5960 = vmatprep.subr.mxu0 0.0
    %5961 = vmatpush2.msra.mxu0 0.0
    %5962 = vmatprep.mubr.f32.mxu0 0.0
    %v5963 = vand.u32 %v5557, 4294901760
    %5964 = vmatmul.mubr.f32.gmra.mxu0 %v5963
    %v5965 = vpop.f32.mrf.mxu0
    %v5966 = vadd.f32 %v5883, %v5965
    %v5967 = vpop.f32.mrf.mxu0
    %5968 = vdwg.mxu0
    %5969 = vmatprep.subr.mxu0 0.0
    %5970 = vmatpush1.msra.mxu0 0.0
    %5971 = vmatprep.subr.mxu0 0.0
    %5972 = vmatpush1.msra.mxu0 0.0
    %5973 = vmatprep.subr.mxu0 0.0
    %5974 = vmatpush1.msra.mxu0 0.0
    %5975 = vmatprep.subr.mxu0 0.0
    %5976 = vmatpush1.msra.mxu0 0.0
    %5977 = vmatprep.subr.mxu0 0.0
    %5978 = vmatpush1.msra.mxu0 0.0
    %5979 = vmatprep.subr.mxu0 0.0
    %5980 = vmatpush1.msra.mxu0 0.0
    %5981 = vmatprep.subr.mxu0 0.0
    %5982 = vmatpush1.msra.mxu0 0.0
    %5983 = vmatprep.subr.mxu0 0.0
    %5984 = vmatpush1.msra.mxu0 0.0
    %5985 = vmatprep.subr.mxu0 0.0
    %5986 = vmatpush1.msra.mxu0 0.0
    %5987 = vmatprep.subr.mxu0 0.0
    %5988 = vmatpush1.msra.mxu0 0.0
    %5989 = vmatprep.subr.mxu0 0.0
    %5990 = vmatpush1.msra.mxu0 0.0
    %5991 = vmatprep.subr.mxu0 0.0
    %5992 = vmatpush1.msra.mxu0 0.0
    %5993 = vmatprep.subr.mxu0 0.0
    %v5994 = vand.u32 %v3819, 4294901760
    %5995 = vmatpush1.msra.mxu0 %v5994
    %5996 = vmatprep.subr.mxu0 0.0
    %v5997 = vand.u32 %v3818, 4294901760
    %5998 = vmatpush1.msra.mxu0 %v5997
    %5999 = vmatprep.subr.mxu0 0.0
    %v6000 = vand.u32 %v3817, 4294901760
    %6001 = vmatpush1.msra.mxu0 %v6000
    %6002 = vmatprep.subr.mxu0 0.0
    %v6003 = vand.u32 %v3816, 4294901760
    %6004 = vmatpush1.msra.mxu0 %v6003
    %6005 = vmatprep.subr.mxu0 0.0
    %6006 = vmatpush2.msra.mxu0 0.0
    %6007 = vmatprep.subr.mxu0 0.0
    %6008 = vmatpush2.msra.mxu0 0.0
    %6009 = vmatprep.subr.mxu0 0.0
    %6010 = vmatpush2.msra.mxu0 0.0
    %6011 = vmatprep.subr.mxu0 0.0
    %6012 = vmatpush2.msra.mxu0 0.0
    %6013 = vmatprep.subr.mxu0 0.0
    %6014 = vmatpush2.msra.mxu0 0.0
    %6015 = vmatprep.subr.mxu0 0.0
    %6016 = vmatpush2.msra.mxu0 0.0
    %6017 = vmatprep.subr.mxu0 0.0
    %6018 = vmatpush2.msra.mxu0 0.0
    %6019 = vmatprep.subr.mxu0 0.0
    %6020 = vmatpush2.msra.mxu0 0.0
    %6021 = vmatprep.subr.mxu0 0.0
    %6022 = vmatpush2.msra.mxu0 0.0
    %6023 = vmatprep.subr.mxu0 0.0
    %6024 = vmatpush2.msra.mxu0 0.0
    %6025 = vmatprep.subr.mxu0 0.0
    %6026 = vmatpush2.msra.mxu0 0.0
    %6027 = vmatprep.subr.mxu0 0.0
    %6028 = vmatpush2.msra.mxu0 0.0
    %6029 = vmatprep.subr.mxu0 0.0
    %6030 = vmatpush2.msra.mxu0 0.0
    %6031 = vmatprep.subr.mxu0 0.0
    %6032 = vmatpush2.msra.mxu0 0.0
    %6033 = vmatprep.subr.mxu0 0.0
    %6034 = vmatpush2.msra.mxu0 0.0
    %6035 = vmatprep.subr.mxu0 0.0
    %6036 = vmatpush2.msra.mxu0 0.0
    %6037 = vmatprep.mubr.f32.mxu0 0.0
    %v6038 = vand.u32 %v5557, 4294901760
    %6039 = vmatmul.mubr.f32.gmra.mxu0 %v6038
    %v6040 = vpop.f32.mrf.mxu0
    %v6041 = vadd.f32 %v5966, %v6040
    %v6042 = vpop.f32.mrf.mxu0
    %6043 = vdwg.mxu0
    %v6044 = vadd.f32 %v4524, %v6041
    %v6045 = vxor.u32 %v6044, 2147483648
    %v6046 = vmul.f32 %v6045, 1.442695
    %v6047 = vpow.pop %v6046
    %v6048 = vadd.f32 %v6047, 1.0
    %v6049 = vrcp.pop %v6048
    %v6050 = vmul.f32 1.0, %v6049
    %v6051 = vtanh.pop %v6044
    %6052 = vrot.lane.b32.xlu0 %v6050, 96
    %v6053 = vpop.permute.xlu0 %6052
    %6054 = vrot.lane.b32.xlu0 %v6051, 64
    %v6055 = vpop.permute.xlu0 %6054
    %6056 = vrot.lane.b32.xlu0 %v6050, 32
    %v6057 = vpop.permute.xlu0 %6056
    %v6058 = vmul.f32 %v6053, %v5553
    %v6059 = vmul.f32 %v6050, %v6055
    %v6060 = vadd.f32 %v6058, %v6059
    %v6061 = vtanh.pop %v6060
    %v6062 = vmul.f32 %v6057, %v6061
    %v6064 = vsel %vm757, %v6062, 0
    %6066 = vmatprep.subr.mxu0 0.0
    %6067 = vmatpush1.msra.mxu0 0.0
    %6068 = vmatprep.subr.mxu0 0.0
    %6069 = vmatpush1.msra.mxu0 0.0
    %6070 = vmatprep.subr.mxu0 0.0
    %6071 = vmatpush1.msra.mxu0 0.0
    %6072 = vmatprep.subr.mxu0 0.0
    %6073 = vmatpush1.msra.mxu0 0.0
    %6074 = vmatprep.subr.mxu0 0.0
    %6075 = vmatpush1.msra.mxu0 0.0
    %6076 = vmatprep.subr.mxu0 0.0
    %6077 = vmatpush1.msra.mxu0 0.0
    %6078 = vmatprep.subr.mxu0 0.0
    %6079 = vmatpush1.msra.mxu0 0.0
    %6080 = vmatprep.subr.mxu0 0.0
    %6081 = vmatpush1.msra.mxu0 0.0
    %6082 = vmatprep.subr.mxu0 0.0
    %6083 = vmatpush1.msra.mxu0 0.0
    %6084 = vmatprep.subr.mxu0 0.0
    %6085 = vmatpush1.msra.mxu0 0.0
    %6086 = vmatprep.subr.mxu0 0.0
    %6087 = vmatpush1.msra.mxu0 0.0
    %6088 = vmatprep.subr.mxu0 0.0
    %6089 = vmatpush1.msra.mxu0 0.0
    %6090 = vmatprep.subr.mxu0 0.0
    %v6091 = vand.u32 %v3819, 4294901760
    %6092 = vmatpush1.msra.mxu0 %v6091
    %6093 = vmatprep.subr.mxu0 0.0
    %v6094 = vand.u32 %v3818, 4294901760
    %6095 = vmatpush1.msra.mxu0 %v6094
    %6096 = vmatprep.subr.mxu0 0.0
    %v6097 = vand.u32 %v3817, 4294901760
    %6098 = vmatpush1.msra.mxu0 %v6097
    %6099 = vmatprep.subr.mxu0 0.0
    %v6100 = vand.u32 %v3816, 4294901760
    %6101 = vmatpush1.msra.mxu0 %v6100
    %6102 = vmatprep.subr.mxu0 0.0
    %6103 = vmatpush2.msra.mxu0 0.0
    %6104 = vmatprep.subr.mxu0 0.0
    %6105 = vmatpush2.msra.mxu0 0.0
    %6106 = vmatprep.subr.mxu0 0.0
    %6107 = vmatpush2.msra.mxu0 0.0
    %6108 = vmatprep.subr.mxu0 0.0
    %6109 = vmatpush2.msra.mxu0 0.0
    %6110 = vmatprep.subr.mxu0 0.0
    %6111 = vmatpush2.msra.mxu0 0.0
    %6112 = vmatprep.subr.mxu0 0.0
    %6113 = vmatpush2.msra.mxu0 0.0
    %6114 = vmatprep.subr.mxu0 0.0
    %6115 = vmatpush2.msra.mxu0 0.0
    %6116 = vmatprep.subr.mxu0 0.0
    %6117 = vmatpush2.msra.mxu0 0.0
    %6118 = vmatprep.subr.mxu0 0.0
    %6119 = vmatpush2.msra.mxu0 0.0
    %6120 = vmatprep.subr.mxu0 0.0
    %6121 = vmatpush2.msra.mxu0 0.0
    %6122 = vmatprep.subr.mxu0 0.0
    %6123 = vmatpush2.msra.mxu0 0.0
    %6124 = vmatprep.subr.mxu0 0.0
    %6125 = vmatpush2.msra.mxu0 0.0
    %6126 = vmatprep.subr.mxu0 0.0
    %6127 = vmatpush2.msra.mxu0 0.0
    %6128 = vmatprep.subr.mxu0 0.0
    %6129 = vmatpush2.msra.mxu0 0.0
    %6130 = vmatprep.subr.mxu0 0.0
    %6131 = vmatpush2.msra.mxu0 0.0
    %6132 = vmatprep.subr.mxu0 0.0
    %6133 = vmatpush2.msra.mxu0 0.0
    %6134 = vmatprep.mubr.f32.mxu0 0.0
    %v6135 = vand.u32 %v6064, 4294901760
    %v6136 = vsub.f32 %v6064, %v6135
    %v6137 = vand.u32 %v6136, 4294901760
    %v6138 = vsub.f32 %v6136, %v6137
    %v6139 = vand.u32 %v6138, 4294901760
    %6140 = vmatmul.mubr.f32.gmra.mxu0 %v6139
    %v6141 = vpop.f32.mrf.mxu0
    %v6142 = vadd.f32 0.0, %v6141
    %v6143 = vpop.f32.mrf.mxu0
    %6144 = vdwg.mxu0
    %6145 = vmatprep.subr.mxu0 0.0
    %6146 = vmatpush1.msra.mxu0 0.0
    %6147 = vmatprep.subr.mxu0 0.0
    %6148 = vmatpush1.msra.mxu0 0.0
    %6149 = vmatprep.subr.mxu0 0.0
    %6150 = vmatpush1.msra.mxu0 0.0
    %6151 = vmatprep.subr.mxu0 0.0
    %6152 = vmatpush1.msra.mxu0 0.0
    %6153 = vmatprep.subr.mxu0 0.0
    %6154 = vmatpush1.msra.mxu0 0.0
    %6155 = vmatprep.subr.mxu0 0.0
    %6156 = vmatpush1.msra.mxu0 0.0
    %6157 = vmatprep.subr.mxu0 0.0
    %6158 = vmatpush1.msra.mxu0 0.0
    %6159 = vmatprep.subr.mxu0 0.0
    %6160 = vmatpush1.msra.mxu0 0.0
    %6161 = vmatprep.subr.mxu0 0.0
    %6162 = vmatpush1.msra.mxu0 0.0
    %6163 = vmatprep.subr.mxu0 0.0
    %6164 = vmatpush1.msra.mxu0 0.0
    %6165 = vmatprep.subr.mxu0 0.0
    %6166 = vmatpush1.msra.mxu0 0.0
    %6167 = vmatprep.subr.mxu0 0.0
    %6168 = vmatpush1.msra.mxu0 0.0
    %6169 = vmatprep.subr.mxu0 0.0
    %v6170 = vand.u32 %v3819, 4294901760
    %v6171 = vsub.f32 %v3819, %v6170
    %v6172 = vand.u32 %v6171, 4294901760
    %v6173 = vsub.f32 %v6171, %v6172
    %v6174 = vand.u32 %v6173, 4294901760
    %6175 = vmatpush1.msra.mxu0 %v6174
    %6176 = vmatprep.subr.mxu0 0.0
    %v6177 = vand.u32 %v3818, 4294901760
    %v6178 = vsub.f32 %v3818, %v6177
    %v6179 = vand.u32 %v6178, 4294901760
    %v6180 = vsub.f32 %v6178, %v6179
    %v6181 = vand.u32 %v6180, 4294901760
    %6182 = vmatpush1.msra.mxu0 %v6181
    %6183 = vmatprep.subr.mxu0 0.0
    %v6184 = vand.u32 %v3817, 4294901760
    %v6185 = vsub.f32 %v3817, %v6184
    %v6186 = vand.u32 %v6185, 4294901760
    %v6187 = vsub.f32 %v6185, %v6186
    %v6188 = vand.u32 %v6187, 4294901760
    %6189 = vmatpush1.msra.mxu0 %v6188
    %6190 = vmatprep.subr.mxu0 0.0
    %v6191 = vand.u32 %v3816, 4294901760
    %v6192 = vsub.f32 %v3816, %v6191
    %v6193 = vand.u32 %v6192, 4294901760
    %v6194 = vsub.f32 %v6192, %v6193
    %v6195 = vand.u32 %v6194, 4294901760
    %6196 = vmatpush1.msra.mxu0 %v6195
    %6197 = vmatprep.subr.mxu0 0.0
    %6198 = vmatpush2.msra.mxu0 0.0
    %6199 = vmatprep.subr.mxu0 0.0
    %6200 = vmatpush2.msra.mxu0 0.0
    %6201 = vmatprep.subr.mxu0 0.0
    %6202 = vmatpush2.msra.mxu0 0.0
    %6203 = vmatprep.subr.mxu0 0.0
    %6204 = vmatpush2.msra.mxu0 0.0
    %6205 = vmatprep.subr.mxu0 0.0
    %6206 = vmatpush2.msra.mxu0 0.0
    %6207 = vmatprep.subr.mxu0 0.0
    %6208 = vmatpush2.msra.mxu0 0.0
    %6209 = vmatprep.subr.mxu0 0.0
    %6210 = vmatpush2.msra.mxu0 0.0
    %6211 = vmatprep.subr.mxu0 0.0
    %6212 = vmatpush2.msra.mxu0 0.0
    %6213 = vmatprep.subr.mxu0 0.0
    %6214 = vmatpush2.msra.mxu0 0.0
    %6215 = vmatprep.subr.mxu0 0.0
    %6216 = vmatpush2.msra.mxu0 0.0
    %6217 = vmatprep.subr.mxu0 0.0
    %6218 = vmatpush2.msra.mxu0 0.0
    %6219 = vmatprep.subr.mxu0 0.0
    %6220 = vmatpush2.msra.mxu0 0.0
    %6221 = vmatprep.subr.mxu0 0.0
    %6222 = vmatpush2.msra.mxu0 0.0
    %6223 = vmatprep.subr.mxu0 0.0
    %6224 = vmatpush2.msra.mxu0 0.0
    %6225 = vmatprep.subr.mxu0 0.0
    %6226 = vmatpush2.msra.mxu0 0.0
    %6227 = vmatprep.subr.mxu0 0.0
    %6228 = vmatpush2.msra.mxu0 0.0
    %6229 = vmatprep.mubr.f32.mxu0 0.0
    %v6230 = vand.u32 %v6064, 4294901760
    %6231 = vmatmul.mubr.f32.gmra.mxu0 %v6230
    %v6232 = vpop.f32.mrf.mxu0
    %v6233 = vadd.f32 %v6142, %v6232
    %v6234 = vpop.f32.mrf.mxu0
    %6235 = vdwg.mxu0
    %6236 = vmatprep.subr.mxu0 0.0
    %6237 = vmatpush1.msra.mxu0 0.0
    %6238 = vmatprep.subr.mxu0 0.0
    %6239 = vmatpush1.msra.mxu0 0.0
    %6240 = vmatprep.subr.mxu0 0.0
    %6241 = vmatpush1.msra.mxu0 0.0
    %6242 = vmatprep.subr.mxu0 0.0
    %6243 = vmatpush1.msra.mxu0 0.0
    %6244 = vmatprep.subr.mxu0 0.0
    %6245 = vmatpush1.msra.mxu0 0.0
    %6246 = vmatprep.subr.mxu0 0.0
    %6247 = vmatpush1.msra.mxu0 0.0
    %6248 = vmatprep.subr.mxu0 0.0
    %6249 = vmatpush1.msra.mxu0 0.0
    %6250 = vmatprep.subr.mxu0 0.0
    %6251 = vmatpush1.msra.mxu0 0.0
    %6252 = vmatprep.subr.mxu0 0.0
    %6253 = vmatpush1.msra.mxu0 0.0
    %6254 = vmatprep.subr.mxu0 0.0
    %6255 = vmatpush1.msra.mxu0 0.0
    %6256 = vmatprep.subr.mxu0 0.0
    %6257 = vmatpush1.msra.mxu0 0.0
    %6258 = vmatprep.subr.mxu0 0.0
    %6259 = vmatpush1.msra.mxu0 0.0
    %6260 = vmatprep.subr.mxu0 0.0
    %v6261 = vand.u32 %v3819, 4294901760
    %v6262 = vsub.f32 %v3819, %v6261
    %6263 = vmatpush1.msra.mxu0 %v6262
    %6264 = vmatprep.subr.mxu0 0.0
    %v6265 = vand.u32 %v3818, 4294901760
    %v6266 = vsub.f32 %v3818, %v6265
    %6267 = vmatpush1.msra.mxu0 %v6266
    %6268 = vmatprep.subr.mxu0 0.0
    %v6269 = vand.u32 %v3817, 4294901760
    %v6270 = vsub.f32 %v3817, %v6269
    %6271 = vmatpush1.msra.mxu0 %v6270
    %6272 = vmatprep.subr.mxu0 0.0
    %v6273 = vand.u32 %v3816, 4294901760
    %v6274 = vsub.f32 %v3816, %v6273
    %6275 = vmatpush1.msra.mxu0 %v6274
    %6276 = vmatprep.subr.mxu0 0.0
    %6277 = vmatpush2.msra.mxu0 0.0
    %6278 = vmatprep.subr.mxu0 0.0
    %6279 = vmatpush2.msra.mxu0 0.0
    %6280 = vmatprep.subr.mxu0 0.0
    %6281 = vmatpush2.msra.mxu0 0.0
    %6282 = vmatprep.subr.mxu0 0.0
    %6283 = vmatpush2.msra.mxu0 0.0
    %6284 = vmatprep.subr.mxu0 0.0
    %6285 = vmatpush2.msra.mxu0 0.0
    %6286 = vmatprep.subr.mxu0 0.0
    %6287 = vmatpush2.msra.mxu0 0.0
    %6288 = vmatprep.subr.mxu0 0.0
    %6289 = vmatpush2.msra.mxu0 0.0
    %6290 = vmatprep.subr.mxu0 0.0
    %6291 = vmatpush2.msra.mxu0 0.0
    %6292 = vmatprep.subr.mxu0 0.0
    %6293 = vmatpush2.msra.mxu0 0.0
    %6294 = vmatprep.subr.mxu0 0.0
    %6295 = vmatpush2.msra.mxu0 0.0
    %6296 = vmatprep.subr.mxu0 0.0
    %6297 = vmatpush2.msra.mxu0 0.0
    %6298 = vmatprep.subr.mxu0 0.0
    %6299 = vmatpush2.msra.mxu0 0.0
    %6300 = vmatprep.subr.mxu0 0.0
    %6301 = vmatpush2.msra.mxu0 0.0
    %6302 = vmatprep.subr.mxu0 0.0
    %6303 = vmatpush2.msra.mxu0 0.0
    %6304 = vmatprep.subr.mxu0 0.0
    %6305 = vmatpush2.msra.mxu0 0.0
    %6306 = vmatprep.subr.mxu0 0.0
    %6307 = vmatpush2.msra.mxu0 0.0
    %6308 = vmatprep.mubr.f32.mxu0 0.0
    %v6309 = vand.u32 %v6064, 4294901760
    %v6310 = vsub.f32 %v6064, %v6309
    %6311 = vmatmul.mubr.f32.gmra.mxu0 %v6310
    %v6312 = vpop.f32.mrf.mxu0
    %v6313 = vadd.f32 %v6233, %v6312
    %v6314 = vpop.f32.mrf.mxu0
    %6315 = vdwg.mxu0
    %6316 = vmatprep.subr.mxu0 0.0
    %6317 = vmatpush1.msra.mxu0 0.0
    %6318 = vmatprep.subr.mxu0 0.0
    %6319 = vmatpush1.msra.mxu0 0.0
    %6320 = vmatprep.subr.mxu0 0.0
    %6321 = vmatpush1.msra.mxu0 0.0
    %6322 = vmatprep.subr.mxu0 0.0
    %6323 = vmatpush1.msra.mxu0 0.0
    %6324 = vmatprep.subr.mxu0 0.0
    %6325 = vmatpush1.msra.mxu0 0.0
    %6326 = vmatprep.subr.mxu0 0.0
    %6327 = vmatpush1.msra.mxu0 0.0
    %6328 = vmatprep.subr.mxu0 0.0
    %6329 = vmatpush1.msra.mxu0 0.0
    %6330 = vmatprep.subr.mxu0 0.0
    %6331 = vmatpush1.msra.mxu0 0.0
    %6332 = vmatprep.subr.mxu0 0.0
    %6333 = vmatpush1.msra.mxu0 0.0
    %6334 = vmatprep.subr.mxu0 0.0
    %6335 = vmatpush1.msra.mxu0 0.0
    %6336 = vmatprep.subr.mxu0 0.0
    %6337 = vmatpush1.msra.mxu0 0.0
    %6338 = vmatprep.subr.mxu0 0.0
    %6339 = vmatpush1.msra.mxu0 0.0
    %6340 = vmatprep.subr.mxu0 0.0
    %v6341 = vand.u32 %v3819, 4294901760
    %6342 = vmatpush1.msra.mxu0 %v6341
    %6343 = vmatprep.subr.mxu0 0.0
    %v6344 = vand.u32 %v3818, 4294901760
    %6345 = vmatpush1.msra.mxu0 %v6344
    %6346 = vmatprep.subr.mxu0 0.0
    %v6347 = vand.u32 %v3817, 4294901760
    %6348 = vmatpush1.msra.mxu0 %v6347
    %6349 = vmatprep.subr.mxu0 0.0
    %v6350 = vand.u32 %v3816, 4294901760
    %6351 = vmatpush1.msra.mxu0 %v6350
    %6352 = vmatprep.subr.mxu0 0.0
    %6353 = vmatpush2.msra.mxu0 0.0
    %6354 = vmatprep.subr.mxu0 0.0
    %6355 = vmatpush2.msra.mxu0 0.0
    %6356 = vmatprep.subr.mxu0 0.0
    %6357 = vmatpush2.msra.mxu0 0.0
    %6358 = vmatprep.subr.mxu0 0.0
    %6359 = vmatpush2.msra.mxu0 0.0
    %6360 = vmatprep.subr.mxu0 0.0
    %6361 = vmatpush2.msra.mxu0 0.0
    %6362 = vmatprep.subr.mxu0 0.0
    %6363 = vmatpush2.msra.mxu0 0.0
    %6364 = vmatprep.subr.mxu0 0.0
    %6365 = vmatpush2.msra.mxu0 0.0
    %6366 = vmatprep.subr.mxu0 0.0
    %6367 = vmatpush2.msra.mxu0 0.0
    %6368 = vmatprep.subr.mxu0 0.0
    %6369 = vmatpush2.msra.mxu0 0.0
    %6370 = vmatprep.subr.mxu0 0.0
    %6371 = vmatpush2.msra.mxu0 0.0
    %6372 = vmatprep.subr.mxu0 0.0
    %6373 = vmatpush2.msra.mxu0 0.0
    %6374 = vmatprep.subr.mxu0 0.0
    %6375 = vmatpush2.msra.mxu0 0.0
    %6376 = vmatprep.subr.mxu0 0.0
    %6377 = vmatpush2.msra.mxu0 0.0
    %6378 = vmatprep.subr.mxu0 0.0
    %6379 = vmatpush2.msra.mxu0 0.0
    %6380 = vmatprep.subr.mxu0 0.0
    %6381 = vmatpush2.msra.mxu0 0.0
    %6382 = vmatprep.subr.mxu0 0.0
    %6383 = vmatpush2.msra.mxu0 0.0
    %6384 = vmatprep.mubr.f32.mxu0 0.0
    %v6385 = vand.u32 %v6064, 4294901760
    %v6386 = vsub.f32 %v6064, %v6385
    %v6387 = vand.u32 %v6386, 4294901760
    %6388 = vmatmul.mubr.f32.gmra.mxu0 %v6387
    %v6389 = vpop.f32.mrf.mxu0
    %v6390 = vadd.f32 %v6313, %v6389
    %v6391 = vpop.f32.mrf.mxu0
    %6392 = vdwg.mxu0
    %6393 = vmatprep.subr.mxu0 0.0
    %6394 = vmatpush1.msra.mxu0 0.0
    %6395 = vmatprep.subr.mxu0 0.0
    %6396 = vmatpush1.msra.mxu0 0.0
    %6397 = vmatprep.subr.mxu0 0.0
    %6398 = vmatpush1.msra.mxu0 0.0
    %6399 = vmatprep.subr.mxu0 0.0
    %6400 = vmatpush1.msra.mxu0 0.0
    %6401 = vmatprep.subr.mxu0 0.0
    %6402 = vmatpush1.msra.mxu0 0.0
    %6403 = vmatprep.subr.mxu0 0.0
    %6404 = vmatpush1.msra.mxu0 0.0
    %6405 = vmatprep.subr.mxu0 0.0
    %6406 = vmatpush1.msra.mxu0 0.0
    %6407 = vmatprep.subr.mxu0 0.0
    %6408 = vmatpush1.msra.mxu0 0.0
    %6409 = vmatprep.subr.mxu0 0.0
    %6410 = vmatpush1.msra.mxu0 0.0
    %6411 = vmatprep.subr.mxu0 0.0
    %6412 = vmatpush1.msra.mxu0 0.0
    %6413 = vmatprep.subr.mxu0 0.0
    %6414 = vmatpush1.msra.mxu0 0.0
    %6415 = vmatprep.subr.mxu0 0.0
    %6416 = vmatpush1.msra.mxu0 0.0
    %6417 = vmatprep.subr.mxu0 0.0
    %v6418 = vand.u32 %v3819, 4294901760
    %v6419 = vsub.f32 %v3819, %v6418
    %v6420 = vand.u32 %v6419, 4294901760
    %6421 = vmatpush1.msra.mxu0 %v6420
    %6422 = vmatprep.subr.mxu0 0.0
    %v6423 = vand.u32 %v3818, 4294901760
    %v6424 = vsub.f32 %v3818, %v6423
    %v6425 = vand.u32 %v6424, 4294901760
    %6426 = vmatpush1.msra.mxu0 %v6425
    %6427 = vmatprep.subr.mxu0 0.0
    %v6428 = vand.u32 %v3817, 4294901760
    %v6429 = vsub.f32 %v3817, %v6428
    %v6430 = vand.u32 %v6429, 4294901760
    %6431 = vmatpush1.msra.mxu0 %v6430
    %6432 = vmatprep.subr.mxu0 0.0
    %v6433 = vand.u32 %v3816, 4294901760
    %v6434 = vsub.f32 %v3816, %v6433
    %v6435 = vand.u32 %v6434, 4294901760
    %6436 = vmatpush1.msra.mxu0 %v6435
    %6437 = vmatprep.subr.mxu0 0.0
    %6438 = vmatpush2.msra.mxu0 0.0
    %6439 = vmatprep.subr.mxu0 0.0
    %6440 = vmatpush2.msra.mxu0 0.0
    %6441 = vmatprep.subr.mxu0 0.0
    %6442 = vmatpush2.msra.mxu0 0.0
    %6443 = vmatprep.subr.mxu0 0.0
    %6444 = vmatpush2.msra.mxu0 0.0
    %6445 = vmatprep.subr.mxu0 0.0
    %6446 = vmatpush2.msra.mxu0 0.0
    %6447 = vmatprep.subr.mxu0 0.0
    %6448 = vmatpush2.msra.mxu0 0.0
    %6449 = vmatprep.subr.mxu0 0.0
    %6450 = vmatpush2.msra.mxu0 0.0
    %6451 = vmatprep.subr.mxu0 0.0
    %6452 = vmatpush2.msra.mxu0 0.0
    %6453 = vmatprep.subr.mxu0 0.0
    %6454 = vmatpush2.msra.mxu0 0.0
    %6455 = vmatprep.subr.mxu0 0.0
    %6456 = vmatpush2.msra.mxu0 0.0
    %6457 = vmatprep.subr.mxu0 0.0
    %6458 = vmatpush2.msra.mxu0 0.0
    %6459 = vmatprep.subr.mxu0 0.0
    %6460 = vmatpush2.msra.mxu0 0.0
    %6461 = vmatprep.subr.mxu0 0.0
    %6462 = vmatpush2.msra.mxu0 0.0
    %6463 = vmatprep.subr.mxu0 0.0
    %6464 = vmatpush2.msra.mxu0 0.0
    %6465 = vmatprep.subr.mxu0 0.0
    %6466 = vmatpush2.msra.mxu0 0.0
    %6467 = vmatprep.subr.mxu0 0.0
    %6468 = vmatpush2.msra.mxu0 0.0
    %6469 = vmatprep.mubr.f32.mxu0 0.0
    %v6470 = vand.u32 %v6064, 4294901760
    %6471 = vmatmul.mubr.f32.gmra.mxu0 %v6470
    %v6472 = vpop.f32.mrf.mxu0
    %v6473 = vadd.f32 %v6390, %v6472
    %v6474 = vpop.f32.mrf.mxu0
    %6475 = vdwg.mxu0
    %6476 = vmatprep.subr.mxu0 0.0
    %6477 = vmatpush1.msra.mxu0 0.0
    %6478 = vmatprep.subr.mxu0 0.0
    %6479 = vmatpush1.msra.mxu0 0.0
    %6480 = vmatprep.subr.mxu0 0.0
    %6481 = vmatpush1.msra.mxu0 0.0
    %6482 = vmatprep.subr.mxu0 0.0
    %6483 = vmatpush1.msra.mxu0 0.0
    %6484 = vmatprep.subr.mxu0 0.0
    %6485 = vmatpush1.msra.mxu0 0.0
    %6486 = vmatprep.subr.mxu0 0.0
    %6487 = vmatpush1.msra.mxu0 0.0
    %6488 = vmatprep.subr.mxu0 0.0
    %6489 = vmatpush1.msra.mxu0 0.0
    %6490 = vmatprep.subr.mxu0 0.0
    %6491 = vmatpush1.msra.mxu0 0.0
    %6492 = vmatprep.subr.mxu0 0.0
    %6493 = vmatpush1.msra.mxu0 0.0
    %6494 = vmatprep.subr.mxu0 0.0
    %6495 = vmatpush1.msra.mxu0 0.0
    %6496 = vmatprep.subr.mxu0 0.0
    %6497 = vmatpush1.msra.mxu0 0.0
    %6498 = vmatprep.subr.mxu0 0.0
    %6499 = vmatpush1.msra.mxu0 0.0
    %6500 = vmatprep.subr.mxu0 0.0
    %v6501 = vand.u32 %v3819, 4294901760
    %6502 = vmatpush1.msra.mxu0 %v6501
    %6503 = vmatprep.subr.mxu0 0.0
    %v6504 = vand.u32 %v3818, 4294901760
    %6505 = vmatpush1.msra.mxu0 %v6504
    %6506 = vmatprep.subr.mxu0 0.0
    %v6507 = vand.u32 %v3817, 4294901760
    %6508 = vmatpush1.msra.mxu0 %v6507
    %6509 = vmatprep.subr.mxu0 0.0
    %v6510 = vand.u32 %v3816, 4294901760
    %6511 = vmatpush1.msra.mxu0 %v6510
    %6512 = vmatprep.subr.mxu0 0.0
    %6513 = vmatpush2.msra.mxu0 0.0
    %6514 = vmatprep.subr.mxu0 0.0
    %6515 = vmatpush2.msra.mxu0 0.0
    %6516 = vmatprep.subr.mxu0 0.0
    %6517 = vmatpush2.msra.mxu0 0.0
    %6518 = vmatprep.subr.mxu0 0.0
    %6519 = vmatpush2.msra.mxu0 0.0
    %6520 = vmatprep.subr.mxu0 0.0
    %6521 = vmatpush2.msra.mxu0 0.0
    %6522 = vmatprep.subr.mxu0 0.0
    %6523 = vmatpush2.msra.mxu0 0.0
    %6524 = vmatprep.subr.mxu0 0.0
    %6525 = vmatpush2.msra.mxu0 0.0
    %6526 = vmatprep.subr.mxu0 0.0
    %6527 = vmatpush2.msra.mxu0 0.0
    %6528 = vmatprep.subr.mxu0 0.0
    %6529 = vmatpush2.msra.mxu0 0.0
    %6530 = vmatprep.subr.mxu0 0.0
    %6531 = vmatpush2.msra.mxu0 0.0
    %6532 = vmatprep.subr.mxu0 0.0
    %6533 = vmatpush2.msra.mxu0 0.0
    %6534 = vmatprep.subr.mxu0 0.0
    %6535 = vmatpush2.msra.mxu0 0.0
    %6536 = vmatprep.subr.mxu0 0.0
    %6537 = vmatpush2.msra.mxu0 0.0
    %6538 = vmatprep.subr.mxu0 0.0
    %6539 = vmatpush2.msra.mxu0 0.0
    %6540 = vmatprep.subr.mxu0 0.0
    %6541 = vmatpush2.msra.mxu0 0.0
    %6542 = vmatprep.subr.mxu0 0.0
    %6543 = vmatpush2.msra.mxu0 0.0
    %6544 = vmatprep.mubr.f32.mxu0 0.0
    %v6545 = vand.u32 %v6064, 4294901760
    %6546 = vmatmul.mubr.f32.gmra.mxu0 %v6545
    %v6547 = vpop.f32.mrf.mxu0
    %v6548 = vadd.f32 %v6473, %v6547
    %v6549 = vpop.f32.mrf.mxu0
    %6550 = vdwg.mxu0
    %v6551 = vadd.f32 %v4530, %v6548
    %v6552 = vxor.u32 %v6551, 2147483648
    %v6553 = vmul.f32 %v6552, 1.442695
    %v6554 = vpow.pop %v6553
    %v6555 = vadd.f32 %v6554, 1.0
    %v6556 = vrcp.pop %v6555
    %v6557 = vmul.f32 1.0, %v6556
    %v6558 = vtanh.pop %v6551
    %6559 = vrot.lane.b32.xlu0 %v6557, 96
    %v6560 = vpop.permute.xlu0 %6559
    %6561 = vrot.lane.b32.xlu0 %v6558, 64
    %v6562 = vpop.permute.xlu0 %6561
    %6563 = vrot.lane.b32.xlu0 %v6557, 32
    %v6564 = vpop.permute.xlu0 %6563
    %v6565 = vmul.f32 %v6560, %v6060
    %v6566 = vmul.f32 %v6557, %v6562
    %v6567 = vadd.f32 %v6565, %v6566
    %v6568 = vtanh.pop %v6567
    %v6569 = vmul.f32 %v6564, %v6568
    %v6571 = vsel %vm757, %v6569, 0
    %6573 = vmatprep.subr.mxu0 0.0
    %6574 = vmatpush1.msra.mxu0 0.0
    %6575 = vmatprep.subr.mxu0 0.0
    %6576 = vmatpush1.msra.mxu0 0.0
    %6577 = vmatprep.subr.mxu0 0.0
    %6578 = vmatpush1.msra.mxu0 0.0
    %6579 = vmatprep.subr.mxu0 0.0
    %6580 = vmatpush1.msra.mxu0 0.0
    %6581 = vmatprep.subr.mxu0 0.0
    %6582 = vmatpush1.msra.mxu0 0.0
    %6583 = vmatprep.subr.mxu0 0.0
    %6584 = vmatpush1.msra.mxu0 0.0
    %6585 = vmatprep.subr.mxu0 0.0
    %6586 = vmatpush1.msra.mxu0 0.0
    %6587 = vmatprep.subr.mxu0 0.0
    %6588 = vmatpush1.msra.mxu0 0.0
    %6589 = vmatprep.subr.mxu0 0.0
    %6590 = vmatpush1.msra.mxu0 0.0
    %6591 = vmatprep.subr.mxu0 0.0
    %6592 = vmatpush1.msra.mxu0 0.0
    %6593 = vmatprep.subr.mxu0 0.0
    %6594 = vmatpush1.msra.mxu0 0.0
    %6595 = vmatprep.subr.mxu0 0.0
    %6596 = vmatpush1.msra.mxu0 0.0
    %6597 = vmatprep.subr.mxu0 0.0
    %v6598 = vand.u32 %v3819, 4294901760
    %6599 = vmatpush1.msra.mxu0 %v6598
    %6600 = vmatprep.subr.mxu0 0.0
    %v6601 = vand.u32 %v3818, 4294901760
    %6602 = vmatpush1.msra.mxu0 %v6601
    %6603 = vmatprep.subr.mxu0 0.0
    %v6604 = vand.u32 %v3817, 4294901760
    %6605 = vmatpush1.msra.mxu0 %v6604
    %6606 = vmatprep.subr.mxu0 0.0
    %v6607 = vand.u32 %v3816, 4294901760
    %6608 = vmatpush1.msra.mxu0 %v6607
    %6609 = vmatprep.subr.mxu0 0.0
    %6610 = vmatpush2.msra.mxu0 0.0
    %6611 = vmatprep.subr.mxu0 0.0
    %6612 = vmatpush2.msra.mxu0 0.0
    %6613 = vmatprep.subr.mxu0 0.0
    %6614 = vmatpush2.msra.mxu0 0.0
    %6615 = vmatprep.subr.mxu0 0.0
    %6616 = vmatpush2.msra.mxu0 0.0
    %6617 = vmatprep.subr.mxu0 0.0
    %6618 = vmatpush2.msra.mxu0 0.0
    %6619 = vmatprep.subr.mxu0 0.0
    %6620 = vmatpush2.msra.mxu0 0.0
    %6621 = vmatprep.subr.mxu0 0.0
    %6622 = vmatpush2.msra.mxu0 0.0
    %6623 = vmatprep.subr.mxu0 0.0
    %6624 = vmatpush2.msra.mxu0 0.0
    %6625 = vmatprep.subr.mxu0 0.0
    %6626 = vmatpush2.msra.mxu0 0.0
    %6627 = vmatprep.subr.mxu0 0.0
    %6628 = vmatpush2.msra.mxu0 0.0
    %6629 = vmatprep.subr.mxu0 0.0
    %6630 = vmatpush2.msra.mxu0 0.0
    %6631 = vmatprep.subr.mxu0 0.0
    %6632 = vmatpush2.msra.mxu0 0.0
    %6633 = vmatprep.subr.mxu0 0.0
    %6634 = vmatpush2.msra.mxu0 0.0
    %6635 = vmatprep.subr.mxu0 0.0
    %6636 = vmatpush2.msra.mxu0 0.0
    %6637 = vmatprep.subr.mxu0 0.0
    %6638 = vmatpush2.msra.mxu0 0.0
    %6639 = vmatprep.subr.mxu0 0.0
    %6640 = vmatpush2.msra.mxu0 0.0
    %6641 = vmatprep.mubr.f32.mxu0 0.0
    %v6642 = vand.u32 %v6571, 4294901760
    %v6643 = vsub.f32 %v6571, %v6642
    %v6644 = vand.u32 %v6643, 4294901760
    %v6645 = vsub.f32 %v6643, %v6644
    %v6646 = vand.u32 %v6645, 4294901760
    %6647 = vmatmul.mubr.f32.gmra.mxu0 %v6646
    %v6648 = vpop.f32.mrf.mxu0
    %v6649 = vadd.f32 0.0, %v6648
    %v6650 = vpop.f32.mrf.mxu0
    %6651 = vdwg.mxu0
    %6652 = vmatprep.subr.mxu0 0.0
    %6653 = vmatpush1.msra.mxu0 0.0
    %6654 = vmatprep.subr.mxu0 0.0
    %6655 = vmatpush1.msra.mxu0 0.0
    %6656 = vmatprep.subr.mxu0 0.0
    %6657 = vmatpush1.msra.mxu0 0.0
    %6658 = vmatprep.subr.mxu0 0.0
    %6659 = vmatpush1.msra.mxu0 0.0
    %6660 = vmatprep.subr.mxu0 0.0
    %6661 = vmatpush1.msra.mxu0 0.0
    %6662 = vmatprep.subr.mxu0 0.0
    %6663 = vmatpush1.msra.mxu0 0.0
    %6664 = vmatprep.subr.mxu0 0.0
    %6665 = vmatpush1.msra.mxu0 0.0
    %6666 = vmatprep.subr.mxu0 0.0
    %6667 = vmatpush1.msra.mxu0 0.0
    %6668 = vmatprep.subr.mxu0 0.0
    %6669 = vmatpush1.msra.mxu0 0.0
    %6670 = vmatprep.subr.mxu0 0.0
    %6671 = vmatpush1.msra.mxu0 0.0
    %6672 = vmatprep.subr.mxu0 0.0
    %6673 = vmatpush1.msra.mxu0 0.0
    %6674 = vmatprep.subr.mxu0 0.0
    %6675 = vmatpush1.msra.mxu0 0.0
    %6676 = vmatprep.subr.mxu0 0.0
    %v6677 = vand.u32 %v3819, 4294901760
    %v6678 = vsub.f32 %v3819, %v6677
    %v6679 = vand.u32 %v6678, 4294901760
    %v6680 = vsub.f32 %v6678, %v6679
    %v6681 = vand.u32 %v6680, 4294901760
    %6682 = vmatpush1.msra.mxu0 %v6681
    %6683 = vmatprep.subr.mxu0 0.0
    %v6684 = vand.u32 %v3818, 4294901760
    %v6685 = vsub.f32 %v3818, %v6684
    %v6686 = vand.u32 %v6685, 4294901760
    %v6687 = vsub.f32 %v6685, %v6686
    %v6688 = vand.u32 %v6687, 4294901760
    %6689 = vmatpush1.msra.mxu0 %v6688
    %6690 = vmatprep.subr.mxu0 0.0
    %v6691 = vand.u32 %v3817, 4294901760
    %v6692 = vsub.f32 %v3817, %v6691
    %v6693 = vand.u32 %v6692, 4294901760
    %v6694 = vsub.f32 %v6692, %v6693
    %v6695 = vand.u32 %v6694, 4294901760
    %6696 = vmatpush1.msra.mxu0 %v6695
    %6697 = vmatprep.subr.mxu0 0.0
    %v6698 = vand.u32 %v3816, 4294901760
    %v6699 = vsub.f32 %v3816, %v6698
    %v6700 = vand.u32 %v6699, 4294901760
    %v6701 = vsub.f32 %v6699, %v6700
    %v6702 = vand.u32 %v6701, 4294901760
    %6703 = vmatpush1.msra.mxu0 %v6702
    %6704 = vmatprep.subr.mxu0 0.0
    %6705 = vmatpush2.msra.mxu0 0.0
    %6706 = vmatprep.subr.mxu0 0.0
    %6707 = vmatpush2.msra.mxu0 0.0
    %6708 = vmatprep.subr.mxu0 0.0
    %6709 = vmatpush2.msra.mxu0 0.0
    %6710 = vmatprep.subr.mxu0 0.0
    %6711 = vmatpush2.msra.mxu0 0.0
    %6712 = vmatprep.subr.mxu0 0.0
    %6713 = vmatpush2.msra.mxu0 0.0
    %6714 = vmatprep.subr.mxu0 0.0
    %6715 = vmatpush2.msra.mxu0 0.0
    %6716 = vmatprep.subr.mxu0 0.0
    %6717 = vmatpush2.msra.mxu0 0.0
    %6718 = vmatprep.subr.mxu0 0.0
    %6719 = vmatpush2.msra.mxu0 0.0
    %6720 = vmatprep.subr.mxu0 0.0
    %6721 = vmatpush2.msra.mxu0 0.0
    %6722 = vmatprep.subr.mxu0 0.0
    %6723 = vmatpush2.msra.mxu0 0.0
    %6724 = vmatprep.subr.mxu0 0.0
    %6725 = vmatpush2.msra.mxu0 0.0
    %6726 = vmatprep.subr.mxu0 0.0
    %6727 = vmatpush2.msra.mxu0 0.0
    %6728 = vmatprep.subr.mxu0 0.0
    %6729 = vmatpush2.msra.mxu0 0.0
    %6730 = vmatprep.subr.mxu0 0.0
    %6731 = vmatpush2.msra.mxu0 0.0
    %6732 = vmatprep.subr.mxu0 0.0
    %6733 = vmatpush2.msra.mxu0 0.0
    %6734 = vmatprep.subr.mxu0 0.0
    %6735 = vmatpush2.msra.mxu0 0.0
    %6736 = vmatprep.mubr.f32.mxu0 0.0
    %v6737 = vand.u32 %v6571, 4294901760
    %6738 = vmatmul.mubr.f32.gmra.mxu0 %v6737
    %v6739 = vpop.f32.mrf.mxu0
    %v6740 = vadd.f32 %v6649, %v6739
    %v6741 = vpop.f32.mrf.mxu0
    %6742 = vdwg.mxu0
    %6743 = vmatprep.subr.mxu0 0.0
    %6744 = vmatpush1.msra.mxu0 0.0
    %6745 = vmatprep.subr.mxu0 0.0
    %6746 = vmatpush1.msra.mxu0 0.0
    %6747 = vmatprep.subr.mxu0 0.0
    %6748 = vmatpush1.msra.mxu0 0.0
    %6749 = vmatprep.subr.mxu0 0.0
    %6750 = vmatpush1.msra.mxu0 0.0
    %6751 = vmatprep.subr.mxu0 0.0
    %6752 = vmatpush1.msra.mxu0 0.0
    %6753 = vmatprep.subr.mxu0 0.0
    %6754 = vmatpush1.msra.mxu0 0.0
    %6755 = vmatprep.subr.mxu0 0.0
    %6756 = vmatpush1.msra.mxu0 0.0
    %6757 = vmatprep.subr.mxu0 0.0
    %6758 = vmatpush1.msra.mxu0 0.0
    %6759 = vmatprep.subr.mxu0 0.0
    %6760 = vmatpush1.msra.mxu0 0.0
    %6761 = vmatprep.subr.mxu0 0.0
    %6762 = vmatpush1.msra.mxu0 0.0
    %6763 = vmatprep.subr.mxu0 0.0
    %6764 = vmatpush1.msra.mxu0 0.0
    %6765 = vmatprep.subr.mxu0 0.0
    %6766 = vmatpush1.msra.mxu0 0.0
    %6767 = vmatprep.subr.mxu0 0.0
    %v6768 = vand.u32 %v3819, 4294901760
    %v6769 = vsub.f32 %v3819, %v6768
    %6770 = vmatpush1.msra.mxu0 %v6769
    %6771 = vmatprep.subr.mxu0 0.0
    %v6772 = vand.u32 %v3818, 4294901760
    %v6773 = vsub.f32 %v3818, %v6772
    %6774 = vmatpush1.msra.mxu0 %v6773
    %6775 = vmatprep.subr.mxu0 0.0
    %v6776 = vand.u32 %v3817, 4294901760
    %v6777 = vsub.f32 %v3817, %v6776
    %6778 = vmatpush1.msra.mxu0 %v6777
    %6779 = vmatprep.subr.mxu0 0.0
    %v6780 = vand.u32 %v3816, 4294901760
    %v6781 = vsub.f32 %v3816, %v6780
    %6782 = vmatpush1.msra.mxu0 %v6781
    %6783 = vmatprep.subr.mxu0 0.0
    %6784 = vmatpush2.msra.mxu0 0.0
    %6785 = vmatprep.subr.mxu0 0.0
    %6786 = vmatpush2.msra.mxu0 0.0
    %6787 = vmatprep.subr.mxu0 0.0
    %6788 = vmatpush2.msra.mxu0 0.0
    %6789 = vmatprep.subr.mxu0 0.0
    %6790 = vmatpush2.msra.mxu0 0.0
    %6791 = vmatprep.subr.mxu0 0.0
    %6792 = vmatpush2.msra.mxu0 0.0
    %6793 = vmatprep.subr.mxu0 0.0
    %6794 = vmatpush2.msra.mxu0 0.0
    %6795 = vmatprep.subr.mxu0 0.0
    %6796 = vmatpush2.msra.mxu0 0.0
    %6797 = vmatprep.subr.mxu0 0.0
    %6798 = vmatpush2.msra.mxu0 0.0
    %6799 = vmatprep.subr.mxu0 0.0
    %6800 = vmatpush2.msra.mxu0 0.0
    %6801 = vmatprep.subr.mxu0 0.0
    %6802 = vmatpush2.msra.mxu0 0.0
    %6803 = vmatprep.subr.mxu0 0.0
    %6804 = vmatpush2.msra.mxu0 0.0
    %6805 = vmatprep.subr.mxu0 0.0
    %6806 = vmatpush2.msra.mxu0 0.0
    %6807 = vmatprep.subr.mxu0 0.0
    %6808 = vmatpush2.msra.mxu0 0.0
    %6809 = vmatprep.subr.mxu0 0.0
    %6810 = vmatpush2.msra.mxu0 0.0
    %6811 = vmatprep.subr.mxu0 0.0
    %6812 = vmatpush2.msra.mxu0 0.0
    %6813 = vmatprep.subr.mxu0 0.0
    %6814 = vmatpush2.msra.mxu0 0.0
    %6815 = vmatprep.mubr.f32.mxu0 0.0
    %v6816 = vand.u32 %v6571, 4294901760
    %v6817 = vsub.f32 %v6571, %v6816
    %6818 = vmatmul.mubr.f32.gmra.mxu0 %v6817
    %v6819 = vpop.f32.mrf.mxu0
    %v6820 = vadd.f32 %v6740, %v6819
    %v6821 = vpop.f32.mrf.mxu0
    %6822 = vdwg.mxu0
    %6823 = vmatprep.subr.mxu0 0.0
    %6824 = vmatpush1.msra.mxu0 0.0
    %6825 = vmatprep.subr.mxu0 0.0
    %6826 = vmatpush1.msra.mxu0 0.0
    %6827 = vmatprep.subr.mxu0 0.0
    %6828 = vmatpush1.msra.mxu0 0.0
    %6829 = vmatprep.subr.mxu0 0.0
    %6830 = vmatpush1.msra.mxu0 0.0
    %6831 = vmatprep.subr.mxu0 0.0
    %6832 = vmatpush1.msra.mxu0 0.0
    %6833 = vmatprep.subr.mxu0 0.0
    %6834 = vmatpush1.msra.mxu0 0.0
    %6835 = vmatprep.subr.mxu0 0.0
    %6836 = vmatpush1.msra.mxu0 0.0
    %6837 = vmatprep.subr.mxu0 0.0
    %6838 = vmatpush1.msra.mxu0 0.0
    %6839 = vmatprep.subr.mxu0 0.0
    %6840 = vmatpush1.msra.mxu0 0.0
    %6841 = vmatprep.subr.mxu0 0.0
    %6842 = vmatpush1.msra.mxu0 0.0
    %6843 = vmatprep.subr.mxu0 0.0
    %6844 = vmatpush1.msra.mxu0 0.0
    %6845 = vmatprep.subr.mxu0 0.0
    %6846 = vmatpush1.msra.mxu0 0.0
    %6847 = vmatprep.subr.mxu0 0.0
    %v6848 = vand.u32 %v3819, 4294901760
    %6849 = vmatpush1.msra.mxu0 %v6848
    %6850 = vmatprep.subr.mxu0 0.0
    %v6851 = vand.u32 %v3818, 4294901760
    %6852 = vmatpush1.msra.mxu0 %v6851
    %6853 = vmatprep.subr.mxu0 0.0
    %v6854 = vand.u32 %v3817, 4294901760
    %6855 = vmatpush1.msra.mxu0 %v6854
    %6856 = vmatprep.subr.mxu0 0.0
    %v6857 = vand.u32 %v3816, 4294901760
    %6858 = vmatpush1.msra.mxu0 %v6857
    %6859 = vmatprep.subr.mxu0 0.0
    %6860 = vmatpush2.msra.mxu0 0.0
    %6861 = vmatprep.subr.mxu0 0.0
    %6862 = vmatpush2.msra.mxu0 0.0
    %6863 = vmatprep.subr.mxu0 0.0
    %6864 = vmatpush2.msra.mxu0 0.0
    %6865 = vmatprep.subr.mxu0 0.0
    %6866 = vmatpush2.msra.mxu0 0.0
    %6867 = vmatprep.subr.mxu0 0.0
    %6868 = vmatpush2.msra.mxu0 0.0
    %6869 = vmatprep.subr.mxu0 0.0
    %6870 = vmatpush2.msra.mxu0 0.0
    %6871 = vmatprep.subr.mxu0 0.0
    %6872 = vmatpush2.msra.mxu0 0.0
    %6873 = vmatprep.subr.mxu0 0.0
    %6874 = vmatpush2.msra.mxu0 0.0
    %6875 = vmatprep.subr.mxu0 0.0
    %6876 = vmatpush2.msra.mxu0 0.0
    %6877 = vmatprep.subr.mxu0 0.0
    %6878 = vmatpush2.msra.mxu0 0.0
    %6879 = vmatprep.subr.mxu0 0.0
    %6880 = vmatpush2.msra.mxu0 0.0
    %6881 = vmatprep.subr.mxu0 0.0
    %6882 = vmatpush2.msra.mxu0 0.0
    %6883 = vmatprep.subr.mxu0 0.0
    %6884 = vmatpush2.msra.mxu0 0.0
    %6885 = vmatprep.subr.mxu0 0.0
    %6886 = vmatpush2.msra.mxu0 0.0
    %6887 = vmatprep.subr.mxu0 0.0
    %6888 = vmatpush2.msra.mxu0 0.0
    %6889 = vmatprep.subr.mxu0 0.0
    %6890 = vmatpush2.msra.mxu0 0.0
    %6891 = vmatprep.mubr.f32.mxu0 0.0
    %v6892 = vand.u32 %v6571, 4294901760
    %v6893 = vsub.f32 %v6571, %v6892
    %v6894 = vand.u32 %v6893, 4294901760
    %6895 = vmatmul.mubr.f32.gmra.mxu0 %v6894
    %v6896 = vpop.f32.mrf.mxu0
    %v6897 = vadd.f32 %v6820, %v6896
    %v6898 = vpop.f32.mrf.mxu0
    %6899 = vdwg.mxu0
    %6900 = vmatprep.subr.mxu0 0.0
    %6901 = vmatpush1.msra.mxu0 0.0
    %6902 = vmatprep.subr.mxu0 0.0
    %6903 = vmatpush1.msra.mxu0 0.0
    %6904 = vmatprep.subr.mxu0 0.0
    %6905 = vmatpush1.msra.mxu0 0.0
    %6906 = vmatprep.subr.mxu0 0.0
    %6907 = vmatpush1.msra.mxu0 0.0
    %6908 = vmatprep.subr.mxu0 0.0
    %6909 = vmatpush1.msra.mxu0 0.0
    %6910 = vmatprep.subr.mxu0 0.0
    %6911 = vmatpush1.msra.mxu0 0.0
    %6912 = vmatprep.subr.mxu0 0.0
    %6913 = vmatpush1.msra.mxu0 0.0
    %6914 = vmatprep.subr.mxu0 0.0
    %6915 = vmatpush1.msra.mxu0 0.0
    %6916 = vmatprep.subr.mxu0 0.0
    %6917 = vmatpush1.msra.mxu0 0.0
    %6918 = vmatprep.subr.mxu0 0.0
    %6919 = vmatpush1.msra.mxu0 0.0
    %6920 = vmatprep.subr.mxu0 0.0
    %6921 = vmatpush1.msra.mxu0 0.0
    %6922 = vmatprep.subr.mxu0 0.0
    %6923 = vmatpush1.msra.mxu0 0.0
    %6924 = vmatprep.subr.mxu0 0.0
    %v6925 = vand.u32 %v3819, 4294901760
    %v6926 = vsub.f32 %v3819, %v6925
    %v6927 = vand.u32 %v6926, 4294901760
    %6928 = vmatpush1.msra.mxu0 %v6927
    %6929 = vmatprep.subr.mxu0 0.0
    %v6930 = vand.u32 %v3818, 4294901760
    %v6931 = vsub.f32 %v3818, %v6930
    %v6932 = vand.u32 %v6931, 4294901760
    %6933 = vmatpush1.msra.mxu0 %v6932
    %6934 = vmatprep.subr.mxu0 0.0
    %v6935 = vand.u32 %v3817, 4294901760
    %v6936 = vsub.f32 %v3817, %v6935
    %v6937 = vand.u32 %v6936, 4294901760
    %6938 = vmatpush1.msra.mxu0 %v6937
    %6939 = vmatprep.subr.mxu0 0.0
    %v6940 = vand.u32 %v3816, 4294901760
    %v6941 = vsub.f32 %v3816, %v6940
    %v6942 = vand.u32 %v6941, 4294901760
    %6943 = vmatpush1.msra.mxu0 %v6942
    %6944 = vmatprep.subr.mxu0 0.0
    %6945 = vmatpush2.msra.mxu0 0.0
    %6946 = vmatprep.subr.mxu0 0.0
    %6947 = vmatpush2.msra.mxu0 0.0
    %6948 = vmatprep.subr.mxu0 0.0
    %6949 = vmatpush2.msra.mxu0 0.0
    %6950 = vmatprep.subr.mxu0 0.0
    %6951 = vmatpush2.msra.mxu0 0.0
    %6952 = vmatprep.subr.mxu0 0.0
    %6953 = vmatpush2.msra.mxu0 0.0
    %6954 = vmatprep.subr.mxu0 0.0
    %6955 = vmatpush2.msra.mxu0 0.0
    %6956 = vmatprep.subr.mxu0 0.0
    %6957 = vmatpush2.msra.mxu0 0.0
    %6958 = vmatprep.subr.mxu0 0.0
    %6959 = vmatpush2.msra.mxu0 0.0
    %6960 = vmatprep.subr.mxu0 0.0
    %6961 = vmatpush2.msra.mxu0 0.0
    %6962 = vmatprep.subr.mxu0 0.0
    %6963 = vmatpush2.msra.mxu0 0.0
    %6964 = vmatprep.subr.mxu0 0.0
    %6965 = vmatpush2.msra.mxu0 0.0
    %6966 = vmatprep.subr.mxu0 0.0
    %6967 = vmatpush2.msra.mxu0 0.0
    %6968 = vmatprep.subr.mxu0 0.0
    %6969 = vmatpush2.msra.mxu0 0.0
    %6970 = vmatprep.subr.mxu0 0.0
    %6971 = vmatpush2.msra.mxu0 0.0
    %6972 = vmatprep.subr.mxu0 0.0
    %6973 = vmatpush2.msra.mxu0 0.0
    %6974 = vmatprep.subr.mxu0 0.0
    %6975 = vmatpush2.msra.mxu0 0.0
    %6976 = vmatprep.mubr.f32.mxu0 0.0
    %v6977 = vand.u32 %v6571, 4294901760
    %6978 = vmatmul.mubr.f32.gmra.mxu0 %v6977
    %v6979 = vpop.f32.mrf.mxu0
    %v6980 = vadd.f32 %v6897, %v6979
    %v6981 = vpop.f32.mrf.mxu0
    %6982 = vdwg.mxu0
    %6983 = vmatprep.subr.mxu0 0.0
    %6984 = vmatpush1.msra.mxu0 0.0
    %6985 = vmatprep.subr.mxu0 0.0
    %6986 = vmatpush1.msra.mxu0 0.0
    %6987 = vmatprep.subr.mxu0 0.0
    %6988 = vmatpush1.msra.mxu0 0.0
    %6989 = vmatprep.subr.mxu0 0.0
    %6990 = vmatpush1.msra.mxu0 0.0
    %6991 = vmatprep.subr.mxu0 0.0
    %6992 = vmatpush1.msra.mxu0 0.0
    %6993 = vmatprep.subr.mxu0 0.0
    %6994 = vmatpush1.msra.mxu0 0.0
    %6995 = vmatprep.subr.mxu0 0.0
    %6996 = vmatpush1.msra.mxu0 0.0
    %6997 = vmatprep.subr.mxu0 0.0
    %6998 = vmatpush1.msra.mxu0 0.0
    %6999 = vmatprep.subr.mxu0 0.0
    %7000 = vmatpush1.msra.mxu0 0.0
    %7001 = vmatprep.subr.mxu0 0.0
    %7002 = vmatpush1.msra.mxu0 0.0
    %7003 = vmatprep.subr.mxu0 0.0
    %7004 = vmatpush1.msra.mxu0 0.0
    %7005 = vmatprep.subr.mxu0 0.0
    %7006 = vmatpush1.msra.mxu0 0.0
    %7007 = vmatprep.subr.mxu0 0.0
    %v7008 = vand.u32 %v3819, 4294901760
    %7009 = vmatpush1.msra.mxu0 %v7008
    %7010 = vmatprep.subr.mxu0 0.0
    %v7011 = vand.u32 %v3818, 4294901760
    %7012 = vmatpush1.msra.mxu0 %v7011
    %7013 = vmatprep.subr.mxu0 0.0
    %v7014 = vand.u32 %v3817, 4294901760
    %7015 = vmatpush1.msra.mxu0 %v7014
    %7016 = vmatprep.subr.mxu0 0.0
    %v7017 = vand.u32 %v3816, 4294901760
    %7018 = vmatpush1.msra.mxu0 %v7017
    %7019 = vmatprep.subr.mxu0 0.0
    %7020 = vmatpush2.msra.mxu0 0.0
    %7021 = vmatprep.subr.mxu0 0.0
    %7022 = vmatpush2.msra.mxu0 0.0
    %7023 = vmatprep.subr.mxu0 0.0
    %7024 = vmatpush2.msra.mxu0 0.0
    %7025 = vmatprep.subr.mxu0 0.0
    %7026 = vmatpush2.msra.mxu0 0.0
    %7027 = vmatprep.subr.mxu0 0.0
    %7028 = vmatpush2.msra.mxu0 0.0
    %7029 = vmatprep.subr.mxu0 0.0
    %7030 = vmatpush2.msra.mxu0 0.0
    %7031 = vmatprep.subr.mxu0 0.0
    %7032 = vmatpush2.msra.mxu0 0.0
    %7033 = vmatprep.subr.mxu0 0.0
    %7034 = vmatpush2.msra.mxu0 0.0
    %7035 = vmatprep.subr.mxu0 0.0
    %7036 = vmatpush2.msra.mxu0 0.0
    %7037 = vmatprep.subr.mxu0 0.0
    %7038 = vmatpush2.msra.mxu0 0.0
    %7039 = vmatprep.subr.mxu0 0.0
    %7040 = vmatpush2.msra.mxu0 0.0
    %7041 = vmatprep.subr.mxu0 0.0
    %7042 = vmatpush2.msra.mxu0 0.0
    %7043 = vmatprep.subr.mxu0 0.0
    %7044 = vmatpush2.msra.mxu0 0.0
    %7045 = vmatprep.subr.mxu0 0.0
    %7046 = vmatpush2.msra.mxu0 0.0
    %7047 = vmatprep.subr.mxu0 0.0
    %7048 = vmatpush2.msra.mxu0 0.0
    %7049 = vmatprep.subr.mxu0 0.0
    %7050 = vmatpush2.msra.mxu0 0.0
    %7051 = vmatprep.mubr.f32.mxu0 0.0
    %v7052 = vand.u32 %v6571, 4294901760
    %7053 = vmatmul.mubr.f32.gmra.mxu0 %v7052
    %v7054 = vpop.f32.mrf.mxu0
    %v7055 = vadd.f32 %v6980, %v7054
    %v7056 = vpop.f32.mrf.mxu0
    %7057 = vdwg.mxu0
    %v7058 = vadd.f32 %v4536, %v7055
    %v7059 = vxor.u32 %v7058, 2147483648
    %v7060 = vmul.f32 %v7059, 1.442695
    %v7061 = vpow.pop %v7060
    %v7062 = vadd.f32 %v7061, 1.0
    %v7063 = vrcp.pop %v7062
    %v7064 = vmul.f32 1.0, %v7063
    %v7065 = vtanh.pop %v7058
    %7066 = vrot.lane.b32.xlu0 %v7064, 96
    %v7067 = vpop.permute.xlu0 %7066
    %7068 = vrot.lane.b32.xlu0 %v7065, 64
    %v7069 = vpop.permute.xlu0 %7068
    %7070 = vrot.lane.b32.xlu0 %v7064, 32
    %v7071 = vpop.permute.xlu0 %7070
    %v7072 = vmul.f32 %v7067, %v6567
    %v7073 = vmul.f32 %v7064, %v7069
    %v7074 = vadd.f32 %v7072, %v7073
    %v7075 = vtanh.pop %v7074
    %v7076 = vmul.f32 %v7071, %v7075
    %v7078 = vsel %vm757, %v7076, 0
    %7080 = vmatprep.subr.mxu0 0.0
    %7081 = vmatpush1.msra.mxu0 0.0
    %7082 = vmatprep.subr.mxu0 0.0
    %7083 = vmatpush1.msra.mxu0 0.0
    %7084 = vmatprep.subr.mxu0 0.0
    %7085 = vmatpush1.msra.mxu0 0.0
    %7086 = vmatprep.subr.mxu0 0.0
    %7087 = vmatpush1.msra.mxu0 0.0
    %7088 = vmatprep.subr.mxu0 0.0
    %7089 = vmatpush1.msra.mxu0 0.0
    %7090 = vmatprep.subr.mxu0 0.0
    %7091 = vmatpush1.msra.mxu0 0.0
    %7092 = vmatprep.subr.mxu0 0.0
    %7093 = vmatpush1.msra.mxu0 0.0
    %7094 = vmatprep.subr.mxu0 0.0
    %7095 = vmatpush1.msra.mxu0 0.0
    %7096 = vmatprep.subr.mxu0 0.0
    %7097 = vmatpush1.msra.mxu0 0.0
    %7098 = vmatprep.subr.mxu0 0.0
    %7099 = vmatpush1.msra.mxu0 0.0
    %7100 = vmatprep.subr.mxu0 0.0
    %7101 = vmatpush1.msra.mxu0 0.0
    %7102 = vmatprep.subr.mxu0 0.0
    %7103 = vmatpush1.msra.mxu0 0.0
    %7104 = vmatprep.subr.mxu0 0.0
    %v7105 = vand.u32 %v3819, 4294901760
    %7106 = vmatpush1.msra.mxu0 %v7105
    %7107 = vmatprep.subr.mxu0 0.0
    %v7108 = vand.u32 %v3818, 4294901760
    %7109 = vmatpush1.msra.mxu0 %v7108
    %7110 = vmatprep.subr.mxu0 0.0
    %v7111 = vand.u32 %v3817, 4294901760
    %7112 = vmatpush1.msra.mxu0 %v7111
    %7113 = vmatprep.subr.mxu0 0.0
    %v7114 = vand.u32 %v3816, 4294901760
    %7115 = vmatpush1.msra.mxu0 %v7114
    %7116 = vmatprep.subr.mxu0 0.0
    %7117 = vmatpush2.msra.mxu0 0.0
    %7118 = vmatprep.subr.mxu0 0.0
    %7119 = vmatpush2.msra.mxu0 0.0
    %7120 = vmatprep.subr.mxu0 0.0
    %7121 = vmatpush2.msra.mxu0 0.0
    %7122 = vmatprep.subr.mxu0 0.0
    %7123 = vmatpush2.msra.mxu0 0.0
    %7124 = vmatprep.subr.mxu0 0.0
    %7125 = vmatpush2.msra.mxu0 0.0
    %7126 = vmatprep.subr.mxu0 0.0
    %7127 = vmatpush2.msra.mxu0 0.0
    %7128 = vmatprep.subr.mxu0 0.0
    %7129 = vmatpush2.msra.mxu0 0.0
    %7130 = vmatprep.subr.mxu0 0.0
    %7131 = vmatpush2.msra.mxu0 0.0
    %7132 = vmatprep.subr.mxu0 0.0
    %7133 = vmatpush2.msra.mxu0 0.0
    %7134 = vmatprep.subr.mxu0 0.0
    %7135 = vmatpush2.msra.mxu0 0.0
    %7136 = vmatprep.subr.mxu0 0.0
    %7137 = vmatpush2.msra.mxu0 0.0
    %7138 = vmatprep.subr.mxu0 0.0
    %7139 = vmatpush2.msra.mxu0 0.0
    %7140 = vmatprep.subr.mxu0 0.0
    %7141 = vmatpush2.msra.mxu0 0.0
    %7142 = vmatprep.subr.mxu0 0.0
    %7143 = vmatpush2.msra.mxu0 0.0
    %7144 = vmatprep.subr.mxu0 0.0
    %7145 = vmatpush2.msra.mxu0 0.0
    %7146 = vmatprep.subr.mxu0 0.0
    %7147 = vmatpush2.msra.mxu0 0.0
    %7148 = vmatprep.mubr.f32.mxu0 0.0
    %v7149 = vand.u32 %v7078, 4294901760
    %v7150 = vsub.f32 %v7078, %v7149
    %v7151 = vand.u32 %v7150, 4294901760
    %v7152 = vsub.f32 %v7150, %v7151
    %v7153 = vand.u32 %v7152, 4294901760
    %7154 = vmatmul.mubr.f32.gmra.mxu0 %v7153
    %v7155 = vpop.f32.mrf.mxu0
    %v7156 = vadd.f32 0.0, %v7155
    %v7157 = vpop.f32.mrf.mxu0
    %7158 = vdwg.mxu0
    %7159 = vmatprep.subr.mxu0 0.0
    %7160 = vmatpush1.msra.mxu0 0.0
    %7161 = vmatprep.subr.mxu0 0.0
    %7162 = vmatpush1.msra.mxu0 0.0
    %7163 = vmatprep.subr.mxu0 0.0
    %7164 = vmatpush1.msra.mxu0 0.0
    %7165 = vmatprep.subr.mxu0 0.0
    %7166 = vmatpush1.msra.mxu0 0.0
    %7167 = vmatprep.subr.mxu0 0.0
    %7168 = vmatpush1.msra.mxu0 0.0
    %7169 = vmatprep.subr.mxu0 0.0
    %7170 = vmatpush1.msra.mxu0 0.0
    %7171 = vmatprep.subr.mxu0 0.0
    %7172 = vmatpush1.msra.mxu0 0.0
    %7173 = vmatprep.subr.mxu0 0.0
    %7174 = vmatpush1.msra.mxu0 0.0
    %7175 = vmatprep.subr.mxu0 0.0
    %7176 = vmatpush1.msra.mxu0 0.0
    %7177 = vmatprep.subr.mxu0 0.0
    %7178 = vmatpush1.msra.mxu0 0.0
    %7179 = vmatprep.subr.mxu0 0.0
    %7180 = vmatpush1.msra.mxu0 0.0
    %7181 = vmatprep.subr.mxu0 0.0
    %7182 = vmatpush1.msra.mxu0 0.0
    %7183 = vmatprep.subr.mxu0 0.0
    %v7184 = vand.u32 %v3819, 4294901760
    %v7185 = vsub.f32 %v3819, %v7184
    %v7186 = vand.u32 %v7185, 4294901760
    %v7187 = vsub.f32 %v7185, %v7186
    %v7188 = vand.u32 %v7187, 4294901760
    %7189 = vmatpush1.msra.mxu0 %v7188
    %7190 = vmatprep.subr.mxu0 0.0
    %v7191 = vand.u32 %v3818, 4294901760
    %v7192 = vsub.f32 %v3818, %v7191
    %v7193 = vand.u32 %v7192, 4294901760
    %v7194 = vsub.f32 %v7192, %v7193
    %v7195 = vand.u32 %v7194, 4294901760
    %7196 = vmatpush1.msra.mxu0 %v7195
    %7197 = vmatprep.subr.mxu0 0.0
    %v7198 = vand.u32 %v3817, 4294901760
    %v7199 = vsub.f32 %v3817, %v7198
    %v7200 = vand.u32 %v7199, 4294901760
    %v7201 = vsub.f32 %v7199, %v7200
    %v7202 = vand.u32 %v7201, 4294901760
    %7203 = vmatpush1.msra.mxu0 %v7202
    %7204 = vmatprep.subr.mxu0 0.0
    %v7205 = vand.u32 %v3816, 4294901760
    %v7206 = vsub.f32 %v3816, %v7205
    %v7207 = vand.u32 %v7206, 4294901760
    %v7208 = vsub.f32 %v7206, %v7207
    %v7209 = vand.u32 %v7208, 4294901760
    %7210 = vmatpush1.msra.mxu0 %v7209
    %7211 = vmatprep.subr.mxu0 0.0
    %7212 = vmatpush2.msra.mxu0 0.0
    %7213 = vmatprep.subr.mxu0 0.0
    %7214 = vmatpush2.msra.mxu0 0.0
    %7215 = vmatprep.subr.mxu0 0.0
    %7216 = vmatpush2.msra.mxu0 0.0
    %7217 = vmatprep.subr.mxu0 0.0
    %7218 = vmatpush2.msra.mxu0 0.0
    %7219 = vmatprep.subr.mxu0 0.0
    %7220 = vmatpush2.msra.mxu0 0.0
    %7221 = vmatprep.subr.mxu0 0.0
    %7222 = vmatpush2.msra.mxu0 0.0
    %7223 = vmatprep.subr.mxu0 0.0
    %7224 = vmatpush2.msra.mxu0 0.0
    %7225 = vmatprep.subr.mxu0 0.0
    %7226 = vmatpush2.msra.mxu0 0.0
    %7227 = vmatprep.subr.mxu0 0.0
    %7228 = vmatpush2.msra.mxu0 0.0
    %7229 = vmatprep.subr.mxu0 0.0
    %7230 = vmatpush2.msra.mxu0 0.0
    %7231 = vmatprep.subr.mxu0 0.0
    %7232 = vmatpush2.msra.mxu0 0.0
    %7233 = vmatprep.subr.mxu0 0.0
    %7234 = vmatpush2.msra.mxu0 0.0
    %7235 = vmatprep.subr.mxu0 0.0
    %7236 = vmatpush2.msra.mxu0 0.0
    %7237 = vmatprep.subr.mxu0 0.0
    %7238 = vmatpush2.msra.mxu0 0.0
    %7239 = vmatprep.subr.mxu0 0.0
    %7240 = vmatpush2.msra.mxu0 0.0
    %7241 = vmatprep.subr.mxu0 0.0
    %7242 = vmatpush2.msra.mxu0 0.0
    %7243 = vmatprep.mubr.f32.mxu0 0.0
    %v7244 = vand.u32 %v7078, 4294901760
    %7245 = vmatmul.mubr.f32.gmra.mxu0 %v7244
    %v7246 = vpop.f32.mrf.mxu0
    %v7247 = vadd.f32 %v7156, %v7246
    %v7248 = vpop.f32.mrf.mxu0
    %7249 = vdwg.mxu0
    %7250 = vmatprep.subr.mxu0 0.0
    %7251 = vmatpush1.msra.mxu0 0.0
    %7252 = vmatprep.subr.mxu0 0.0
    %7253 = vmatpush1.msra.mxu0 0.0
    %7254 = vmatprep.subr.mxu0 0.0
    %7255 = vmatpush1.msra.mxu0 0.0
    %7256 = vmatprep.subr.mxu0 0.0
    %7257 = vmatpush1.msra.mxu0 0.0
    %7258 = vmatprep.subr.mxu0 0.0
    %7259 = vmatpush1.msra.mxu0 0.0
    %7260 = vmatprep.subr.mxu0 0.0
    %7261 = vmatpush1.msra.mxu0 0.0
    %7262 = vmatprep.subr.mxu0 0.0
    %7263 = vmatpush1.msra.mxu0 0.0
    %7264 = vmatprep.subr.mxu0 0.0
    %7265 = vmatpush1.msra.mxu0 0.0
    %7266 = vmatprep.subr.mxu0 0.0
    %7267 = vmatpush1.msra.mxu0 0.0
    %7268 = vmatprep.subr.mxu0 0.0
    %7269 = vmatpush1.msra.mxu0 0.0
    %7270 = vmatprep.subr.mxu0 0.0
    %7271 = vmatpush1.msra.mxu0 0.0
    %7272 = vmatprep.subr.mxu0 0.0
    %7273 = vmatpush1.msra.mxu0 0.0
    %7274 = vmatprep.subr.mxu0 0.0
    %v7275 = vand.u32 %v3819, 4294901760
    %v7276 = vsub.f32 %v3819, %v7275
    %7277 = vmatpush1.msra.mxu0 %v7276
    %7278 = vmatprep.subr.mxu0 0.0
    %v7279 = vand.u32 %v3818, 4294901760
    %v7280 = vsub.f32 %v3818, %v7279
    %7281 = vmatpush1.msra.mxu0 %v7280
    %7282 = vmatprep.subr.mxu0 0.0
    %v7283 = vand.u32 %v3817, 4294901760
    %v7284 = vsub.f32 %v3817, %v7283
    %7285 = vmatpush1.msra.mxu0 %v7284
    %7286 = vmatprep.subr.mxu0 0.0
    %v7287 = vand.u32 %v3816, 4294901760
    %v7288 = vsub.f32 %v3816, %v7287
    %7289 = vmatpush1.msra.mxu0 %v7288
    %7290 = vmatprep.subr.mxu0 0.0
    %7291 = vmatpush2.msra.mxu0 0.0
    %7292 = vmatprep.subr.mxu0 0.0
    %7293 = vmatpush2.msra.mxu0 0.0
    %7294 = vmatprep.subr.mxu0 0.0
    %7295 = vmatpush2.msra.mxu0 0.0
    %7296 = vmatprep.subr.mxu0 0.0
    %7297 = vmatpush2.msra.mxu0 0.0
    %7298 = vmatprep.subr.mxu0 0.0
    %7299 = vmatpush2.msra.mxu0 0.0
    %7300 = vmatprep.subr.mxu0 0.0
    %7301 = vmatpush2.msra.mxu0 0.0
    %7302 = vmatprep.subr.mxu0 0.0
    %7303 = vmatpush2.msra.mxu0 0.0
    %7304 = vmatprep.subr.mxu0 0.0
    %7305 = vmatpush2.msra.mxu0 0.0
    %7306 = vmatprep.subr.mxu0 0.0
    %7307 = vmatpush2.msra.mxu0 0.0
    %7308 = vmatprep.subr.mxu0 0.0
    %7309 = vmatpush2.msra.mxu0 0.0
    %7310 = vmatprep.subr.mxu0 0.0
    %7311 = vmatpush2.msra.mxu0 0.0
    %7312 = vmatprep.subr.mxu0 0.0
    %7313 = vmatpush2.msra.mxu0 0.0
    %7314 = vmatprep.subr.mxu0 0.0
    %7315 = vmatpush2.msra.mxu0 0.0
    %7316 = vmatprep.subr.mxu0 0.0
    %7317 = vmatpush2.msra.mxu0 0.0
    %7318 = vmatprep.subr.mxu0 0.0
    %7319 = vmatpush2.msra.mxu0 0.0
    %7320 = vmatprep.subr.mxu0 0.0
    %7321 = vmatpush2.msra.mxu0 0.0
    %7322 = vmatprep.mubr.f32.mxu0 0.0
    %v7323 = vand.u32 %v7078, 4294901760
    %v7324 = vsub.f32 %v7078, %v7323
    %7325 = vmatmul.mubr.f32.gmra.mxu0 %v7324
    %v7326 = vpop.f32.mrf.mxu0
    %v7327 = vadd.f32 %v7247, %v7326
    %v7328 = vpop.f32.mrf.mxu0
    %7329 = vdwg.mxu0
    %7330 = vmatprep.subr.mxu0 0.0
    %7331 = vmatpush1.msra.mxu0 0.0
    %7332 = vmatprep.subr.mxu0 0.0
    %7333 = vmatpush1.msra.mxu0 0.0
    %7334 = vmatprep.subr.mxu0 0.0
    %7335 = vmatpush1.msra.mxu0 0.0
    %7336 = vmatprep.subr.mxu0 0.0
    %7337 = vmatpush1.msra.mxu0 0.0
    %7338 = vmatprep.subr.mxu0 0.0
    %7339 = vmatpush1.msra.mxu0 0.0
    %7340 = vmatprep.subr.mxu0 0.0
    %7341 = vmatpush1.msra.mxu0 0.0
    %7342 = vmatprep.subr.mxu0 0.0
    %7343 = vmatpush1.msra.mxu0 0.0
    %7344 = vmatprep.subr.mxu0 0.0
    %7345 = vmatpush1.msra.mxu0 0.0
    %7346 = vmatprep.subr.mxu0 0.0
    %7347 = vmatpush1.msra.mxu0 0.0
    %7348 = vmatprep.subr.mxu0 0.0
    %7349 = vmatpush1.msra.mxu0 0.0
    %7350 = vmatprep.subr.mxu0 0.0
    %7351 = vmatpush1.msra.mxu0 0.0
    %7352 = vmatprep.subr.mxu0 0.0
    %7353 = vmatpush1.msra.mxu0 0.0
    %7354 = vmatprep.subr.mxu0 0.0
    %v7355 = vand.u32 %v3819, 4294901760
    %7356 = vmatpush1.msra.mxu0 %v7355
    %7357 = vmatprep.subr.mxu0 0.0
    %v7358 = vand.u32 %v3818, 4294901760
    %7359 = vmatpush1.msra.mxu0 %v7358
    %7360 = vmatprep.subr.mxu0 0.0
    %v7361 = vand.u32 %v3817, 4294901760
    %7362 = vmatpush1.msra.mxu0 %v7361
    %7363 = vmatprep.subr.mxu0 0.0
    %v7364 = vand.u32 %v3816, 4294901760
    %7365 = vmatpush1.msra.mxu0 %v7364
    %7366 = vmatprep.subr.mxu0 0.0
    %7367 = vmatpush2.msra.mxu0 0.0
    %7368 = vmatprep.subr.mxu0 0.0
    %7369 = vmatpush2.msra.mxu0 0.0
    %7370 = vmatprep.subr.mxu0 0.0
    %7371 = vmatpush2.msra.mxu0 0.0
    %7372 = vmatprep.subr.mxu0 0.0
    %7373 = vmatpush2.msra.mxu0 0.0
    %7374 = vmatprep.subr.mxu0 0.0
    %7375 = vmatpush2.msra.mxu0 0.0
    %7376 = vmatprep.subr.mxu0 0.0
    %7377 = vmatpush2.msra.mxu0 0.0
    %7378 = vmatprep.subr.mxu0 0.0
    %7379 = vmatpush2.msra.mxu0 0.0
    %7380 = vmatprep.subr.mxu0 0.0
    %7381 = vmatpush2.msra.mxu0 0.0
    %7382 = vmatprep.subr.mxu0 0.0
    %7383 = vmatpush2.msra.mxu0 0.0
    %7384 = vmatprep.subr.mxu0 0.0
    %7385 = vmatpush2.msra.mxu0 0.0
    %7386 = vmatprep.subr.mxu0 0.0
    %7387 = vmatpush2.msra.mxu0 0.0
    %7388 = vmatprep.subr.mxu0 0.0
    %7389 = vmatpush2.msra.mxu0 0.0
    %7390 = vmatprep.subr.mxu0 0.0
    %7391 = vmatpush2.msra.mxu0 0.0
    %7392 = vmatprep.subr.mxu0 0.0
    %7393 = vmatpush2.msra.mxu0 0.0
    %7394 = vmatprep.subr.mxu0 0.0
    %7395 = vmatpush2.msra.mxu0 0.0
    %7396 = vmatprep.subr.mxu0 0.0
    %7397 = vmatpush2.msra.mxu0 0.0
    %7398 = vmatprep.mubr.f32.mxu0 0.0
    %v7399 = vand.u32 %v7078, 4294901760
    %v7400 = vsub.f32 %v7078, %v7399
    %v7401 = vand.u32 %v7400, 4294901760
    %7402 = vmatmul.mubr.f32.gmra.mxu0 %v7401
    %v7403 = vpop.f32.mrf.mxu0
    %v7404 = vadd.f32 %v7327, %v7403
    %v7405 = vpop.f32.mrf.mxu0
    %7406 = vdwg.mxu0
    %7407 = vmatprep.subr.mxu0 0.0
    %7408 = vmatpush1.msra.mxu0 0.0
    %7409 = vmatprep.subr.mxu0 0.0
    %7410 = vmatpush1.msra.mxu0 0.0
    %7411 = vmatprep.subr.mxu0 0.0
    %7412 = vmatpush1.msra.mxu0 0.0
    %7413 = vmatprep.subr.mxu0 0.0
    %7414 = vmatpush1.msra.mxu0 0.0
    %7415 = vmatprep.subr.mxu0 0.0
    %7416 = vmatpush1.msra.mxu0 0.0
    %7417 = vmatprep.subr.mxu0 0.0
    %7418 = vmatpush1.msra.mxu0 0.0
    %7419 = vmatprep.subr.mxu0 0.0
    %7420 = vmatpush1.msra.mxu0 0.0
    %7421 = vmatprep.subr.mxu0 0.0
    %7422 = vmatpush1.msra.mxu0 0.0
    %7423 = vmatprep.subr.mxu0 0.0
    %7424 = vmatpush1.msra.mxu0 0.0
    %7425 = vmatprep.subr.mxu0 0.0
    %7426 = vmatpush1.msra.mxu0 0.0
    %7427 = vmatprep.subr.mxu0 0.0
    %7428 = vmatpush1.msra.mxu0 0.0
    %7429 = vmatprep.subr.mxu0 0.0
    %7430 = vmatpush1.msra.mxu0 0.0
    %7431 = vmatprep.subr.mxu0 0.0
    %v7432 = vand.u32 %v3819, 4294901760
    %v7433 = vsub.f32 %v3819, %v7432
    %v7434 = vand.u32 %v7433, 4294901760
    %7435 = vmatpush1.msra.mxu0 %v7434
    %7436 = vmatprep.subr.mxu0 0.0
    %v7437 = vand.u32 %v3818, 4294901760
    %v7438 = vsub.f32 %v3818, %v7437
    %v7439 = vand.u32 %v7438, 4294901760
    %7440 = vmatpush1.msra.mxu0 %v7439
    %7441 = vmatprep.subr.mxu0 0.0
    %v7442 = vand.u32 %v3817, 4294901760
    %v7443 = vsub.f32 %v3817, %v7442
    %v7444 = vand.u32 %v7443, 4294901760
    %7445 = vmatpush1.msra.mxu0 %v7444
    %7446 = vmatprep.subr.mxu0 0.0
    %v7447 = vand.u32 %v3816, 4294901760
    %v7448 = vsub.f32 %v3816, %v7447
    %v7449 = vand.u32 %v7448, 4294901760
    %7450 = vmatpush1.msra.mxu0 %v7449
    %7451 = vmatprep.subr.mxu0 0.0
    %7452 = vmatpush2.msra.mxu0 0.0
    %7453 = vmatprep.subr.mxu0 0.0
    %7454 = vmatpush2.msra.mxu0 0.0
    %7455 = vmatprep.subr.mxu0 0.0
    %7456 = vmatpush2.msra.mxu0 0.0
    %7457 = vmatprep.subr.mxu0 0.0
    %7458 = vmatpush2.msra.mxu0 0.0
    %7459 = vmatprep.subr.mxu0 0.0
    %7460 = vmatpush2.msra.mxu0 0.0
    %7461 = vmatprep.subr.mxu0 0.0
    %7462 = vmatpush2.msra.mxu0 0.0
    %7463 = vmatprep.subr.mxu0 0.0
    %7464 = vmatpush2.msra.mxu0 0.0
    %7465 = vmatprep.subr.mxu0 0.0
    %7466 = vmatpush2.msra.mxu0 0.0
    %7467 = vmatprep.subr.mxu0 0.0
    %7468 = vmatpush2.msra.mxu0 0.0
    %7469 = vmatprep.subr.mxu0 0.0
    %7470 = vmatpush2.msra.mxu0 0.0
    %7471 = vmatprep.subr.mxu0 0.0
    %7472 = vmatpush2.msra.mxu0 0.0
    %7473 = vmatprep.subr.mxu0 0.0
    %7474 = vmatpush2.msra.mxu0 0.0
    %7475 = vmatprep.subr.mxu0 0.0
    %7476 = vmatpush2.msra.mxu0 0.0
    %7477 = vmatprep.subr.mxu0 0.0
    %7478 = vmatpush2.msra.mxu0 0.0
    %7479 = vmatprep.subr.mxu0 0.0
    %7480 = vmatpush2.msra.mxu0 0.0
    %7481 = vmatprep.subr.mxu0 0.0
    %7482 = vmatpush2.msra.mxu0 0.0
    %7483 = vmatprep.mubr.f32.mxu0 0.0
    %v7484 = vand.u32 %v7078, 4294901760
    %7485 = vmatmul.mubr.f32.gmra.mxu0 %v7484
    %v7486 = vpop.f32.mrf.mxu0
    %v7487 = vadd.f32 %v7404, %v7486
    %v7488 = vpop.f32.mrf.mxu0
    %7489 = vdwg.mxu0
    %7490 = vmatprep.subr.mxu0 0.0
    %7491 = vmatpush1.msra.mxu0 0.0
    %7492 = vmatprep.subr.mxu0 0.0
    %7493 = vmatpush1.msra.mxu0 0.0
    %7494 = vmatprep.subr.mxu0 0.0
    %7495 = vmatpush1.msra.mxu0 0.0
    %7496 = vmatprep.subr.mxu0 0.0
    %7497 = vmatpush1.msra.mxu0 0.0
    %7498 = vmatprep.subr.mxu0 0.0
    %7499 = vmatpush1.msra.mxu0 0.0
    %7500 = vmatprep.subr.mxu0 0.0
    %7501 = vmatpush1.msra.mxu0 0.0
    %7502 = vmatprep.subr.mxu0 0.0
    %7503 = vmatpush1.msra.mxu0 0.0
    %7504 = vmatprep.subr.mxu0 0.0
    %7505 = vmatpush1.msra.mxu0 0.0
    %7506 = vmatprep.subr.mxu0 0.0
    %7507 = vmatpush1.msra.mxu0 0.0
    %7508 = vmatprep.subr.mxu0 0.0
    %7509 = vmatpush1.msra.mxu0 0.0
    %7510 = vmatprep.subr.mxu0 0.0
    %7511 = vmatpush1.msra.mxu0 0.0
    %7512 = vmatprep.subr.mxu0 0.0
    %7513 = vmatpush1.msra.mxu0 0.0
    %7514 = vmatprep.subr.mxu0 0.0
    %v7515 = vand.u32 %v3819, 4294901760
    %7516 = vmatpush1.msra.mxu0 %v7515
    %7517 = vmatprep.subr.mxu0 0.0
    %v7518 = vand.u32 %v3818, 4294901760
    %7519 = vmatpush1.msra.mxu0 %v7518
    %7520 = vmatprep.subr.mxu0 0.0
    %v7521 = vand.u32 %v3817, 4294901760
    %7522 = vmatpush1.msra.mxu0 %v7521
    %7523 = vmatprep.subr.mxu0 0.0
    %v7524 = vand.u32 %v3816, 4294901760
    %7525 = vmatpush1.msra.mxu0 %v7524
    %7526 = vmatprep.subr.mxu0 0.0
    %7527 = vmatpush2.msra.mxu0 0.0
    %7528 = vmatprep.subr.mxu0 0.0
    %7529 = vmatpush2.msra.mxu0 0.0
    %7530 = vmatprep.subr.mxu0 0.0
    %7531 = vmatpush2.msra.mxu0 0.0
    %7532 = vmatprep.subr.mxu0 0.0
    %7533 = vmatpush2.msra.mxu0 0.0
    %7534 = vmatprep.subr.mxu0 0.0
    %7535 = vmatpush2.msra.mxu0 0.0
    %7536 = vmatprep.subr.mxu0 0.0
    %7537 = vmatpush2.msra.mxu0 0.0
    %7538 = vmatprep.subr.mxu0 0.0
    %7539 = vmatpush2.msra.mxu0 0.0
    %7540 = vmatprep.subr.mxu0 0.0
    %7541 = vmatpush2.msra.mxu0 0.0
    %7542 = vmatprep.subr.mxu0 0.0
    %7543 = vmatpush2.msra.mxu0 0.0
    %7544 = vmatprep.subr.mxu0 0.0
    %7545 = vmatpush2.msra.mxu0 0.0
    %7546 = vmatprep.subr.mxu0 0.0
    %7547 = vmatpush2.msra.mxu0 0.0
    %7548 = vmatprep.subr.mxu0 0.0
    %7549 = vmatpush2.msra.mxu0 0.0
    %7550 = vmatprep.subr.mxu0 0.0
    %7551 = vmatpush2.msra.mxu0 0.0
    %7552 = vmatprep.subr.mxu0 0.0
    %7553 = vmatpush2.msra.mxu0 0.0
    %7554 = vmatprep.subr.mxu0 0.0
    %7555 = vmatpush2.msra.mxu0 0.0
    %7556 = vmatprep.subr.mxu0 0.0
    %7557 = vmatpush2.msra.mxu0 0.0
    %7558 = vmatprep.mubr.f32.mxu0 0.0
    %v7559 = vand.u32 %v7078, 4294901760
    %7560 = vmatmul.mubr.f32.gmra.mxu0 %v7559
    %v7561 = vpop.f32.mrf.mxu0
    %v7562 = vadd.f32 %v7487, %v7561
    %v7563 = vpop.f32.mrf.mxu0
    %7564 = vdwg.mxu0
    %v7565 = vadd.f32 %v4542, %v7562
    %v7566 = vxor.u32 %v7565, 2147483648
    %v7567 = vmul.f32 %v7566, 1.442695
    %v7568 = vpow.pop %v7567
    %v7569 = vadd.f32 %v7568, 1.0
    %v7570 = vrcp.pop %v7569
    %v7571 = vmul.f32 1.0, %v7570
    %v7572 = vtanh.pop %v7565
    %7573 = vrot.lane.b32.xlu0 %v7571, 96
    %v7574 = vpop.permute.xlu0 %7573
    %7575 = vrot.lane.b32.xlu0 %v7572, 64
    %v7576 = vpop.permute.xlu0 %7575
    %7577 = vrot.lane.b32.xlu0 %v7571, 32
    %v7578 = vpop.permute.xlu0 %7577
    %v7579 = vmul.f32 %v7574, %v7074
    %v7580 = vmul.f32 %v7571, %v7576
    %v7581 = vadd.f32 %v7579, %v7580
    %v7582 = vtanh.pop %v7581
    %v7583 = vmul.f32 %v7578, %v7582
    %s7584 = sld [smem:[#allocation3]]
    %v7585 = vld [vmem:[%s7] sm:$0x1]
    %v7587 = vlaneseq
    %v7588 = vshrl.u32 %v7587, 7
    %v7589 = vsub.s32 0, %v7588
    %v7590 = vrot.slane %v7585, %v7589
    %v7592 = vmul.f32 %v7583, %v7590
    %vm7593 = vcmask 261122
    %v7594 = vsel %vm7593, %v7592, 0.0
    %7595 = vadd.xlane.f32.xlu0 %v7594
    %v7596 = vpop.xlane.xlu0 %7595
    %v7597 = vstv %s7584
    %v7598 = vadd.f32 %v7596, %v7597
    %vm7599 = vcmask 7170
    %7600 = vst.msk [vmem:[%s9 - $0x2] sm:$0xfc] %vm7599, %v7598
    // Predicated region
    $region46: #{tpu_custom_call.1} parent=1 // pred_check
      _
    $region47: #{tpu_custom_call.1} parent=1 // pred_check_branch
      %7602 = sbr.rel (0) target = $region49
    $region48: #{tpu_custom_call.1} parent=1 // pred_region
      _
    $region49: #{tpu_custom_call.1} parent=1 // pred_fallthru
      _
    // Predicated region
    $region50: #{tpu_custom_call.1} parent=1 // pred_check
      _
    $region51: #{tpu_custom_call.1} parent=1 // pred_check_branch
      %7604 = sbr.rel (0) target = $region53
    $region52: #{tpu_custom_call.1} parent=1 // pred_region
      _
    $region53: #{tpu_custom_call.1} parent=1 // pred_fallthru
      _
    %7605 = vsyncpa [#allocation5], 1
    %7606 = vsyncpa [#allocation7], 1

</llo_original>
